<compile_context>
chip_gen: v7x
topology: tpu7x:2x2x1
jax: 0.10.0
libtpu: 0.0.40
codegen_flags: <defaults>
</compile_context>

<pallas_src>
import jax
import jax.numpy as jnp
from jax.experimental import pallas as pl
from jax.experimental.pallas import tpu as pltpu


def decoder_kernel(enc_ref, y_ref,
                   w1hc_ref, w1e_ref, b1_ref, w2_ref, b2_ref,
                   wih_ref, whh_ref, blstm_ref,
                   fcwc_ref, fcwy_ref, fcb_ref,
                   ffwh_ref, ffwc_ref, ffb_ref,
                   out_ref):
    enc = enc_ref[...]                       # (B, T1, E)
    B, T1, E = enc.shape
    y_all = y_ref[...]                       # (B, T1)

    # ---- hoisted weight loads (once, outside the time loop) -----------------
    w1hc_t = w1hc_ref[...]                   # (2D, E)  state -> attn-hidden
    D = w1hc_t.shape[0] // 2
    w1e_t = w1e_ref[...]                     # (E, E)   encoder -> attn-hidden
    b1 = b1_ref[...]                         # (1, E)
    w2_b = w2_ref[...][0][None, None, :]     # (1, 1, E)
    b2 = b2_ref[...][0, 0]
    wih_row = wih_ref[...]                   # (1, 4D)
    whh_t = whh_ref[...]                     # (D, 4D)
    b_lstm = blstm_ref[...]                  # (1, 4D)  bih + bhh
    fcw_ctx = fcwc_ref[...]                  # (E, 1)
    fcw_y = fcwy_ref[...][0, 0]
    fcb = fcb_ref[...][0, 0]
    ffw_h = ffwh_ref[...]                    # (D, 1)
    ffw_c = ffwc_ref[...]                    # (E, 1)
    ffb = ffb_ref[...][0, 0]

    # ---- loop-invariant encoder projection through first attention Linear ---
    enc_proj = jax.lax.dot_general(
        enc, w1e_t, (((2,), (0,)), ((), ())),
        preferred_element_type=jnp.float32) + b1[None, :, :]     # (B, T1, E)

    hidden = jnp.zeros((B, D), jnp.float32)
    cell = jnp.zeros((B, D), jnp.float32)
    ctx = jnp.zeros((B, E), jnp.float32)

    # ---- decoder time loop, fully unrolled (T1 is static) --------------------
    for t in range(T1):
        # attention: Linear(2D+E -> E) . tanh . Linear(E -> 1), softmax over T1
        state = jnp.concatenate([hidden, cell], axis=1)                       # (B, 2D)
        s_proj = jnp.dot(state, w1hc_t, preferred_element_type=jnp.float32)   # (B, E)
        z = jnp.tanh(enc_proj + s_proj[:, None, :])                           # (B, T1, E)
        scores = jnp.sum(z * w2_b, axis=-1) + b2                              # (B, T1)

        m = jnp.max(scores, axis=1, keepdims=True)
        e = jnp.exp(scores - m)
        # exact reciprocal kept: approx=True risks exceeding the 1e-4 tolerance
        alpha = e * pl.reciprocal(jnp.sum(e, axis=1, keepdims=True), approx=False)

        # context vector
        ctx = jnp.sum(alpha[:, :, None] * enc, axis=1)                        # (B, E)

        # y_tilde = fc([context, y_history[:, t]])
        y_t = y_all[:, t:t + 1]                                               # (B, 1) static slice
        y_tilde = (jnp.dot(ctx, fcw_ctx, preferred_element_type=jnp.float32)
                   + y_t * fcw_y + fcb)                                       # (B, 1)

        # LSTM cell (input_size=1, hidden=D), PyTorch gate order i, f, g, o
        gates = (y_tilde * wih_row
                 + jnp.dot(hidden, whh_t, preferred_element_type=jnp.float32)
                 + b_lstm)                                                    # (B, 4D)
        i_g = jax.nn.sigmoid(gates[:, 0:D])
        f_g = jax.nn.sigmoid(gates[:, D:2 * D])
        g_g = jnp.tanh(gates[:, 2 * D:3 * D])
        o_g = jax.nn.sigmoid(gates[:, 3 * D:4 * D])
        cell = f_g * cell + i_g * g_g
        hidden = o_g * jnp.tanh(cell)

    # ---- final projection: fc_final([hidden, context]) -----------------------
    out_ref[...] = (jnp.dot(hidden, ffw_h, preferred_element_type=jnp.float32)
                    + jnp.dot(ctx, ffw_c, preferred_element_type=jnp.float32)
                    + ffb)


def decoder_pallas(input_encoded, y_history, params):
    B, T1, E = input_encoded.shape
    D = params["whh"].shape[1]

    # Wrapper-side weight prep (once, outside the kernel): split / transpose so
    # the kernel never does .T or column slicing of weights.
    w1 = params["w1"]                          # (E, 2D+E) torch (out, in) layout
    prepped = [
        input_encoded,                         # (B, T1, E)
        y_history,                             # (B, T1)
        jnp.transpose(w1[:, :2 * D]),          # w1hc_t (2D, E)  [hidden|cell] block
        jnp.transpose(w1[:, 2 * D:]),          # w1e_t  (E, E)   encoder block
        params["b1"],                          # (1, E)
        params["w2"],                          # (1, E)
        params["b2"],                          # (1, 1)
        jnp.transpose(params["wih"]),          # (1, 4D)
        jnp.transpose(params["whh"]),          # (D, 4D)
        params["bih"] + params["bhh"],         # (1, 4D) fused LSTM bias
        jnp.transpose(params["fcw"][:, :E]),   # fcw_ctx (E, 1)
        params["fcw"][:, E:],                  # fcw_y   (1, 1)
        params["fcb"],                         # (1, 1)
        jnp.transpose(params["ffw"][:, :D]),   # ffw_h (D, 1)
        jnp.transpose(params["ffw"][:, D:]),   # ffw_c (E, 1)
        params["ffb"],                         # (1, 1)
    ]

    vmem = pl.BlockSpec(memory_space=pltpu.MemorySpace.VMEM)

    # TODO(synk): for large B on v7x, add a "parallel" batch grid axis (tiles of 8)
    # so both TensorCores are used; at B=4 a single invocation is optimal.
    return pl.pallas_call(
        decoder_kernel,
        out_shape=jax.ShapeDtypeStruct((B, 1), jnp.float32),
        in_specs=[vmem] * len(prepped),
        out_specs=vmem,
    )(*prepped)


def decoder_ref(enc, y_hist, params):
    """Pure-JAX reference mirroring the PyTorch forward."""
    B, T1, E = enc.shape
    D = params["whh"].shape[1]
    hidden = jnp.zeros((B, D), jnp.float32)
    cell = jnp.zeros((B, D), jnp.float32)
    context = jnp.zeros((B, E), jnp.float32)
    for t in range(T1):
        x = jnp.concatenate([jnp.broadcast_to(hidden[:, None, :], (B, T1, D)),
                             jnp.broadcast_to(cell[:, None, :], (B, T1, D)),
                             enc], axis=2)                                    # (B, T1, 2D+E)
        h = jnp.tanh(x.reshape(-1, 2 * D + E) @ params["w1"].T + params["b1"][0])
        s = (h @ params["w2"].T + params["b2"][0]).reshape(B, T1)
        alpha = jax.nn.softmax(s, axis=1)
        context = jnp.einsum("bt,bte->be", alpha, enc)
        y_tilde = (jnp.concatenate([context, y_hist[:, t:t + 1]], axis=1)
                   @ params["fcw"].T + params["fcb"][0])
        gates = (y_tilde @ params["wih"].T + hidden @ params["whh"].T
                 + params["bih"][0] + params["bhh"][0])
        i = jax.nn.sigmoid(gates[:, :D])
        f = jax.nn.sigmoid(gates[:, D:2 * D])
        g = jnp.tanh(gates[:, 2 * D:3 * D])
        o = jax.nn.sigmoid(gates[:, 3 * D:])
        cell = f * cell + i * g
        hidden = o * jnp.tanh(cell)
    return jnp.concatenate([hidden, context], axis=1) @ params["ffw"].T + params["ffb"][0]


def make_params(key, E, D):
    ks = jax.random.split(key, 12)
    n = lambda k, shape, s=0.1: (jax.random.normal(k, shape, jnp.float32) * s)
    return {
        # attn_layer: Linear(2D+E -> E), tanh, Linear(E -> 1)
        "w1": n(ks[0], (E, 2 * D + E)),
        "b1": n(ks[1], (1, E)),
        "w2": n(ks[2], (1, E)),
        "b2": n(ks[3], (1, 1)),
        # nn.LSTM(input_size=1, hidden_size=D): gate order i, f, g, o
        "wih": n(ks[4], (4 * D, 1)),
        "whh": n(ks[5], (4 * D, D)),
        "bih": n(ks[6], (1, 4 * D)),
        "bhh": n(ks[7], (1, 4 * D)),
        # fc: Linear(E+1 -> 1), weight normal_() in torch -> std-normal here
        "fcw": jax.random.normal(ks[8], (1, E + 1), jnp.float32),
        "fcb": n(ks[9], (1, 1)),
        # fc_final: Linear(D+E -> 1)
        "ffw": n(ks[10], (1, D + E)),
        "ffb": n(ks[11], (1, 1)),
    }


if __name__ == "__main__":
    B, E, D, T = 4, 32, 32, 8          # encoder_hidden_size=32, decoder_hidden_size=32, time_step=8
    T1 = T - 1

    root = jax.random.PRNGKey(0)
    k_enc, k_y, k_p = jax.random.split(root, 3)
    input_encoded = jax.random.normal(k_enc, (B, T1, E), jnp.float32)
    y_history = jax.random.normal(k_y, (B, T1), jnp.float32)
    params = make_params(k_p, E, D)

    y_pred = decoder_pallas(input_encoded, y_history, params)
    jax.block_until_ready(y_pred)

    y_ref = decoder_ref(input_encoded, y_history, params)
    assert y_pred.shape == (B, 1)
    assert jnp.allclose(y_pred, y_ref, rtol=1e-4, atol=1e-4), (
        f"mismatch: max abs err {jnp.max(jnp.abs(y_pred - y_ref))}")

    print("KERNEL_OK")
</pallas_src>

<mosaic_0001>
module attributes {stable_mosaic.version = 11 : i64} {
  func.func @decoder_kernel(%arg0: memref<4x7x32xf32, #tpu.memory_space<vmem>>, %arg1: memref<4x7xf32, #tpu.memory_space<vmem>>, %arg2: memref<64x32xf32, #tpu.memory_space<vmem>>, %arg3: memref<32x32xf32, #tpu.memory_space<vmem>>, %arg4: memref<1x32xf32, #tpu.memory_space<vmem>>, %arg5: memref<1x32xf32, #tpu.memory_space<vmem>>, %arg6: memref<1x1xf32, #tpu.memory_space<vmem>>, %arg7: memref<1x128xf32, #tpu.memory_space<vmem>>, %arg8: memref<32x128xf32, #tpu.memory_space<vmem>>, %arg9: memref<1x128xf32, #tpu.memory_space<vmem>>, %arg10: memref<32x1xf32, #tpu.memory_space<vmem>>, %arg11: memref<1x1xf32, #tpu.memory_space<vmem>>, %arg12: memref<1x1xf32, #tpu.memory_space<vmem>>, %arg13: memref<32x1xf32, #tpu.memory_space<vmem>>, %arg14: memref<32x1xf32, #tpu.memory_space<vmem>>, %arg15: memref<1x1xf32, #tpu.memory_space<vmem>>, %arg16: memref<4x1xf32, #tpu.memory_space<vmem>>) attributes {dimension_semantics = [], scalar_prefetch = 0 : i64, scratch_operands = 0 : i64, tpu.core_type = #tpu.core_type<tc>} {
    %c0 = arith.constant 0 : index
    %c0_0 = arith.constant 0 : index
    %c0_1 = arith.constant 0 : index
    %0 = vector.load %arg0[%c0, %c0_0, %c0_1] : memref<4x7x32xf32, #tpu.memory_space<vmem>>, vector<4x7x32xf32>
    %c0_2 = arith.constant 0 : index
    %c0_3 = arith.constant 0 : index
    %1 = vector.load %arg1[%c0_2, %c0_3] : memref<4x7xf32, #tpu.memory_space<vmem>>, vector<4x7xf32>
    %c0_4 = arith.constant 0 : index
    %c0_5 = arith.constant 0 : index
    %2 = vector.load %arg2[%c0_4, %c0_5] : memref<64x32xf32, #tpu.memory_space<vmem>>, vector<64x32xf32>
    %c0_6 = arith.constant 0 : index
    %c0_7 = arith.constant 0 : index
    %3 = vector.load %arg3[%c0_6, %c0_7] : memref<32x32xf32, #tpu.memory_space<vmem>>, vector<32x32xf32>
    %c0_8 = arith.constant 0 : index
    %c0_9 = arith.constant 0 : index
    %4 = vector.load %arg4[%c0_8, %c0_9] : memref<1x32xf32, #tpu.memory_space<vmem>>, vector<1x32xf32>
    %c0_10 = arith.constant 0 : index
    %c0_11 = arith.constant 0 : index
    %5 = vector.load %arg5[%c0_10, %c0_11] : memref<1x32xf32, #tpu.memory_space<vmem>>, vector<1x32xf32>
    %6 = vector.shape_cast %5 : vector<1x32xf32> to vector<32xf32>
    %7 = vector.shape_cast %6 : vector<32xf32> to vector<1x1x32xf32>
    %c0_12 = arith.constant 0 : index
    %c0_13 = arith.constant 0 : index
    %8 = vector.load %arg6[%c0_12, %c0_13] : memref<1x1xf32, #tpu.memory_space<vmem>>, vector<1x1xf32>
    %9 = vector.extract %8[0, 0] : f32 from vector<1x1xf32>
    %c0_14 = arith.constant 0 : index
    %c0_15 = arith.constant 0 : index
    %10 = vector.load %arg7[%c0_14, %c0_15] : memref<1x128xf32, #tpu.memory_space<vmem>>, vector<1x128xf32>
    %c0_16 = arith.constant 0 : index
    %c0_17 = arith.constant 0 : index
    %11 = vector.load %arg8[%c0_16, %c0_17] : memref<32x128xf32, #tpu.memory_space<vmem>>, vector<32x128xf32>
    %c0_18 = arith.constant 0 : index
    %c0_19 = arith.constant 0 : index
    %12 = vector.load %arg9[%c0_18, %c0_19] : memref<1x128xf32, #tpu.memory_space<vmem>>, vector<1x128xf32>
    %c0_20 = arith.constant 0 : index
    %c0_21 = arith.constant 0 : index
    %13 = vector.load %arg10[%c0_20, %c0_21] : memref<32x1xf32, #tpu.memory_space<vmem>>, vector<32x1xf32>
    %c0_22 = arith.constant 0 : index
    %c0_23 = arith.constant 0 : index
    %14 = vector.load %arg11[%c0_22, %c0_23] : memref<1x1xf32, #tpu.memory_space<vmem>>, vector<1x1xf32>
    %15 = vector.extract %14[0, 0] : f32 from vector<1x1xf32>
    %c0_24 = arith.constant 0 : index
    %c0_25 = arith.constant 0 : index
    %16 = vector.load %arg12[%c0_24, %c0_25] : memref<1x1xf32, #tpu.memory_space<vmem>>, vector<1x1xf32>
    %17 = vector.extract %16[0, 0] : f32 from vector<1x1xf32>
    %c0_26 = arith.constant 0 : index
    %c0_27 = arith.constant 0 : index
    %18 = vector.load %arg13[%c0_26, %c0_27] : memref<32x1xf32, #tpu.memory_space<vmem>>, vector<32x1xf32>
    %c0_28 = arith.constant 0 : index
    %c0_29 = arith.constant 0 : index
    %19 = vector.load %arg14[%c0_28, %c0_29] : memref<32x1xf32, #tpu.memory_space<vmem>>, vector<32x1xf32>
    %c0_30 = arith.constant 0 : index
    %c0_31 = arith.constant 0 : index
    %20 = vector.load %arg15[%c0_30, %c0_31] : memref<1x1xf32, #tpu.memory_space<vmem>>, vector<1x1xf32>
    %21 = vector.extract %20[0, 0] : f32 from vector<1x1xf32>
    %cst = arith.constant dense<0.000000e+00> : vector<4x7x32xf32>
    %22 = tpu.matmul %0, %3, %cst {dimension_numbers = #tpu.dot_dimension_numbers<[2], [0], [0, 1], [1], [0, 0, 0, 1, 1, 1], [], []>} : vector<4x7x32xf32>, vector<32x32xf32>, vector<4x7x32xf32> -> vector<4x7x32xf32>
    %23 = vector.shape_cast %4 : vector<1x32xf32> to vector<1x1x32xf32>
    %24 = vector.broadcast %23 : vector<1x1x32xf32> to vector<4x7x32xf32>
    %25 = arith.addf %22, %24 : vector<4x7x32xf32>
    %cst_32 = arith.constant 0.000000e+00 : f32
    %26 = vector.broadcast %cst_32 : f32 to vector<4x32xf32>
    %cst_33 = arith.constant 0.000000e+00 : f32
    %27 = vector.broadcast %cst_33 : f32 to vector<4x32xf32>
    %28 = tpu.concatenate %26, %27 in 1 : vector<4x32xf32>, vector<4x32xf32> -> vector<4x64xf32>
    %cst_34 = arith.constant dense<0.000000e+00> : vector<4x32xf32>
    %29 = tpu.matmul %28, %2, %cst_34 {dimension_numbers = #tpu.dot_dimension_numbers<[1], [0], [0], [1], [0, 0, 1, 1], [], []>} : vector<4x64xf32>, vector<64x32xf32>, vector<4x32xf32> -> vector<4x32xf32>
    %30 = vector.shape_cast %29 : vector<4x32xf32> to vector<4x1x32xf32>
    %31 = vector.broadcast %30 : vector<4x1x32xf32> to vector<4x7x32xf32>
    %32 = arith.addf %25, %31 : vector<4x7x32xf32>
    %33 = math.tanh %32 : vector<4x7x32xf32>
    %34 = vector.broadcast %7 : vector<1x1x32xf32> to vector<4x7x32xf32>
    %35 = arith.mulf %33, %34 : vector<4x7x32xf32>
    %cst_35 = arith.constant dense<0.000000e+00> : vector<4x7xf32>
    %36 = vector.multi_reduction <add>, %35, %cst_35 [2] : vector<4x7x32xf32> to vector<4x7xf32>
    %37 = vector.broadcast %9 : f32 to vector<4x7xf32>
    %38 = arith.addf %36, %37 : vector<4x7xf32>
    %cst_36 = arith.constant dense<0xFF800000> : vector<4xf32>
    %39 = vector.multi_reduction <maximumf>, %38, %cst_36 [1] : vector<4x7xf32> to vector<4xf32>
    %40 = vector.shape_cast %39 : vector<4xf32> to vector<4x1xf32>
    %41 = vector.broadcast %40 : vector<4x1xf32> to vector<4x7xf32>
    %42 = arith.subf %38, %41 : vector<4x7xf32>
    %43 = math.exp %42 : vector<4x7xf32>
    %cst_37 = arith.constant dense<0.000000e+00> : vector<4xf32>
    %44 = vector.multi_reduction <add>, %43, %cst_37 [1] : vector<4x7xf32> to vector<4xf32>
    %45 = vector.shape_cast %44 : vector<4xf32> to vector<4x1xf32>
    %46 = tpu.reciprocal %45 : vector<4x1xf32> -> vector<4x1xf32>
    %47 = vector.broadcast %46 : vector<4x1xf32> to vector<4x7xf32>
    %48 = arith.mulf %43, %47 : vector<4x7xf32>
    %49 = vector.shape_cast %48 : vector<4x7xf32> to vector<4x7x1xf32>
    %50 = vector.broadcast %49 : vector<4x7x1xf32> to vector<4x7x32xf32>
    %51 = arith.mulf %50, %0 : vector<4x7x32xf32>
    %cst_38 = arith.constant dense<0.000000e+00> : vector<4x32xf32>
    %52 = vector.multi_reduction <add>, %51, %cst_38 [1] : vector<4x7x32xf32> to vector<4x32xf32>
    %53 = vector.extract_strided_slice %1 {offsets = [0, 0], sizes = [4, 1], strides = [1, 1]} : vector<4x7xf32> to vector<4x1xf32>
    %cst_39 = arith.constant dense<0.000000e+00> : vector<4x1xf32>
    %54 = tpu.matmul %52, %13, %cst_39 {dimension_numbers = #tpu.dot_dimension_numbers<[1], [0], [0], [1], [0, 0, 1, 1], [], []>} : vector<4x32xf32>, vector<32x1xf32>, vector<4x1xf32> -> vector<4x1xf32>
    %55 = vector.broadcast %15 : f32 to vector<4x1xf32>
    %56 = arith.mulf %53, %55 : vector<4x1xf32>
    %57 = arith.addf %54, %56 : vector<4x1xf32>
    %58 = vector.broadcast %17 : f32 to vector<4x1xf32>
    %59 = arith.addf %57, %58 : vector<4x1xf32>
    %60 = vector.broadcast %59 : vector<4x1xf32> to vector<4x128xf32>
    %61 = vector.broadcast %10 : vector<1x128xf32> to vector<4x128xf32>
    %62 = arith.mulf %60, %61 : vector<4x128xf32>
    %cst_40 = arith.constant dense<0.000000e+00> : vector<4x128xf32>
    %63 = tpu.matmul %26, %11, %cst_40 {dimension_numbers = #tpu.dot_dimension_numbers<[1], [0], [0], [1], [0, 0, 1, 1], [], []>} : vector<4x32xf32>, vector<32x128xf32>, vector<4x128xf32> -> vector<4x128xf32>
    %64 = arith.addf %62, %63 : vector<4x128xf32>
    %65 = vector.broadcast %12 : vector<1x128xf32> to vector<4x128xf32>
    %66 = arith.addf %64, %65 : vector<4x128xf32>
    %67 = vector.extract_strided_slice %66 {offsets = [0, 0], sizes = [4, 32], strides = [1, 1]} : vector<4x128xf32> to vector<4x32xf32>
    %68 = arith.negf %67 : vector<4x32xf32>
    %69 = math.exp %68 : vector<4x32xf32>
    %cst_41 = arith.constant 1.000000e+00 : f32
    %70 = vector.broadcast %cst_41 : f32 to vector<4x32xf32>
    %71 = arith.addf %70, %69 : vector<4x32xf32>
    %72 = arith.divf %70, %71 : vector<4x32xf32>
    %73 = vector.extract_strided_slice %66 {offsets = [0, 32], sizes = [4, 32], strides = [1, 1]} : vector<4x128xf32> to vector<4x32xf32>
    %74 = arith.negf %73 : vector<4x32xf32>
    %75 = math.exp %74 : vector<4x32xf32>
    %cst_42 = arith.constant 1.000000e+00 : f32
    %76 = vector.broadcast %cst_42 : f32 to vector<4x32xf32>
    %77 = arith.addf %76, %75 : vector<4x32xf32>
    %78 = arith.divf %76, %77 : vector<4x32xf32>
    %79 = vector.extract_strided_slice %66 {offsets = [0, 64], sizes = [4, 32], strides = [1, 1]} : vector<4x128xf32> to vector<4x32xf32>
    %80 = math.tanh %79 : vector<4x32xf32>
    %81 = vector.extract_strided_slice %66 {offsets = [0, 96], sizes = [4, 32], strides = [1, 1]} : vector<4x128xf32> to vector<4x32xf32>
    %82 = arith.negf %81 : vector<4x32xf32>
    %83 = math.exp %82 : vector<4x32xf32>
    %cst_43 = arith.constant 1.000000e+00 : f32
    %84 = vector.broadcast %cst_43 : f32 to vector<4x32xf32>
    %85 = arith.addf %84, %83 : vector<4x32xf32>
    %86 = arith.divf %84, %85 : vector<4x32xf32>
    %87 = arith.mulf %78, %27 : vector<4x32xf32>
    %88 = arith.mulf %72, %80 : vector<4x32xf32>
    %89 = arith.addf %87, %88 : vector<4x32xf32>
    %90 = math.tanh %89 : vector<4x32xf32>
    %91 = arith.mulf %86, %90 : vector<4x32xf32>
    %92 = tpu.concatenate %91, %89 in 1 : vector<4x32xf32>, vector<4x32xf32> -> vector<4x64xf32>
    %cst_44 = arith.constant dense<0.000000e+00> : vector<4x32xf32>
    %93 = tpu.matmul %92, %2, %cst_44 {dimension_numbers = #tpu.dot_dimension_numbers<[1], [0], [0], [1], [0, 0, 1, 1], [], []>} : vector<4x64xf32>, vector<64x32xf32>, vector<4x32xf32> -> vector<4x32xf32>
    %94 = vector.shape_cast %93 : vector<4x32xf32> to vector<4x1x32xf32>
    %95 = vector.broadcast %94 : vector<4x1x32xf32> to vector<4x7x32xf32>
    %96 = arith.addf %25, %95 : vector<4x7x32xf32>
    %97 = math.tanh %96 : vector<4x7x32xf32>
    %98 = vector.broadcast %7 : vector<1x1x32xf32> to vector<4x7x32xf32>
    %99 = arith.mulf %97, %98 : vector<4x7x32xf32>
    %cst_45 = arith.constant dense<0.000000e+00> : vector<4x7xf32>
    %100 = vector.multi_reduction <add>, %99, %cst_45 [2] : vector<4x7x32xf32> to vector<4x7xf32>
    %101 = vector.broadcast %9 : f32 to vector<4x7xf32>
    %102 = arith.addf %100, %101 : vector<4x7xf32>
    %cst_46 = arith.constant dense<0xFF800000> : vector<4xf32>
    %103 = vector.multi_reduction <maximumf>, %102, %cst_46 [1] : vector<4x7xf32> to vector<4xf32>
    %104 = vector.shape_cast %103 : vector<4xf32> to vector<4x1xf32>
    %105 = vector.broadcast %104 : vector<4x1xf32> to vector<4x7xf32>
    %106 = arith.subf %102, %105 : vector<4x7xf32>
    %107 = math.exp %106 : vector<4x7xf32>
    %cst_47 = arith.constant dense<0.000000e+00> : vector<4xf32>
    %108 = vector.multi_reduction <add>, %107, %cst_47 [1] : vector<4x7xf32> to vector<4xf32>
    %109 = vector.shape_cast %108 : vector<4xf32> to vector<4x1xf32>
    %110 = tpu.reciprocal %109 : vector<4x1xf32> -> vector<4x1xf32>
    %111 = vector.broadcast %110 : vector<4x1xf32> to vector<4x7xf32>
    %112 = arith.mulf %107, %111 : vector<4x7xf32>
    %113 = vector.shape_cast %112 : vector<4x7xf32> to vector<4x7x1xf32>
    %114 = vector.broadcast %113 : vector<4x7x1xf32> to vector<4x7x32xf32>
    %115 = arith.mulf %114, %0 : vector<4x7x32xf32>
    %cst_48 = arith.constant dense<0.000000e+00> : vector<4x32xf32>
    %116 = vector.multi_reduction <add>, %115, %cst_48 [1] : vector<4x7x32xf32> to vector<4x32xf32>
    %117 = vector.extract_strided_slice %1 {offsets = [0, 1], sizes = [4, 1], strides = [1, 1]} : vector<4x7xf32> to vector<4x1xf32>
    %cst_49 = arith.constant dense<0.000000e+00> : vector<4x1xf32>
    %118 = tpu.matmul %116, %13, %cst_49 {dimension_numbers = #tpu.dot_dimension_numbers<[1], [0], [0], [1], [0, 0, 1, 1], [], []>} : vector<4x32xf32>, vector<32x1xf32>, vector<4x1xf32> -> vector<4x1xf32>
    %119 = vector.broadcast %15 : f32 to vector<4x1xf32>
    %120 = arith.mulf %117, %119 : vector<4x1xf32>
    %121 = arith.addf %118, %120 : vector<4x1xf32>
    %122 = vector.broadcast %17 : f32 to vector<4x1xf32>
    %123 = arith.addf %121, %122 : vector<4x1xf32>
    %124 = vector.broadcast %123 : vector<4x1xf32> to vector<4x128xf32>
    %125 = vector.broadcast %10 : vector<1x128xf32> to vector<4x128xf32>
    %126 = arith.mulf %124, %125 : vector<4x128xf32>
    %cst_50 = arith.constant dense<0.000000e+00> : vector<4x128xf32>
    %127 = tpu.matmul %91, %11, %cst_50 {dimension_numbers = #tpu.dot_dimension_numbers<[1], [0], [0], [1], [0, 0, 1, 1], [], []>} : vector<4x32xf32>, vector<32x128xf32>, vector<4x128xf32> -> vector<4x128xf32>
    %128 = arith.addf %126, %127 : vector<4x128xf32>
    %129 = vector.broadcast %12 : vector<1x128xf32> to vector<4x128xf32>
    %130 = arith.addf %128, %129 : vector<4x128xf32>
    %131 = vector.extract_strided_slice %130 {offsets = [0, 0], sizes = [4, 32], strides = [1, 1]} : vector<4x128xf32> to vector<4x32xf32>
    %132 = arith.negf %131 : vector<4x32xf32>
    %133 = math.exp %132 : vector<4x32xf32>
    %cst_51 = arith.constant 1.000000e+00 : f32
    %134 = vector.broadcast %cst_51 : f32 to vector<4x32xf32>
    %135 = arith.addf %134, %133 : vector<4x32xf32>
    %136 = arith.divf %134, %135 : vector<4x32xf32>
    %137 = vector.extract_strided_slice %130 {offsets = [0, 32], sizes = [4, 32], strides = [1, 1]} : vector<4x128xf32> to vector<4x32xf32>
    %138 = arith.negf %137 : vector<4x32xf32>
    %139 = math.exp %138 : vector<4x32xf32>
    %cst_52 = arith.constant 1.000000e+00 : f32
    %140 = vector.broadcast %cst_52 : f32 to vector<4x32xf32>
    %141 = arith.addf %140, %139 : vector<4x32xf32>
    %142 = arith.divf %140, %141 : vector<4x32xf32>
    %143 = vector.extract_strided_slice %130 {offsets = [0, 64], sizes = [4, 32], strides = [1, 1]} : vector<4x128xf32> to vector<4x32xf32>
    %144 = math.tanh %143 : vector<4x32xf32>
    %145 = vector.extract_strided_slice %130 {offsets = [0, 96], sizes = [4, 32], strides = [1, 1]} : vector<4x128xf32> to vector<4x32xf32>
    %146 = arith.negf %145 : vector<4x32xf32>
    %147 = math.exp %146 : vector<4x32xf32>
    %cst_53 = arith.constant 1.000000e+00 : f32
    %148 = vector.broadcast %cst_53 : f32 to vector<4x32xf32>
    %149 = arith.addf %148, %147 : vector<4x32xf32>
    %150 = arith.divf %148, %149 : vector<4x32xf32>
    %151 = arith.mulf %142, %89 : vector<4x32xf32>
    %152 = arith.mulf %136, %144 : vector<4x32xf32>
    %153 = arith.addf %151, %152 : vector<4x32xf32>
    %154 = math.tanh %153 : vector<4x32xf32>
    %155 = arith.mulf %150, %154 : vector<4x32xf32>
    %156 = tpu.concatenate %155, %153 in 1 : vector<4x32xf32>, vector<4x32xf32> -> vector<4x64xf32>
    %cst_54 = arith.constant dense<0.000000e+00> : vector<4x32xf32>
    %157 = tpu.matmul %156, %2, %cst_54 {dimension_numbers = #tpu.dot_dimension_numbers<[1], [0], [0], [1], [0, 0, 1, 1], [], []>} : vector<4x64xf32>, vector<64x32xf32>, vector<4x32xf32> -> vector<4x32xf32>
    %158 = vector.shape_cast %157 : vector<4x32xf32> to vector<4x1x32xf32>
    %159 = vector.broadcast %158 : vector<4x1x32xf32> to vector<4x7x32xf32>
    %160 = arith.addf %25, %159 : vector<4x7x32xf32>
    %161 = math.tanh %160 : vector<4x7x32xf32>
    %162 = vector.broadcast %7 : vector<1x1x32xf32> to vector<4x7x32xf32>
    %163 = arith.mulf %161, %162 : vector<4x7x32xf32>
    %cst_55 = arith.constant dense<0.000000e+00> : vector<4x7xf32>
    %164 = vector.multi_reduction <add>, %163, %cst_55 [2] : vector<4x7x32xf32> to vector<4x7xf32>
    %165 = vector.broadcast %9 : f32 to vector<4x7xf32>
    %166 = arith.addf %164, %165 : vector<4x7xf32>
    %cst_56 = arith.constant dense<0xFF800000> : vector<4xf32>
    %167 = vector.multi_reduction <maximumf>, %166, %cst_56 [1] : vector<4x7xf32> to vector<4xf32>
    %168 = vector.shape_cast %167 : vector<4xf32> to vector<4x1xf32>
    %169 = vector.broadcast %168 : vector<4x1xf32> to vector<4x7xf32>
    %170 = arith.subf %166, %169 : vector<4x7xf32>
    %171 = math.exp %170 : vector<4x7xf32>
    %cst_57 = arith.constant dense<0.000000e+00> : vector<4xf32>
    %172 = vector.multi_reduction <add>, %171, %cst_57 [1] : vector<4x7xf32> to vector<4xf32>
    %173 = vector.shape_cast %172 : vector<4xf32> to vector<4x1xf32>
    %174 = tpu.reciprocal %173 : vector<4x1xf32> -> vector<4x1xf32>
    %175 = vector.broadcast %174 : vector<4x1xf32> to vector<4x7xf32>
    %176 = arith.mulf %171, %175 : vector<4x7xf32>
    %177 = vector.shape_cast %176 : vector<4x7xf32> to vector<4x7x1xf32>
    %178 = vector.broadcast %177 : vector<4x7x1xf32> to vector<4x7x32xf32>
    %179 = arith.mulf %178, %0 : vector<4x7x32xf32>
    %cst_58 = arith.constant dense<0.000000e+00> : vector<4x32xf32>
    %180 = vector.multi_reduction <add>, %179, %cst_58 [1] : vector<4x7x32xf32> to vector<4x32xf32>
    %181 = vector.extract_strided_slice %1 {offsets = [0, 2], sizes = [4, 1], strides = [1, 1]} : vector<4x7xf32> to vector<4x1xf32>
    %cst_59 = arith.constant dense<0.000000e+00> : vector<4x1xf32>
    %182 = tpu.matmul %180, %13, %cst_59 {dimension_numbers = #tpu.dot_dimension_numbers<[1], [0], [0], [1], [0, 0, 1, 1], [], []>} : vector<4x32xf32>, vector<32x1xf32>, vector<4x1xf32> -> vector<4x1xf32>
    %183 = vector.broadcast %15 : f32 to vector<4x1xf32>
    %184 = arith.mulf %181, %183 : vector<4x1xf32>
    %185 = arith.addf %182, %184 : vector<4x1xf32>
    %186 = vector.broadcast %17 : f32 to vector<4x1xf32>
    %187 = arith.addf %185, %186 : vector<4x1xf32>
    %188 = vector.broadcast %187 : vector<4x1xf32> to vector<4x128xf32>
    %189 = vector.broadcast %10 : vector<1x128xf32> to vector<4x128xf32>
    %190 = arith.mulf %188, %189 : vector<4x128xf32>
    %cst_60 = arith.constant dense<0.000000e+00> : vector<4x128xf32>
    %191 = tpu.matmul %155, %11, %cst_60 {dimension_numbers = #tpu.dot_dimension_numbers<[1], [0], [0], [1], [0, 0, 1, 1], [], []>} : vector<4x32xf32>, vector<32x128xf32>, vector<4x128xf32> -> vector<4x128xf32>
    %192 = arith.addf %190, %191 : vector<4x128xf32>
    %193 = vector.broadcast %12 : vector<1x128xf32> to vector<4x128xf32>
    %194 = arith.addf %192, %193 : vector<4x128xf32>
    %195 = vector.extract_strided_slice %194 {offsets = [0, 0], sizes = [4, 32], strides = [1, 1]} : vector<4x128xf32> to vector<4x32xf32>
    %196 = arith.negf %195 : vector<4x32xf32>
    %197 = math.exp %196 : vector<4x32xf32>
    %cst_61 = arith.constant 1.000000e+00 : f32
    %198 = vector.broadcast %cst_61 : f32 to vector<4x32xf32>
    %199 = arith.addf %198, %197 : vector<4x32xf32>
    %200 = arith.divf %198, %199 : vector<4x32xf32>
    %201 = vector.extract_strided_slice %194 {offsets = [0, 32], sizes = [4, 32], strides = [1, 1]} : vector<4x128xf32> to vector<4x32xf32>
    %202 = arith.negf %201 : vector<4x32xf32>
    %203 = math.exp %202 : vector<4x32xf32>
    %cst_62 = arith.constant 1.000000e+00 : f32
    %204 = vector.broadcast %cst_62 : f32 to vector<4x32xf32>
    %205 = arith.addf %204, %203 : vector<4x32xf32>
    %206 = arith.divf %204, %205 : vector<4x32xf32>
    %207 = vector.extract_strided_slice %194 {offsets = [0, 64], sizes = [4, 32], strides = [1, 1]} : vector<4x128xf32> to vector<4x32xf32>
    %208 = math.tanh %207 : vector<4x32xf32>
    %209 = vector.extract_strided_slice %194 {offsets = [0, 96], sizes = [4, 32], strides = [1, 1]} : vector<4x128xf32> to vector<4x32xf32>
    %210 = arith.negf %209 : vector<4x32xf32>
    %211 = math.exp %210 : vector<4x32xf32>
    %cst_63 = arith.constant 1.000000e+00 : f32
    %212 = vector.broadcast %cst_63 : f32 to vector<4x32xf32>
    %213 = arith.addf %212, %211 : vector<4x32xf32>
    %214 = arith.divf %212, %213 : vector<4x32xf32>
    %215 = arith.mulf %206, %153 : vector<4x32xf32>
    %216 = arith.mulf %200, %208 : vector<4x32xf32>
    %217 = arith.addf %215, %216 : vector<4x32xf32>
    %218 = math.tanh %217 : vector<4x32xf32>
    %219 = arith.mulf %214, %218 : vector<4x32xf32>
    %220 = tpu.concatenate %219, %217 in 1 : vector<4x32xf32>, vector<4x32xf32> -> vector<4x64xf32>
    %cst_64 = arith.constant dense<0.000000e+00> : vector<4x32xf32>
    %221 = tpu.matmul %220, %2, %cst_64 {dimension_numbers = #tpu.dot_dimension_numbers<[1], [0], [0], [1], [0, 0, 1, 1], [], []>} : vector<4x64xf32>, vector<64x32xf32>, vector<4x32xf32> -> vector<4x32xf32>
    %222 = vector.shape_cast %221 : vector<4x32xf32> to vector<4x1x32xf32>
    %223 = vector.broadcast %222 : vector<4x1x32xf32> to vector<4x7x32xf32>
    %224 = arith.addf %25, %223 : vector<4x7x32xf32>
    %225 = math.tanh %224 : vector<4x7x32xf32>
    %226 = vector.broadcast %7 : vector<1x1x32xf32> to vector<4x7x32xf32>
    %227 = arith.mulf %225, %226 : vector<4x7x32xf32>
    %cst_65 = arith.constant dense<0.000000e+00> : vector<4x7xf32>
    %228 = vector.multi_reduction <add>, %227, %cst_65 [2] : vector<4x7x32xf32> to vector<4x7xf32>
    %229 = vector.broadcast %9 : f32 to vector<4x7xf32>
    %230 = arith.addf %228, %229 : vector<4x7xf32>
    %cst_66 = arith.constant dense<0xFF800000> : vector<4xf32>
    %231 = vector.multi_reduction <maximumf>, %230, %cst_66 [1] : vector<4x7xf32> to vector<4xf32>
    %232 = vector.shape_cast %231 : vector<4xf32> to vector<4x1xf32>
    %233 = vector.broadcast %232 : vector<4x1xf32> to vector<4x7xf32>
    %234 = arith.subf %230, %233 : vector<4x7xf32>
    %235 = math.exp %234 : vector<4x7xf32>
    %cst_67 = arith.constant dense<0.000000e+00> : vector<4xf32>
    %236 = vector.multi_reduction <add>, %235, %cst_67 [1] : vector<4x7xf32> to vector<4xf32>
    %237 = vector.shape_cast %236 : vector<4xf32> to vector<4x1xf32>
    %238 = tpu.reciprocal %237 : vector<4x1xf32> -> vector<4x1xf32>
    %239 = vector.broadcast %238 : vector<4x1xf32> to vector<4x7xf32>
    %240 = arith.mulf %235, %239 : vector<4x7xf32>
    %241 = vector.shape_cast %240 : vector<4x7xf32> to vector<4x7x1xf32>
    %242 = vector.broadcast %241 : vector<4x7x1xf32> to vector<4x7x32xf32>
    %243 = arith.mulf %242, %0 : vector<4x7x32xf32>
    %cst_68 = arith.constant dense<0.000000e+00> : vector<4x32xf32>
    %244 = vector.multi_reduction <add>, %243, %cst_68 [1] : vector<4x7x32xf32> to vector<4x32xf32>
    %245 = vector.extract_strided_slice %1 {offsets = [0, 3], sizes = [4, 1], strides = [1, 1]} : vector<4x7xf32> to vector<4x1xf32>
    %cst_69 = arith.constant dense<0.000000e+00> : vector<4x1xf32>
    %246 = tpu.matmul %244, %13, %cst_69 {dimension_numbers = #tpu.dot_dimension_numbers<[1], [0], [0], [1], [0, 0, 1, 1], [], []>} : vector<4x32xf32>, vector<32x1xf32>, vector<4x1xf32> -> vector<4x1xf32>
    %247 = vector.broadcast %15 : f32 to vector<4x1xf32>
    %248 = arith.mulf %245, %247 : vector<4x1xf32>
    %249 = arith.addf %246, %248 : vector<4x1xf32>
    %250 = vector.broadcast %17 : f32 to vector<4x1xf32>
    %251 = arith.addf %249, %250 : vector<4x1xf32>
    %252 = vector.broadcast %251 : vector<4x1xf32> to vector<4x128xf32>
    %253 = vector.broadcast %10 : vector<1x128xf32> to vector<4x128xf32>
    %254 = arith.mulf %252, %253 : vector<4x128xf32>
    %cst_70 = arith.constant dense<0.000000e+00> : vector<4x128xf32>
    %255 = tpu.matmul %219, %11, %cst_70 {dimension_numbers = #tpu.dot_dimension_numbers<[1], [0], [0], [1], [0, 0, 1, 1], [], []>} : vector<4x32xf32>, vector<32x128xf32>, vector<4x128xf32> -> vector<4x128xf32>
    %256 = arith.addf %254, %255 : vector<4x128xf32>
    %257 = vector.broadcast %12 : vector<1x128xf32> to vector<4x128xf32>
    %258 = arith.addf %256, %257 : vector<4x128xf32>
    %259 = vector.extract_strided_slice %258 {offsets = [0, 0], sizes = [4, 32], strides = [1, 1]} : vector<4x128xf32> to vector<4x32xf32>
    %260 = arith.negf %259 : vector<4x32xf32>
    %261 = math.exp %260 : vector<4x32xf32>
    %cst_71 = arith.constant 1.000000e+00 : f32
    %262 = vector.broadcast %cst_71 : f32 to vector<4x32xf32>
    %263 = arith.addf %262, %261 : vector<4x32xf32>
    %264 = arith.divf %262, %263 : vector<4x32xf32>
    %265 = vector.extract_strided_slice %258 {offsets = [0, 32], sizes = [4, 32], strides = [1, 1]} : vector<4x128xf32> to vector<4x32xf32>
    %266 = arith.negf %265 : vector<4x32xf32>
    %267 = math.exp %266 : vector<4x32xf32>
    %cst_72 = arith.constant 1.000000e+00 : f32
    %268 = vector.broadcast %cst_72 : f32 to vector<4x32xf32>
    %269 = arith.addf %268, %267 : vector<4x32xf32>
    %270 = arith.divf %268, %269 : vector<4x32xf32>
    %271 = vector.extract_strided_slice %258 {offsets = [0, 64], sizes = [4, 32], strides = [1, 1]} : vector<4x128xf32> to vector<4x32xf32>
    %272 = math.tanh %271 : vector<4x32xf32>
    %273 = vector.extract_strided_slice %258 {offsets = [0, 96], sizes = [4, 32], strides = [1, 1]} : vector<4x128xf32> to vector<4x32xf32>
    %274 = arith.negf %273 : vector<4x32xf32>
    %275 = math.exp %274 : vector<4x32xf32>
    %cst_73 = arith.constant 1.000000e+00 : f32
    %276 = vector.broadcast %cst_73 : f32 to vector<4x32xf32>
    %277 = arith.addf %276, %275 : vector<4x32xf32>
    %278 = arith.divf %276, %277 : vector<4x32xf32>
    %279 = arith.mulf %270, %217 : vector<4x32xf32>
    %280 = arith.mulf %264, %272 : vector<4x32xf32>
    %281 = arith.addf %279, %280 : vector<4x32xf32>
    %282 = math.tanh %281 : vector<4x32xf32>
    %283 = arith.mulf %278, %282 : vector<4x32xf32>
    %284 = tpu.concatenate %283, %281 in 1 : vector<4x32xf32>, vector<4x32xf32> -> vector<4x64xf32>
    %cst_74 = arith.constant dense<0.000000e+00> : vector<4x32xf32>
    %285 = tpu.matmul %284, %2, %cst_74 {dimension_numbers = #tpu.dot_dimension_numbers<[1], [0], [0], [1], [0, 0, 1, 1], [], []>} : vector<4x64xf32>, vector<64x32xf32>, vector<4x32xf32> -> vector<4x32xf32>
    %286 = vector.shape_cast %285 : vector<4x32xf32> to vector<4x1x32xf32>
    %287 = vector.broadcast %286 : vector<4x1x32xf32> to vector<4x7x32xf32>
    %288 = arith.addf %25, %287 : vector<4x7x32xf32>
    %289 = math.tanh %288 : vector<4x7x32xf32>
    %290 = vector.broadcast %7 : vector<1x1x32xf32> to vector<4x7x32xf32>
    %291 = arith.mulf %289, %290 : vector<4x7x32xf32>
    %cst_75 = arith.constant dense<0.000000e+00> : vector<4x7xf32>
    %292 = vector.multi_reduction <add>, %291, %cst_75 [2] : vector<4x7x32xf32> to vector<4x7xf32>
    %293 = vector.broadcast %9 : f32 to vector<4x7xf32>
    %294 = arith.addf %292, %293 : vector<4x7xf32>
    %cst_76 = arith.constant dense<0xFF800000> : vector<4xf32>
    %295 = vector.multi_reduction <maximumf>, %294, %cst_76 [1] : vector<4x7xf32> to vector<4xf32>
    %296 = vector.shape_cast %295 : vector<4xf32> to vector<4x1xf32>
    %297 = vector.broadcast %296 : vector<4x1xf32> to vector<4x7xf32>
    %298 = arith.subf %294, %297 : vector<4x7xf32>
    %299 = math.exp %298 : vector<4x7xf32>
    %cst_77 = arith.constant dense<0.000000e+00> : vector<4xf32>
    %300 = vector.multi_reduction <add>, %299, %cst_77 [1] : vector<4x7xf32> to vector<4xf32>
    %301 = vector.shape_cast %300 : vector<4xf32> to vector<4x1xf32>
    %302 = tpu.reciprocal %301 : vector<4x1xf32> -> vector<4x1xf32>
    %303 = vector.broadcast %302 : vector<4x1xf32> to vector<4x7xf32>
    %304 = arith.mulf %299, %303 : vector<4x7xf32>
    %305 = vector.shape_cast %304 : vector<4x7xf32> to vector<4x7x1xf32>
    %306 = vector.broadcast %305 : vector<4x7x1xf32> to vector<4x7x32xf32>
    %307 = arith.mulf %306, %0 : vector<4x7x32xf32>
    %cst_78 = arith.constant dense<0.000000e+00> : vector<4x32xf32>
    %308 = vector.multi_reduction <add>, %307, %cst_78 [1] : vector<4x7x32xf32> to vector<4x32xf32>
    %309 = vector.extract_strided_slice %1 {offsets = [0, 4], sizes = [4, 1], strides = [1, 1]} : vector<4x7xf32> to vector<4x1xf32>
    %cst_79 = arith.constant dense<0.000000e+00> : vector<4x1xf32>
    %310 = tpu.matmul %308, %13, %cst_79 {dimension_numbers = #tpu.dot_dimension_numbers<[1], [0], [0], [1], [0, 0, 1, 1], [], []>} : vector<4x32xf32>, vector<32x1xf32>, vector<4x1xf32> -> vector<4x1xf32>
    %311 = vector.broadcast %15 : f32 to vector<4x1xf32>
    %312 = arith.mulf %309, %311 : vector<4x1xf32>
    %313 = arith.addf %310, %312 : vector<4x1xf32>
    %314 = vector.broadcast %17 : f32 to vector<4x1xf32>
    %315 = arith.addf %313, %314 : vector<4x1xf32>
    %316 = vector.broadcast %315 : vector<4x1xf32> to vector<4x128xf32>
    %317 = vector.broadcast %10 : vector<1x128xf32> to vector<4x128xf32>
    %318 = arith.mulf %316, %317 : vector<4x128xf32>
    %cst_80 = arith.constant dense<0.000000e+00> : vector<4x128xf32>
    %319 = tpu.matmul %283, %11, %cst_80 {dimension_numbers = #tpu.dot_dimension_numbers<[1], [0], [0], [1], [0, 0, 1, 1], [], []>} : vector<4x32xf32>, vector<32x128xf32>, vector<4x128xf32> -> vector<4x128xf32>
    %320 = arith.addf %318, %319 : vector<4x128xf32>
    %321 = vector.broadcast %12 : vector<1x128xf32> to vector<4x128xf32>
    %322 = arith.addf %320, %321 : vector<4x128xf32>
    %323 = vector.extract_strided_slice %322 {offsets = [0, 0], sizes = [4, 32], strides = [1, 1]} : vector<4x128xf32> to vector<4x32xf32>
    %324 = arith.negf %323 : vector<4x32xf32>
    %325 = math.exp %324 : vector<4x32xf32>
    %cst_81 = arith.constant 1.000000e+00 : f32
    %326 = vector.broadcast %cst_81 : f32 to vector<4x32xf32>
    %327 = arith.addf %326, %325 : vector<4x32xf32>
    %328 = arith.divf %326, %327 : vector<4x32xf32>
    %329 = vector.extract_strided_slice %322 {offsets = [0, 32], sizes = [4, 32], strides = [1, 1]} : vector<4x128xf32> to vector<4x32xf32>
    %330 = arith.negf %329 : vector<4x32xf32>
    %331 = math.exp %330 : vector<4x32xf32>
    %cst_82 = arith.constant 1.000000e+00 : f32
    %332 = vector.broadcast %cst_82 : f32 to vector<4x32xf32>
    %333 = arith.addf %332, %331 : vector<4x32xf32>
    %334 = arith.divf %332, %333 : vector<4x32xf32>
    %335 = vector.extract_strided_slice %322 {offsets = [0, 64], sizes = [4, 32], strides = [1, 1]} : vector<4x128xf32> to vector<4x32xf32>
    %336 = math.tanh %335 : vector<4x32xf32>
    %337 = vector.extract_strided_slice %322 {offsets = [0, 96], sizes = [4, 32], strides = [1, 1]} : vector<4x128xf32> to vector<4x32xf32>
    %338 = arith.negf %337 : vector<4x32xf32>
    %339 = math.exp %338 : vector<4x32xf32>
    %cst_83 = arith.constant 1.000000e+00 : f32
    %340 = vector.broadcast %cst_83 : f32 to vector<4x32xf32>
    %341 = arith.addf %340, %339 : vector<4x32xf32>
    %342 = arith.divf %340, %341 : vector<4x32xf32>
    %343 = arith.mulf %334, %281 : vector<4x32xf32>
    %344 = arith.mulf %328, %336 : vector<4x32xf32>
    %345 = arith.addf %343, %344 : vector<4x32xf32>
    %346 = math.tanh %345 : vector<4x32xf32>
    %347 = arith.mulf %342, %346 : vector<4x32xf32>
    %348 = tpu.concatenate %347, %345 in 1 : vector<4x32xf32>, vector<4x32xf32> -> vector<4x64xf32>
    %cst_84 = arith.constant dense<0.000000e+00> : vector<4x32xf32>
    %349 = tpu.matmul %348, %2, %cst_84 {dimension_numbers = #tpu.dot_dimension_numbers<[1], [0], [0], [1], [0, 0, 1, 1], [], []>} : vector<4x64xf32>, vector<64x32xf32>, vector<4x32xf32> -> vector<4x32xf32>
    %350 = vector.shape_cast %349 : vector<4x32xf32> to vector<4x1x32xf32>
    %351 = vector.broadcast %350 : vector<4x1x32xf32> to vector<4x7x32xf32>
    %352 = arith.addf %25, %351 : vector<4x7x32xf32>
    %353 = math.tanh %352 : vector<4x7x32xf32>
    %354 = vector.broadcast %7 : vector<1x1x32xf32> to vector<4x7x32xf32>
    %355 = arith.mulf %353, %354 : vector<4x7x32xf32>
    %cst_85 = arith.constant dense<0.000000e+00> : vector<4x7xf32>
    %356 = vector.multi_reduction <add>, %355, %cst_85 [2] : vector<4x7x32xf32> to vector<4x7xf32>
    %357 = vector.broadcast %9 : f32 to vector<4x7xf32>
    %358 = arith.addf %356, %357 : vector<4x7xf32>
    %cst_86 = arith.constant dense<0xFF800000> : vector<4xf32>
    %359 = vector.multi_reduction <maximumf>, %358, %cst_86 [1] : vector<4x7xf32> to vector<4xf32>
    %360 = vector.shape_cast %359 : vector<4xf32> to vector<4x1xf32>
    %361 = vector.broadcast %360 : vector<4x1xf32> to vector<4x7xf32>
    %362 = arith.subf %358, %361 : vector<4x7xf32>
    %363 = math.exp %362 : vector<4x7xf32>
    %cst_87 = arith.constant dense<0.000000e+00> : vector<4xf32>
    %364 = vector.multi_reduction <add>, %363, %cst_87 [1] : vector<4x7xf32> to vector<4xf32>
    %365 = vector.shape_cast %364 : vector<4xf32> to vector<4x1xf32>
    %366 = tpu.reciprocal %365 : vector<4x1xf32> -> vector<4x1xf32>
    %367 = vector.broadcast %366 : vector<4x1xf32> to vector<4x7xf32>
    %368 = arith.mulf %363, %367 : vector<4x7xf32>
    %369 = vector.shape_cast %368 : vector<4x7xf32> to vector<4x7x1xf32>
    %370 = vector.broadcast %369 : vector<4x7x1xf32> to vector<4x7x32xf32>
    %371 = arith.mulf %370, %0 : vector<4x7x32xf32>
    %cst_88 = arith.constant dense<0.000000e+00> : vector<4x32xf32>
    %372 = vector.multi_reduction <add>, %371, %cst_88 [1] : vector<4x7x32xf32> to vector<4x32xf32>
    %373 = vector.extract_strided_slice %1 {offsets = [0, 5], sizes = [4, 1], strides = [1, 1]} : vector<4x7xf32> to vector<4x1xf32>
    %cst_89 = arith.constant dense<0.000000e+00> : vector<4x1xf32>
    %374 = tpu.matmul %372, %13, %cst_89 {dimension_numbers = #tpu.dot_dimension_numbers<[1], [0], [0], [1], [0, 0, 1, 1], [], []>} : vector<4x32xf32>, vector<32x1xf32>, vector<4x1xf32> -> vector<4x1xf32>
    %375 = vector.broadcast %15 : f32 to vector<4x1xf32>
    %376 = arith.mulf %373, %375 : vector<4x1xf32>
    %377 = arith.addf %374, %376 : vector<4x1xf32>
    %378 = vector.broadcast %17 : f32 to vector<4x1xf32>
    %379 = arith.addf %377, %378 : vector<4x1xf32>
    %380 = vector.broadcast %379 : vector<4x1xf32> to vector<4x128xf32>
    %381 = vector.broadcast %10 : vector<1x128xf32> to vector<4x128xf32>
    %382 = arith.mulf %380, %381 : vector<4x128xf32>
    %cst_90 = arith.constant dense<0.000000e+00> : vector<4x128xf32>
    %383 = tpu.matmul %347, %11, %cst_90 {dimension_numbers = #tpu.dot_dimension_numbers<[1], [0], [0], [1], [0, 0, 1, 1], [], []>} : vector<4x32xf32>, vector<32x128xf32>, vector<4x128xf32> -> vector<4x128xf32>
    %384 = arith.addf %382, %383 : vector<4x128xf32>
    %385 = vector.broadcast %12 : vector<1x128xf32> to vector<4x128xf32>
    %386 = arith.addf %384, %385 : vector<4x128xf32>
    %387 = vector.extract_strided_slice %386 {offsets = [0, 0], sizes = [4, 32], strides = [1, 1]} : vector<4x128xf32> to vector<4x32xf32>
    %388 = arith.negf %387 : vector<4x32xf32>
    %389 = math.exp %388 : vector<4x32xf32>
    %cst_91 = arith.constant 1.000000e+00 : f32
    %390 = vector.broadcast %cst_91 : f32 to vector<4x32xf32>
    %391 = arith.addf %390, %389 : vector<4x32xf32>
    %392 = arith.divf %390, %391 : vector<4x32xf32>
    %393 = vector.extract_strided_slice %386 {offsets = [0, 32], sizes = [4, 32], strides = [1, 1]} : vector<4x128xf32> to vector<4x32xf32>
    %394 = arith.negf %393 : vector<4x32xf32>
    %395 = math.exp %394 : vector<4x32xf32>
    %cst_92 = arith.constant 1.000000e+00 : f32
    %396 = vector.broadcast %cst_92 : f32 to vector<4x32xf32>
    %397 = arith.addf %396, %395 : vector<4x32xf32>
    %398 = arith.divf %396, %397 : vector<4x32xf32>
    %399 = vector.extract_strided_slice %386 {offsets = [0, 64], sizes = [4, 32], strides = [1, 1]} : vector<4x128xf32> to vector<4x32xf32>
    %400 = math.tanh %399 : vector<4x32xf32>
    %401 = vector.extract_strided_slice %386 {offsets = [0, 96], sizes = [4, 32], strides = [1, 1]} : vector<4x128xf32> to vector<4x32xf32>
    %402 = arith.negf %401 : vector<4x32xf32>
    %403 = math.exp %402 : vector<4x32xf32>
    %cst_93 = arith.constant 1.000000e+00 : f32
    %404 = vector.broadcast %cst_93 : f32 to vector<4x32xf32>
    %405 = arith.addf %404, %403 : vector<4x32xf32>
    %406 = arith.divf %404, %405 : vector<4x32xf32>
    %407 = arith.mulf %398, %345 : vector<4x32xf32>
    %408 = arith.mulf %392, %400 : vector<4x32xf32>
    %409 = arith.addf %407, %408 : vector<4x32xf32>
    %410 = math.tanh %409 : vector<4x32xf32>
    %411 = arith.mulf %406, %410 : vector<4x32xf32>
    %412 = tpu.concatenate %411, %409 in 1 : vector<4x32xf32>, vector<4x32xf32> -> vector<4x64xf32>
    %cst_94 = arith.constant dense<0.000000e+00> : vector<4x32xf32>
    %413 = tpu.matmul %412, %2, %cst_94 {dimension_numbers = #tpu.dot_dimension_numbers<[1], [0], [0], [1], [0, 0, 1, 1], [], []>} : vector<4x64xf32>, vector<64x32xf32>, vector<4x32xf32> -> vector<4x32xf32>
    %414 = vector.shape_cast %413 : vector<4x32xf32> to vector<4x1x32xf32>
    %415 = vector.broadcast %414 : vector<4x1x32xf32> to vector<4x7x32xf32>
    %416 = arith.addf %25, %415 : vector<4x7x32xf32>
    %417 = math.tanh %416 : vector<4x7x32xf32>
    %418 = vector.broadcast %7 : vector<1x1x32xf32> to vector<4x7x32xf32>
    %419 = arith.mulf %417, %418 : vector<4x7x32xf32>
    %cst_95 = arith.constant dense<0.000000e+00> : vector<4x7xf32>
    %420 = vector.multi_reduction <add>, %419, %cst_95 [2] : vector<4x7x32xf32> to vector<4x7xf32>
    %421 = vector.broadcast %9 : f32 to vector<4x7xf32>
    %422 = arith.addf %420, %421 : vector<4x7xf32>
    %cst_96 = arith.constant dense<0xFF800000> : vector<4xf32>
    %423 = vector.multi_reduction <maximumf>, %422, %cst_96 [1] : vector<4x7xf32> to vector<4xf32>
    %424 = vector.shape_cast %423 : vector<4xf32> to vector<4x1xf32>
    %425 = vector.broadcast %424 : vector<4x1xf32> to vector<4x7xf32>
    %426 = arith.subf %422, %425 : vector<4x7xf32>
    %427 = math.exp %426 : vector<4x7xf32>
    %cst_97 = arith.constant dense<0.000000e+00> : vector<4xf32>
    %428 = vector.multi_reduction <add>, %427, %cst_97 [1] : vector<4x7xf32> to vector<4xf32>
    %429 = vector.shape_cast %428 : vector<4xf32> to vector<4x1xf32>
    %430 = tpu.reciprocal %429 : vector<4x1xf32> -> vector<4x1xf32>
    %431 = vector.broadcast %430 : vector<4x1xf32> to vector<4x7xf32>
    %432 = arith.mulf %427, %431 : vector<4x7xf32>
    %433 = vector.shape_cast %432 : vector<4x7xf32> to vector<4x7x1xf32>
    %434 = vector.broadcast %433 : vector<4x7x1xf32> to vector<4x7x32xf32>
    %435 = arith.mulf %434, %0 : vector<4x7x32xf32>
    %cst_98 = arith.constant dense<0.000000e+00> : vector<4x32xf32>
    %436 = vector.multi_reduction <add>, %435, %cst_98 [1] : vector<4x7x32xf32> to vector<4x32xf32>
    %437 = vector.extract_strided_slice %1 {offsets = [0, 6], sizes = [4, 1], strides = [1, 1]} : vector<4x7xf32> to vector<4x1xf32>
    %cst_99 = arith.constant dense<0.000000e+00> : vector<4x1xf32>
    %438 = tpu.matmul %436, %13, %cst_99 {dimension_numbers = #tpu.dot_dimension_numbers<[1], [0], [0], [1], [0, 0, 1, 1], [], []>} : vector<4x32xf32>, vector<32x1xf32>, vector<4x1xf32> -> vector<4x1xf32>
    %439 = vector.broadcast %15 : f32 to vector<4x1xf32>
    %440 = arith.mulf %437, %439 : vector<4x1xf32>
    %441 = arith.addf %438, %440 : vector<4x1xf32>
    %442 = vector.broadcast %17 : f32 to vector<4x1xf32>
    %443 = arith.addf %441, %442 : vector<4x1xf32>
    %444 = vector.broadcast %443 : vector<4x1xf32> to vector<4x128xf32>
    %445 = vector.broadcast %10 : vector<1x128xf32> to vector<4x128xf32>
    %446 = arith.mulf %444, %445 : vector<4x128xf32>
    %cst_100 = arith.constant dense<0.000000e+00> : vector<4x128xf32>
    %447 = tpu.matmul %411, %11, %cst_100 {dimension_numbers = #tpu.dot_dimension_numbers<[1], [0], [0], [1], [0, 0, 1, 1], [], []>} : vector<4x32xf32>, vector<32x128xf32>, vector<4x128xf32> -> vector<4x128xf32>
    %448 = arith.addf %446, %447 : vector<4x128xf32>
    %449 = vector.broadcast %12 : vector<1x128xf32> to vector<4x128xf32>
    %450 = arith.addf %448, %449 : vector<4x128xf32>
    %451 = vector.extract_strided_slice %450 {offsets = [0, 0], sizes = [4, 32], strides = [1, 1]} : vector<4x128xf32> to vector<4x32xf32>
    %452 = arith.negf %451 : vector<4x32xf32>
    %453 = math.exp %452 : vector<4x32xf32>
    %cst_101 = arith.constant 1.000000e+00 : f32
    %454 = vector.broadcast %cst_101 : f32 to vector<4x32xf32>
    %455 = arith.addf %454, %453 : vector<4x32xf32>
    %456 = arith.divf %454, %455 : vector<4x32xf32>
    %457 = vector.extract_strided_slice %450 {offsets = [0, 32], sizes = [4, 32], strides = [1, 1]} : vector<4x128xf32> to vector<4x32xf32>
    %458 = arith.negf %457 : vector<4x32xf32>
    %459 = math.exp %458 : vector<4x32xf32>
    %cst_102 = arith.constant 1.000000e+00 : f32
    %460 = vector.broadcast %cst_102 : f32 to vector<4x32xf32>
    %461 = arith.addf %460, %459 : vector<4x32xf32>
    %462 = arith.divf %460, %461 : vector<4x32xf32>
    %463 = vector.extract_strided_slice %450 {offsets = [0, 64], sizes = [4, 32], strides = [1, 1]} : vector<4x128xf32> to vector<4x32xf32>
    %464 = math.tanh %463 : vector<4x32xf32>
    %465 = vector.extract_strided_slice %450 {offsets = [0, 96], sizes = [4, 32], strides = [1, 1]} : vector<4x128xf32> to vector<4x32xf32>
    %466 = arith.negf %465 : vector<4x32xf32>
    %467 = math.exp %466 : vector<4x32xf32>
    %cst_103 = arith.constant 1.000000e+00 : f32
    %468 = vector.broadcast %cst_103 : f32 to vector<4x32xf32>
    %469 = arith.addf %468, %467 : vector<4x32xf32>
    %470 = arith.divf %468, %469 : vector<4x32xf32>
    %471 = arith.mulf %462, %409 : vector<4x32xf32>
    %472 = arith.mulf %456, %464 : vector<4x32xf32>
    %473 = arith.addf %471, %472 : vector<4x32xf32>
    %474 = math.tanh %473 : vector<4x32xf32>
    %475 = arith.mulf %470, %474 : vector<4x32xf32>
    %cst_104 = arith.constant dense<0.000000e+00> : vector<4x1xf32>
    %476 = tpu.matmul %475, %18, %cst_104 {dimension_numbers = #tpu.dot_dimension_numbers<[1], [0], [0], [1], [0, 0, 1, 1], [], []>} : vector<4x32xf32>, vector<32x1xf32>, vector<4x1xf32> -> vector<4x1xf32>
    %cst_105 = arith.constant dense<0.000000e+00> : vector<4x1xf32>
    %477 = tpu.matmul %436, %19, %cst_105 {dimension_numbers = #tpu.dot_dimension_numbers<[1], [0], [0], [1], [0, 0, 1, 1], [], []>} : vector<4x32xf32>, vector<32x1xf32>, vector<4x1xf32> -> vector<4x1xf32>
    %478 = arith.addf %476, %477 : vector<4x1xf32>
    %479 = vector.broadcast %21 : f32 to vector<4x1xf32>
    %480 = arith.addf %478, %479 : vector<4x1xf32>
    %c0_106 = arith.constant 0 : index
    %c0_107 = arith.constant 0 : index
    %481 = vector.load %arg16[%c0_106, %c0_107] : memref<4x1xf32, #tpu.memory_space<vmem>>, vector<4x1xf32>
    tpu.vector_store %arg16[%c0_106, %c0_107], %480 {strides = array<i32>} : memref<4x1xf32, #tpu.memory_space<vmem>>, vector<4x1xf32>,
    return
  }
}

</mosaic_0001>

<llo_original>
// kernel: tpu_custom_call.1
$region0: #{tpu_custom_call.1}
  #allocation0 [shape = 'u32[]', space=smem, size = 0x4, offset = 0x4, fixed_abs, tag = 'smem constant byte address 0x4 - core index']
  #allocation1 [shape = 'u32[144,128]{1,0:T(1,128)}', space=vmem, size = 0x12000, scoped, tag = 'internal scratch']
  #allocation2 [shape = 'f32[1,1]{1,0:T(1,128)S(1)}', space=vmem, size = 0x200, scoped, tag = 'scoped memory for tpu_custom_call.1']
  #allocation3 [shape = 'f32[1,1]{1,0:T(1,128)S(1)}', space=vmem, size = 0x200, scoped, tag = 'scoped memory for tpu_custom_call.1']
  #allocation4 [shape = 'f32[1,1]{1,0:T(1,128)S(1)}', space=vmem, size = 0x200, scoped, tag = 'scoped memory for tpu_custom_call.1']
  #allocation5 [shape = 'f32[1,1]{1,0:T(1,128)S(1)}', space=vmem, size = 0x200, scoped, tag = 'scoped memory for tpu_custom_call.1']
  %s0 = inlined_call_operand.vmem [shape: f32[4,7,32], index: 0, kind: input, shape index: {}]
  %s1 = inlined_call_operand.vmem [shape: f32[4,7], index: 1, kind: input, shape index: {}]
  %s2 = inlined_call_operand.vmem [shape: f32[64,32], index: 2, kind: input, shape index: {}]
  %s3 = inlined_call_operand.vmem [shape: f32[32,32], index: 3, kind: input, shape index: {}]
  %s4 = inlined_call_operand.vmem [shape: f32[1,32], index: 4, kind: input, shape index: {}]
  %s5 = inlined_call_operand.vmem [shape: f32[1,32], index: 5, kind: input, shape index: {}]
  %s6 = inlined_call_operand.<no memory space> [shape: f32[1,1], index: 6, kind: input, shape index: {}]
  %s7 = inlined_call_operand.vmem [shape: f32[1,128], index: 7, kind: input, shape index: {}]
  %s8 = inlined_call_operand.vmem [shape: f32[32,128], index: 8, kind: input, shape index: {}]
  %s9 = inlined_call_operand.vmem [shape: f32[1,128], index: 9, kind: input, shape index: {}]
  %s10 = inlined_call_operand.vmem [shape: f32[32,1], index: 10, kind: input, shape index: {}]
  %s11 = inlined_call_operand.<no memory space> [shape: f32[1,1], index: 11, kind: input, shape index: {}]
  %s12 = inlined_call_operand.<no memory space> [shape: f32[1,1], index: 12, kind: input, shape index: {}]
  %s13 = inlined_call_operand.vmem [shape: f32[32,1], index: 13, kind: input, shape index: {}]
  %s14 = inlined_call_operand.vmem [shape: f32[32,1], index: 14, kind: input, shape index: {}]
  %s15 = inlined_call_operand.<no memory space> [shape: f32[1,1], index: 15, kind: input, shape index: {}]
  %s16 = inlined_call_operand.vmem [shape: f32[4,1], index: 16, kind: output, shape index: {}]
  %s17 = sld [smem:[#allocation0]]
  $region74: #{tpu_custom_call.1} parent=0
    _
  %s19 = ssub.s32 1, %s17
  %s20 = scalar_select 0, %s19, %s17
  %v21 = vstv %s6
  %22 = vst [vmem:[#allocation2] sm:$0x1] %v21
  %v23 = vstv %s11
  %24 = vst [vmem:[#allocation3] sm:$0x1] %v23
  %v25 = vstv %s12
  %26 = vst [vmem:[#allocation4] sm:$0x1] %v25
  %v27 = vstv %s15
  %28 = vst [vmem:[#allocation5] sm:$0x1] %v27
  // Predicated region
  $region2: #{tpu_custom_call.1} parent=0 // pred_check
    _
  $region3: #{tpu_custom_call.1} parent=0 // pred_check_branch
    %30 = sbr.rel (0) target = $region5
  $region4: #{tpu_custom_call.1} parent=0 // pred_region
    _
  $region5: #{tpu_custom_call.1} parent=0 // pred_fallthru
    _
  // Predicated region
  $region6: #{tpu_custom_call.1} parent=0 // pred_check
    _
  $region7: #{tpu_custom_call.1} parent=0 // pred_check_branch
    %32 = sbr.rel (0) target = $region9
  $region8: #{tpu_custom_call.1} parent=0 // pred_region
    _
  $region9: #{tpu_custom_call.1} parent=0 // pred_fallthru
    _
  // Predicated region
  $region10: #{tpu_custom_call.1} parent=0 // pred_check
    _
  $region11: #{tpu_custom_call.1} parent=0 // pred_check_branch
    %34 = sbr.rel (0) target = $region13
  $region12: #{tpu_custom_call.1} parent=0 // pred_region
    _
  $region13: #{tpu_custom_call.1} parent=0 // pred_fallthru
    _
  // Predicated region
  $region14: #{tpu_custom_call.1} parent=0 // pred_check
    _
  $region15: #{tpu_custom_call.1} parent=0 // pred_check_branch
    %36 = sbr.rel (0) target = $region17
  $region16: #{tpu_custom_call.1} parent=0 // pred_region
    _
  $region17: #{tpu_custom_call.1} parent=0 // pred_fallthru
    _
  // Predicated region
  $region18: #{tpu_custom_call.1} parent=0 // pred_check
    _
  $region19: #{tpu_custom_call.1} parent=0 // pred_check_branch
    %38 = sbr.rel (0) target = $region21
  $region20: #{tpu_custom_call.1} parent=0 // pred_region
    _
  $region21: #{tpu_custom_call.1} parent=0 // pred_fallthru
    _
  // Predicated region
  $region22: #{tpu_custom_call.1} parent=0 // pred_check
    _
  $region23: #{tpu_custom_call.1} parent=0 // pred_check_branch
    %40 = sbr.rel (0) target = $region25
  $region24: #{tpu_custom_call.1} parent=0 // pred_region
    _
  $region25: #{tpu_custom_call.1} parent=0 // pred_fallthru
    _
  // Predicated region
  $region26: #{tpu_custom_call.1} parent=0 // pred_check
    _
  $region27: #{tpu_custom_call.1} parent=0 // pred_check_branch
    %42 = sbr.rel (0) target = $region29
  $region28: #{tpu_custom_call.1} parent=0 // pred_region
    _
  $region29: #{tpu_custom_call.1} parent=0 // pred_fallthru
    _
  // Predicated region
  $region30: #{tpu_custom_call.1} parent=0 // pred_check
    _
  $region31: #{tpu_custom_call.1} parent=0 // pred_check_branch
    %44 = sbr.rel (0) target = $region33
  $region32: #{tpu_custom_call.1} parent=0 // pred_region
    _
  $region33: #{tpu_custom_call.1} parent=0 // pred_fallthru
    _
  // Predicated region
  $region34: #{tpu_custom_call.1} parent=0 // pred_check
    _
  $region35: #{tpu_custom_call.1} parent=0 // pred_check_branch
    %46 = sbr.rel (0) target = $region37
  $region36: #{tpu_custom_call.1} parent=0 // pred_region
    _
  $region37: #{tpu_custom_call.1} parent=0 // pred_fallthru
    _
  // Predicated region
  $region38: #{tpu_custom_call.1} parent=0 // pred_check
    _
  $region39: #{tpu_custom_call.1} parent=0 // pred_check_branch
    %48 = sbr.rel (0) target = $region41
  $region40: #{tpu_custom_call.1} parent=0 // pred_region
    _
  $region41: #{tpu_custom_call.1} parent=0 // pred_fallthru
    _
  // Predicated region
  $region42: #{tpu_custom_call.1} parent=0 // pred_check
    _
  $region43: #{tpu_custom_call.1} parent=0 // pred_check_branch
    %50 = sbr.rel (0) target = $region45
  $region44: #{tpu_custom_call.1} parent=0 // pred_region
    _
  $region45: #{tpu_custom_call.1} parent=0 // pred_fallthru
    _
  // Predicated region
  $region46: #{tpu_custom_call.1} parent=0 // pred_check
    _
  $region47: #{tpu_custom_call.1} parent=0 // pred_check_branch
    %52 = sbr.rel (0) target = $region49
  $region48: #{tpu_custom_call.1} parent=0 // pred_region
    _
  $region49: #{tpu_custom_call.1} parent=0 // pred_fallthru
    _
  // Predicated region
  $region50: #{tpu_custom_call.1} parent=0 // pred_check
    _
  $region51: #{tpu_custom_call.1} parent=0 // pred_check_branch
    %54 = sbr.rel (0) target = $region53
  $region52: #{tpu_custom_call.1} parent=0 // pred_region
    _
  $region53: #{tpu_custom_call.1} parent=0 // pred_fallthru
    _
  // Predicated region
  $region54: #{tpu_custom_call.1} parent=0 // pred_check
    _
  $region55: #{tpu_custom_call.1} parent=0 // pred_check_branch
    %56 = sbr.rel (0) target = $region57
  $region56: #{tpu_custom_call.1} parent=0 // pred_region
    _
  $region57: #{tpu_custom_call.1} parent=0 // pred_fallthru
    _
  // Predicated region
  $region58: #{tpu_custom_call.1} parent=0 // pred_check
    _
  $region59: #{tpu_custom_call.1} parent=0 // pred_check_branch
    %58 = sbr.rel (0) target = $region61
  $region60: #{tpu_custom_call.1} parent=0 // pred_region
    _
  $region61: #{tpu_custom_call.1} parent=0 // pred_fallthru
    _
  // Predicated region
  $region62: #{tpu_custom_call.1} parent=0 // pred_check
    _
  $region63: #{tpu_custom_call.1} parent=0 // pred_check_branch
    %60 = sbr.rel (0) target = $region65
  $region64: #{tpu_custom_call.1} parent=0 // pred_region
    _
  $region65: #{tpu_custom_call.1} parent=0 // pred_fallthru
    _
  %v61 = vld [vmem:[%s0] sm:$0x7f]
  %v62 = vld [vmem:[%s0 + $0x8] sm:$0x7f]
  %v63 = vld [vmem:[%s0 + $0x10] sm:$0x7f]
  %v64 = vld [vmem:[%s0 + $0x18] sm:$0x7f]
  %v65 = vld [vmem:[%s1] sm:$0xf]
  %v66 = vld [vmem:[%s2] sm:$0xff]
  %v67 = vld [vmem:[%s2 + $0x8] sm:$0xff]
  %v68 = vld [vmem:[%s2 + $0x10] sm:$0xff]
  %v69 = vld [vmem:[%s2 + $0x18] sm:$0xff]
  %v70 = vld [vmem:[%s2 + $0x20] sm:$0xff]
  %v71 = vld [vmem:[%s2 + $0x28] sm:$0xff]
  %v72 = vld [vmem:[%s2 + $0x30] sm:$0xff]
  %v73 = vld [vmem:[%s2 + $0x38] sm:$0xff]
  %v74 = vld [vmem:[%s3] sm:$0xff]
  %v75 = vld [vmem:[%s3 + $0x8] sm:$0xff]
  %v76 = vld [vmem:[%s3 + $0x10] sm:$0xff]
  %v77 = vld [vmem:[%s3 + $0x18] sm:$0xff]
  %v78 = vld [vmem:[%s4] sm:$0x1]
  %v79 = vld [vmem:[%s5] sm:$0x1]
  %v80 = vld [vmem:[#allocation2] sm:$0x1]
  %s81 = vtos %v80
  %v82 = vld [vmem:[%s7] sm:$0x1]
  %v83 = vld [vmem:[%s8] sm:$0xff]
  %v84 = vld [vmem:[%s8 + $0x8] sm:$0xff]
  %v85 = vld [vmem:[%s8 + $0x10] sm:$0xff]
  %v86 = vld [vmem:[%s8 + $0x18] sm:$0xff]
  %v87 = vld [vmem:[%s9] sm:$0x1]
  %v88 = vld [vmem:[%s10] sm:$0xff]
  %v89 = vld [vmem:[%s10 + $0x8] sm:$0xff]
  %v90 = vld [vmem:[%s10 + $0x10] sm:$0xff]
  %v91 = vld [vmem:[%s10 + $0x18] sm:$0xff]
  %v92 = vld [vmem:[#allocation3] sm:$0x1]
  %s93 = vtos %v92
  %v94 = vld [vmem:[#allocation4] sm:$0x1]
  %s95 = vtos %v94
  %v96 = vld [vmem:[%s13] sm:$0xff]
  %v97 = vld [vmem:[%s13 + $0x8] sm:$0xff]
  %v98 = vld [vmem:[%s13 + $0x10] sm:$0xff]
  %v99 = vld [vmem:[%s13 + $0x18] sm:$0xff]
  %v100 = vld [vmem:[%s14] sm:$0xff]
  %v101 = vld [vmem:[%s14 + $0x8] sm:$0xff]
  %v102 = vld [vmem:[%s14 + $0x10] sm:$0xff]
  %v103 = vld [vmem:[%s14 + $0x18] sm:$0xff]
  %v104 = vld [vmem:[#allocation5] sm:$0x1]
  %s105 = vtos %v104
  %v107 = vlaneseq
  %v108 = vshrl.u32 %v107, 7
  %v109 = vsub.s32 0, %v108
  %v110 = vrot.slane %v78, %v109
  %v115 = vcombine.high %v61, %v61
  %v117 = vunpack.c.l.s4 1966171168
  %v118 = vunpack.c.0.s8 %v117
  %v119 = vlaneseq
  %v120 = vshrl.u32 %v119, 7
  %v121 = vsub.s32 %v118, %v120
  %v122 = vrot.slane %v61, %v121
  %v124 = vunpack.c.l.s4 1966171168
  %v125 = vunpack.c.0.s8 %v124
  %v126 = vlaneseq
  %v127 = vshrl.u32 %v126, 7
  %v128 = vsub.s32 %v125, %v127
  %v129 = vrot.slane %v115, %v128
  %v130 = vcombine.high %v122, %v122
  %v131 = vcombine.high %v129, %v129
  %v133 = vunpack.c.l.s4 1966171168
  %v134 = vunpack.c.0.s8 %v133
  %v135 = vlaneseq
  %v136 = vshrl.u32 %v135, 7
  %v137 = vsub.s32 %v134, %v136
  %v138 = vrot.slane %v122, %v137
  %v140 = vunpack.c.l.s4 1966171168
  %v141 = vunpack.c.0.s8 %v140
  %v142 = vlaneseq
  %v143 = vshrl.u32 %v142, 7
  %v144 = vsub.s32 %v141, %v143
  %v145 = vrot.slane %v129, %v144
  %v147 = vunpack.c.l.s4 1966171168
  %v148 = vunpack.c.0.s8 %v147
  %v149 = vlaneseq
  %v150 = vshrl.u32 %v149, 7
  %v151 = vsub.s32 %v148, %v150
  %v152 = vrot.slane %v130, %v151
  %v154 = vunpack.c.l.s4 1966171168
  %v155 = vunpack.c.0.s8 %v154
  %v156 = vlaneseq
  %v157 = vshrl.u32 %v156, 7
  %v158 = vsub.s32 %v155, %v157
  %v159 = vrot.slane %v131, %v158
  %v160 = vcombine.high %v138, %v138
  %v161 = vcombine.high %v145, %v145
  %v162 = vcombine.high %v152, %v152
  %v163 = vcombine.high %v62, %v62
  %v165 = vunpack.c.l.s4 1966171168
  %v166 = vunpack.c.0.s8 %v165
  %v167 = vlaneseq
  %v168 = vshrl.u32 %v167, 7
  %v169 = vsub.s32 %v166, %v168
  %v170 = vrot.slane %v62, %v169
  %v172 = vunpack.c.l.s4 1966171168
  %v173 = vunpack.c.0.s8 %v172
  %v174 = vlaneseq
  %v175 = vshrl.u32 %v174, 7
  %v176 = vsub.s32 %v173, %v175
  %v177 = vrot.slane %v163, %v176
  %v178 = vcombine.high %v170, %v170
  %v179 = vcombine.high %v177, %v177
  %v181 = vunpack.c.l.s4 1966171168
  %v182 = vunpack.c.0.s8 %v181
  %v183 = vlaneseq
  %v184 = vshrl.u32 %v183, 7
  %v185 = vsub.s32 %v182, %v184
  %v186 = vrot.slane %v170, %v185
  %v188 = vunpack.c.l.s4 1966171168
  %v189 = vunpack.c.0.s8 %v188
  %v190 = vlaneseq
  %v191 = vshrl.u32 %v190, 7
  %v192 = vsub.s32 %v189, %v191
  %v193 = vrot.slane %v177, %v192
  %v195 = vunpack.c.l.s4 1966171168
  %v196 = vunpack.c.0.s8 %v195
  %v197 = vlaneseq
  %v198 = vshrl.u32 %v197, 7
  %v199 = vsub.s32 %v196, %v198
  %v200 = vrot.slane %v178, %v199
  %v202 = vunpack.c.l.s4 1966171168
  %v203 = vunpack.c.0.s8 %v202
  %v204 = vlaneseq
  %v205 = vshrl.u32 %v204, 7
  %v206 = vsub.s32 %v203, %v205
  %v207 = vrot.slane %v179, %v206
  %v208 = vcombine.high %v186, %v186
  %v209 = vcombine.high %v193, %v193
  %v210 = vcombine.high %v200, %v200
  %v211 = vcombine.high %v63, %v63
  %v213 = vunpack.c.l.s4 1966171168
  %v214 = vunpack.c.0.s8 %v213
  %v215 = vlaneseq
  %v216 = vshrl.u32 %v215, 7
  %v217 = vsub.s32 %v214, %v216
  %v218 = vrot.slane %v63, %v217
  %v220 = vunpack.c.l.s4 1966171168
  %v221 = vunpack.c.0.s8 %v220
  %v222 = vlaneseq
  %v223 = vshrl.u32 %v222, 7
  %v224 = vsub.s32 %v221, %v223
  %v225 = vrot.slane %v211, %v224
  %v226 = vcombine.high %v218, %v218
  %v227 = vcombine.high %v225, %v225
  %v229 = vunpack.c.l.s4 1966171168
  %v230 = vunpack.c.0.s8 %v229
  %v231 = vlaneseq
  %v232 = vshrl.u32 %v231, 7
  %v233 = vsub.s32 %v230, %v232
  %v234 = vrot.slane %v218, %v233
  %v236 = vunpack.c.l.s4 1966171168
  %v237 = vunpack.c.0.s8 %v236
  %v238 = vlaneseq
  %v239 = vshrl.u32 %v238, 7
  %v240 = vsub.s32 %v237, %v239
  %v241 = vrot.slane %v225, %v240
  %v243 = vunpack.c.l.s4 1966171168
  %v244 = vunpack.c.0.s8 %v243
  %v245 = vlaneseq
  %v246 = vshrl.u32 %v245, 7
  %v247 = vsub.s32 %v244, %v246
  %v248 = vrot.slane %v226, %v247
  %v250 = vunpack.c.l.s4 1966171168
  %v251 = vunpack.c.0.s8 %v250
  %v252 = vlaneseq
  %v253 = vshrl.u32 %v252, 7
  %v254 = vsub.s32 %v251, %v253
  %v255 = vrot.slane %v227, %v254
  %v256 = vcombine.high %v234, %v234
  %v257 = vcombine.high %v241, %v241
  %v258 = vcombine.high %v248, %v248
  %v259 = vcombine.high %v64, %v64
  %v261 = vunpack.c.l.s4 1966171168
  %v262 = vunpack.c.0.s8 %v261
  %v263 = vlaneseq
  %v264 = vshrl.u32 %v263, 7
  %v265 = vsub.s32 %v262, %v264
  %v266 = vrot.slane %v64, %v265
  %v268 = vunpack.c.l.s4 1966171168
  %v269 = vunpack.c.0.s8 %v268
  %v270 = vlaneseq
  %v271 = vshrl.u32 %v270, 7
  %v272 = vsub.s32 %v269, %v271
  %v273 = vrot.slane %v259, %v272
  %v274 = vcombine.high %v266, %v266
  %v275 = vcombine.high %v273, %v273
  %v277 = vunpack.c.l.s4 1966171168
  %v278 = vunpack.c.0.s8 %v277
  %v279 = vlaneseq
  %v280 = vshrl.u32 %v279, 7
  %v281 = vsub.s32 %v278, %v280
  %v282 = vrot.slane %v266, %v281
  %v284 = vunpack.c.l.s4 1966171168
  %v285 = vunpack.c.0.s8 %v284
  %v286 = vlaneseq
  %v287 = vshrl.u32 %v286, 7
  %v288 = vsub.s32 %v285, %v287
  %v289 = vrot.slane %v273, %v288
  %v291 = vunpack.c.l.s4 1966171168
  %v292 = vunpack.c.0.s8 %v291
  %v293 = vlaneseq
  %v294 = vshrl.u32 %v293, 7
  %v295 = vsub.s32 %v292, %v294
  %v296 = vrot.slane %v274, %v295
  %v298 = vunpack.c.l.s4 1966171168
  %v299 = vunpack.c.0.s8 %v298
  %v300 = vlaneseq
  %v301 = vshrl.u32 %v300, 7
  %v302 = vsub.s32 %v299, %v301
  %v303 = vrot.slane %v275, %v302
  %v304 = vcombine.high %v282, %v282
  %v305 = vcombine.high %v289, %v289
  %v306 = vcombine.high %v296, %v296
  %v307 = vcombine.high %v110, %v110
  %v309 = vunpack.c.l.s4 1966171168
  %v310 = vunpack.c.0.s8 %v309
  %v311 = vlaneseq
  %v312 = vshrl.u32 %v311, 7
  %v313 = vsub.s32 %v310, %v312
  %v314 = vrot.slane %v110, %v313
  %v316 = vunpack.c.l.s4 1966171168
  %v317 = vunpack.c.0.s8 %v316
  %v318 = vlaneseq
  %v319 = vshrl.u32 %v318, 7
  %v320 = vsub.s32 %v317, %v319
  %v321 = vrot.slane %v307, %v320
  %v322 = vcombine.high %v314, %v314
  %v323 = vcombine.high %v321, %v321
  %v325 = vunpack.c.l.s4 1966171168
  %v326 = vunpack.c.0.s8 %v325
  %v327 = vlaneseq
  %v328 = vshrl.u32 %v327, 7
  %v329 = vsub.s32 %v326, %v328
  %v330 = vrot.slane %v314, %v329
  %v332 = vunpack.c.l.s4 1966171168
  %v333 = vunpack.c.0.s8 %v332
  %v334 = vlaneseq
  %v335 = vshrl.u32 %v334, 7
  %v336 = vsub.s32 %v333, %v335
  %v337 = vrot.slane %v321, %v336
  %v339 = vunpack.c.l.s4 1966171168
  %v340 = vunpack.c.0.s8 %v339
  %v341 = vlaneseq
  %v342 = vshrl.u32 %v341, 7
  %v343 = vsub.s32 %v340, %v342
  %v344 = vrot.slane %v322, %v343
  %v346 = vunpack.c.l.s4 1966171168
  %v347 = vunpack.c.0.s8 %v346
  %v348 = vlaneseq
  %v349 = vshrl.u32 %v348, 7
  %v350 = vsub.s32 %v347, %v349
  %v351 = vrot.slane %v323, %v350
  %v352 = vcombine.high %v330, %v330
  %v353 = vcombine.high %v337, %v337
  %v354 = vcombine.high %v344, %v344
  %v355 = vcombine.low %v138, %v152
  %v356 = vcombine.low %v160, %v162
  %v357 = vcombine.low %v145, %v159
  %v358 = vcombine.low %v161, %v186
  %v360 = vunpack.c.l.s4 1966171168
  %v361 = vunpack.c.0.s8 %v360
  %v362 = vlaneseq
  %v363 = vshrl.u32 %v362, 7
  %v364 = vsub.s32 %v361, %v363
  %v365 = vrot.slane %v355, %v364
  %v367 = vunpack.c.l.s4 1966171168
  %v368 = vunpack.c.0.s8 %v367
  %v369 = vlaneseq
  %v370 = vshrl.u32 %v369, 7
  %v371 = vsub.s32 %v368, %v370
  %v372 = vrot.slane %v356, %v371
  %v374 = vunpack.c.l.s4 1966171168
  %v375 = vunpack.c.0.s8 %v374
  %v376 = vlaneseq
  %v377 = vshrl.u32 %v376, 7
  %v378 = vsub.s32 %v375, %v377
  %v379 = vrot.slane %v357, %v378
  %v381 = vunpack.c.l.s4 1966171168
  %v382 = vunpack.c.0.s8 %v381
  %v383 = vlaneseq
  %v384 = vshrl.u32 %v383, 7
  %v385 = vsub.s32 %v382, %v384
  %v386 = vrot.slane %v358, %v385
  %v387 = vcombine.low %v365, %v372
  %v388 = vcombine.low %v379, %v386
  %v390 = vunpack.c.l.s4 1966171168
  %v391 = vunpack.c.0.s8 %v390
  %v392 = vlaneseq
  %v393 = vshrl.u32 %v392, 7
  %v394 = vsub.s32 %v391, %v393
  %v395 = vrot.slane %v387, %v394
  %v397 = vunpack.c.l.s4 1966171168
  %v398 = vunpack.c.0.s8 %v397
  %v399 = vlaneseq
  %v400 = vshrl.u32 %v399, 7
  %v401 = vsub.s32 %v398, %v400
  %v402 = vrot.slane %v388, %v401
  %v403 = vcombine.low %v395, %v402
  %v404 = vcombine.low %v200, %v208
  %v405 = vcombine.low %v210, %v193
  %v406 = vcombine.low %v207, %v209
  %v407 = vcombine.low %v234, %v248
  %v409 = vunpack.c.l.s4 1966171168
  %v410 = vunpack.c.0.s8 %v409
  %v411 = vlaneseq
  %v412 = vshrl.u32 %v411, 7
  %v413 = vsub.s32 %v410, %v412
  %v414 = vrot.slane %v404, %v413
  %v416 = vunpack.c.l.s4 1966171168
  %v417 = vunpack.c.0.s8 %v416
  %v418 = vlaneseq
  %v419 = vshrl.u32 %v418, 7
  %v420 = vsub.s32 %v417, %v419
  %v421 = vrot.slane %v405, %v420
  %v423 = vunpack.c.l.s4 1966171168
  %v424 = vunpack.c.0.s8 %v423
  %v425 = vlaneseq
  %v426 = vshrl.u32 %v425, 7
  %v427 = vsub.s32 %v424, %v426
  %v428 = vrot.slane %v406, %v427
  %v430 = vunpack.c.l.s4 1966171168
  %v431 = vunpack.c.0.s8 %v430
  %v432 = vlaneseq
  %v433 = vshrl.u32 %v432, 7
  %v434 = vsub.s32 %v431, %v433
  %v435 = vrot.slane %v407, %v434
  %v436 = vcombine.low %v414, %v421
  %v437 = vcombine.low %v428, %v435
  %v439 = vunpack.c.l.s4 1966171168
  %v440 = vunpack.c.0.s8 %v439
  %v441 = vlaneseq
  %v442 = vshrl.u32 %v441, 7
  %v443 = vsub.s32 %v440, %v442
  %v444 = vrot.slane %v436, %v443
  %v446 = vunpack.c.l.s4 1966171168
  %v447 = vunpack.c.0.s8 %v446
  %v448 = vlaneseq
  %v449 = vshrl.u32 %v448, 7
  %v450 = vsub.s32 %v447, %v449
  %v451 = vrot.slane %v437, %v450
  %v452 = vcombine.low %v444, %v451
  %v453 = vcombine.low %v256, %v258
  %v454 = vcombine.low %v241, %v255
  %v455 = vcombine.low %v257, %v282
  %v456 = vcombine.low %v296, %v304
  %v458 = vunpack.c.l.s4 1966171168
  %v459 = vunpack.c.0.s8 %v458
  %v460 = vlaneseq
  %v461 = vshrl.u32 %v460, 7
  %v462 = vsub.s32 %v459, %v461
  %v463 = vrot.slane %v453, %v462
  %v465 = vunpack.c.l.s4 1966171168
  %v466 = vunpack.c.0.s8 %v465
  %v467 = vlaneseq
  %v468 = vshrl.u32 %v467, 7
  %v469 = vsub.s32 %v466, %v468
  %v470 = vrot.slane %v454, %v469
  %v472 = vunpack.c.l.s4 1966171168
  %v473 = vunpack.c.0.s8 %v472
  %v474 = vlaneseq
  %v475 = vshrl.u32 %v474, 7
  %v476 = vsub.s32 %v473, %v475
  %v477 = vrot.slane %v455, %v476
  %v479 = vunpack.c.l.s4 1966171168
  %v480 = vunpack.c.0.s8 %v479
  %v481 = vlaneseq
  %v482 = vshrl.u32 %v481, 7
  %v483 = vsub.s32 %v480, %v482
  %v484 = vrot.slane %v456, %v483
  %v485 = vcombine.low %v463, %v470
  %v486 = vcombine.low %v477, %v484
  %v488 = vunpack.c.l.s4 1966171168
  %v489 = vunpack.c.0.s8 %v488
  %v490 = vlaneseq
  %v491 = vshrl.u32 %v490, 7
  %v492 = vsub.s32 %v489, %v491
  %v493 = vrot.slane %v485, %v492
  %v495 = vunpack.c.l.s4 1966171168
  %v496 = vunpack.c.0.s8 %v495
  %v497 = vlaneseq
  %v498 = vshrl.u32 %v497, 7
  %v499 = vsub.s32 %v496, %v498
  %v500 = vrot.slane %v486, %v499
  %v501 = vcombine.low %v493, %v500
  %v502 = vcombine.low %v306, %v289
  %v503 = vcombine.low %v303, %v305
  %v505 = vunpack.c.l.s4 1966171168
  %v506 = vunpack.c.0.s8 %v505
  %v507 = vlaneseq
  %v508 = vshrl.u32 %v507, 7
  %v509 = vsub.s32 %v506, %v508
  %v510 = vrot.slane %v502, %v509
  %v512 = vunpack.c.l.s4 1966171168
  %v513 = vunpack.c.0.s8 %v512
  %v514 = vlaneseq
  %v515 = vshrl.u32 %v514, 7
  %v516 = vsub.s32 %v513, %v515
  %v517 = vrot.slane %v503, %v516
  %v518 = vcombine.low %v510, %v517
  %v520 = vunpack.c.l.s4 1966171168
  %v521 = vunpack.c.0.s8 %v520
  %v522 = vlaneseq
  %v523 = vshrl.u32 %v522, 7
  %v524 = vsub.s32 %v521, %v523
  %v525 = vrot.slane %v518, %v524
  %v526 = vcombine.low %v330, %v344
  %v527 = vcombine.low %v352, %v354
  %v528 = vcombine.low %v337, %v351
  %v529 = vcombine.low %v353, %v330
  %v531 = vunpack.c.l.s4 1966171168
  %v532 = vunpack.c.0.s8 %v531
  %v533 = vlaneseq
  %v534 = vshrl.u32 %v533, 7
  %v535 = vsub.s32 %v532, %v534
  %v536 = vrot.slane %v526, %v535
  %v538 = vunpack.c.l.s4 1966171168
  %v539 = vunpack.c.0.s8 %v538
  %v540 = vlaneseq
  %v541 = vshrl.u32 %v540, 7
  %v542 = vsub.s32 %v539, %v541
  %v543 = vrot.slane %v527, %v542
  %v545 = vunpack.c.l.s4 1966171168
  %v546 = vunpack.c.0.s8 %v545
  %v547 = vlaneseq
  %v548 = vshrl.u32 %v547, 7
  %v549 = vsub.s32 %v546, %v548
  %v550 = vrot.slane %v528, %v549
  %v552 = vunpack.c.l.s4 1966171168
  %v553 = vunpack.c.0.s8 %v552
  %v554 = vlaneseq
  %v555 = vshrl.u32 %v554, 7
  %v556 = vsub.s32 %v553, %v555
  %v557 = vrot.slane %v529, %v556
  %v558 = vcombine.low %v536, %v543
  %v559 = vcombine.low %v550, %v557
  %v561 = vunpack.c.l.s4 1966171168
  %v562 = vunpack.c.0.s8 %v561
  %v563 = vlaneseq
  %v564 = vshrl.u32 %v563, 7
  %v565 = vsub.s32 %v562, %v564
  %v566 = vrot.slane %v558, %v565
  %v568 = vunpack.c.l.s4 1966171168
  %v569 = vunpack.c.0.s8 %v568
  %v570 = vlaneseq
  %v571 = vshrl.u32 %v570, 7
  %v572 = vsub.s32 %v569, %v571
  %v573 = vrot.slane %v559, %v572
  %v574 = vcombine.low %v566, %v573
  %v575 = vcombine.low %v344, %v352
  %v576 = vcombine.low %v354, %v337
  %v577 = vcombine.low %v351, %v353
  %v579 = vunpack.c.l.s4 1966171168
  %v580 = vunpack.c.0.s8 %v579
  %v581 = vlaneseq
  %v582 = vshrl.u32 %v581, 7
  %v583 = vsub.s32 %v580, %v582
  %v584 = vrot.slane %v575, %v583
  %v586 = vunpack.c.l.s4 1966171168
  %v587 = vunpack.c.0.s8 %v586
  %v588 = vlaneseq
  %v589 = vshrl.u32 %v588, 7
  %v590 = vsub.s32 %v587, %v589
  %v591 = vrot.slane %v576, %v590
  %v593 = vunpack.c.l.s4 1966171168
  %v594 = vunpack.c.0.s8 %v593
  %v595 = vlaneseq
  %v596 = vshrl.u32 %v595, 7
  %v597 = vsub.s32 %v594, %v596
  %v598 = vrot.slane %v577, %v597
  %v599 = vcombine.low %v584, %v591
  %v600 = vcombine.low %v598, %v536
  %v602 = vunpack.c.l.s4 1966171168
  %v603 = vunpack.c.0.s8 %v602
  %v604 = vlaneseq
  %v605 = vshrl.u32 %v604, 7
  %v606 = vsub.s32 %v603, %v605
  %v607 = vrot.slane %v599, %v606
  %v609 = vunpack.c.l.s4 1966171168
  %v610 = vunpack.c.0.s8 %v609
  %v611 = vlaneseq
  %v612 = vshrl.u32 %v611, 7
  %v613 = vsub.s32 %v610, %v612
  %v614 = vrot.slane %v600, %v613
  %v615 = vcombine.low %v607, %v614
  %v616 = vcombine.low %v543, %v550
  %v617 = vcombine.low %v557, %v584
  %v619 = vunpack.c.l.s4 1966171168
  %v620 = vunpack.c.0.s8 %v619
  %v621 = vlaneseq
  %v622 = vshrl.u32 %v621, 7
  %v623 = vsub.s32 %v620, %v622
  %v624 = vrot.slane %v616, %v623
  %v626 = vunpack.c.l.s4 1966171168
  %v627 = vunpack.c.0.s8 %v626
  %v628 = vlaneseq
  %v629 = vshrl.u32 %v628, 7
  %v630 = vsub.s32 %v627, %v629
  %v631 = vrot.slane %v617, %v630
  %v632 = vcombine.low %v624, %v631
  %v633 = vcombine.low %v591, %v598
  %v635 = vunpack.c.l.s4 1966171168
  %v636 = vunpack.c.0.s8 %v635
  %v637 = vlaneseq
  %v638 = vshrl.u32 %v637, 7
  %v639 = vsub.s32 %v636, %v638
  %v640 = vrot.slane %v633, %v639
  %vm645 = vcmask 261120
  %v646 = vsel %vm645, %v403, 0
  %v648 = vsel %vm645, %v452, 0
  %v650 = vsel %vm645, %v501, 0
  %v652 = vsel %vm645, %v525, 0
  %654 = vmatprep.subr.mxu0 0.0
  %655 = vmatpush1.msra.mxu0 %v74
  %656 = vmatprep.subr.mxu0 0.0
  %657 = vmatpush1.msra.mxu0 %v75
  %658 = vmatprep.subr.mxu0 0.0
  %659 = vmatpush1.msra.mxu0 %v76
  %660 = vmatprep.subr.mxu0 0.0
  %661 = vmatpush1.msra.mxu0 %v77
  %662 = vmatprep.subr.mxu0 0.0
  %663 = vmatpush1.msra.mxu0 0.0
  %664 = vmatprep.subr.mxu0 0.0
  %665 = vmatpush1.msra.mxu0 0.0
  %666 = vmatprep.subr.mxu0 0.0
  %667 = vmatpush1.msra.mxu0 0.0
  %668 = vmatprep.subr.mxu0 0.0
  %669 = vmatpush1.msra.mxu0 0.0
  %670 = vmatprep.subr.mxu0 0.0
  %671 = vmatpush1.msra.mxu0 0.0
  %672 = vmatprep.subr.mxu0 0.0
  %673 = vmatpush1.msra.mxu0 0.0
  %674 = vmatprep.subr.mxu0 0.0
  %675 = vmatpush1.msra.mxu0 0.0
  %676 = vmatprep.subr.mxu0 0.0
  %677 = vmatpush1.msra.mxu0 0.0
  %678 = vmatprep.subr.mxu0 0.0
  %679 = vmatpush1.msra.mxu0 0.0
  %680 = vmatprep.subr.mxu0 0.0
  %681 = vmatpush1.msra.mxu0 0.0
  %682 = vmatprep.subr.mxu0 0.0
  %683 = vmatpush1.msra.mxu0 0.0
  %684 = vmatprep.subr.mxu0 0.0
  %685 = vmatpush1.msra.mxu0 0.0
  %686 = vmatprep.subr.mxu0 0.0
  %687 = vmatpush1.msra.mxu0 0.0
  %688 = vmatprep.subr.mxu0 0.0
  %689 = vmatpush1.msra.mxu0 0.0
  %690 = vmatprep.subr.mxu0 0.0
  %691 = vmatpush1.msra.mxu0 0.0
  %692 = vmatprep.subr.mxu0 0.0
  %693 = vmatpush1.msra.mxu0 0.0
  %694 = vmatprep.subr.mxu0 0.0
  %695 = vmatpush1.msra.mxu0 0.0
  %696 = vmatprep.subr.mxu0 0.0
  %697 = vmatpush1.msra.mxu0 0.0
  %698 = vmatprep.subr.mxu0 0.0
  %699 = vmatpush1.msra.mxu0 0.0
  %700 = vmatprep.subr.mxu0 0.0
  %701 = vmatpush1.msra.mxu0 0.0
  %702 = vmatprep.subr.mxu0 0.0
  %703 = vmatpush1.msra.mxu0 0.0
  %704 = vmatprep.subr.mxu0 0.0
  %705 = vmatpush1.msra.mxu0 0.0
  %706 = vmatprep.subr.mxu0 0.0
  %707 = vmatpush1.msra.mxu0 0.0
  %708 = vmatprep.subr.mxu0 0.0
  %709 = vmatpush1.msra.mxu0 0.0
  %710 = vmatprep.subr.mxu0 0.0
  %711 = vmatpush1.msra.mxu0 0.0
  %712 = vmatprep.subr.mxu0 0.0
  %713 = vmatpush1.msra.mxu0 0.0
  %714 = vmatprep.subr.mxu0 0.0
  %715 = vmatpush1.msra.mxu0 0.0
  %716 = vmatprep.subr.mxu0 0.0
  %717 = vmatpush1.msra.mxu0 0.0
  %718 = vmatprep.mubr.f32.mxu0 0.0
  %719 = vmatmul.mubr.f32.gmra.mrb[0].mxu0 %v646
  %v720 = vpop.f32.mrb[0].mxu0
  %v721 = vadd.f32 %v574, %v720
  %v722 = vpop.f32.mrb[0].mxu0
  %723 = vmatprep.mubr.f32.mxu0 0.0
  %724 = vmatmul.mubr.f32.gmra.mrb[0].mxu0 %v648
  %v725 = vpop.f32.mrb[0].mxu0
  %v726 = vadd.f32 %v615, %v725
  %v727 = vpop.f32.mrb[0].mxu0
  %728 = vmatprep.mubr.f32.mxu0 0.0
  %729 = vmatmul.mubr.f32.gmra.mrb[0].mxu0 %v650
  %v730 = vpop.f32.mrb[0].mxu0
  %v731 = vadd.f32 %v632, %v730
  %v732 = vpop.f32.mrb[0].mxu0
  %733 = vmatprep.mubr.f32.mxu0 0.0
  %734 = vmatmul.mubr.f32.gmra.mrb[0].mxu0 %v652
  %v735 = vpop.f32.mrb[0].mxu0
  %v736 = vadd.f32 %v640, %v735
  %v737 = vpop.f32.mrb[0].mxu0
  %738 = vdwg.mxu0
  %v743 = vcombine.high %v721, %v721
  %v745 = vunpack.c.l.s4 1966171168
  %v746 = vunpack.c.0.s8 %v745
  %v747 = vlaneseq
  %v748 = vshrl.u32 %v747, 7
  %v749 = vsub.s32 %v746, %v748
  %v750 = vrot.slane %v721, %v749
  %v752 = vunpack.c.l.s4 1966171168
  %v753 = vunpack.c.0.s8 %v752
  %v754 = vlaneseq
  %v755 = vshrl.u32 %v754, 7
  %v756 = vsub.s32 %v753, %v755
  %v757 = vrot.slane %v743, %v756
  %v758 = vcombine.high %v750, %v750
  %v759 = vcombine.high %v757, %v757
  %v761 = vunpack.c.l.s4 1966171168
  %v762 = vunpack.c.0.s8 %v761
  %v763 = vlaneseq
  %v764 = vshrl.u32 %v763, 7
  %v765 = vsub.s32 %v762, %v764
  %v766 = vrot.slane %v750, %v765
  %v768 = vunpack.c.l.s4 1966171168
  %v769 = vunpack.c.0.s8 %v768
  %v770 = vlaneseq
  %v771 = vshrl.u32 %v770, 7
  %v772 = vsub.s32 %v769, %v771
  %v773 = vrot.slane %v757, %v772
  %v775 = vunpack.c.l.s4 1966171168
  %v776 = vunpack.c.0.s8 %v775
  %v777 = vlaneseq
  %v778 = vshrl.u32 %v777, 7
  %v779 = vsub.s32 %v776, %v778
  %v780 = vrot.slane %v758, %v779
  %v782 = vunpack.c.l.s4 1966171168
  %v783 = vunpack.c.0.s8 %v782
  %v784 = vlaneseq
  %v785 = vshrl.u32 %v784, 7
  %v786 = vsub.s32 %v783, %v785
  %v787 = vrot.slane %v759, %v786
  %v788 = vcombine.high %v766, %v766
  %v789 = vcombine.high %v773, %v773
  %v790 = vcombine.high %v780, %v780
  %v791 = vcombine.high %v787, %v787
  %v792 = vcombine.high %v726, %v726
  %v794 = vunpack.c.l.s4 1966171168
  %v795 = vunpack.c.0.s8 %v794
  %v796 = vlaneseq
  %v797 = vshrl.u32 %v796, 7
  %v798 = vsub.s32 %v795, %v797
  %v799 = vrot.slane %v726, %v798
  %v801 = vunpack.c.l.s4 1966171168
  %v802 = vunpack.c.0.s8 %v801
  %v803 = vlaneseq
  %v804 = vshrl.u32 %v803, 7
  %v805 = vsub.s32 %v802, %v804
  %v806 = vrot.slane %v792, %v805
  %v807 = vcombine.high %v799, %v799
  %v808 = vcombine.high %v806, %v806
  %v810 = vunpack.c.l.s4 1966171168
  %v811 = vunpack.c.0.s8 %v810
  %v812 = vlaneseq
  %v813 = vshrl.u32 %v812, 7
  %v814 = vsub.s32 %v811, %v813
  %v815 = vrot.slane %v799, %v814
  %v817 = vunpack.c.l.s4 1966171168
  %v818 = vunpack.c.0.s8 %v817
  %v819 = vlaneseq
  %v820 = vshrl.u32 %v819, 7
  %v821 = vsub.s32 %v818, %v820
  %v822 = vrot.slane %v806, %v821
  %v824 = vunpack.c.l.s4 1966171168
  %v825 = vunpack.c.0.s8 %v824
  %v826 = vlaneseq
  %v827 = vshrl.u32 %v826, 7
  %v828 = vsub.s32 %v825, %v827
  %v829 = vrot.slane %v807, %v828
  %v831 = vunpack.c.l.s4 1966171168
  %v832 = vunpack.c.0.s8 %v831
  %v833 = vlaneseq
  %v834 = vshrl.u32 %v833, 7
  %v835 = vsub.s32 %v832, %v834
  %v836 = vrot.slane %v808, %v835
  %v837 = vcombine.high %v815, %v815
  %v838 = vcombine.high %v822, %v822
  %v839 = vcombine.high %v829, %v829
  %v840 = vcombine.high %v836, %v836
  %v841 = vcombine.high %v731, %v731
  %v843 = vunpack.c.l.s4 1966171168
  %v844 = vunpack.c.0.s8 %v843
  %v845 = vlaneseq
  %v846 = vshrl.u32 %v845, 7
  %v847 = vsub.s32 %v844, %v846
  %v848 = vrot.slane %v731, %v847
  %v850 = vunpack.c.l.s4 1966171168
  %v851 = vunpack.c.0.s8 %v850
  %v852 = vlaneseq
  %v853 = vshrl.u32 %v852, 7
  %v854 = vsub.s32 %v851, %v853
  %v855 = vrot.slane %v841, %v854
  %v856 = vcombine.high %v848, %v848
  %v857 = vcombine.high %v855, %v855
  %v859 = vunpack.c.l.s4 1966171168
  %v860 = vunpack.c.0.s8 %v859
  %v861 = vlaneseq
  %v862 = vshrl.u32 %v861, 7
  %v863 = vsub.s32 %v860, %v862
  %v864 = vrot.slane %v848, %v863
  %v866 = vunpack.c.l.s4 1966171168
  %v867 = vunpack.c.0.s8 %v866
  %v868 = vlaneseq
  %v869 = vshrl.u32 %v868, 7
  %v870 = vsub.s32 %v867, %v869
  %v871 = vrot.slane %v855, %v870
  %v873 = vunpack.c.l.s4 1966171168
  %v874 = vunpack.c.0.s8 %v873
  %v875 = vlaneseq
  %v876 = vshrl.u32 %v875, 7
  %v877 = vsub.s32 %v874, %v876
  %v878 = vrot.slane %v856, %v877
  %v880 = vunpack.c.l.s4 1966171168
  %v881 = vunpack.c.0.s8 %v880
  %v882 = vlaneseq
  %v883 = vshrl.u32 %v882, 7
  %v884 = vsub.s32 %v881, %v883
  %v885 = vrot.slane %v857, %v884
  %v886 = vcombine.high %v864, %v864
  %v887 = vcombine.high %v871, %v871
  %v888 = vcombine.high %v878, %v878
  %v889 = vcombine.high %v885, %v885
  %v891 = vunpack.c.l.s4 1966171168
  %v892 = vunpack.c.0.s8 %v891
  %v893 = vlaneseq
  %v894 = vshrl.u32 %v893, 7
  %v895 = vsub.s32 %v892, %v894
  %v896 = vrot.slane %v736, %v895
  %v897 = vcombine.high %v896, %v896
  %v899 = vunpack.c.l.s4 1966171168
  %v900 = vunpack.c.0.s8 %v899
  %v901 = vlaneseq
  %v902 = vshrl.u32 %v901, 7
  %v903 = vsub.s32 %v900, %v902
  %v904 = vrot.slane %v896, %v903
  %v906 = vunpack.c.l.s4 1966171168
  %v907 = vunpack.c.0.s8 %v906
  %v908 = vlaneseq
  %v909 = vshrl.u32 %v908, 7
  %v910 = vsub.s32 %v907, %v909
  %v911 = vrot.slane %v897, %v910
  %v912 = vcombine.high %v904, %v904
  %v913 = vcombine.high %v911, %v911
  %vm942 = vcmask 523264
  %v944 = vsel %vm942, 0.0, 0
  %946 = vmatprep.subr.mxu0 0.0
  %947 = vmatpush1.msra.mxu0 %v66
  %948 = vmatprep.subr.mxu0 0.0
  %949 = vmatpush1.msra.mxu0 %v67
  %950 = vmatprep.subr.mxu0 0.0
  %951 = vmatpush1.msra.mxu0 %v68
  %952 = vmatprep.subr.mxu0 0.0
  %953 = vmatpush1.msra.mxu0 %v69
  %954 = vmatprep.subr.mxu0 0.0
  %955 = vmatpush1.msra.mxu0 %v70
  %956 = vmatprep.subr.mxu0 0.0
  %957 = vmatpush1.msra.mxu0 %v71
  %958 = vmatprep.subr.mxu0 0.0
  %959 = vmatpush1.msra.mxu0 %v72
  %960 = vmatprep.subr.mxu0 0.0
  %961 = vmatpush1.msra.mxu0 %v73
  %962 = vmatprep.subr.mxu0 0.0
  %963 = vmatpush1.msra.mxu0 0.0
  %964 = vmatprep.subr.mxu0 0.0
  %965 = vmatpush1.msra.mxu0 0.0
  %966 = vmatprep.subr.mxu0 0.0
  %967 = vmatpush1.msra.mxu0 0.0
  %968 = vmatprep.subr.mxu0 0.0
  %969 = vmatpush1.msra.mxu0 0.0
  %970 = vmatprep.subr.mxu0 0.0
  %971 = vmatpush1.msra.mxu0 0.0
  %972 = vmatprep.subr.mxu0 0.0
  %973 = vmatpush1.msra.mxu0 0.0
  %974 = vmatprep.subr.mxu0 0.0
  %975 = vmatpush1.msra.mxu0 0.0
  %976 = vmatprep.subr.mxu0 0.0
  %977 = vmatpush1.msra.mxu0 0.0
  %978 = vmatprep.subr.mxu0 0.0
  %979 = vmatpush1.msra.mxu0 0.0
  %980 = vmatprep.subr.mxu0 0.0
  %981 = vmatpush1.msra.mxu0 0.0
  %982 = vmatprep.subr.mxu0 0.0
  %983 = vmatpush1.msra.mxu0 0.0
  %984 = vmatprep.subr.mxu0 0.0
  %985 = vmatpush1.msra.mxu0 0.0
  %986 = vmatprep.subr.mxu0 0.0
  %987 = vmatpush1.msra.mxu0 0.0
  %988 = vmatprep.subr.mxu0 0.0
  %989 = vmatpush1.msra.mxu0 0.0
  %990 = vmatprep.subr.mxu0 0.0
  %991 = vmatpush1.msra.mxu0 0.0
  %992 = vmatprep.subr.mxu0 0.0
  %993 = vmatpush1.msra.mxu0 0.0
  %994 = vmatprep.subr.mxu0 0.0
  %995 = vmatpush1.msra.mxu0 0.0
  %996 = vmatprep.subr.mxu0 0.0
  %997 = vmatpush1.msra.mxu0 0.0
  %998 = vmatprep.subr.mxu0 0.0
  %999 = vmatpush1.msra.mxu0 0.0
  %1000 = vmatprep.subr.mxu0 0.0
  %1001 = vmatpush1.msra.mxu0 0.0
  %1002 = vmatprep.subr.mxu0 0.0
  %1003 = vmatpush1.msra.mxu0 0.0
  %1004 = vmatprep.subr.mxu0 0.0
  %1005 = vmatpush1.msra.mxu0 0.0
  %1006 = vmatprep.subr.mxu0 0.0
  %1007 = vmatpush1.msra.mxu0 0.0
  %1008 = vmatprep.subr.mxu0 0.0
  %1009 = vmatpush1.msra.mxu0 0.0
  %1010 = vmatprep.mubr.f32.mxu0 0.0
  %1011 = vmatmul.mubr.f32.gmra.mrb[0].mxu0 %v944
  %v1012 = vpop.f32.mrb[0].mxu0
  %v1013 = vadd.f32 0.0, %v1012
  %v1014 = vpop.f32.mrb[0].mxu0
  %1015 = vdwg.mxu0
  %v1018 = vunpack.c.l.s4 1966171168
  %v1019 = vunpack.c.0.s8 %v1018
  %v1020 = vlaneseq
  %v1021 = vshrl.u32 %v1020, 7
  %v1022 = vsub.s32 %v1019, %v1021
  %v1023 = vrot.slane %v1013, %v1022
  %v1024 = vcombine.high %v1023, %v1023
  %v1026 = vunpack.c.l.s4 1966171168
  %v1027 = vunpack.c.0.s8 %v1026
  %v1028 = vlaneseq
  %v1029 = vshrl.u32 %v1028, 7
  %v1030 = vsub.s32 %v1027, %v1029
  %v1031 = vrot.slane %v1023, %v1030
  %v1033 = vunpack.c.l.s4 1966171168
  %v1034 = vunpack.c.0.s8 %v1033
  %v1035 = vlaneseq
  %v1036 = vshrl.u32 %v1035, 7
  %v1037 = vsub.s32 %v1034, %v1036
  %v1038 = vrot.slane %v1024, %v1037
  %v1039 = vcombine.high %v1031, %v1031
  %v1040 = vcombine.high %v1038, %v1038
  %v1041 = vlaneseq
  %v1042 = vshrl.u32 %v1041, 7
  %v1043 = vsub.s32 0, %v1042
  %v1044 = vrot.slane %v1031, %v1043
  %v1045 = vlaneseq
  %v1046 = vshrl.u32 %v1045, 7
  %v1047 = vsub.s32 0, %v1046
  %v1048 = vrot.slane %v1038, %v1047
  %v1049 = vlaneseq
  %v1050 = vshrl.u32 %v1049, 7
  %v1051 = vsub.s32 0, %v1050
  %v1052 = vrot.slane %v1039, %v1051
  %v1053 = vlaneseq
  %v1054 = vshrl.u32 %v1053, 7
  %v1055 = vsub.s32 0, %v1054
  %v1056 = vrot.slane %v1040, %v1055
  %v1057 = vcombine.high %v1044, %v1044
  %v1059 = vunpack.c.l.s4 1966171168
  %v1060 = vunpack.c.0.s8 %v1059
  %v1061 = vlaneseq
  %v1062 = vshrl.u32 %v1061, 7
  %v1063 = vsub.s32 %v1060, %v1062
  %v1064 = vrot.slane %v1044, %v1063
  %v1066 = vunpack.c.l.s4 1966171168
  %v1067 = vunpack.c.0.s8 %v1066
  %v1068 = vlaneseq
  %v1069 = vshrl.u32 %v1068, 7
  %v1070 = vsub.s32 %v1067, %v1069
  %v1071 = vrot.slane %v1057, %v1070
  %v1072 = vcombine.high %v1064, %v1064
  %v1073 = vcombine.high %v1071, %v1071
  %v1075 = vunpack.c.l.s4 1966171168
  %v1076 = vunpack.c.0.s8 %v1075
  %v1077 = vlaneseq
  %v1078 = vshrl.u32 %v1077, 7
  %v1079 = vsub.s32 %v1076, %v1078
  %v1080 = vrot.slane %v1064, %v1079
  %v1082 = vunpack.c.l.s4 1966171168
  %v1083 = vunpack.c.0.s8 %v1082
  %v1084 = vlaneseq
  %v1085 = vshrl.u32 %v1084, 7
  %v1086 = vsub.s32 %v1083, %v1085
  %v1087 = vrot.slane %v1071, %v1086
  %v1089 = vunpack.c.l.s4 1966171168
  %v1090 = vunpack.c.0.s8 %v1089
  %v1091 = vlaneseq
  %v1092 = vshrl.u32 %v1091, 7
  %v1093 = vsub.s32 %v1090, %v1092
  %v1094 = vrot.slane %v1072, %v1093
  %v1096 = vunpack.c.l.s4 1966171168
  %v1097 = vunpack.c.0.s8 %v1096
  %v1098 = vlaneseq
  %v1099 = vshrl.u32 %v1098, 7
  %v1100 = vsub.s32 %v1097, %v1099
  %v1101 = vrot.slane %v1073, %v1100
  %v1102 = vcombine.high %v1080, %v1080
  %v1103 = vcombine.high %v1087, %v1087
  %v1104 = vcombine.high %v1094, %v1094
  %v1105 = vcombine.high %v1048, %v1048
  %v1107 = vunpack.c.l.s4 1966171168
  %v1108 = vunpack.c.0.s8 %v1107
  %v1109 = vlaneseq
  %v1110 = vshrl.u32 %v1109, 7
  %v1111 = vsub.s32 %v1108, %v1110
  %v1112 = vrot.slane %v1048, %v1111
  %v1114 = vunpack.c.l.s4 1966171168
  %v1115 = vunpack.c.0.s8 %v1114
  %v1116 = vlaneseq
  %v1117 = vshrl.u32 %v1116, 7
  %v1118 = vsub.s32 %v1115, %v1117
  %v1119 = vrot.slane %v1105, %v1118
  %v1120 = vcombine.high %v1112, %v1112
  %v1121 = vcombine.high %v1119, %v1119
  %v1123 = vunpack.c.l.s4 1966171168
  %v1124 = vunpack.c.0.s8 %v1123
  %v1125 = vlaneseq
  %v1126 = vshrl.u32 %v1125, 7
  %v1127 = vsub.s32 %v1124, %v1126
  %v1128 = vrot.slane %v1112, %v1127
  %v1130 = vunpack.c.l.s4 1966171168
  %v1131 = vunpack.c.0.s8 %v1130
  %v1132 = vlaneseq
  %v1133 = vshrl.u32 %v1132, 7
  %v1134 = vsub.s32 %v1131, %v1133
  %v1135 = vrot.slane %v1119, %v1134
  %v1137 = vunpack.c.l.s4 1966171168
  %v1138 = vunpack.c.0.s8 %v1137
  %v1139 = vlaneseq
  %v1140 = vshrl.u32 %v1139, 7
  %v1141 = vsub.s32 %v1138, %v1140
  %v1142 = vrot.slane %v1120, %v1141
  %v1144 = vunpack.c.l.s4 1966171168
  %v1145 = vunpack.c.0.s8 %v1144
  %v1146 = vlaneseq
  %v1147 = vshrl.u32 %v1146, 7
  %v1148 = vsub.s32 %v1145, %v1147
  %v1149 = vrot.slane %v1121, %v1148
  %v1150 = vcombine.high %v1128, %v1128
  %v1151 = vcombine.high %v1135, %v1135
  %v1152 = vcombine.high %v1142, %v1142
  %v1153 = vcombine.high %v1052, %v1052
  %v1155 = vunpack.c.l.s4 1966171168
  %v1156 = vunpack.c.0.s8 %v1155
  %v1157 = vlaneseq
  %v1158 = vshrl.u32 %v1157, 7
  %v1159 = vsub.s32 %v1156, %v1158
  %v1160 = vrot.slane %v1052, %v1159
  %v1162 = vunpack.c.l.s4 1966171168
  %v1163 = vunpack.c.0.s8 %v1162
  %v1164 = vlaneseq
  %v1165 = vshrl.u32 %v1164, 7
  %v1166 = vsub.s32 %v1163, %v1165
  %v1167 = vrot.slane %v1153, %v1166
  %v1168 = vcombine.high %v1160, %v1160
  %v1169 = vcombine.high %v1167, %v1167
  %v1171 = vunpack.c.l.s4 1966171168
  %v1172 = vunpack.c.0.s8 %v1171
  %v1173 = vlaneseq
  %v1174 = vshrl.u32 %v1173, 7
  %v1175 = vsub.s32 %v1172, %v1174
  %v1176 = vrot.slane %v1160, %v1175
  %v1178 = vunpack.c.l.s4 1966171168
  %v1179 = vunpack.c.0.s8 %v1178
  %v1180 = vlaneseq
  %v1181 = vshrl.u32 %v1180, 7
  %v1182 = vsub.s32 %v1179, %v1181
  %v1183 = vrot.slane %v1167, %v1182
  %v1185 = vunpack.c.l.s4 1966171168
  %v1186 = vunpack.c.0.s8 %v1185
  %v1187 = vlaneseq
  %v1188 = vshrl.u32 %v1187, 7
  %v1189 = vsub.s32 %v1186, %v1188
  %v1190 = vrot.slane %v1168, %v1189
  %v1192 = vunpack.c.l.s4 1966171168
  %v1193 = vunpack.c.0.s8 %v1192
  %v1194 = vlaneseq
  %v1195 = vshrl.u32 %v1194, 7
  %v1196 = vsub.s32 %v1193, %v1195
  %v1197 = vrot.slane %v1169, %v1196
  %v1198 = vcombine.high %v1176, %v1176
  %v1199 = vcombine.high %v1183, %v1183
  %v1200 = vcombine.high %v1190, %v1190
  %v1201 = vcombine.high %v1056, %v1056
  %v1203 = vunpack.c.l.s4 1966171168
  %v1204 = vunpack.c.0.s8 %v1203
  %v1205 = vlaneseq
  %v1206 = vshrl.u32 %v1205, 7
  %v1207 = vsub.s32 %v1204, %v1206
  %v1208 = vrot.slane %v1056, %v1207
  %v1210 = vunpack.c.l.s4 1966171168
  %v1211 = vunpack.c.0.s8 %v1210
  %v1212 = vlaneseq
  %v1213 = vshrl.u32 %v1212, 7
  %v1214 = vsub.s32 %v1211, %v1213
  %v1215 = vrot.slane %v1201, %v1214
  %v1216 = vcombine.high %v1208, %v1208
  %v1217 = vcombine.high %v1215, %v1215
  %v1219 = vunpack.c.l.s4 1966171168
  %v1220 = vunpack.c.0.s8 %v1219
  %v1221 = vlaneseq
  %v1222 = vshrl.u32 %v1221, 7
  %v1223 = vsub.s32 %v1220, %v1222
  %v1224 = vrot.slane %v1208, %v1223
  %v1226 = vunpack.c.l.s4 1966171168
  %v1227 = vunpack.c.0.s8 %v1226
  %v1228 = vlaneseq
  %v1229 = vshrl.u32 %v1228, 7
  %v1230 = vsub.s32 %v1227, %v1229
  %v1231 = vrot.slane %v1215, %v1230
  %v1233 = vunpack.c.l.s4 1966171168
  %v1234 = vunpack.c.0.s8 %v1233
  %v1235 = vlaneseq
  %v1236 = vshrl.u32 %v1235, 7
  %v1237 = vsub.s32 %v1234, %v1236
  %v1238 = vrot.slane %v1216, %v1237
  %v1240 = vunpack.c.l.s4 1966171168
  %v1241 = vunpack.c.0.s8 %v1240
  %v1242 = vlaneseq
  %v1243 = vshrl.u32 %v1242, 7
  %v1244 = vsub.s32 %v1241, %v1243
  %v1245 = vrot.slane %v1217, %v1244
  %v1246 = vcombine.high %v1224, %v1224
  %v1247 = vcombine.high %v1231, %v1231
  %v1248 = vcombine.high %v1238, %v1238
  %v1277 = vadd.f32 %v766, %v1080
  %v1278 = vadd.f32 %v780, %v1094
  %v1279 = vadd.f32 %v788, %v1102
  %v1280 = vadd.f32 %v790, %v1104
  %v1281 = vadd.f32 %v773, %v1087
  %v1282 = vadd.f32 %v787, %v1101
  %v1283 = vadd.f32 %v789, %v1103
  %v1284 = vadd.f32 %v791, %v1128
  %v1285 = vadd.f32 %v815, %v1142
  %v1286 = vadd.f32 %v829, %v1150
  %v1287 = vadd.f32 %v837, %v1152
  %v1288 = vadd.f32 %v839, %v1135
  %v1289 = vadd.f32 %v822, %v1149
  %v1290 = vadd.f32 %v836, %v1151
  %v1291 = vadd.f32 %v838, %v1176
  %v1292 = vadd.f32 %v840, %v1190
  %v1293 = vadd.f32 %v864, %v1198
  %v1294 = vadd.f32 %v878, %v1200
  %v1295 = vadd.f32 %v886, %v1183
  %v1296 = vadd.f32 %v888, %v1197
  %v1297 = vadd.f32 %v871, %v1199
  %v1298 = vadd.f32 %v885, %v1224
  %v1299 = vadd.f32 %v887, %v1238
  %v1300 = vadd.f32 %v889, %v1246
  %v1301 = vadd.f32 %v904, %v1248
  %v1302 = vadd.f32 %v911, %v1231
  %v1303 = vadd.f32 %v912, %v1245
  %v1304 = vadd.f32 %v913, %v1247
  %v1305 = vtanh.pop %v1277
  %v1306 = vtanh.pop %v1278
  %v1307 = vtanh.pop %v1279
  %v1308 = vtanh.pop %v1280
  %v1309 = vtanh.pop %v1281
  %v1310 = vtanh.pop %v1282
  %v1311 = vtanh.pop %v1283
  %v1312 = vtanh.pop %v1284
  %v1313 = vtanh.pop %v1285
  %v1314 = vtanh.pop %v1286
  %v1315 = vtanh.pop %v1287
  %v1316 = vtanh.pop %v1288
  %v1317 = vtanh.pop %v1289
  %v1318 = vtanh.pop %v1290
  %v1319 = vtanh.pop %v1291
  %v1320 = vtanh.pop %v1292
  %v1321 = vtanh.pop %v1293
  %v1322 = vtanh.pop %v1294
  %v1323 = vtanh.pop %v1295
  %v1324 = vtanh.pop %v1296
  %v1325 = vtanh.pop %v1297
  %v1326 = vtanh.pop %v1298
  %v1327 = vtanh.pop %v1299
  %v1328 = vtanh.pop %v1300
  %v1329 = vtanh.pop %v1301
  %v1330 = vtanh.pop %v1302
  %v1331 = vtanh.pop %v1303
  %v1332 = vtanh.pop %v1304
  %v1334 = vlaneseq
  %v1335 = vshrl.u32 %v1334, 7
  %v1336 = vsub.s32 0, %v1335
  %v1337 = vrot.slane %v79, %v1336
  %v1338 = vcombine.high %v1337, %v1337
  %v1340 = vunpack.c.l.s4 1966171168
  %v1341 = vunpack.c.0.s8 %v1340
  %v1342 = vlaneseq
  %v1343 = vshrl.u32 %v1342, 7
  %v1344 = vsub.s32 %v1341, %v1343
  %v1345 = vrot.slane %v1337, %v1344
  %v1347 = vunpack.c.l.s4 1966171168
  %v1348 = vunpack.c.0.s8 %v1347
  %v1349 = vlaneseq
  %v1350 = vshrl.u32 %v1349, 7
  %v1351 = vsub.s32 %v1348, %v1350
  %v1352 = vrot.slane %v1338, %v1351
  %v1353 = vcombine.high %v1345, %v1345
  %v1354 = vcombine.high %v1352, %v1352
  %v1356 = vunpack.c.l.s4 1966171168
  %v1357 = vunpack.c.0.s8 %v1356
  %v1358 = vlaneseq
  %v1359 = vshrl.u32 %v1358, 7
  %v1360 = vsub.s32 %v1357, %v1359
  %v1361 = vrot.slane %v1345, %v1360
  %v1363 = vunpack.c.l.s4 1966171168
  %v1364 = vunpack.c.0.s8 %v1363
  %v1365 = vlaneseq
  %v1366 = vshrl.u32 %v1365, 7
  %v1367 = vsub.s32 %v1364, %v1366
  %v1368 = vrot.slane %v1352, %v1367
  %v1370 = vunpack.c.l.s4 1966171168
  %v1371 = vunpack.c.0.s8 %v1370
  %v1372 = vlaneseq
  %v1373 = vshrl.u32 %v1372, 7
  %v1374 = vsub.s32 %v1371, %v1373
  %v1375 = vrot.slane %v1353, %v1374
  %v1377 = vunpack.c.l.s4 1966171168
  %v1378 = vunpack.c.0.s8 %v1377
  %v1379 = vlaneseq
  %v1380 = vshrl.u32 %v1379, 7
  %v1381 = vsub.s32 %v1378, %v1380
  %v1382 = vrot.slane %v1354, %v1381
  %v1383 = vcombine.high %v1361, %v1361
  %v1384 = vcombine.high %v1368, %v1368
  %v1385 = vcombine.high %v1375, %v1375
  %v1393 = vmul.f32 %v1305, %v1361
  %v1394 = vmul.f32 %v1306, %v1375
  %v1395 = vmul.f32 %v1307, %v1383
  %v1396 = vmul.f32 %v1308, %v1385
  %v1397 = vmul.f32 %v1309, %v1368
  %v1398 = vmul.f32 %v1310, %v1382
  %v1399 = vmul.f32 %v1311, %v1384
  %v1400 = vmul.f32 %v1312, %v1361
  %v1401 = vmul.f32 %v1313, %v1375
  %v1402 = vmul.f32 %v1314, %v1383
  %v1403 = vmul.f32 %v1315, %v1385
  %v1404 = vmul.f32 %v1316, %v1368
  %v1405 = vmul.f32 %v1317, %v1382
  %v1406 = vmul.f32 %v1318, %v1384
  %v1407 = vmul.f32 %v1319, %v1361
  %v1408 = vmul.f32 %v1320, %v1375
  %v1409 = vmul.f32 %v1321, %v1383
  %v1410 = vmul.f32 %v1322, %v1385
  %v1411 = vmul.f32 %v1323, %v1368
  %v1412 = vmul.f32 %v1324, %v1382
  %v1413 = vmul.f32 %v1325, %v1384
  %v1414 = vmul.f32 %v1326, %v1361
  %v1415 = vmul.f32 %v1327, %v1375
  %v1416 = vmul.f32 %v1328, %v1383
  %v1417 = vmul.f32 %v1329, %v1385
  %v1418 = vmul.f32 %v1330, %v1368
  %v1419 = vmul.f32 %v1331, %v1382
  %v1420 = vmul.f32 %v1332, %v1384
  %v1449 = vcombine.low %v1393, %v1394
  %v1450 = vcombine.low %v1395, %v1396
  %v1451 = vcombine.low %v1397, %v1398
  %v1453 = vunpack.c.l.s4 1966171168
  %v1454 = vunpack.c.0.s8 %v1453
  %v1455 = vlaneseq
  %v1456 = vshrl.u32 %v1455, 7
  %v1457 = vsub.s32 %v1454, %v1456
  %v1458 = vrot.slane %v1449, %v1457
  %v1460 = vunpack.c.l.s4 1966171168
  %v1461 = vunpack.c.0.s8 %v1460
  %v1462 = vlaneseq
  %v1463 = vshrl.u32 %v1462, 7
  %v1464 = vsub.s32 %v1461, %v1463
  %v1465 = vrot.slane %v1450, %v1464
  %v1467 = vunpack.c.l.s4 1966171168
  %v1468 = vunpack.c.0.s8 %v1467
  %v1469 = vlaneseq
  %v1470 = vshrl.u32 %v1469, 7
  %v1471 = vsub.s32 %v1468, %v1470
  %v1472 = vrot.slane %v1451, %v1471
  %v1474 = vunpack.c.l.s4 1966171168
  %v1475 = vunpack.c.0.s8 %v1474
  %v1476 = vlaneseq
  %v1477 = vshrl.u32 %v1476, 7
  %v1478 = vsub.s32 %v1475, %v1477
  %v1479 = vrot.slane %v1399, %v1478
  %v1480 = vcombine.low %v1458, %v1465
  %v1481 = vcombine.low %v1472, %v1479
  %v1483 = vunpack.c.l.s4 1966171168
  %v1484 = vunpack.c.0.s8 %v1483
  %v1485 = vlaneseq
  %v1486 = vshrl.u32 %v1485, 7
  %v1487 = vsub.s32 %v1484, %v1486
  %v1488 = vrot.slane %v1480, %v1487
  %v1490 = vunpack.c.l.s4 1966171168
  %v1491 = vunpack.c.0.s8 %v1490
  %v1492 = vlaneseq
  %v1493 = vshrl.u32 %v1492, 7
  %v1494 = vsub.s32 %v1491, %v1493
  %v1495 = vrot.slane %v1481, %v1494
  %v1496 = vcombine.low %v1488, %v1495
  %v1497 = vcombine.low %v1400, %v1401
  %v1498 = vcombine.low %v1402, %v1403
  %v1499 = vcombine.low %v1404, %v1405
  %v1501 = vunpack.c.l.s4 1966171168
  %v1502 = vunpack.c.0.s8 %v1501
  %v1503 = vlaneseq
  %v1504 = vshrl.u32 %v1503, 7
  %v1505 = vsub.s32 %v1502, %v1504
  %v1506 = vrot.slane %v1497, %v1505
  %v1508 = vunpack.c.l.s4 1966171168
  %v1509 = vunpack.c.0.s8 %v1508
  %v1510 = vlaneseq
  %v1511 = vshrl.u32 %v1510, 7
  %v1512 = vsub.s32 %v1509, %v1511
  %v1513 = vrot.slane %v1498, %v1512
  %v1515 = vunpack.c.l.s4 1966171168
  %v1516 = vunpack.c.0.s8 %v1515
  %v1517 = vlaneseq
  %v1518 = vshrl.u32 %v1517, 7
  %v1519 = vsub.s32 %v1516, %v1518
  %v1520 = vrot.slane %v1499, %v1519
  %v1522 = vunpack.c.l.s4 1966171168
  %v1523 = vunpack.c.0.s8 %v1522
  %v1524 = vlaneseq
  %v1525 = vshrl.u32 %v1524, 7
  %v1526 = vsub.s32 %v1523, %v1525
  %v1527 = vrot.slane %v1406, %v1526
  %v1528 = vcombine.low %v1506, %v1513
  %v1529 = vcombine.low %v1520, %v1527
  %v1531 = vunpack.c.l.s4 1966171168
  %v1532 = vunpack.c.0.s8 %v1531
  %v1533 = vlaneseq
  %v1534 = vshrl.u32 %v1533, 7
  %v1535 = vsub.s32 %v1532, %v1534
  %v1536 = vrot.slane %v1528, %v1535
  %v1538 = vunpack.c.l.s4 1966171168
  %v1539 = vunpack.c.0.s8 %v1538
  %v1540 = vlaneseq
  %v1541 = vshrl.u32 %v1540, 7
  %v1542 = vsub.s32 %v1539, %v1541
  %v1543 = vrot.slane %v1529, %v1542
  %v1544 = vcombine.low %v1536, %v1543
  %v1545 = vcombine.low %v1407, %v1408
  %v1546 = vcombine.low %v1409, %v1410
  %v1547 = vcombine.low %v1411, %v1412
  %v1549 = vunpack.c.l.s4 1966171168
  %v1550 = vunpack.c.0.s8 %v1549
  %v1551 = vlaneseq
  %v1552 = vshrl.u32 %v1551, 7
  %v1553 = vsub.s32 %v1550, %v1552
  %v1554 = vrot.slane %v1545, %v1553
  %v1556 = vunpack.c.l.s4 1966171168
  %v1557 = vunpack.c.0.s8 %v1556
  %v1558 = vlaneseq
  %v1559 = vshrl.u32 %v1558, 7
  %v1560 = vsub.s32 %v1557, %v1559
  %v1561 = vrot.slane %v1546, %v1560
  %v1563 = vunpack.c.l.s4 1966171168
  %v1564 = vunpack.c.0.s8 %v1563
  %v1565 = vlaneseq
  %v1566 = vshrl.u32 %v1565, 7
  %v1567 = vsub.s32 %v1564, %v1566
  %v1568 = vrot.slane %v1547, %v1567
  %v1570 = vunpack.c.l.s4 1966171168
  %v1571 = vunpack.c.0.s8 %v1570
  %v1572 = vlaneseq
  %v1573 = vshrl.u32 %v1572, 7
  %v1574 = vsub.s32 %v1571, %v1573
  %v1575 = vrot.slane %v1413, %v1574
  %v1576 = vcombine.low %v1554, %v1561
  %v1577 = vcombine.low %v1568, %v1575
  %v1579 = vunpack.c.l.s4 1966171168
  %v1580 = vunpack.c.0.s8 %v1579
  %v1581 = vlaneseq
  %v1582 = vshrl.u32 %v1581, 7
  %v1583 = vsub.s32 %v1580, %v1582
  %v1584 = vrot.slane %v1576, %v1583
  %v1586 = vunpack.c.l.s4 1966171168
  %v1587 = vunpack.c.0.s8 %v1586
  %v1588 = vlaneseq
  %v1589 = vshrl.u32 %v1588, 7
  %v1590 = vsub.s32 %v1587, %v1589
  %v1591 = vrot.slane %v1577, %v1590
  %v1592 = vcombine.low %v1584, %v1591
  %v1593 = vcombine.low %v1414, %v1415
  %v1594 = vcombine.low %v1416, %v1417
  %v1595 = vcombine.low %v1418, %v1419
  %v1597 = vunpack.c.l.s4 1966171168
  %v1598 = vunpack.c.0.s8 %v1597
  %v1599 = vlaneseq
  %v1600 = vshrl.u32 %v1599, 7
  %v1601 = vsub.s32 %v1598, %v1600
  %v1602 = vrot.slane %v1593, %v1601
  %v1604 = vunpack.c.l.s4 1966171168
  %v1605 = vunpack.c.0.s8 %v1604
  %v1606 = vlaneseq
  %v1607 = vshrl.u32 %v1606, 7
  %v1608 = vsub.s32 %v1605, %v1607
  %v1609 = vrot.slane %v1594, %v1608
  %v1611 = vunpack.c.l.s4 1966171168
  %v1612 = vunpack.c.0.s8 %v1611
  %v1613 = vlaneseq
  %v1614 = vshrl.u32 %v1613, 7
  %v1615 = vsub.s32 %v1612, %v1614
  %v1616 = vrot.slane %v1595, %v1615
  %v1618 = vunpack.c.l.s4 1966171168
  %v1619 = vunpack.c.0.s8 %v1618
  %v1620 = vlaneseq
  %v1621 = vshrl.u32 %v1620, 7
  %v1622 = vsub.s32 %v1619, %v1621
  %v1623 = vrot.slane %v1420, %v1622
  %v1624 = vcombine.low %v1602, %v1609
  %v1625 = vcombine.low %v1616, %v1623
  %v1627 = vunpack.c.l.s4 1966171168
  %v1628 = vunpack.c.0.s8 %v1627
  %v1629 = vlaneseq
  %v1630 = vshrl.u32 %v1629, 7
  %v1631 = vsub.s32 %v1628, %v1630
  %v1632 = vrot.slane %v1624, %v1631
  %v1634 = vunpack.c.l.s4 1966171168
  %v1635 = vunpack.c.0.s8 %v1634
  %v1636 = vlaneseq
  %v1637 = vshrl.u32 %v1636, 7
  %v1638 = vsub.s32 %v1635, %v1637
  %v1639 = vrot.slane %v1625, %v1638
  %v1640 = vcombine.low %v1632, %v1639
  %vm1645 = vcmask 260096
  %v1646 = vsel %vm1645, %v1496, 0.0
  %1647 = vadd.xlane.f32.xlu0 %v1646
  %v1648 = vpop.xlane.xlu0 %1647
  %v1649 = vsel %vm1645, %v1544, 0.0
  %1650 = vadd.xlane.f32.xlu0 %v1649
  %v1651 = vpop.xlane.xlu0 %1650
  %v1652 = vsel %vm1645, %v1592, 0.0
  %1653 = vadd.xlane.f32.xlu0 %v1652
  %v1654 = vpop.xlane.xlu0 %1653
  %v1655 = vsel %vm1645, %v1640, 0.0
  %1656 = vadd.xlane.f32.xlu0 %v1655
  %v1657 = vpop.xlane.xlu0 %1656
  %v1658 = vstv %s81
  %v1659 = vadd.f32 %v1648, %v1658
  %v1660 = vadd.f32 %v1651, %v1658
  %v1661 = vadd.f32 %v1654, %v1658
  %v1662 = vadd.f32 %v1657, %v1658
  %v1667 = vlaneseq
  %v1668 = vand.u32 %v1667, 127
  %v1669 = vlaneseq
  %v1670 = vshrl.u32 %v1669, 7
  %v1671 = vsub.s32 %v1668, %v1670
  %v1672 = vrot.slane %v1659, %v1671
  %v1673 = vlaneseq
  %v1674 = vshrl.u32 %v1673, 7
  %v1675 = vsub.s32 %v1668, %v1674
  %v1676 = vrot.slane %v1660, %v1675
  %v1677 = vlaneseq
  %v1678 = vshrl.u32 %v1677, 7
  %v1679 = vsub.s32 %v1668, %v1678
  %v1680 = vrot.slane %v1661, %v1679
  %v1681 = vlaneseq
  %v1682 = vshrl.u32 %v1681, 7
  %v1683 = vsub.s32 %v1668, %v1682
  %v1684 = vrot.slane %v1662, %v1683
  %vm1685 = vcmask 1041409
  %v1686 = vsel %vm1685, %v1676, %v1672
  %vm1687 = vcmask 1042434
  %v1688 = vsel %vm1687, %v1680, %v1686
  %vm1689 = vcmask 1043459
  %v1690 = vsel %vm1689, %v1684, %v1688
  %vm1692 = vcmask 52224
  %v1693 = vsel %vm1692, %v1690, -inf
  %1694 = vmax.xlane.f32.xlu0 %v1693
  %v1695 = vpop.xlane.xlu0 %1694
  %v1697 = vlaneseq
  %v1698 = vshrl.u32 %v1697, 7
  %v1699 = vsub.s32 0, %v1698
  %v1700 = vrot.slane %v1695, %v1699
  %v1701 = vlaneseq
  %v1702 = vshrl.u32 %v1701, 7
  %v1703 = vsub.s32 1, %v1702
  %v1704 = vrot.slane %v1695, %v1703
  %v1705 = vlaneseq
  %v1706 = vshrl.u32 %v1705, 7
  %v1707 = vsub.s32 2, %v1706
  %v1708 = vrot.slane %v1695, %v1707
  %v1709 = vlaneseq
  %v1710 = vshrl.u32 %v1709, 7
  %v1711 = vsub.s32 3, %v1710
  %v1712 = vrot.slane %v1695, %v1711
  %v1717 = vsub.f32 %v1659, %v1700
  %v1718 = vsub.f32 %v1660, %v1704
  %v1719 = vsub.f32 %v1661, %v1708
  %v1720 = vsub.f32 %v1662, %v1712
  %v1721 = vmul.f32 %v1717, 1.442695
  %v1722 = vpow.pop %v1721
  %v1723 = vmul.f32 %v1718, 1.442695
  %v1724 = vpow.pop %v1723
  %v1725 = vmul.f32 %v1719, 1.442695
  %v1726 = vpow.pop %v1725
  %v1727 = vmul.f32 %v1720, 1.442695
  %v1728 = vpow.pop %v1727
  %1733 = vset.pattern.permute.xlu0 0
  %1734 = vperm.xlu0 %1733, %v1722
  %v1735 = vpop.permute.xlu0 %1734
  %1736 = vset.pattern.permute.xlu0 0
  %1737 = vperm.xlu0 %1736, %v1724
  %v1738 = vpop.permute.xlu0 %1737
  %1739 = vset.pattern.permute.xlu0 0
  %1740 = vperm.xlu0 %1739, %v1726
  %v1741 = vpop.permute.xlu0 %1740
  %1742 = vset.pattern.permute.xlu0 0
  %1743 = vperm.xlu0 %1742, %v1728
  %v1744 = vpop.permute.xlu0 %1743
  %v1745 = vlaneseq
  %v1746 = vshrl.u32 %v1745, 7
  %v1747 = vsub.s32 %v1668, %v1746
  %v1748 = vrot.slane %v1735, %v1747
  %v1749 = vlaneseq
  %v1750 = vshrl.u32 %v1749, 7
  %v1751 = vsub.s32 %v1668, %v1750
  %v1752 = vrot.slane %v1738, %v1751
  %v1753 = vlaneseq
  %v1754 = vshrl.u32 %v1753, 7
  %v1755 = vsub.s32 %v1668, %v1754
  %v1756 = vrot.slane %v1741, %v1755
  %v1757 = vlaneseq
  %v1758 = vshrl.u32 %v1757, 7
  %v1759 = vsub.s32 %v1668, %v1758
  %v1760 = vrot.slane %v1744, %v1759
  %v1761 = vsel %vm1685, %v1752, %v1748
  %v1762 = vsel %vm1687, %v1756, %v1761
  %v1763 = vsel %vm1689, %v1760, %v1762
  %v1765 = vsel %vm1692, %v1763, 0.0
  %1766 = vadd.xlane.f32.xlu0 %v1765
  %v1767 = vpop.xlane.xlu0 %1766
  %v1768 = vrcp.pop %v1767
  %v1770 = vlaneseq
  %v1771 = vshrl.u32 %v1770, 7
  %v1772 = vsub.s32 0, %v1771
  %v1773 = vrot.slane %v1768, %v1772
  %v1774 = vlaneseq
  %v1775 = vshrl.u32 %v1774, 7
  %v1776 = vsub.s32 1, %v1775
  %v1777 = vrot.slane %v1768, %v1776
  %v1778 = vlaneseq
  %v1779 = vshrl.u32 %v1778, 7
  %v1780 = vsub.s32 2, %v1779
  %v1781 = vrot.slane %v1768, %v1780
  %v1782 = vlaneseq
  %v1783 = vshrl.u32 %v1782, 7
  %v1784 = vsub.s32 3, %v1783
  %v1785 = vrot.slane %v1768, %v1784
  %v1790 = vmul.f32 %v1722, %v1773
  %v1791 = vmul.f32 %v1724, %v1777
  %v1792 = vmul.f32 %v1726, %v1781
  %v1793 = vmul.f32 %v1728, %v1785
  %1795 = vset.pattern.permute.xlu0 0
  %1796 = vperm.xlu0 %1795, %v1790
  %v1797 = vpop.permute.xlu0 %1796
  %1800 = vset.pattern.permute.xlu0 0
  %1801 = vperm.xlu0 %1800, %v1791
  %v1802 = vpop.permute.xlu0 %1801
  %1805 = vset.pattern.permute.xlu0 0
  %1806 = vperm.xlu0 %1805, %v1792
  %v1807 = vpop.permute.xlu0 %1806
  %1810 = vset.pattern.permute.xlu0 0
  %1811 = vperm.xlu0 %1810, %v1793
  %v1812 = vpop.permute.xlu0 %1811
  %v1814 = vmul.f32 %v1797, %v61
  %v1815 = vmul.f32 %v1802, %v62
  %v1816 = vmul.f32 %v1807, %v63
  %v1817 = vmul.f32 %v1812, %v64
  %v1818 = vsel %vm1645, %v1814, 0.0
  %v1819 = vrot.slane %v1818, 4
  %v1820 = vadd.f32 %v1818, %v1819
  %v1821 = vrot.slane %v1820, 2
  %v1822 = vadd.f32 %v1820, %v1821
  %v1823 = vrot.slane %v1822, 1
  %v1824 = vadd.f32 %v1822, %v1823
  %v1825 = vsel %vm1645, %v1815, 0.0
  %v1826 = vrot.slane %v1825, 4
  %v1827 = vadd.f32 %v1825, %v1826
  %v1828 = vrot.slane %v1827, 2
  %v1829 = vadd.f32 %v1827, %v1828
  %v1830 = vrot.slane %v1829, 1
  %v1831 = vadd.f32 %v1829, %v1830
  %v1832 = vsel %vm1645, %v1816, 0.0
  %v1833 = vrot.slane %v1832, 4
  %v1834 = vadd.f32 %v1832, %v1833
  %v1835 = vrot.slane %v1834, 2
  %v1836 = vadd.f32 %v1834, %v1835
  %v1837 = vrot.slane %v1836, 1
  %v1838 = vadd.f32 %v1836, %v1837
  %v1839 = vsel %vm1645, %v1817, 0.0
  %v1840 = vrot.slane %v1839, 4
  %v1841 = vadd.f32 %v1839, %v1840
  %v1842 = vrot.slane %v1841, 2
  %v1843 = vadd.f32 %v1841, %v1842
  %v1844 = vrot.slane %v1843, 1
  %v1845 = vadd.f32 %v1843, %v1844
  %v1846 = vstv %s93
  %v1847 = vmul.f32 %v65, %v1846
  %v1852 = vsel %vm1685, %v1831, %v1824
  %v1853 = vsel %vm1687, %v1838, %v1852
  %v1854 = vsel %vm1689, %v1845, %v1853
  %v1855 = vsel %vm645, %v1854, 0
  %1857 = vmatprep.subr.mxu0 0.0
  %1858 = vmatpush1.msra.mxu0 %v88
  %1859 = vmatprep.subr.mxu0 0.0
  %1860 = vmatpush1.msra.mxu0 %v89
  %1861 = vmatprep.subr.mxu0 0.0
  %1862 = vmatpush1.msra.mxu0 %v90
  %1863 = vmatprep.subr.mxu0 0.0
  %1864 = vmatpush1.msra.mxu0 %v91
  %1865 = vmatprep.subr.mxu0 0.0
  %1866 = vmatpush1.msra.mxu0 0.0
  %1867 = vmatprep.subr.mxu0 0.0
  %1868 = vmatpush1.msra.mxu0 0.0
  %1869 = vmatprep.subr.mxu0 0.0
  %1870 = vmatpush1.msra.mxu0 0.0
  %1871 = vmatprep.subr.mxu0 0.0
  %1872 = vmatpush1.msra.mxu0 0.0
  %1873 = vmatprep.subr.mxu0 0.0
  %1874 = vmatpush1.msra.mxu0 0.0
  %1875 = vmatprep.subr.mxu0 0.0
  %1876 = vmatpush1.msra.mxu0 0.0
  %1877 = vmatprep.subr.mxu0 0.0
  %1878 = vmatpush1.msra.mxu0 0.0
  %1879 = vmatprep.subr.mxu0 0.0
  %1880 = vmatpush1.msra.mxu0 0.0
  %1881 = vmatprep.subr.mxu0 0.0
  %1882 = vmatpush1.msra.mxu0 0.0
  %1883 = vmatprep.subr.mxu0 0.0
  %1884 = vmatpush1.msra.mxu0 0.0
  %1885 = vmatprep.subr.mxu0 0.0
  %1886 = vmatpush1.msra.mxu0 0.0
  %1887 = vmatprep.subr.mxu0 0.0
  %1888 = vmatpush1.msra.mxu0 0.0
  %1889 = vmatprep.subr.mxu0 0.0
  %1890 = vmatpush1.msra.mxu0 0.0
  %1891 = vmatprep.subr.mxu0 0.0
  %1892 = vmatpush1.msra.mxu0 0.0
  %1893 = vmatprep.subr.mxu0 0.0
  %1894 = vmatpush1.msra.mxu0 0.0
  %1895 = vmatprep.subr.mxu0 0.0
  %1896 = vmatpush1.msra.mxu0 0.0
  %1897 = vmatprep.subr.mxu0 0.0
  %1898 = vmatpush1.msra.mxu0 0.0
  %1899 = vmatprep.subr.mxu0 0.0
  %1900 = vmatpush1.msra.mxu0 0.0
  %1901 = vmatprep.subr.mxu0 0.0
  %1902 = vmatpush1.msra.mxu0 0.0
  %1903 = vmatprep.subr.mxu0 0.0
  %1904 = vmatpush1.msra.mxu0 0.0
  %1905 = vmatprep.subr.mxu0 0.0
  %1906 = vmatpush1.msra.mxu0 0.0
  %1907 = vmatprep.subr.mxu0 0.0
  %1908 = vmatpush1.msra.mxu0 0.0
  %1909 = vmatprep.subr.mxu0 0.0
  %1910 = vmatpush1.msra.mxu0 0.0
  %1911 = vmatprep.subr.mxu0 0.0
  %1912 = vmatpush1.msra.mxu0 0.0
  %1913 = vmatprep.subr.mxu0 0.0
  %1914 = vmatpush1.msra.mxu0 0.0
  %1915 = vmatprep.subr.mxu0 0.0
  %1916 = vmatpush1.msra.mxu0 0.0
  %1917 = vmatprep.subr.mxu0 0.0
  %1918 = vmatpush1.msra.mxu0 0.0
  %1919 = vmatprep.subr.mxu0 0.0
  %1920 = vmatpush1.msra.mxu0 0.0
  %1921 = vmatprep.mubr.f32.mxu0 0.0
  %1922 = vmatmul.mubr.f32.gmra.mrb[0].mxu0 %v1855
  %v1923 = vpop.f32.mrb[0].mxu0
  %v1924 = vadd.f32 %v1847, %v1923
  %v1925 = vpop.f32.mrb[0].mxu0
  %1926 = vdwg.mxu0
  %v1927 = vstv %s95
  %v1928 = vadd.f32 %v1924, %v1927
  %1930 = vset.pattern.permute.xlu0 0
  %1931 = vperm.xlu0 %1930, %v1928
  %v1932 = vpop.permute.xlu0 %1931
  %v1935 = vlaneseq
  %v1936 = vshrl.u32 %v1935, 7
  %v1937 = vsub.s32 0, %v1936
  %v1938 = vrot.slane %v82, %v1937
  %v1940 = vmul.f32 %v1932, %v1938
  %v1941 = vsel %vm645, 0.0, 0
  %1943 = vmatprep.subr.mxu0 0.0
  %1944 = vmatpush1.msra.mxu0 %v83
  %1945 = vmatprep.subr.mxu0 0.0
  %1946 = vmatpush1.msra.mxu0 %v84
  %1947 = vmatprep.subr.mxu0 0.0
  %1948 = vmatpush1.msra.mxu0 %v85
  %1949 = vmatprep.subr.mxu0 0.0
  %1950 = vmatpush1.msra.mxu0 %v86
  %1951 = vmatprep.subr.mxu0 0.0
  %1952 = vmatpush1.msra.mxu0 0.0
  %1953 = vmatprep.subr.mxu0 0.0
  %1954 = vmatpush1.msra.mxu0 0.0
  %1955 = vmatprep.subr.mxu0 0.0
  %1956 = vmatpush1.msra.mxu0 0.0
  %1957 = vmatprep.subr.mxu0 0.0
  %1958 = vmatpush1.msra.mxu0 0.0
  %1959 = vmatprep.subr.mxu0 0.0
  %1960 = vmatpush1.msra.mxu0 0.0
  %1961 = vmatprep.subr.mxu0 0.0
  %1962 = vmatpush1.msra.mxu0 0.0
  %1963 = vmatprep.subr.mxu0 0.0
  %1964 = vmatpush1.msra.mxu0 0.0
  %1965 = vmatprep.subr.mxu0 0.0
  %1966 = vmatpush1.msra.mxu0 0.0
  %1967 = vmatprep.subr.mxu0 0.0
  %1968 = vmatpush1.msra.mxu0 0.0
  %1969 = vmatprep.subr.mxu0 0.0
  %1970 = vmatpush1.msra.mxu0 0.0
  %1971 = vmatprep.subr.mxu0 0.0
  %1972 = vmatpush1.msra.mxu0 0.0
  %1973 = vmatprep.subr.mxu0 0.0
  %1974 = vmatpush1.msra.mxu0 0.0
  %1975 = vmatprep.subr.mxu0 0.0
  %1976 = vmatpush1.msra.mxu0 0.0
  %1977 = vmatprep.subr.mxu0 0.0
  %1978 = vmatpush1.msra.mxu0 0.0
  %1979 = vmatprep.subr.mxu0 0.0
  %1980 = vmatpush1.msra.mxu0 0.0
  %1981 = vmatprep.subr.mxu0 0.0
  %1982 = vmatpush1.msra.mxu0 0.0
  %1983 = vmatprep.subr.mxu0 0.0
  %1984 = vmatpush1.msra.mxu0 0.0
  %1985 = vmatprep.subr.mxu0 0.0
  %1986 = vmatpush1.msra.mxu0 0.0
  %1987 = vmatprep.subr.mxu0 0.0
  %1988 = vmatpush1.msra.mxu0 0.0
  %1989 = vmatprep.subr.mxu0 0.0
  %1990 = vmatpush1.msra.mxu0 0.0
  %1991 = vmatprep.subr.mxu0 0.0
  %1992 = vmatpush1.msra.mxu0 0.0
  %1993 = vmatprep.subr.mxu0 0.0
  %1994 = vmatpush1.msra.mxu0 0.0
  %1995 = vmatprep.subr.mxu0 0.0
  %1996 = vmatpush1.msra.mxu0 0.0
  %1997 = vmatprep.subr.mxu0 0.0
  %1998 = vmatpush1.msra.mxu0 0.0
  %1999 = vmatprep.subr.mxu0 0.0
  %2000 = vmatpush1.msra.mxu0 0.0
  %2001 = vmatprep.subr.mxu0 0.0
  %2002 = vmatpush1.msra.mxu0 0.0
  %2003 = vmatprep.subr.mxu0 0.0
  %2004 = vmatpush1.msra.mxu0 0.0
  %2005 = vmatprep.subr.mxu0 0.0
  %2006 = vmatpush1.msra.mxu0 0.0
  %2007 = vmatprep.mubr.f32.mxu0 0.0
  %2008 = vmatmul.mubr.f32.gmra.mrb[0].mxu0 %v1941
  %v2009 = vpop.f32.mrb[0].mxu0
  %v2010 = vadd.f32 0.0, %v2009
  %v2011 = vpop.f32.mrb[0].mxu0
  %2012 = vdwg.mxu0
  %v2013 = vadd.f32 %v1940, %v2010
  %v2015 = vlaneseq
  %v2016 = vshrl.u32 %v2015, 7
  %v2017 = vsub.s32 0, %v2016
  %v2018 = vrot.slane %v87, %v2017
  %v2020 = vadd.f32 %v2013, %v2018
  %v2021 = vxor.u32 %v2020, 2147483648
  %v2022 = vmul.f32 %v2021, 1.442695
  %v2023 = vpow.pop %v2022
  %v2024 = vadd.f32 %v2023, 1.0
  %v2025 = vrcp.pop %v2024
  %v2026 = vmul.f32 1.0, %v2025
  %v2027 = vtanh.pop %v2020
  %v2028 = vmul.f32 %v2026, 0.0
  %2030 = vrot.lane.b32.xlu0 %v2027, 64
  %v2031 = vpop.permute.xlu0 %2030
  %v2033 = vmul.f32 %v2026, %v2031
  %2035 = vrot.lane.b32.xlu0 %v2033, 32
  %v2036 = vpop.permute.xlu0 %2035
  %v2038 = vadd.f32 %v2028, %v2036
  %v2039 = vtanh.pop %v2038
  %2041 = vrot.lane.b32.xlu0 %v2039, 64
  %v2042 = vpop.permute.xlu0 %2041
  %v2044 = vmul.f32 %v2026, %v2042
  %2046 = vrot.lane.b32.xlu0 %v2044, 32
  %v2047 = vpop.permute.xlu0 %2046
  %v2049 = vsel %vm645, %v2047, %v2038
  %v2051 = vsel %vm942, %v2049, 0
  %2053 = vmatprep.subr.mxu0 0.0
  %2054 = vmatpush1.msra.mxu0 %v66
  %2055 = vmatprep.subr.mxu0 0.0
  %2056 = vmatpush1.msra.mxu0 %v67
  %2057 = vmatprep.subr.mxu0 0.0
  %2058 = vmatpush1.msra.mxu0 %v68
  %2059 = vmatprep.subr.mxu0 0.0
  %2060 = vmatpush1.msra.mxu0 %v69
  %2061 = vmatprep.subr.mxu0 0.0
  %2062 = vmatpush1.msra.mxu0 %v70
  %2063 = vmatprep.subr.mxu0 0.0
  %2064 = vmatpush1.msra.mxu0 %v71
  %2065 = vmatprep.subr.mxu0 0.0
  %2066 = vmatpush1.msra.mxu0 %v72
  %2067 = vmatprep.subr.mxu0 0.0
  %2068 = vmatpush1.msra.mxu0 %v73
  %2069 = vmatprep.subr.mxu0 0.0
  %2070 = vmatpush1.msra.mxu0 0.0
  %2071 = vmatprep.subr.mxu0 0.0
  %2072 = vmatpush1.msra.mxu0 0.0
  %2073 = vmatprep.subr.mxu0 0.0
  %2074 = vmatpush1.msra.mxu0 0.0
  %2075 = vmatprep.subr.mxu0 0.0
  %2076 = vmatpush1.msra.mxu0 0.0
  %2077 = vmatprep.subr.mxu0 0.0
  %2078 = vmatpush1.msra.mxu0 0.0
  %2079 = vmatprep.subr.mxu0 0.0
  %2080 = vmatpush1.msra.mxu0 0.0
  %2081 = vmatprep.subr.mxu0 0.0
  %2082 = vmatpush1.msra.mxu0 0.0
  %2083 = vmatprep.subr.mxu0 0.0
  %2084 = vmatpush1.msra.mxu0 0.0
  %2085 = vmatprep.subr.mxu0 0.0
  %2086 = vmatpush1.msra.mxu0 0.0
  %2087 = vmatprep.subr.mxu0 0.0
  %2088 = vmatpush1.msra.mxu0 0.0
  %2089 = vmatprep.subr.mxu0 0.0
  %2090 = vmatpush1.msra.mxu0 0.0
  %2091 = vmatprep.subr.mxu0 0.0
  %2092 = vmatpush1.msra.mxu0 0.0
  %2093 = vmatprep.subr.mxu0 0.0
  %2094 = vmatpush1.msra.mxu0 0.0
  %2095 = vmatprep.subr.mxu0 0.0
  %2096 = vmatpush1.msra.mxu0 0.0
  %2097 = vmatprep.subr.mxu0 0.0
  %2098 = vmatpush1.msra.mxu0 0.0
  %2099 = vmatprep.subr.mxu0 0.0
  %2100 = vmatpush1.msra.mxu0 0.0
  %2101 = vmatprep.subr.mxu0 0.0
  %2102 = vmatpush1.msra.mxu0 0.0
  %2103 = vmatprep.subr.mxu0 0.0
  %2104 = vmatpush1.msra.mxu0 0.0
  %2105 = vmatprep.subr.mxu0 0.0
  %2106 = vmatpush1.msra.mxu0 0.0
  %2107 = vmatprep.subr.mxu0 0.0
  %2108 = vmatpush1.msra.mxu0 0.0
  %2109 = vmatprep.subr.mxu0 0.0
  %2110 = vmatpush1.msra.mxu0 0.0
  %2111 = vmatprep.subr.mxu0 0.0
  %2112 = vmatpush1.msra.mxu0 0.0
  %2113 = vmatprep.subr.mxu0 0.0
  %2114 = vmatpush1.msra.mxu0 0.0
  %2115 = vmatprep.subr.mxu0 0.0
  %2116 = vmatpush1.msra.mxu0 0.0
  %2117 = vmatprep.mubr.f32.mxu0 0.0
  %2118 = vmatmul.mubr.f32.gmra.mrb[0].mxu0 %v2051
  %v2119 = vpop.f32.mrb[0].mxu0
  %v2120 = vadd.f32 0.0, %v2119
  %v2121 = vpop.f32.mrb[0].mxu0
  %2122 = vdwg.mxu0
  %v2125 = vunpack.c.l.s4 1966171168
  %v2126 = vunpack.c.0.s8 %v2125
  %v2127 = vlaneseq
  %v2128 = vshrl.u32 %v2127, 7
  %v2129 = vsub.s32 %v2126, %v2128
  %v2130 = vrot.slane %v2120, %v2129
  %v2131 = vcombine.high %v2130, %v2130
  %v2133 = vunpack.c.l.s4 1966171168
  %v2134 = vunpack.c.0.s8 %v2133
  %v2135 = vlaneseq
  %v2136 = vshrl.u32 %v2135, 7
  %v2137 = vsub.s32 %v2134, %v2136
  %v2138 = vrot.slane %v2130, %v2137
  %v2140 = vunpack.c.l.s4 1966171168
  %v2141 = vunpack.c.0.s8 %v2140
  %v2142 = vlaneseq
  %v2143 = vshrl.u32 %v2142, 7
  %v2144 = vsub.s32 %v2141, %v2143
  %v2145 = vrot.slane %v2131, %v2144
  %v2146 = vcombine.high %v2138, %v2138
  %v2147 = vcombine.high %v2145, %v2145
  %v2148 = vlaneseq
  %v2149 = vshrl.u32 %v2148, 7
  %v2150 = vsub.s32 0, %v2149
  %v2151 = vrot.slane %v2138, %v2150
  %v2152 = vlaneseq
  %v2153 = vshrl.u32 %v2152, 7
  %v2154 = vsub.s32 0, %v2153
  %v2155 = vrot.slane %v2145, %v2154
  %v2156 = vlaneseq
  %v2157 = vshrl.u32 %v2156, 7
  %v2158 = vsub.s32 0, %v2157
  %v2159 = vrot.slane %v2146, %v2158
  %v2160 = vlaneseq
  %v2161 = vshrl.u32 %v2160, 7
  %v2162 = vsub.s32 0, %v2161
  %v2163 = vrot.slane %v2147, %v2162
  %v2164 = vcombine.high %v2151, %v2151
  %v2166 = vunpack.c.l.s4 1966171168
  %v2167 = vunpack.c.0.s8 %v2166
  %v2168 = vlaneseq
  %v2169 = vshrl.u32 %v2168, 7
  %v2170 = vsub.s32 %v2167, %v2169
  %v2171 = vrot.slane %v2151, %v2170
  %v2173 = vunpack.c.l.s4 1966171168
  %v2174 = vunpack.c.0.s8 %v2173
  %v2175 = vlaneseq
  %v2176 = vshrl.u32 %v2175, 7
  %v2177 = vsub.s32 %v2174, %v2176
  %v2178 = vrot.slane %v2164, %v2177
  %v2179 = vcombine.high %v2171, %v2171
  %v2180 = vcombine.high %v2178, %v2178
  %v2182 = vunpack.c.l.s4 1966171168
  %v2183 = vunpack.c.0.s8 %v2182
  %v2184 = vlaneseq
  %v2185 = vshrl.u32 %v2184, 7
  %v2186 = vsub.s32 %v2183, %v2185
  %v2187 = vrot.slane %v2171, %v2186
  %v2189 = vunpack.c.l.s4 1966171168
  %v2190 = vunpack.c.0.s8 %v2189
  %v2191 = vlaneseq
  %v2192 = vshrl.u32 %v2191, 7
  %v2193 = vsub.s32 %v2190, %v2192
  %v2194 = vrot.slane %v2178, %v2193
  %v2196 = vunpack.c.l.s4 1966171168
  %v2197 = vunpack.c.0.s8 %v2196
  %v2198 = vlaneseq
  %v2199 = vshrl.u32 %v2198, 7
  %v2200 = vsub.s32 %v2197, %v2199
  %v2201 = vrot.slane %v2179, %v2200
  %v2203 = vunpack.c.l.s4 1966171168
  %v2204 = vunpack.c.0.s8 %v2203
  %v2205 = vlaneseq
  %v2206 = vshrl.u32 %v2205, 7
  %v2207 = vsub.s32 %v2204, %v2206
  %v2208 = vrot.slane %v2180, %v2207
  %v2209 = vcombine.high %v2187, %v2187
  %v2210 = vcombine.high %v2194, %v2194
  %v2211 = vcombine.high %v2201, %v2201
  %v2212 = vcombine.high %v2155, %v2155
  %v2214 = vunpack.c.l.s4 1966171168
  %v2215 = vunpack.c.0.s8 %v2214
  %v2216 = vlaneseq
  %v2217 = vshrl.u32 %v2216, 7
  %v2218 = vsub.s32 %v2215, %v2217
  %v2219 = vrot.slane %v2155, %v2218
  %v2221 = vunpack.c.l.s4 1966171168
  %v2222 = vunpack.c.0.s8 %v2221
  %v2223 = vlaneseq
  %v2224 = vshrl.u32 %v2223, 7
  %v2225 = vsub.s32 %v2222, %v2224
  %v2226 = vrot.slane %v2212, %v2225
  %v2227 = vcombine.high %v2219, %v2219
  %v2228 = vcombine.high %v2226, %v2226
  %v2230 = vunpack.c.l.s4 1966171168
  %v2231 = vunpack.c.0.s8 %v2230
  %v2232 = vlaneseq
  %v2233 = vshrl.u32 %v2232, 7
  %v2234 = vsub.s32 %v2231, %v2233
  %v2235 = vrot.slane %v2219, %v2234
  %v2237 = vunpack.c.l.s4 1966171168
  %v2238 = vunpack.c.0.s8 %v2237
  %v2239 = vlaneseq
  %v2240 = vshrl.u32 %v2239, 7
  %v2241 = vsub.s32 %v2238, %v2240
  %v2242 = vrot.slane %v2226, %v2241
  %v2244 = vunpack.c.l.s4 1966171168
  %v2245 = vunpack.c.0.s8 %v2244
  %v2246 = vlaneseq
  %v2247 = vshrl.u32 %v2246, 7
  %v2248 = vsub.s32 %v2245, %v2247
  %v2249 = vrot.slane %v2227, %v2248
  %v2251 = vunpack.c.l.s4 1966171168
  %v2252 = vunpack.c.0.s8 %v2251
  %v2253 = vlaneseq
  %v2254 = vshrl.u32 %v2253, 7
  %v2255 = vsub.s32 %v2252, %v2254
  %v2256 = vrot.slane %v2228, %v2255
  %v2257 = vcombine.high %v2235, %v2235
  %v2258 = vcombine.high %v2242, %v2242
  %v2259 = vcombine.high %v2249, %v2249
  %v2260 = vcombine.high %v2159, %v2159
  %v2262 = vunpack.c.l.s4 1966171168
  %v2263 = vunpack.c.0.s8 %v2262
  %v2264 = vlaneseq
  %v2265 = vshrl.u32 %v2264, 7
  %v2266 = vsub.s32 %v2263, %v2265
  %v2267 = vrot.slane %v2159, %v2266
  %v2269 = vunpack.c.l.s4 1966171168
  %v2270 = vunpack.c.0.s8 %v2269
  %v2271 = vlaneseq
  %v2272 = vshrl.u32 %v2271, 7
  %v2273 = vsub.s32 %v2270, %v2272
  %v2274 = vrot.slane %v2260, %v2273
  %v2275 = vcombine.high %v2267, %v2267
  %v2276 = vcombine.high %v2274, %v2274
  %v2278 = vunpack.c.l.s4 1966171168
  %v2279 = vunpack.c.0.s8 %v2278
  %v2280 = vlaneseq
  %v2281 = vshrl.u32 %v2280, 7
  %v2282 = vsub.s32 %v2279, %v2281
  %v2283 = vrot.slane %v2267, %v2282
  %v2285 = vunpack.c.l.s4 1966171168
  %v2286 = vunpack.c.0.s8 %v2285
  %v2287 = vlaneseq
  %v2288 = vshrl.u32 %v2287, 7
  %v2289 = vsub.s32 %v2286, %v2288
  %v2290 = vrot.slane %v2274, %v2289
  %v2292 = vunpack.c.l.s4 1966171168
  %v2293 = vunpack.c.0.s8 %v2292
  %v2294 = vlaneseq
  %v2295 = vshrl.u32 %v2294, 7
  %v2296 = vsub.s32 %v2293, %v2295
  %v2297 = vrot.slane %v2275, %v2296
  %v2299 = vunpack.c.l.s4 1966171168
  %v2300 = vunpack.c.0.s8 %v2299
  %v2301 = vlaneseq
  %v2302 = vshrl.u32 %v2301, 7
  %v2303 = vsub.s32 %v2300, %v2302
  %v2304 = vrot.slane %v2276, %v2303
  %v2305 = vcombine.high %v2283, %v2283
  %v2306 = vcombine.high %v2290, %v2290
  %v2307 = vcombine.high %v2297, %v2297
  %v2308 = vcombine.high %v2163, %v2163
  %v2310 = vunpack.c.l.s4 1966171168
  %v2311 = vunpack.c.0.s8 %v2310
  %v2312 = vlaneseq
  %v2313 = vshrl.u32 %v2312, 7
  %v2314 = vsub.s32 %v2311, %v2313
  %v2315 = vrot.slane %v2163, %v2314
  %v2317 = vunpack.c.l.s4 1966171168
  %v2318 = vunpack.c.0.s8 %v2317
  %v2319 = vlaneseq
  %v2320 = vshrl.u32 %v2319, 7
  %v2321 = vsub.s32 %v2318, %v2320
  %v2322 = vrot.slane %v2308, %v2321
  %v2323 = vcombine.high %v2315, %v2315
  %v2324 = vcombine.high %v2322, %v2322
  %v2326 = vunpack.c.l.s4 1966171168
  %v2327 = vunpack.c.0.s8 %v2326
  %v2328 = vlaneseq
  %v2329 = vshrl.u32 %v2328, 7
  %v2330 = vsub.s32 %v2327, %v2329
  %v2331 = vrot.slane %v2315, %v2330
  %v2333 = vunpack.c.l.s4 1966171168
  %v2334 = vunpack.c.0.s8 %v2333
  %v2335 = vlaneseq
  %v2336 = vshrl.u32 %v2335, 7
  %v2337 = vsub.s32 %v2334, %v2336
  %v2338 = vrot.slane %v2322, %v2337
  %v2340 = vunpack.c.l.s4 1966171168
  %v2341 = vunpack.c.0.s8 %v2340
  %v2342 = vlaneseq
  %v2343 = vshrl.u32 %v2342, 7
  %v2344 = vsub.s32 %v2341, %v2343
  %v2345 = vrot.slane %v2323, %v2344
  %v2347 = vunpack.c.l.s4 1966171168
  %v2348 = vunpack.c.0.s8 %v2347
  %v2349 = vlaneseq
  %v2350 = vshrl.u32 %v2349, 7
  %v2351 = vsub.s32 %v2348, %v2350
  %v2352 = vrot.slane %v2324, %v2351
  %v2353 = vcombine.high %v2331, %v2331
  %v2354 = vcombine.high %v2338, %v2338
  %v2355 = vcombine.high %v2345, %v2345
  %v2384 = vadd.f32 %v766, %v2187
  %v2385 = vadd.f32 %v780, %v2201
  %v2386 = vadd.f32 %v788, %v2209
  %v2387 = vadd.f32 %v790, %v2211
  %v2388 = vadd.f32 %v773, %v2194
  %v2389 = vadd.f32 %v787, %v2208
  %v2390 = vadd.f32 %v789, %v2210
  %v2391 = vadd.f32 %v791, %v2235
  %v2392 = vadd.f32 %v815, %v2249
  %v2393 = vadd.f32 %v829, %v2257
  %v2394 = vadd.f32 %v837, %v2259
  %v2395 = vadd.f32 %v839, %v2242
  %v2396 = vadd.f32 %v822, %v2256
  %v2397 = vadd.f32 %v836, %v2258
  %v2398 = vadd.f32 %v838, %v2283
  %v2399 = vadd.f32 %v840, %v2297
  %v2400 = vadd.f32 %v864, %v2305
  %v2401 = vadd.f32 %v878, %v2307
  %v2402 = vadd.f32 %v886, %v2290
  %v2403 = vadd.f32 %v888, %v2304
  %v2404 = vadd.f32 %v871, %v2306
  %v2405 = vadd.f32 %v885, %v2331
  %v2406 = vadd.f32 %v887, %v2345
  %v2407 = vadd.f32 %v889, %v2353
  %v2408 = vadd.f32 %v904, %v2355
  %v2409 = vadd.f32 %v911, %v2338
  %v2410 = vadd.f32 %v912, %v2352
  %v2411 = vadd.f32 %v913, %v2354
  %v2412 = vtanh.pop %v2384
  %v2413 = vtanh.pop %v2385
  %v2414 = vtanh.pop %v2386
  %v2415 = vtanh.pop %v2387
  %v2416 = vtanh.pop %v2388
  %v2417 = vtanh.pop %v2389
  %v2418 = vtanh.pop %v2390
  %v2419 = vtanh.pop %v2391
  %v2420 = vtanh.pop %v2392
  %v2421 = vtanh.pop %v2393
  %v2422 = vtanh.pop %v2394
  %v2423 = vtanh.pop %v2395
  %v2424 = vtanh.pop %v2396
  %v2425 = vtanh.pop %v2397
  %v2426 = vtanh.pop %v2398
  %v2427 = vtanh.pop %v2399
  %v2428 = vtanh.pop %v2400
  %v2429 = vtanh.pop %v2401
  %v2430 = vtanh.pop %v2402
  %v2431 = vtanh.pop %v2403
  %v2432 = vtanh.pop %v2404
  %v2433 = vtanh.pop %v2405
  %v2434 = vtanh.pop %v2406
  %v2435 = vtanh.pop %v2407
  %v2436 = vtanh.pop %v2408
  %v2437 = vtanh.pop %v2409
  %v2438 = vtanh.pop %v2410
  %v2439 = vtanh.pop %v2411
  %v2440 = vmul.f32 %v2412, %v1361
  %v2441 = vmul.f32 %v2413, %v1375
  %v2442 = vmul.f32 %v2414, %v1383
  %v2443 = vmul.f32 %v2415, %v1385
  %v2444 = vmul.f32 %v2416, %v1368
  %v2445 = vmul.f32 %v2417, %v1382
  %v2446 = vmul.f32 %v2418, %v1384
  %v2447 = vmul.f32 %v2419, %v1361
  %v2448 = vmul.f32 %v2420, %v1375
  %v2449 = vmul.f32 %v2421, %v1383
  %v2450 = vmul.f32 %v2422, %v1385
  %v2451 = vmul.f32 %v2423, %v1368
  %v2452 = vmul.f32 %v2424, %v1382
  %v2453 = vmul.f32 %v2425, %v1384
  %v2454 = vmul.f32 %v2426, %v1361
  %v2455 = vmul.f32 %v2427, %v1375
  %v2456 = vmul.f32 %v2428, %v1383
  %v2457 = vmul.f32 %v2429, %v1385
  %v2458 = vmul.f32 %v2430, %v1368
  %v2459 = vmul.f32 %v2431, %v1382
  %v2460 = vmul.f32 %v2432, %v1384
  %v2461 = vmul.f32 %v2433, %v1361
  %v2462 = vmul.f32 %v2434, %v1375
  %v2463 = vmul.f32 %v2435, %v1383
  %v2464 = vmul.f32 %v2436, %v1385
  %v2465 = vmul.f32 %v2437, %v1368
  %v2466 = vmul.f32 %v2438, %v1382
  %v2467 = vmul.f32 %v2439, %v1384
  %v2496 = vcombine.low %v2440, %v2441
  %v2497 = vcombine.low %v2442, %v2443
  %v2498 = vcombine.low %v2444, %v2445
  %v2500 = vunpack.c.l.s4 1966171168
  %v2501 = vunpack.c.0.s8 %v2500
  %v2502 = vlaneseq
  %v2503 = vshrl.u32 %v2502, 7
  %v2504 = vsub.s32 %v2501, %v2503
  %v2505 = vrot.slane %v2496, %v2504
  %v2507 = vunpack.c.l.s4 1966171168
  %v2508 = vunpack.c.0.s8 %v2507
  %v2509 = vlaneseq
  %v2510 = vshrl.u32 %v2509, 7
  %v2511 = vsub.s32 %v2508, %v2510
  %v2512 = vrot.slane %v2497, %v2511
  %v2514 = vunpack.c.l.s4 1966171168
  %v2515 = vunpack.c.0.s8 %v2514
  %v2516 = vlaneseq
  %v2517 = vshrl.u32 %v2516, 7
  %v2518 = vsub.s32 %v2515, %v2517
  %v2519 = vrot.slane %v2498, %v2518
  %v2521 = vunpack.c.l.s4 1966171168
  %v2522 = vunpack.c.0.s8 %v2521
  %v2523 = vlaneseq
  %v2524 = vshrl.u32 %v2523, 7
  %v2525 = vsub.s32 %v2522, %v2524
  %v2526 = vrot.slane %v2446, %v2525
  %v2527 = vcombine.low %v2505, %v2512
  %v2528 = vcombine.low %v2519, %v2526
  %v2530 = vunpack.c.l.s4 1966171168
  %v2531 = vunpack.c.0.s8 %v2530
  %v2532 = vlaneseq
  %v2533 = vshrl.u32 %v2532, 7
  %v2534 = vsub.s32 %v2531, %v2533
  %v2535 = vrot.slane %v2527, %v2534
  %v2537 = vunpack.c.l.s4 1966171168
  %v2538 = vunpack.c.0.s8 %v2537
  %v2539 = vlaneseq
  %v2540 = vshrl.u32 %v2539, 7
  %v2541 = vsub.s32 %v2538, %v2540
  %v2542 = vrot.slane %v2528, %v2541
  %v2543 = vcombine.low %v2535, %v2542
  %v2544 = vcombine.low %v2447, %v2448
  %v2545 = vcombine.low %v2449, %v2450
  %v2546 = vcombine.low %v2451, %v2452
  %v2548 = vunpack.c.l.s4 1966171168
  %v2549 = vunpack.c.0.s8 %v2548
  %v2550 = vlaneseq
  %v2551 = vshrl.u32 %v2550, 7
  %v2552 = vsub.s32 %v2549, %v2551
  %v2553 = vrot.slane %v2544, %v2552
  %v2555 = vunpack.c.l.s4 1966171168
  %v2556 = vunpack.c.0.s8 %v2555
  %v2557 = vlaneseq
  %v2558 = vshrl.u32 %v2557, 7
  %v2559 = vsub.s32 %v2556, %v2558
  %v2560 = vrot.slane %v2545, %v2559
  %v2562 = vunpack.c.l.s4 1966171168
  %v2563 = vunpack.c.0.s8 %v2562
  %v2564 = vlaneseq
  %v2565 = vshrl.u32 %v2564, 7
  %v2566 = vsub.s32 %v2563, %v2565
  %v2567 = vrot.slane %v2546, %v2566
  %v2569 = vunpack.c.l.s4 1966171168
  %v2570 = vunpack.c.0.s8 %v2569
  %v2571 = vlaneseq
  %v2572 = vshrl.u32 %v2571, 7
  %v2573 = vsub.s32 %v2570, %v2572
  %v2574 = vrot.slane %v2453, %v2573
  %v2575 = vcombine.low %v2553, %v2560
  %v2576 = vcombine.low %v2567, %v2574
  %v2578 = vunpack.c.l.s4 1966171168
  %v2579 = vunpack.c.0.s8 %v2578
  %v2580 = vlaneseq
  %v2581 = vshrl.u32 %v2580, 7
  %v2582 = vsub.s32 %v2579, %v2581
  %v2583 = vrot.slane %v2575, %v2582
  %v2585 = vunpack.c.l.s4 1966171168
  %v2586 = vunpack.c.0.s8 %v2585
  %v2587 = vlaneseq
  %v2588 = vshrl.u32 %v2587, 7
  %v2589 = vsub.s32 %v2586, %v2588
  %v2590 = vrot.slane %v2576, %v2589
  %v2591 = vcombine.low %v2583, %v2590
  %v2592 = vcombine.low %v2454, %v2455
  %v2593 = vcombine.low %v2456, %v2457
  %v2594 = vcombine.low %v2458, %v2459
  %v2596 = vunpack.c.l.s4 1966171168
  %v2597 = vunpack.c.0.s8 %v2596
  %v2598 = vlaneseq
  %v2599 = vshrl.u32 %v2598, 7
  %v2600 = vsub.s32 %v2597, %v2599
  %v2601 = vrot.slane %v2592, %v2600
  %v2603 = vunpack.c.l.s4 1966171168
  %v2604 = vunpack.c.0.s8 %v2603
  %v2605 = vlaneseq
  %v2606 = vshrl.u32 %v2605, 7
  %v2607 = vsub.s32 %v2604, %v2606
  %v2608 = vrot.slane %v2593, %v2607
  %v2610 = vunpack.c.l.s4 1966171168
  %v2611 = vunpack.c.0.s8 %v2610
  %v2612 = vlaneseq
  %v2613 = vshrl.u32 %v2612, 7
  %v2614 = vsub.s32 %v2611, %v2613
  %v2615 = vrot.slane %v2594, %v2614
  %v2617 = vunpack.c.l.s4 1966171168
  %v2618 = vunpack.c.0.s8 %v2617
  %v2619 = vlaneseq
  %v2620 = vshrl.u32 %v2619, 7
  %v2621 = vsub.s32 %v2618, %v2620
  %v2622 = vrot.slane %v2460, %v2621
  %v2623 = vcombine.low %v2601, %v2608
  %v2624 = vcombine.low %v2615, %v2622
  %v2626 = vunpack.c.l.s4 1966171168
  %v2627 = vunpack.c.0.s8 %v2626
  %v2628 = vlaneseq
  %v2629 = vshrl.u32 %v2628, 7
  %v2630 = vsub.s32 %v2627, %v2629
  %v2631 = vrot.slane %v2623, %v2630
  %v2633 = vunpack.c.l.s4 1966171168
  %v2634 = vunpack.c.0.s8 %v2633
  %v2635 = vlaneseq
  %v2636 = vshrl.u32 %v2635, 7
  %v2637 = vsub.s32 %v2634, %v2636
  %v2638 = vrot.slane %v2624, %v2637
  %v2639 = vcombine.low %v2631, %v2638
  %v2640 = vcombine.low %v2461, %v2462
  %v2641 = vcombine.low %v2463, %v2464
  %v2642 = vcombine.low %v2465, %v2466
  %v2644 = vunpack.c.l.s4 1966171168
  %v2645 = vunpack.c.0.s8 %v2644
  %v2646 = vlaneseq
  %v2647 = vshrl.u32 %v2646, 7
  %v2648 = vsub.s32 %v2645, %v2647
  %v2649 = vrot.slane %v2640, %v2648
  %v2651 = vunpack.c.l.s4 1966171168
  %v2652 = vunpack.c.0.s8 %v2651
  %v2653 = vlaneseq
  %v2654 = vshrl.u32 %v2653, 7
  %v2655 = vsub.s32 %v2652, %v2654
  %v2656 = vrot.slane %v2641, %v2655
  %v2658 = vunpack.c.l.s4 1966171168
  %v2659 = vunpack.c.0.s8 %v2658
  %v2660 = vlaneseq
  %v2661 = vshrl.u32 %v2660, 7
  %v2662 = vsub.s32 %v2659, %v2661
  %v2663 = vrot.slane %v2642, %v2662
  %v2665 = vunpack.c.l.s4 1966171168
  %v2666 = vunpack.c.0.s8 %v2665
  %v2667 = vlaneseq
  %v2668 = vshrl.u32 %v2667, 7
  %v2669 = vsub.s32 %v2666, %v2668
  %v2670 = vrot.slane %v2467, %v2669
  %v2671 = vcombine.low %v2649, %v2656
  %v2672 = vcombine.low %v2663, %v2670
  %v2674 = vunpack.c.l.s4 1966171168
  %v2675 = vunpack.c.0.s8 %v2674
  %v2676 = vlaneseq
  %v2677 = vshrl.u32 %v2676, 7
  %v2678 = vsub.s32 %v2675, %v2677
  %v2679 = vrot.slane %v2671, %v2678
  %v2681 = vunpack.c.l.s4 1966171168
  %v2682 = vunpack.c.0.s8 %v2681
  %v2683 = vlaneseq
  %v2684 = vshrl.u32 %v2683, 7
  %v2685 = vsub.s32 %v2682, %v2684
  %v2686 = vrot.slane %v2672, %v2685
  %v2687 = vcombine.low %v2679, %v2686
  %v2692 = vsel %vm1645, %v2543, 0.0
  %2693 = vadd.xlane.f32.xlu0 %v2692
  %v2694 = vpop.xlane.xlu0 %2693
  %v2695 = vsel %vm1645, %v2591, 0.0
  %2696 = vadd.xlane.f32.xlu0 %v2695
  %v2697 = vpop.xlane.xlu0 %2696
  %v2698 = vsel %vm1645, %v2639, 0.0
  %2699 = vadd.xlane.f32.xlu0 %v2698
  %v2700 = vpop.xlane.xlu0 %2699
  %v2701 = vsel %vm1645, %v2687, 0.0
  %2702 = vadd.xlane.f32.xlu0 %v2701
  %v2703 = vpop.xlane.xlu0 %2702
  %v2704 = vadd.f32 %v2694, %v1658
  %v2705 = vadd.f32 %v2697, %v1658
  %v2706 = vadd.f32 %v2700, %v1658
  %v2707 = vadd.f32 %v2703, %v1658
  %v2712 = vlaneseq
  %v2713 = vshrl.u32 %v2712, 7
  %v2714 = vsub.s32 %v1668, %v2713
  %v2715 = vrot.slane %v2704, %v2714
  %v2716 = vlaneseq
  %v2717 = vshrl.u32 %v2716, 7
  %v2718 = vsub.s32 %v1668, %v2717
  %v2719 = vrot.slane %v2705, %v2718
  %v2720 = vlaneseq
  %v2721 = vshrl.u32 %v2720, 7
  %v2722 = vsub.s32 %v1668, %v2721
  %v2723 = vrot.slane %v2706, %v2722
  %v2724 = vlaneseq
  %v2725 = vshrl.u32 %v2724, 7
  %v2726 = vsub.s32 %v1668, %v2725
  %v2727 = vrot.slane %v2707, %v2726
  %v2728 = vsel %vm1685, %v2719, %v2715
  %v2729 = vsel %vm1687, %v2723, %v2728
  %v2730 = vsel %vm1689, %v2727, %v2729
  %v2732 = vsel %vm1692, %v2730, -inf
  %2733 = vmax.xlane.f32.xlu0 %v2732
  %v2734 = vpop.xlane.xlu0 %2733
  %v2736 = vlaneseq
  %v2737 = vshrl.u32 %v2736, 7
  %v2738 = vsub.s32 0, %v2737
  %v2739 = vrot.slane %v2734, %v2738
  %v2740 = vlaneseq
  %v2741 = vshrl.u32 %v2740, 7
  %v2742 = vsub.s32 1, %v2741
  %v2743 = vrot.slane %v2734, %v2742
  %v2744 = vlaneseq
  %v2745 = vshrl.u32 %v2744, 7
  %v2746 = vsub.s32 2, %v2745
  %v2747 = vrot.slane %v2734, %v2746
  %v2748 = vlaneseq
  %v2749 = vshrl.u32 %v2748, 7
  %v2750 = vsub.s32 3, %v2749
  %v2751 = vrot.slane %v2734, %v2750
  %v2756 = vsub.f32 %v2704, %v2739
  %v2757 = vsub.f32 %v2705, %v2743
  %v2758 = vsub.f32 %v2706, %v2747
  %v2759 = vsub.f32 %v2707, %v2751
  %v2760 = vmul.f32 %v2756, 1.442695
  %v2761 = vpow.pop %v2760
  %v2762 = vmul.f32 %v2757, 1.442695
  %v2763 = vpow.pop %v2762
  %v2764 = vmul.f32 %v2758, 1.442695
  %v2765 = vpow.pop %v2764
  %v2766 = vmul.f32 %v2759, 1.442695
  %v2767 = vpow.pop %v2766
  %2772 = vset.pattern.permute.xlu0 0
  %2773 = vperm.xlu0 %2772, %v2761
  %v2774 = vpop.permute.xlu0 %2773
  %2775 = vset.pattern.permute.xlu0 0
  %2776 = vperm.xlu0 %2775, %v2763
  %v2777 = vpop.permute.xlu0 %2776
  %2778 = vset.pattern.permute.xlu0 0
  %2779 = vperm.xlu0 %2778, %v2765
  %v2780 = vpop.permute.xlu0 %2779
  %2781 = vset.pattern.permute.xlu0 0
  %2782 = vperm.xlu0 %2781, %v2767
  %v2783 = vpop.permute.xlu0 %2782
  %v2784 = vlaneseq
  %v2785 = vshrl.u32 %v2784, 7
  %v2786 = vsub.s32 %v1668, %v2785
  %v2787 = vrot.slane %v2774, %v2786
  %v2788 = vlaneseq
  %v2789 = vshrl.u32 %v2788, 7
  %v2790 = vsub.s32 %v1668, %v2789
  %v2791 = vrot.slane %v2777, %v2790
  %v2792 = vlaneseq
  %v2793 = vshrl.u32 %v2792, 7
  %v2794 = vsub.s32 %v1668, %v2793
  %v2795 = vrot.slane %v2780, %v2794
  %v2796 = vlaneseq
  %v2797 = vshrl.u32 %v2796, 7
  %v2798 = vsub.s32 %v1668, %v2797
  %v2799 = vrot.slane %v2783, %v2798
  %v2800 = vsel %vm1685, %v2791, %v2787
  %v2801 = vsel %vm1687, %v2795, %v2800
  %v2802 = vsel %vm1689, %v2799, %v2801
  %v2804 = vsel %vm1692, %v2802, 0.0
  %2805 = vadd.xlane.f32.xlu0 %v2804
  %v2806 = vpop.xlane.xlu0 %2805
  %v2807 = vrcp.pop %v2806
  %v2809 = vlaneseq
  %v2810 = vshrl.u32 %v2809, 7
  %v2811 = vsub.s32 0, %v2810
  %v2812 = vrot.slane %v2807, %v2811
  %v2813 = vlaneseq
  %v2814 = vshrl.u32 %v2813, 7
  %v2815 = vsub.s32 1, %v2814
  %v2816 = vrot.slane %v2807, %v2815
  %v2817 = vlaneseq
  %v2818 = vshrl.u32 %v2817, 7
  %v2819 = vsub.s32 2, %v2818
  %v2820 = vrot.slane %v2807, %v2819
  %v2821 = vlaneseq
  %v2822 = vshrl.u32 %v2821, 7
  %v2823 = vsub.s32 3, %v2822
  %v2824 = vrot.slane %v2807, %v2823
  %v2829 = vmul.f32 %v2761, %v2812
  %v2830 = vmul.f32 %v2763, %v2816
  %v2831 = vmul.f32 %v2765, %v2820
  %v2832 = vmul.f32 %v2767, %v2824
  %2834 = vset.pattern.permute.xlu0 0
  %2835 = vperm.xlu0 %2834, %v2829
  %v2836 = vpop.permute.xlu0 %2835
  %2839 = vset.pattern.permute.xlu0 0
  %2840 = vperm.xlu0 %2839, %v2830
  %v2841 = vpop.permute.xlu0 %2840
  %2844 = vset.pattern.permute.xlu0 0
  %2845 = vperm.xlu0 %2844, %v2831
  %v2846 = vpop.permute.xlu0 %2845
  %2849 = vset.pattern.permute.xlu0 0
  %2850 = vperm.xlu0 %2849, %v2832
  %v2851 = vpop.permute.xlu0 %2850
  %v2853 = vmul.f32 %v2836, %v61
  %v2854 = vmul.f32 %v2841, %v62
  %v2855 = vmul.f32 %v2846, %v63
  %v2856 = vmul.f32 %v2851, %v64
  %v2857 = vsel %vm1645, %v2853, 0.0
  %v2858 = vrot.slane %v2857, 4
  %v2859 = vadd.f32 %v2857, %v2858
  %v2860 = vrot.slane %v2859, 2
  %v2861 = vadd.f32 %v2859, %v2860
  %v2862 = vrot.slane %v2861, 1
  %v2863 = vadd.f32 %v2861, %v2862
  %v2864 = vsel %vm1645, %v2854, 0.0
  %v2865 = vrot.slane %v2864, 4
  %v2866 = vadd.f32 %v2864, %v2865
  %v2867 = vrot.slane %v2866, 2
  %v2868 = vadd.f32 %v2866, %v2867
  %v2869 = vrot.slane %v2868, 1
  %v2870 = vadd.f32 %v2868, %v2869
  %v2871 = vsel %vm1645, %v2855, 0.0
  %v2872 = vrot.slane %v2871, 4
  %v2873 = vadd.f32 %v2871, %v2872
  %v2874 = vrot.slane %v2873, 2
  %v2875 = vadd.f32 %v2873, %v2874
  %v2876 = vrot.slane %v2875, 1
  %v2877 = vadd.f32 %v2875, %v2876
  %v2878 = vsel %vm1645, %v2856, 0.0
  %v2879 = vrot.slane %v2878, 4
  %v2880 = vadd.f32 %v2878, %v2879
  %v2881 = vrot.slane %v2880, 2
  %v2882 = vadd.f32 %v2880, %v2881
  %v2883 = vrot.slane %v2882, 1
  %v2884 = vadd.f32 %v2882, %v2883
  %v2889 = vsel %vm1685, %v2870, %v2863
  %v2890 = vsel %vm1687, %v2877, %v2889
  %v2891 = vsel %vm1689, %v2884, %v2890
  %2893 = vrot.lane.b32.xlu0 %v1847, 127
  %v2894 = vpop.permute.xlu0 %2893
  %v2896 = vsel %vm645, %v2891, 0
  %2898 = vmatprep.subr.mxu0 0.0
  %2899 = vmatpush1.msra.mxu0 %v88
  %2900 = vmatprep.subr.mxu0 0.0
  %2901 = vmatpush1.msra.mxu0 %v89
  %2902 = vmatprep.subr.mxu0 0.0
  %2903 = vmatpush1.msra.mxu0 %v90
  %2904 = vmatprep.subr.mxu0 0.0
  %2905 = vmatpush1.msra.mxu0 %v91
  %2906 = vmatprep.subr.mxu0 0.0
  %2907 = vmatpush1.msra.mxu0 0.0
  %2908 = vmatprep.subr.mxu0 0.0
  %2909 = vmatpush1.msra.mxu0 0.0
  %2910 = vmatprep.subr.mxu0 0.0
  %2911 = vmatpush1.msra.mxu0 0.0
  %2912 = vmatprep.subr.mxu0 0.0
  %2913 = vmatpush1.msra.mxu0 0.0
  %2914 = vmatprep.subr.mxu0 0.0
  %2915 = vmatpush1.msra.mxu0 0.0
  %2916 = vmatprep.subr.mxu0 0.0
  %2917 = vmatpush1.msra.mxu0 0.0
  %2918 = vmatprep.subr.mxu0 0.0
  %2919 = vmatpush1.msra.mxu0 0.0
  %2920 = vmatprep.subr.mxu0 0.0
  %2921 = vmatpush1.msra.mxu0 0.0
  %2922 = vmatprep.subr.mxu0 0.0
  %2923 = vmatpush1.msra.mxu0 0.0
  %2924 = vmatprep.subr.mxu0 0.0
  %2925 = vmatpush1.msra.mxu0 0.0
  %2926 = vmatprep.subr.mxu0 0.0
  %2927 = vmatpush1.msra.mxu0 0.0
  %2928 = vmatprep.subr.mxu0 0.0
  %2929 = vmatpush1.msra.mxu0 0.0
  %2930 = vmatprep.subr.mxu0 0.0
  %2931 = vmatpush1.msra.mxu0 0.0
  %2932 = vmatprep.subr.mxu0 0.0
  %2933 = vmatpush1.msra.mxu0 0.0
  %2934 = vmatprep.subr.mxu0 0.0
  %2935 = vmatpush1.msra.mxu0 0.0
  %2936 = vmatprep.subr.mxu0 0.0
  %2937 = vmatpush1.msra.mxu0 0.0
  %2938 = vmatprep.subr.mxu0 0.0
  %2939 = vmatpush1.msra.mxu0 0.0
  %2940 = vmatprep.subr.mxu0 0.0
  %2941 = vmatpush1.msra.mxu0 0.0
  %2942 = vmatprep.subr.mxu0 0.0
  %2943 = vmatpush1.msra.mxu0 0.0
  %2944 = vmatprep.subr.mxu0 0.0
  %2945 = vmatpush1.msra.mxu0 0.0
  %2946 = vmatprep.subr.mxu0 0.0
  %2947 = vmatpush1.msra.mxu0 0.0
  %2948 = vmatprep.subr.mxu0 0.0
  %2949 = vmatpush1.msra.mxu0 0.0
  %2950 = vmatprep.subr.mxu0 0.0
  %2951 = vmatpush1.msra.mxu0 0.0
  %2952 = vmatprep.subr.mxu0 0.0
  %2953 = vmatpush1.msra.mxu0 0.0
  %2954 = vmatprep.subr.mxu0 0.0
  %2955 = vmatpush1.msra.mxu0 0.0
  %2956 = vmatprep.subr.mxu0 0.0
  %2957 = vmatpush1.msra.mxu0 0.0
  %2958 = vmatprep.subr.mxu0 0.0
  %2959 = vmatpush1.msra.mxu0 0.0
  %2960 = vmatprep.subr.mxu0 0.0
  %2961 = vmatpush1.msra.mxu0 0.0
  %2962 = vmatprep.mubr.f32.mxu0 0.0
  %2963 = vmatmul.mubr.f32.gmra.mrb[0].mxu0 %v2896
  %v2964 = vpop.f32.mrb[0].mxu0
  %v2965 = vadd.f32 %v2894, %v2964
  %v2966 = vpop.f32.mrb[0].mxu0
  %2967 = vdwg.mxu0
  %v2968 = vadd.f32 %v2965, %v1927
  %2970 = vset.pattern.permute.xlu0 0
  %2971 = vperm.xlu0 %2970, %v2968
  %v2972 = vpop.permute.xlu0 %2971
  %v2974 = vmul.f32 %v2972, %v1938
  %v2975 = vsel %vm645, %v2047, 0
  %2977 = vmatprep.subr.mxu0 0.0
  %2978 = vmatpush1.msra.mxu0 %v83
  %2979 = vmatprep.subr.mxu0 0.0
  %2980 = vmatpush1.msra.mxu0 %v84
  %2981 = vmatprep.subr.mxu0 0.0
  %2982 = vmatpush1.msra.mxu0 %v85
  %2983 = vmatprep.subr.mxu0 0.0
  %2984 = vmatpush1.msra.mxu0 %v86
  %2985 = vmatprep.subr.mxu0 0.0
  %2986 = vmatpush1.msra.mxu0 0.0
  %2987 = vmatprep.subr.mxu0 0.0
  %2988 = vmatpush1.msra.mxu0 0.0
  %2989 = vmatprep.subr.mxu0 0.0
  %2990 = vmatpush1.msra.mxu0 0.0
  %2991 = vmatprep.subr.mxu0 0.0
  %2992 = vmatpush1.msra.mxu0 0.0
  %2993 = vmatprep.subr.mxu0 0.0
  %2994 = vmatpush1.msra.mxu0 0.0
  %2995 = vmatprep.subr.mxu0 0.0
  %2996 = vmatpush1.msra.mxu0 0.0
  %2997 = vmatprep.subr.mxu0 0.0
  %2998 = vmatpush1.msra.mxu0 0.0
  %2999 = vmatprep.subr.mxu0 0.0
  %3000 = vmatpush1.msra.mxu0 0.0
  %3001 = vmatprep.subr.mxu0 0.0
  %3002 = vmatpush1.msra.mxu0 0.0
  %3003 = vmatprep.subr.mxu0 0.0
  %3004 = vmatpush1.msra.mxu0 0.0
  %3005 = vmatprep.subr.mxu0 0.0
  %3006 = vmatpush1.msra.mxu0 0.0
  %3007 = vmatprep.subr.mxu0 0.0
  %3008 = vmatpush1.msra.mxu0 0.0
  %3009 = vmatprep.subr.mxu0 0.0
  %3010 = vmatpush1.msra.mxu0 0.0
  %3011 = vmatprep.subr.mxu0 0.0
  %3012 = vmatpush1.msra.mxu0 0.0
  %3013 = vmatprep.subr.mxu0 0.0
  %3014 = vmatpush1.msra.mxu0 0.0
  %3015 = vmatprep.subr.mxu0 0.0
  %3016 = vmatpush1.msra.mxu0 0.0
  %3017 = vmatprep.subr.mxu0 0.0
  %3018 = vmatpush1.msra.mxu0 0.0
  %3019 = vmatprep.subr.mxu0 0.0
  %3020 = vmatpush1.msra.mxu0 0.0
  %3021 = vmatprep.subr.mxu0 0.0
  %3022 = vmatpush1.msra.mxu0 0.0
  %3023 = vmatprep.subr.mxu0 0.0
  %3024 = vmatpush1.msra.mxu0 0.0
  %3025 = vmatprep.subr.mxu0 0.0
  %3026 = vmatpush1.msra.mxu0 0.0
  %3027 = vmatprep.subr.mxu0 0.0
  %3028 = vmatpush1.msra.mxu0 0.0
  %3029 = vmatprep.subr.mxu0 0.0
  %3030 = vmatpush1.msra.mxu0 0.0
  %3031 = vmatprep.subr.mxu0 0.0
  %3032 = vmatpush1.msra.mxu0 0.0
  %3033 = vmatprep.subr.mxu0 0.0
  %3034 = vmatpush1.msra.mxu0 0.0
  %3035 = vmatprep.subr.mxu0 0.0
  %3036 = vmatpush1.msra.mxu0 0.0
  %3037 = vmatprep.subr.mxu0 0.0
  %3038 = vmatpush1.msra.mxu0 0.0
  %3039 = vmatprep.subr.mxu0 0.0
  %3040 = vmatpush1.msra.mxu0 0.0
  %3041 = vmatprep.mubr.f32.mxu0 0.0
  %3042 = vmatmul.mubr.f32.gmra.mrb[0].mxu0 %v2975
  %v3043 = vpop.f32.mrb[0].mxu0
  %v3044 = vadd.f32 0.0, %v3043
  %v3045 = vpop.f32.mrb[0].mxu0
  %3046 = vdwg.mxu0
  %v3047 = vadd.f32 %v2974, %v3044
  %v3048 = vadd.f32 %v3047, %v2018
  %v3049 = vxor.u32 %v3048, 2147483648
  %v3050 = vmul.f32 %v3049, 1.442695
  %v3051 = vpow.pop %v3050
  %v3052 = vadd.f32 %v3051, 1.0
  %v3053 = vrcp.pop %v3052
  %v3054 = vmul.f32 1.0, %v3053
  %v3055 = vtanh.pop %v3048
  %v3056 = vmul.f32 %v3054, %v2038
  %3058 = vrot.lane.b32.xlu0 %v3055, 64
  %v3059 = vpop.permute.xlu0 %3058
  %v3061 = vmul.f32 %v3054, %v3059
  %3063 = vrot.lane.b32.xlu0 %v3061, 32
  %v3064 = vpop.permute.xlu0 %3063
  %v3066 = vadd.f32 %v3056, %v3064
  %v3067 = vtanh.pop %v3066
  %3069 = vrot.lane.b32.xlu0 %v3067, 64
  %v3070 = vpop.permute.xlu0 %3069
  %v3072 = vmul.f32 %v3054, %v3070
  %3074 = vrot.lane.b32.xlu0 %v3072, 32
  %v3075 = vpop.permute.xlu0 %3074
  %v3077 = vsel %vm645, %v3075, %v3066
  %v3079 = vsel %vm942, %v3077, 0
  %3081 = vmatprep.subr.mxu0 0.0
  %3082 = vmatpush1.msra.mxu0 %v66
  %3083 = vmatprep.subr.mxu0 0.0
  %3084 = vmatpush1.msra.mxu0 %v67
  %3085 = vmatprep.subr.mxu0 0.0
  %3086 = vmatpush1.msra.mxu0 %v68
  %3087 = vmatprep.subr.mxu0 0.0
  %3088 = vmatpush1.msra.mxu0 %v69
  %3089 = vmatprep.subr.mxu0 0.0
  %3090 = vmatpush1.msra.mxu0 %v70
  %3091 = vmatprep.subr.mxu0 0.0
  %3092 = vmatpush1.msra.mxu0 %v71
  %3093 = vmatprep.subr.mxu0 0.0
  %3094 = vmatpush1.msra.mxu0 %v72
  %3095 = vmatprep.subr.mxu0 0.0
  %3096 = vmatpush1.msra.mxu0 %v73
  %3097 = vmatprep.subr.mxu0 0.0
  %3098 = vmatpush1.msra.mxu0 0.0
  %3099 = vmatprep.subr.mxu0 0.0
  %3100 = vmatpush1.msra.mxu0 0.0
  %3101 = vmatprep.subr.mxu0 0.0
  %3102 = vmatpush1.msra.mxu0 0.0
  %3103 = vmatprep.subr.mxu0 0.0
  %3104 = vmatpush1.msra.mxu0 0.0
  %3105 = vmatprep.subr.mxu0 0.0
  %3106 = vmatpush1.msra.mxu0 0.0
  %3107 = vmatprep.subr.mxu0 0.0
  %3108 = vmatpush1.msra.mxu0 0.0
  %3109 = vmatprep.subr.mxu0 0.0
  %3110 = vmatpush1.msra.mxu0 0.0
  %3111 = vmatprep.subr.mxu0 0.0
  %3112 = vmatpush1.msra.mxu0 0.0
  %3113 = vmatprep.subr.mxu0 0.0
  %3114 = vmatpush1.msra.mxu0 0.0
  %3115 = vmatprep.subr.mxu0 0.0
  %3116 = vmatpush1.msra.mxu0 0.0
  %3117 = vmatprep.subr.mxu0 0.0
  %3118 = vmatpush1.msra.mxu0 0.0
  %3119 = vmatprep.subr.mxu0 0.0
  %3120 = vmatpush1.msra.mxu0 0.0
  %3121 = vmatprep.subr.mxu0 0.0
  %3122 = vmatpush1.msra.mxu0 0.0
  %3123 = vmatprep.subr.mxu0 0.0
  %3124 = vmatpush1.msra.mxu0 0.0
  %3125 = vmatprep.subr.mxu0 0.0
  %3126 = vmatpush1.msra.mxu0 0.0
  %3127 = vmatprep.subr.mxu0 0.0
  %3128 = vmatpush1.msra.mxu0 0.0
  %3129 = vmatprep.subr.mxu0 0.0
  %3130 = vmatpush1.msra.mxu0 0.0
  %3131 = vmatprep.subr.mxu0 0.0
  %3132 = vmatpush1.msra.mxu0 0.0
  %3133 = vmatprep.subr.mxu0 0.0
  %3134 = vmatpush1.msra.mxu0 0.0
  %3135 = vmatprep.subr.mxu0 0.0
  %3136 = vmatpush1.msra.mxu0 0.0
  %3137 = vmatprep.subr.mxu0 0.0
  %3138 = vmatpush1.msra.mxu0 0.0
  %3139 = vmatprep.subr.mxu0 0.0
  %3140 = vmatpush1.msra.mxu0 0.0
  %3141 = vmatprep.subr.mxu0 0.0
  %3142 = vmatpush1.msra.mxu0 0.0
  %3143 = vmatprep.subr.mxu0 0.0
  %3144 = vmatpush1.msra.mxu0 0.0
  %3145 = vmatprep.mubr.f32.mxu0 0.0
  %3146 = vmatmul.mubr.f32.gmra.mrb[0].mxu0 %v3079
  %v3147 = vpop.f32.mrb[0].mxu0
  %v3148 = vadd.f32 0.0, %v3147
  %v3149 = vpop.f32.mrb[0].mxu0
  %3150 = vdwg.mxu0
  %v3153 = vunpack.c.l.s4 1966171168
  %v3154 = vunpack.c.0.s8 %v3153
  %v3155 = vlaneseq
  %v3156 = vshrl.u32 %v3155, 7
  %v3157 = vsub.s32 %v3154, %v3156
  %v3158 = vrot.slane %v3148, %v3157
  %v3159 = vcombine.high %v3158, %v3158
  %v3161 = vunpack.c.l.s4 1966171168
  %v3162 = vunpack.c.0.s8 %v3161
  %v3163 = vlaneseq
  %v3164 = vshrl.u32 %v3163, 7
  %v3165 = vsub.s32 %v3162, %v3164
  %v3166 = vrot.slane %v3158, %v3165
  %v3168 = vunpack.c.l.s4 1966171168
  %v3169 = vunpack.c.0.s8 %v3168
  %v3170 = vlaneseq
  %v3171 = vshrl.u32 %v3170, 7
  %v3172 = vsub.s32 %v3169, %v3171
  %v3173 = vrot.slane %v3159, %v3172
  %v3174 = vcombine.high %v3166, %v3166
  %v3175 = vcombine.high %v3173, %v3173
  %v3176 = vlaneseq
  %v3177 = vshrl.u32 %v3176, 7
  %v3178 = vsub.s32 0, %v3177
  %v3179 = vrot.slane %v3166, %v3178
  %v3180 = vlaneseq
  %v3181 = vshrl.u32 %v3180, 7
  %v3182 = vsub.s32 0, %v3181
  %v3183 = vrot.slane %v3173, %v3182
  %v3184 = vlaneseq
  %v3185 = vshrl.u32 %v3184, 7
  %v3186 = vsub.s32 0, %v3185
  %v3187 = vrot.slane %v3174, %v3186
  %v3188 = vlaneseq
  %v3189 = vshrl.u32 %v3188, 7
  %v3190 = vsub.s32 0, %v3189
  %v3191 = vrot.slane %v3175, %v3190
  %v3192 = vcombine.high %v3179, %v3179
  %v3194 = vunpack.c.l.s4 1966171168
  %v3195 = vunpack.c.0.s8 %v3194
  %v3196 = vlaneseq
  %v3197 = vshrl.u32 %v3196, 7
  %v3198 = vsub.s32 %v3195, %v3197
  %v3199 = vrot.slane %v3179, %v3198
  %v3201 = vunpack.c.l.s4 1966171168
  %v3202 = vunpack.c.0.s8 %v3201
  %v3203 = vlaneseq
  %v3204 = vshrl.u32 %v3203, 7
  %v3205 = vsub.s32 %v3202, %v3204
  %v3206 = vrot.slane %v3192, %v3205
  %v3207 = vcombine.high %v3199, %v3199
  %v3208 = vcombine.high %v3206, %v3206
  %v3210 = vunpack.c.l.s4 1966171168
  %v3211 = vunpack.c.0.s8 %v3210
  %v3212 = vlaneseq
  %v3213 = vshrl.u32 %v3212, 7
  %v3214 = vsub.s32 %v3211, %v3213
  %v3215 = vrot.slane %v3199, %v3214
  %v3217 = vunpack.c.l.s4 1966171168
  %v3218 = vunpack.c.0.s8 %v3217
  %v3219 = vlaneseq
  %v3220 = vshrl.u32 %v3219, 7
  %v3221 = vsub.s32 %v3218, %v3220
  %v3222 = vrot.slane %v3206, %v3221
  %v3224 = vunpack.c.l.s4 1966171168
  %v3225 = vunpack.c.0.s8 %v3224
  %v3226 = vlaneseq
  %v3227 = vshrl.u32 %v3226, 7
  %v3228 = vsub.s32 %v3225, %v3227
  %v3229 = vrot.slane %v3207, %v3228
  %v3231 = vunpack.c.l.s4 1966171168
  %v3232 = vunpack.c.0.s8 %v3231
  %v3233 = vlaneseq
  %v3234 = vshrl.u32 %v3233, 7
  %v3235 = vsub.s32 %v3232, %v3234
  %v3236 = vrot.slane %v3208, %v3235
  %v3237 = vcombine.high %v3215, %v3215
  %v3238 = vcombine.high %v3222, %v3222
  %v3239 = vcombine.high %v3229, %v3229
  %v3240 = vcombine.high %v3183, %v3183
  %v3242 = vunpack.c.l.s4 1966171168
  %v3243 = vunpack.c.0.s8 %v3242
  %v3244 = vlaneseq
  %v3245 = vshrl.u32 %v3244, 7
  %v3246 = vsub.s32 %v3243, %v3245
  %v3247 = vrot.slane %v3183, %v3246
  %v3249 = vunpack.c.l.s4 1966171168
  %v3250 = vunpack.c.0.s8 %v3249
  %v3251 = vlaneseq
  %v3252 = vshrl.u32 %v3251, 7
  %v3253 = vsub.s32 %v3250, %v3252
  %v3254 = vrot.slane %v3240, %v3253
  %v3255 = vcombine.high %v3247, %v3247
  %v3256 = vcombine.high %v3254, %v3254
  %v3258 = vunpack.c.l.s4 1966171168
  %v3259 = vunpack.c.0.s8 %v3258
  %v3260 = vlaneseq
  %v3261 = vshrl.u32 %v3260, 7
  %v3262 = vsub.s32 %v3259, %v3261
  %v3263 = vrot.slane %v3247, %v3262
  %v3265 = vunpack.c.l.s4 1966171168
  %v3266 = vunpack.c.0.s8 %v3265
  %v3267 = vlaneseq
  %v3268 = vshrl.u32 %v3267, 7
  %v3269 = vsub.s32 %v3266, %v3268
  %v3270 = vrot.slane %v3254, %v3269
  %v3272 = vunpack.c.l.s4 1966171168
  %v3273 = vunpack.c.0.s8 %v3272
  %v3274 = vlaneseq
  %v3275 = vshrl.u32 %v3274, 7
  %v3276 = vsub.s32 %v3273, %v3275
  %v3277 = vrot.slane %v3255, %v3276
  %v3279 = vunpack.c.l.s4 1966171168
  %v3280 = vunpack.c.0.s8 %v3279
  %v3281 = vlaneseq
  %v3282 = vshrl.u32 %v3281, 7
  %v3283 = vsub.s32 %v3280, %v3282
  %v3284 = vrot.slane %v3256, %v3283
  %v3285 = vcombine.high %v3263, %v3263
  %v3286 = vcombine.high %v3270, %v3270
  %v3287 = vcombine.high %v3277, %v3277
  %v3288 = vcombine.high %v3187, %v3187
  %v3290 = vunpack.c.l.s4 1966171168
  %v3291 = vunpack.c.0.s8 %v3290
  %v3292 = vlaneseq
  %v3293 = vshrl.u32 %v3292, 7
  %v3294 = vsub.s32 %v3291, %v3293
  %v3295 = vrot.slane %v3187, %v3294
  %v3297 = vunpack.c.l.s4 1966171168
  %v3298 = vunpack.c.0.s8 %v3297
  %v3299 = vlaneseq
  %v3300 = vshrl.u32 %v3299, 7
  %v3301 = vsub.s32 %v3298, %v3300
  %v3302 = vrot.slane %v3288, %v3301
  %v3303 = vcombine.high %v3295, %v3295
  %v3304 = vcombine.high %v3302, %v3302
  %v3306 = vunpack.c.l.s4 1966171168
  %v3307 = vunpack.c.0.s8 %v3306
  %v3308 = vlaneseq
  %v3309 = vshrl.u32 %v3308, 7
  %v3310 = vsub.s32 %v3307, %v3309
  %v3311 = vrot.slane %v3295, %v3310
  %v3313 = vunpack.c.l.s4 1966171168
  %v3314 = vunpack.c.0.s8 %v3313
  %v3315 = vlaneseq
  %v3316 = vshrl.u32 %v3315, 7
  %v3317 = vsub.s32 %v3314, %v3316
  %v3318 = vrot.slane %v3302, %v3317
  %v3320 = vunpack.c.l.s4 1966171168
  %v3321 = vunpack.c.0.s8 %v3320
  %v3322 = vlaneseq
  %v3323 = vshrl.u32 %v3322, 7
  %v3324 = vsub.s32 %v3321, %v3323
  %v3325 = vrot.slane %v3303, %v3324
  %v3327 = vunpack.c.l.s4 1966171168
  %v3328 = vunpack.c.0.s8 %v3327
  %v3329 = vlaneseq
  %v3330 = vshrl.u32 %v3329, 7
  %v3331 = vsub.s32 %v3328, %v3330
  %v3332 = vrot.slane %v3304, %v3331
  %v3333 = vcombine.high %v3311, %v3311
  %v3334 = vcombine.high %v3318, %v3318
  %v3335 = vcombine.high %v3325, %v3325
  %v3336 = vcombine.high %v3191, %v3191
  %v3338 = vunpack.c.l.s4 1966171168
  %v3339 = vunpack.c.0.s8 %v3338
  %v3340 = vlaneseq
  %v3341 = vshrl.u32 %v3340, 7
  %v3342 = vsub.s32 %v3339, %v3341
  %v3343 = vrot.slane %v3191, %v3342
  %v3345 = vunpack.c.l.s4 1966171168
  %v3346 = vunpack.c.0.s8 %v3345
  %v3347 = vlaneseq
  %v3348 = vshrl.u32 %v3347, 7
  %v3349 = vsub.s32 %v3346, %v3348
  %v3350 = vrot.slane %v3336, %v3349
  %v3351 = vcombine.high %v3343, %v3343
  %v3352 = vcombine.high %v3350, %v3350
  %v3354 = vunpack.c.l.s4 1966171168
  %v3355 = vunpack.c.0.s8 %v3354
  %v3356 = vlaneseq
  %v3357 = vshrl.u32 %v3356, 7
  %v3358 = vsub.s32 %v3355, %v3357
  %v3359 = vrot.slane %v3343, %v3358
  %v3361 = vunpack.c.l.s4 1966171168
  %v3362 = vunpack.c.0.s8 %v3361
  %v3363 = vlaneseq
  %v3364 = vshrl.u32 %v3363, 7
  %v3365 = vsub.s32 %v3362, %v3364
  %v3366 = vrot.slane %v3350, %v3365
  %v3368 = vunpack.c.l.s4 1966171168
  %v3369 = vunpack.c.0.s8 %v3368
  %v3370 = vlaneseq
  %v3371 = vshrl.u32 %v3370, 7
  %v3372 = vsub.s32 %v3369, %v3371
  %v3373 = vrot.slane %v3351, %v3372
  %v3375 = vunpack.c.l.s4 1966171168
  %v3376 = vunpack.c.0.s8 %v3375
  %v3377 = vlaneseq
  %v3378 = vshrl.u32 %v3377, 7
  %v3379 = vsub.s32 %v3376, %v3378
  %v3380 = vrot.slane %v3352, %v3379
  %v3381 = vcombine.high %v3359, %v3359
  %v3382 = vcombine.high %v3366, %v3366
  %v3383 = vcombine.high %v3373, %v3373
  %v3412 = vadd.f32 %v766, %v3215
  %v3413 = vadd.f32 %v780, %v3229
  %v3414 = vadd.f32 %v788, %v3237
  %v3415 = vadd.f32 %v790, %v3239
  %v3416 = vadd.f32 %v773, %v3222
  %v3417 = vadd.f32 %v787, %v3236
  %v3418 = vadd.f32 %v789, %v3238
  %v3419 = vadd.f32 %v791, %v3263
  %v3420 = vadd.f32 %v815, %v3277
  %v3421 = vadd.f32 %v829, %v3285
  %v3422 = vadd.f32 %v837, %v3287
  %v3423 = vadd.f32 %v839, %v3270
  %v3424 = vadd.f32 %v822, %v3284
  %v3425 = vadd.f32 %v836, %v3286
  %v3426 = vadd.f32 %v838, %v3311
  %v3427 = vadd.f32 %v840, %v3325
  %v3428 = vadd.f32 %v864, %v3333
  %v3429 = vadd.f32 %v878, %v3335
  %v3430 = vadd.f32 %v886, %v3318
  %v3431 = vadd.f32 %v888, %v3332
  %v3432 = vadd.f32 %v871, %v3334
  %v3433 = vadd.f32 %v885, %v3359
  %v3434 = vadd.f32 %v887, %v3373
  %v3435 = vadd.f32 %v889, %v3381
  %v3436 = vadd.f32 %v904, %v3383
  %v3437 = vadd.f32 %v911, %v3366
  %v3438 = vadd.f32 %v912, %v3380
  %v3439 = vadd.f32 %v913, %v3382
  %v3440 = vtanh.pop %v3412
  %v3441 = vtanh.pop %v3413
  %v3442 = vtanh.pop %v3414
  %v3443 = vtanh.pop %v3415
  %v3444 = vtanh.pop %v3416
  %v3445 = vtanh.pop %v3417
  %v3446 = vtanh.pop %v3418
  %v3447 = vtanh.pop %v3419
  %v3448 = vtanh.pop %v3420
  %v3449 = vtanh.pop %v3421
  %v3450 = vtanh.pop %v3422
  %v3451 = vtanh.pop %v3423
  %v3452 = vtanh.pop %v3424
  %v3453 = vtanh.pop %v3425
  %v3454 = vtanh.pop %v3426
  %v3455 = vtanh.pop %v3427
  %v3456 = vtanh.pop %v3428
  %v3457 = vtanh.pop %v3429
  %v3458 = vtanh.pop %v3430
  %v3459 = vtanh.pop %v3431
  %v3460 = vtanh.pop %v3432
  %v3461 = vtanh.pop %v3433
  %v3462 = vtanh.pop %v3434
  %v3463 = vtanh.pop %v3435
  %v3464 = vtanh.pop %v3436
  %v3465 = vtanh.pop %v3437
  %v3466 = vtanh.pop %v3438
  %v3467 = vtanh.pop %v3439
  %v3468 = vmul.f32 %v3440, %v1361
  %v3469 = vmul.f32 %v3441, %v1375
  %v3470 = vmul.f32 %v3442, %v1383
  %v3471 = vmul.f32 %v3443, %v1385
  %v3472 = vmul.f32 %v3444, %v1368
  %v3473 = vmul.f32 %v3445, %v1382
  %v3474 = vmul.f32 %v3446, %v1384
  %v3475 = vmul.f32 %v3447, %v1361
  %v3476 = vmul.f32 %v3448, %v1375
  %v3477 = vmul.f32 %v3449, %v1383
  %v3478 = vmul.f32 %v3450, %v1385
  %v3479 = vmul.f32 %v3451, %v1368
  %v3480 = vmul.f32 %v3452, %v1382
  %v3481 = vmul.f32 %v3453, %v1384
  %v3482 = vmul.f32 %v3454, %v1361
  %v3483 = vmul.f32 %v3455, %v1375
  %v3484 = vmul.f32 %v3456, %v1383
  %v3485 = vmul.f32 %v3457, %v1385
  %v3486 = vmul.f32 %v3458, %v1368
  %v3487 = vmul.f32 %v3459, %v1382
  %v3488 = vmul.f32 %v3460, %v1384
  %v3489 = vmul.f32 %v3461, %v1361
  %v3490 = vmul.f32 %v3462, %v1375
  %v3491 = vmul.f32 %v3463, %v1383
  %v3492 = vmul.f32 %v3464, %v1385
  %v3493 = vmul.f32 %v3465, %v1368
  %v3494 = vmul.f32 %v3466, %v1382
  %v3495 = vmul.f32 %v3467, %v1384
  %v3524 = vcombine.low %v3468, %v3469
  %v3525 = vcombine.low %v3470, %v3471
  %v3526 = vcombine.low %v3472, %v3473
  %v3528 = vunpack.c.l.s4 1966171168
  %v3529 = vunpack.c.0.s8 %v3528
  %v3530 = vlaneseq
  %v3531 = vshrl.u32 %v3530, 7
  %v3532 = vsub.s32 %v3529, %v3531
  %v3533 = vrot.slane %v3524, %v3532
  %v3535 = vunpack.c.l.s4 1966171168
  %v3536 = vunpack.c.0.s8 %v3535
  %v3537 = vlaneseq
  %v3538 = vshrl.u32 %v3537, 7
  %v3539 = vsub.s32 %v3536, %v3538
  %v3540 = vrot.slane %v3525, %v3539
  %v3542 = vunpack.c.l.s4 1966171168
  %v3543 = vunpack.c.0.s8 %v3542
  %v3544 = vlaneseq
  %v3545 = vshrl.u32 %v3544, 7
  %v3546 = vsub.s32 %v3543, %v3545
  %v3547 = vrot.slane %v3526, %v3546
  %v3549 = vunpack.c.l.s4 1966171168
  %v3550 = vunpack.c.0.s8 %v3549
  %v3551 = vlaneseq
  %v3552 = vshrl.u32 %v3551, 7
  %v3553 = vsub.s32 %v3550, %v3552
  %v3554 = vrot.slane %v3474, %v3553
  %v3555 = vcombine.low %v3533, %v3540
  %v3556 = vcombine.low %v3547, %v3554
  %v3558 = vunpack.c.l.s4 1966171168
  %v3559 = vunpack.c.0.s8 %v3558
  %v3560 = vlaneseq
  %v3561 = vshrl.u32 %v3560, 7
  %v3562 = vsub.s32 %v3559, %v3561
  %v3563 = vrot.slane %v3555, %v3562
  %v3565 = vunpack.c.l.s4 1966171168
  %v3566 = vunpack.c.0.s8 %v3565
  %v3567 = vlaneseq
  %v3568 = vshrl.u32 %v3567, 7
  %v3569 = vsub.s32 %v3566, %v3568
  %v3570 = vrot.slane %v3556, %v3569
  %v3571 = vcombine.low %v3563, %v3570
  %v3572 = vcombine.low %v3475, %v3476
  %v3573 = vcombine.low %v3477, %v3478
  %v3574 = vcombine.low %v3479, %v3480
  %v3576 = vunpack.c.l.s4 1966171168
  %v3577 = vunpack.c.0.s8 %v3576
  %v3578 = vlaneseq
  %v3579 = vshrl.u32 %v3578, 7
  %v3580 = vsub.s32 %v3577, %v3579
  %v3581 = vrot.slane %v3572, %v3580
  %v3583 = vunpack.c.l.s4 1966171168
  %v3584 = vunpack.c.0.s8 %v3583
  %v3585 = vlaneseq
  %v3586 = vshrl.u32 %v3585, 7
  %v3587 = vsub.s32 %v3584, %v3586
  %v3588 = vrot.slane %v3573, %v3587
  %v3590 = vunpack.c.l.s4 1966171168
  %v3591 = vunpack.c.0.s8 %v3590
  %v3592 = vlaneseq
  %v3593 = vshrl.u32 %v3592, 7
  %v3594 = vsub.s32 %v3591, %v3593
  %v3595 = vrot.slane %v3574, %v3594
  %v3597 = vunpack.c.l.s4 1966171168
  %v3598 = vunpack.c.0.s8 %v3597
  %v3599 = vlaneseq
  %v3600 = vshrl.u32 %v3599, 7
  %v3601 = vsub.s32 %v3598, %v3600
  %v3602 = vrot.slane %v3481, %v3601
  %v3603 = vcombine.low %v3581, %v3588
  %v3604 = vcombine.low %v3595, %v3602
  %v3606 = vunpack.c.l.s4 1966171168
  %v3607 = vunpack.c.0.s8 %v3606
  %v3608 = vlaneseq
  %v3609 = vshrl.u32 %v3608, 7
  %v3610 = vsub.s32 %v3607, %v3609
  %v3611 = vrot.slane %v3603, %v3610
  %v3613 = vunpack.c.l.s4 1966171168
  %v3614 = vunpack.c.0.s8 %v3613
  %v3615 = vlaneseq
  %v3616 = vshrl.u32 %v3615, 7
  %v3617 = vsub.s32 %v3614, %v3616
  %v3618 = vrot.slane %v3604, %v3617
  %v3619 = vcombine.low %v3611, %v3618
  %v3620 = vcombine.low %v3482, %v3483
  %v3621 = vcombine.low %v3484, %v3485
  %v3622 = vcombine.low %v3486, %v3487
  %v3624 = vunpack.c.l.s4 1966171168
  %v3625 = vunpack.c.0.s8 %v3624
  %v3626 = vlaneseq
  %v3627 = vshrl.u32 %v3626, 7
  %v3628 = vsub.s32 %v3625, %v3627
  %v3629 = vrot.slane %v3620, %v3628
  %v3631 = vunpack.c.l.s4 1966171168
  %v3632 = vunpack.c.0.s8 %v3631
  %v3633 = vlaneseq
  %v3634 = vshrl.u32 %v3633, 7
  %v3635 = vsub.s32 %v3632, %v3634
  %v3636 = vrot.slane %v3621, %v3635
  %v3638 = vunpack.c.l.s4 1966171168
  %v3639 = vunpack.c.0.s8 %v3638
  %v3640 = vlaneseq
  %v3641 = vshrl.u32 %v3640, 7
  %v3642 = vsub.s32 %v3639, %v3641
  %v3643 = vrot.slane %v3622, %v3642
  %v3645 = vunpack.c.l.s4 1966171168
  %v3646 = vunpack.c.0.s8 %v3645
  %v3647 = vlaneseq
  %v3648 = vshrl.u32 %v3647, 7
  %v3649 = vsub.s32 %v3646, %v3648
  %v3650 = vrot.slane %v3488, %v3649
  %v3651 = vcombine.low %v3629, %v3636
  %v3652 = vcombine.low %v3643, %v3650
  %v3654 = vunpack.c.l.s4 1966171168
  %v3655 = vunpack.c.0.s8 %v3654
  %v3656 = vlaneseq
  %v3657 = vshrl.u32 %v3656, 7
  %v3658 = vsub.s32 %v3655, %v3657
  %v3659 = vrot.slane %v3651, %v3658
  %v3661 = vunpack.c.l.s4 1966171168
  %v3662 = vunpack.c.0.s8 %v3661
  %v3663 = vlaneseq
  %v3664 = vshrl.u32 %v3663, 7
  %v3665 = vsub.s32 %v3662, %v3664
  %v3666 = vrot.slane %v3652, %v3665
  %v3667 = vcombine.low %v3659, %v3666
  %v3668 = vcombine.low %v3489, %v3490
  %v3669 = vcombine.low %v3491, %v3492
  %v3670 = vcombine.low %v3493, %v3494
  %v3672 = vunpack.c.l.s4 1966171168
  %v3673 = vunpack.c.0.s8 %v3672
  %v3674 = vlaneseq
  %v3675 = vshrl.u32 %v3674, 7
  %v3676 = vsub.s32 %v3673, %v3675
  %v3677 = vrot.slane %v3668, %v3676
  %v3679 = vunpack.c.l.s4 1966171168
  %v3680 = vunpack.c.0.s8 %v3679
  %v3681 = vlaneseq
  %v3682 = vshrl.u32 %v3681, 7
  %v3683 = vsub.s32 %v3680, %v3682
  %v3684 = vrot.slane %v3669, %v3683
  %v3686 = vunpack.c.l.s4 1966171168
  %v3687 = vunpack.c.0.s8 %v3686
  %v3688 = vlaneseq
  %v3689 = vshrl.u32 %v3688, 7
  %v3690 = vsub.s32 %v3687, %v3689
  %v3691 = vrot.slane %v3670, %v3690
  %v3693 = vunpack.c.l.s4 1966171168
  %v3694 = vunpack.c.0.s8 %v3693
  %v3695 = vlaneseq
  %v3696 = vshrl.u32 %v3695, 7
  %v3697 = vsub.s32 %v3694, %v3696
  %v3698 = vrot.slane %v3495, %v3697
  %v3699 = vcombine.low %v3677, %v3684
  %v3700 = vcombine.low %v3691, %v3698
  %v3702 = vunpack.c.l.s4 1966171168
  %v3703 = vunpack.c.0.s8 %v3702
  %v3704 = vlaneseq
  %v3705 = vshrl.u32 %v3704, 7
  %v3706 = vsub.s32 %v3703, %v3705
  %v3707 = vrot.slane %v3699, %v3706
  %v3709 = vunpack.c.l.s4 1966171168
  %v3710 = vunpack.c.0.s8 %v3709
  %v3711 = vlaneseq
  %v3712 = vshrl.u32 %v3711, 7
  %v3713 = vsub.s32 %v3710, %v3712
  %v3714 = vrot.slane %v3700, %v3713
  %v3715 = vcombine.low %v3707, %v3714
  %v3720 = vsel %vm1645, %v3571, 0.0
  %3721 = vadd.xlane.f32.xlu0 %v3720
  %v3722 = vpop.xlane.xlu0 %3721
  %v3723 = vsel %vm1645, %v3619, 0.0
  %3724 = vadd.xlane.f32.xlu0 %v3723
  %v3725 = vpop.xlane.xlu0 %3724
  %v3726 = vsel %vm1645, %v3667, 0.0
  %3727 = vadd.xlane.f32.xlu0 %v3726
  %v3728 = vpop.xlane.xlu0 %3727
  %v3729 = vsel %vm1645, %v3715, 0.0
  %3730 = vadd.xlane.f32.xlu0 %v3729
  %v3731 = vpop.xlane.xlu0 %3730
  %v3732 = vadd.f32 %v3722, %v1658
  %v3733 = vadd.f32 %v3725, %v1658
  %v3734 = vadd.f32 %v3728, %v1658
  %v3735 = vadd.f32 %v3731, %v1658
  %v3740 = vlaneseq
  %v3741 = vshrl.u32 %v3740, 7
  %v3742 = vsub.s32 %v1668, %v3741
  %v3743 = vrot.slane %v3732, %v3742
  %v3744 = vlaneseq
  %v3745 = vshrl.u32 %v3744, 7
  %v3746 = vsub.s32 %v1668, %v3745
  %v3747 = vrot.slane %v3733, %v3746
  %v3748 = vlaneseq
  %v3749 = vshrl.u32 %v3748, 7
  %v3750 = vsub.s32 %v1668, %v3749
  %v3751 = vrot.slane %v3734, %v3750
  %v3752 = vlaneseq
  %v3753 = vshrl.u32 %v3752, 7
  %v3754 = vsub.s32 %v1668, %v3753
  %v3755 = vrot.slane %v3735, %v3754
  %v3756 = vsel %vm1685, %v3747, %v3743
  %v3757 = vsel %vm1687, %v3751, %v3756
  %v3758 = vsel %vm1689, %v3755, %v3757
  %v3760 = vsel %vm1692, %v3758, -inf
  %3761 = vmax.xlane.f32.xlu0 %v3760
  %v3762 = vpop.xlane.xlu0 %3761
  %v3764 = vlaneseq
  %v3765 = vshrl.u32 %v3764, 7
  %v3766 = vsub.s32 0, %v3765
  %v3767 = vrot.slane %v3762, %v3766
  %v3768 = vlaneseq
  %v3769 = vshrl.u32 %v3768, 7
  %v3770 = vsub.s32 1, %v3769
  %v3771 = vrot.slane %v3762, %v3770
  %v3772 = vlaneseq
  %v3773 = vshrl.u32 %v3772, 7
  %v3774 = vsub.s32 2, %v3773
  %v3775 = vrot.slane %v3762, %v3774
  %v3776 = vlaneseq
  %v3777 = vshrl.u32 %v3776, 7
  %v3778 = vsub.s32 3, %v3777
  %v3779 = vrot.slane %v3762, %v3778
  %v3784 = vsub.f32 %v3732, %v3767
  %v3785 = vsub.f32 %v3733, %v3771
  %v3786 = vsub.f32 %v3734, %v3775
  %v3787 = vsub.f32 %v3735, %v3779
  %v3788 = vmul.f32 %v3784, 1.442695
  %v3789 = vpow.pop %v3788
  %v3790 = vmul.f32 %v3785, 1.442695
  %v3791 = vpow.pop %v3790
  %v3792 = vmul.f32 %v3786, 1.442695
  %v3793 = vpow.pop %v3792
  %v3794 = vmul.f32 %v3787, 1.442695
  %v3795 = vpow.pop %v3794
  %3800 = vset.pattern.permute.xlu0 0
  %3801 = vperm.xlu0 %3800, %v3789
  %v3802 = vpop.permute.xlu0 %3801
  %3803 = vset.pattern.permute.xlu0 0
  %3804 = vperm.xlu0 %3803, %v3791
  %v3805 = vpop.permute.xlu0 %3804
  %3806 = vset.pattern.permute.xlu0 0
  %3807 = vperm.xlu0 %3806, %v3793
  %v3808 = vpop.permute.xlu0 %3807
  %3809 = vset.pattern.permute.xlu0 0
  %3810 = vperm.xlu0 %3809, %v3795
  %v3811 = vpop.permute.xlu0 %3810
  %v3812 = vlaneseq
  %v3813 = vshrl.u32 %v3812, 7
  %v3814 = vsub.s32 %v1668, %v3813
  %v3815 = vrot.slane %v3802, %v3814
  %v3816 = vlaneseq
  %v3817 = vshrl.u32 %v3816, 7
  %v3818 = vsub.s32 %v1668, %v3817
  %v3819 = vrot.slane %v3805, %v3818
  %v3820 = vlaneseq
  %v3821 = vshrl.u32 %v3820, 7
  %v3822 = vsub.s32 %v1668, %v3821
  %v3823 = vrot.slane %v3808, %v3822
  %v3824 = vlaneseq
  %v3825 = vshrl.u32 %v3824, 7
  %v3826 = vsub.s32 %v1668, %v3825
  %v3827 = vrot.slane %v3811, %v3826
  %v3828 = vsel %vm1685, %v3819, %v3815
  %v3829 = vsel %vm1687, %v3823, %v3828
  %v3830 = vsel %vm1689, %v3827, %v3829
  %v3832 = vsel %vm1692, %v3830, 0.0
  %3833 = vadd.xlane.f32.xlu0 %v3832
  %v3834 = vpop.xlane.xlu0 %3833
  %v3835 = vrcp.pop %v3834
  %v3837 = vlaneseq
  %v3838 = vshrl.u32 %v3837, 7
  %v3839 = vsub.s32 0, %v3838
  %v3840 = vrot.slane %v3835, %v3839
  %v3841 = vlaneseq
  %v3842 = vshrl.u32 %v3841, 7
  %v3843 = vsub.s32 1, %v3842
  %v3844 = vrot.slane %v3835, %v3843
  %v3845 = vlaneseq
  %v3846 = vshrl.u32 %v3845, 7
  %v3847 = vsub.s32 2, %v3846
  %v3848 = vrot.slane %v3835, %v3847
  %v3849 = vlaneseq
  %v3850 = vshrl.u32 %v3849, 7
  %v3851 = vsub.s32 3, %v3850
  %v3852 = vrot.slane %v3835, %v3851
  %v3857 = vmul.f32 %v3789, %v3840
  %v3858 = vmul.f32 %v3791, %v3844
  %v3859 = vmul.f32 %v3793, %v3848
  %v3860 = vmul.f32 %v3795, %v3852
  %3862 = vset.pattern.permute.xlu0 0
  %3863 = vperm.xlu0 %3862, %v3857
  %v3864 = vpop.permute.xlu0 %3863
  %3867 = vset.pattern.permute.xlu0 0
  %3868 = vperm.xlu0 %3867, %v3858
  %v3869 = vpop.permute.xlu0 %3868
  %3872 = vset.pattern.permute.xlu0 0
  %3873 = vperm.xlu0 %3872, %v3859
  %v3874 = vpop.permute.xlu0 %3873
  %3877 = vset.pattern.permute.xlu0 0
  %3878 = vperm.xlu0 %3877, %v3860
  %v3879 = vpop.permute.xlu0 %3878
  %v3881 = vmul.f32 %v3864, %v61
  %v3882 = vmul.f32 %v3869, %v62
  %v3883 = vmul.f32 %v3874, %v63
  %v3884 = vmul.f32 %v3879, %v64
  %v3885 = vsel %vm1645, %v3881, 0.0
  %v3886 = vrot.slane %v3885, 4
  %v3887 = vadd.f32 %v3885, %v3886
  %v3888 = vrot.slane %v3887, 2
  %v3889 = vadd.f32 %v3887, %v3888
  %v3890 = vrot.slane %v3889, 1
  %v3891 = vadd.f32 %v3889, %v3890
  %v3892 = vsel %vm1645, %v3882, 0.0
  %v3893 = vrot.slane %v3892, 4
  %v3894 = vadd.f32 %v3892, %v3893
  %v3895 = vrot.slane %v3894, 2
  %v3896 = vadd.f32 %v3894, %v3895
  %v3897 = vrot.slane %v3896, 1
  %v3898 = vadd.f32 %v3896, %v3897
  %v3899 = vsel %vm1645, %v3883, 0.0
  %v3900 = vrot.slane %v3899, 4
  %v3901 = vadd.f32 %v3899, %v3900
  %v3902 = vrot.slane %v3901, 2
  %v3903 = vadd.f32 %v3901, %v3902
  %v3904 = vrot.slane %v3903, 1
  %v3905 = vadd.f32 %v3903, %v3904
  %v3906 = vsel %vm1645, %v3884, 0.0
  %v3907 = vrot.slane %v3906, 4
  %v3908 = vadd.f32 %v3906, %v3907
  %v3909 = vrot.slane %v3908, 2
  %v3910 = vadd.f32 %v3908, %v3909
  %v3911 = vrot.slane %v3910, 1
  %v3912 = vadd.f32 %v3910, %v3911
  %v3917 = vsel %vm1685, %v3898, %v3891
  %v3918 = vsel %vm1687, %v3905, %v3917
  %v3919 = vsel %vm1689, %v3912, %v3918
  %3920 = vrot.lane.b32.xlu0 %v1847, 126
  %v3921 = vpop.permute.xlu0 %3920
  %v3923 = vsel %vm645, %v3919, 0
  %3925 = vmatprep.subr.mxu0 0.0
  %3926 = vmatpush1.msra.mxu0 %v88
  %3927 = vmatprep.subr.mxu0 0.0
  %3928 = vmatpush1.msra.mxu0 %v89
  %3929 = vmatprep.subr.mxu0 0.0
  %3930 = vmatpush1.msra.mxu0 %v90
  %3931 = vmatprep.subr.mxu0 0.0
  %3932 = vmatpush1.msra.mxu0 %v91
  %3933 = vmatprep.subr.mxu0 0.0
  %3934 = vmatpush1.msra.mxu0 0.0
  %3935 = vmatprep.subr.mxu0 0.0
  %3936 = vmatpush1.msra.mxu0 0.0
  %3937 = vmatprep.subr.mxu0 0.0
  %3938 = vmatpush1.msra.mxu0 0.0
  %3939 = vmatprep.subr.mxu0 0.0
  %3940 = vmatpush1.msra.mxu0 0.0
  %3941 = vmatprep.subr.mxu0 0.0
  %3942 = vmatpush1.msra.mxu0 0.0
  %3943 = vmatprep.subr.mxu0 0.0
  %3944 = vmatpush1.msra.mxu0 0.0
  %3945 = vmatprep.subr.mxu0 0.0
  %3946 = vmatpush1.msra.mxu0 0.0
  %3947 = vmatprep.subr.mxu0 0.0
  %3948 = vmatpush1.msra.mxu0 0.0
  %3949 = vmatprep.subr.mxu0 0.0
  %3950 = vmatpush1.msra.mxu0 0.0
  %3951 = vmatprep.subr.mxu0 0.0
  %3952 = vmatpush1.msra.mxu0 0.0
  %3953 = vmatprep.subr.mxu0 0.0
  %3954 = vmatpush1.msra.mxu0 0.0
  %3955 = vmatprep.subr.mxu0 0.0
  %3956 = vmatpush1.msra.mxu0 0.0
  %3957 = vmatprep.subr.mxu0 0.0
  %3958 = vmatpush1.msra.mxu0 0.0
  %3959 = vmatprep.subr.mxu0 0.0
  %3960 = vmatpush1.msra.mxu0 0.0
  %3961 = vmatprep.subr.mxu0 0.0
  %3962 = vmatpush1.msra.mxu0 0.0
  %3963 = vmatprep.subr.mxu0 0.0
  %3964 = vmatpush1.msra.mxu0 0.0
  %3965 = vmatprep.subr.mxu0 0.0
  %3966 = vmatpush1.msra.mxu0 0.0
  %3967 = vmatprep.subr.mxu0 0.0
  %3968 = vmatpush1.msra.mxu0 0.0
  %3969 = vmatprep.subr.mxu0 0.0
  %3970 = vmatpush1.msra.mxu0 0.0
  %3971 = vmatprep.subr.mxu0 0.0
  %3972 = vmatpush1.msra.mxu0 0.0
  %3973 = vmatprep.subr.mxu0 0.0
  %3974 = vmatpush1.msra.mxu0 0.0
  %3975 = vmatprep.subr.mxu0 0.0
  %3976 = vmatpush1.msra.mxu0 0.0
  %3977 = vmatprep.subr.mxu0 0.0
  %3978 = vmatpush1.msra.mxu0 0.0
  %3979 = vmatprep.subr.mxu0 0.0
  %3980 = vmatpush1.msra.mxu0 0.0
  %3981 = vmatprep.subr.mxu0 0.0
  %3982 = vmatpush1.msra.mxu0 0.0
  %3983 = vmatprep.subr.mxu0 0.0
  %3984 = vmatpush1.msra.mxu0 0.0
  %3985 = vmatprep.subr.mxu0 0.0
  %3986 = vmatpush1.msra.mxu0 0.0
  %3987 = vmatprep.subr.mxu0 0.0
  %3988 = vmatpush1.msra.mxu0 0.0
  %3989 = vmatprep.mubr.f32.mxu0 0.0
  %3990 = vmatmul.mubr.f32.gmra.mrb[0].mxu0 %v3923
  %v3991 = vpop.f32.mrb[0].mxu0
  %v3992 = vadd.f32 %v3921, %v3991
  %v3993 = vpop.f32.mrb[0].mxu0
  %3994 = vdwg.mxu0
  %v3995 = vadd.f32 %v3992, %v1927
  %3997 = vset.pattern.permute.xlu0 0
  %3998 = vperm.xlu0 %3997, %v3995
  %v3999 = vpop.permute.xlu0 %3998
  %v4001 = vmul.f32 %v3999, %v1938
  %v4002 = vsel %vm645, %v3075, 0
  %4004 = vmatprep.subr.mxu0 0.0
  %4005 = vmatpush1.msra.mxu0 %v83
  %4006 = vmatprep.subr.mxu0 0.0
  %4007 = vmatpush1.msra.mxu0 %v84
  %4008 = vmatprep.subr.mxu0 0.0
  %4009 = vmatpush1.msra.mxu0 %v85
  %4010 = vmatprep.subr.mxu0 0.0
  %4011 = vmatpush1.msra.mxu0 %v86
  %4012 = vmatprep.subr.mxu0 0.0
  %4013 = vmatpush1.msra.mxu0 0.0
  %4014 = vmatprep.subr.mxu0 0.0
  %4015 = vmatpush1.msra.mxu0 0.0
  %4016 = vmatprep.subr.mxu0 0.0
  %4017 = vmatpush1.msra.mxu0 0.0
  %4018 = vmatprep.subr.mxu0 0.0
  %4019 = vmatpush1.msra.mxu0 0.0
  %4020 = vmatprep.subr.mxu0 0.0
  %4021 = vmatpush1.msra.mxu0 0.0
  %4022 = vmatprep.subr.mxu0 0.0
  %4023 = vmatpush1.msra.mxu0 0.0
  %4024 = vmatprep.subr.mxu0 0.0
  %4025 = vmatpush1.msra.mxu0 0.0
  %4026 = vmatprep.subr.mxu0 0.0
  %4027 = vmatpush1.msra.mxu0 0.0
  %4028 = vmatprep.subr.mxu0 0.0
  %4029 = vmatpush1.msra.mxu0 0.0
  %4030 = vmatprep.subr.mxu0 0.0
  %4031 = vmatpush1.msra.mxu0 0.0
  %4032 = vmatprep.subr.mxu0 0.0
  %4033 = vmatpush1.msra.mxu0 0.0
  %4034 = vmatprep.subr.mxu0 0.0
  %4035 = vmatpush1.msra.mxu0 0.0
  %4036 = vmatprep.subr.mxu0 0.0
  %4037 = vmatpush1.msra.mxu0 0.0
  %4038 = vmatprep.subr.mxu0 0.0
  %4039 = vmatpush1.msra.mxu0 0.0
  %4040 = vmatprep.subr.mxu0 0.0
  %4041 = vmatpush1.msra.mxu0 0.0
  %4042 = vmatprep.subr.mxu0 0.0
  %4043 = vmatpush1.msra.mxu0 0.0
  %4044 = vmatprep.subr.mxu0 0.0
  %4045 = vmatpush1.msra.mxu0 0.0
  %4046 = vmatprep.subr.mxu0 0.0
  %4047 = vmatpush1.msra.mxu0 0.0
  %4048 = vmatprep.subr.mxu0 0.0
  %4049 = vmatpush1.msra.mxu0 0.0
  %4050 = vmatprep.subr.mxu0 0.0
  %4051 = vmatpush1.msra.mxu0 0.0
  %4052 = vmatprep.subr.mxu0 0.0
  %4053 = vmatpush1.msra.mxu0 0.0
  %4054 = vmatprep.subr.mxu0 0.0
  %4055 = vmatpush1.msra.mxu0 0.0
  %4056 = vmatprep.subr.mxu0 0.0
  %4057 = vmatpush1.msra.mxu0 0.0
  %4058 = vmatprep.subr.mxu0 0.0
  %4059 = vmatpush1.msra.mxu0 0.0
  %4060 = vmatprep.subr.mxu0 0.0
  %4061 = vmatpush1.msra.mxu0 0.0
  %4062 = vmatprep.subr.mxu0 0.0
  %4063 = vmatpush1.msra.mxu0 0.0
  %4064 = vmatprep.subr.mxu0 0.0
  %4065 = vmatpush1.msra.mxu0 0.0
  %4066 = vmatprep.subr.mxu0 0.0
  %4067 = vmatpush1.msra.mxu0 0.0
  %4068 = vmatprep.mubr.f32.mxu0 0.0
  %4069 = vmatmul.mubr.f32.gmra.mrb[0].mxu0 %v4002
  %v4070 = vpop.f32.mrb[0].mxu0
  %v4071 = vadd.f32 0.0, %v4070
  %v4072 = vpop.f32.mrb[0].mxu0
  %4073 = vdwg.mxu0
  %v4074 = vadd.f32 %v4001, %v4071
  %v4075 = vadd.f32 %v4074, %v2018
  %v4076 = vxor.u32 %v4075, 2147483648
  %v4077 = vmul.f32 %v4076, 1.442695
  %v4078 = vpow.pop %v4077
  %v4079 = vadd.f32 %v4078, 1.0
  %v4080 = vrcp.pop %v4079
  %v4081 = vmul.f32 1.0, %v4080
  %v4082 = vtanh.pop %v4075
  %v4083 = vmul.f32 %v4081, %v3066
  %4085 = vrot.lane.b32.xlu0 %v4082, 64
  %v4086 = vpop.permute.xlu0 %4085
  %v4088 = vmul.f32 %v4081, %v4086
  %4090 = vrot.lane.b32.xlu0 %v4088, 32
  %v4091 = vpop.permute.xlu0 %4090
  %v4093 = vadd.f32 %v4083, %v4091
  %v4094 = vtanh.pop %v4093
  %4096 = vrot.lane.b32.xlu0 %v4094, 64
  %v4097 = vpop.permute.xlu0 %4096
  %v4099 = vmul.f32 %v4081, %v4097
  %4101 = vrot.lane.b32.xlu0 %v4099, 32
  %v4102 = vpop.permute.xlu0 %4101
  %v4104 = vsel %vm645, %v4102, %v4093
  %v4106 = vsel %vm942, %v4104, 0
  %4108 = vmatprep.subr.mxu0 0.0
  %4109 = vmatpush1.msra.mxu0 %v66
  %4110 = vmatprep.subr.mxu0 0.0
  %4111 = vmatpush1.msra.mxu0 %v67
  %4112 = vmatprep.subr.mxu0 0.0
  %4113 = vmatpush1.msra.mxu0 %v68
  %4114 = vmatprep.subr.mxu0 0.0
  %4115 = vmatpush1.msra.mxu0 %v69
  %4116 = vmatprep.subr.mxu0 0.0
  %4117 = vmatpush1.msra.mxu0 %v70
  %4118 = vmatprep.subr.mxu0 0.0
  %4119 = vmatpush1.msra.mxu0 %v71
  %4120 = vmatprep.subr.mxu0 0.0
  %4121 = vmatpush1.msra.mxu0 %v72
  %4122 = vmatprep.subr.mxu0 0.0
  %4123 = vmatpush1.msra.mxu0 %v73
  %4124 = vmatprep.subr.mxu0 0.0
  %4125 = vmatpush1.msra.mxu0 0.0
  %4126 = vmatprep.subr.mxu0 0.0
  %4127 = vmatpush1.msra.mxu0 0.0
  %4128 = vmatprep.subr.mxu0 0.0
  %4129 = vmatpush1.msra.mxu0 0.0
  %4130 = vmatprep.subr.mxu0 0.0
  %4131 = vmatpush1.msra.mxu0 0.0
  %4132 = vmatprep.subr.mxu0 0.0
  %4133 = vmatpush1.msra.mxu0 0.0
  %4134 = vmatprep.subr.mxu0 0.0
  %4135 = vmatpush1.msra.mxu0 0.0
  %4136 = vmatprep.subr.mxu0 0.0
  %4137 = vmatpush1.msra.mxu0 0.0
  %4138 = vmatprep.subr.mxu0 0.0
  %4139 = vmatpush1.msra.mxu0 0.0
  %4140 = vmatprep.subr.mxu0 0.0
  %4141 = vmatpush1.msra.mxu0 0.0
  %4142 = vmatprep.subr.mxu0 0.0
  %4143 = vmatpush1.msra.mxu0 0.0
  %4144 = vmatprep.subr.mxu0 0.0
  %4145 = vmatpush1.msra.mxu0 0.0
  %4146 = vmatprep.subr.mxu0 0.0
  %4147 = vmatpush1.msra.mxu0 0.0
  %4148 = vmatprep.subr.mxu0 0.0
  %4149 = vmatpush1.msra.mxu0 0.0
  %4150 = vmatprep.subr.mxu0 0.0
  %4151 = vmatpush1.msra.mxu0 0.0
  %4152 = vmatprep.subr.mxu0 0.0
  %4153 = vmatpush1.msra.mxu0 0.0
  %4154 = vmatprep.subr.mxu0 0.0
  %4155 = vmatpush1.msra.mxu0 0.0
  %4156 = vmatprep.subr.mxu0 0.0
  %4157 = vmatpush1.msra.mxu0 0.0
  %4158 = vmatprep.subr.mxu0 0.0
  %4159 = vmatpush1.msra.mxu0 0.0
  %4160 = vmatprep.subr.mxu0 0.0
  %4161 = vmatpush1.msra.mxu0 0.0
  %4162 = vmatprep.subr.mxu0 0.0
  %4163 = vmatpush1.msra.mxu0 0.0
  %4164 = vmatprep.subr.mxu0 0.0
  %4165 = vmatpush1.msra.mxu0 0.0
  %4166 = vmatprep.subr.mxu0 0.0
  %4167 = vmatpush1.msra.mxu0 0.0
  %4168 = vmatprep.subr.mxu0 0.0
  %4169 = vmatpush1.msra.mxu0 0.0
  %4170 = vmatprep.subr.mxu0 0.0
  %4171 = vmatpush1.msra.mxu0 0.0
  %4172 = vmatprep.mubr.f32.mxu0 0.0
  %4173 = vmatmul.mubr.f32.gmra.mrb[0].mxu0 %v4106
  %v4174 = vpop.f32.mrb[0].mxu0
  %v4175 = vadd.f32 0.0, %v4174
  %v4176 = vpop.f32.mrb[0].mxu0
  %4177 = vdwg.mxu0
  %v4180 = vunpack.c.l.s4 1966171168
  %v4181 = vunpack.c.0.s8 %v4180
  %v4182 = vlaneseq
  %v4183 = vshrl.u32 %v4182, 7
  %v4184 = vsub.s32 %v4181, %v4183
  %v4185 = vrot.slane %v4175, %v4184
  %v4186 = vcombine.high %v4185, %v4185
  %v4188 = vunpack.c.l.s4 1966171168
  %v4189 = vunpack.c.0.s8 %v4188
  %v4190 = vlaneseq
  %v4191 = vshrl.u32 %v4190, 7
  %v4192 = vsub.s32 %v4189, %v4191
  %v4193 = vrot.slane %v4185, %v4192
  %v4195 = vunpack.c.l.s4 1966171168
  %v4196 = vunpack.c.0.s8 %v4195
  %v4197 = vlaneseq
  %v4198 = vshrl.u32 %v4197, 7
  %v4199 = vsub.s32 %v4196, %v4198
  %v4200 = vrot.slane %v4186, %v4199
  %v4201 = vcombine.high %v4193, %v4193
  %v4202 = vcombine.high %v4200, %v4200
  %v4203 = vlaneseq
  %v4204 = vshrl.u32 %v4203, 7
  %v4205 = vsub.s32 0, %v4204
  %v4206 = vrot.slane %v4193, %v4205
  %v4207 = vlaneseq
  %v4208 = vshrl.u32 %v4207, 7
  %v4209 = vsub.s32 0, %v4208
  %v4210 = vrot.slane %v4200, %v4209
  %v4211 = vlaneseq
  %v4212 = vshrl.u32 %v4211, 7
  %v4213 = vsub.s32 0, %v4212
  %v4214 = vrot.slane %v4201, %v4213
  %v4215 = vlaneseq
  %v4216 = vshrl.u32 %v4215, 7
  %v4217 = vsub.s32 0, %v4216
  %v4218 = vrot.slane %v4202, %v4217
  %v4219 = vcombine.high %v4206, %v4206
  %v4221 = vunpack.c.l.s4 1966171168
  %v4222 = vunpack.c.0.s8 %v4221
  %v4223 = vlaneseq
  %v4224 = vshrl.u32 %v4223, 7
  %v4225 = vsub.s32 %v4222, %v4224
  %v4226 = vrot.slane %v4206, %v4225
  %v4228 = vunpack.c.l.s4 1966171168
  %v4229 = vunpack.c.0.s8 %v4228
  %v4230 = vlaneseq
  %v4231 = vshrl.u32 %v4230, 7
  %v4232 = vsub.s32 %v4229, %v4231
  %v4233 = vrot.slane %v4219, %v4232
  %v4234 = vcombine.high %v4226, %v4226
  %v4235 = vcombine.high %v4233, %v4233
  %v4237 = vunpack.c.l.s4 1966171168
  %v4238 = vunpack.c.0.s8 %v4237
  %v4239 = vlaneseq
  %v4240 = vshrl.u32 %v4239, 7
  %v4241 = vsub.s32 %v4238, %v4240
  %v4242 = vrot.slane %v4226, %v4241
  %v4244 = vunpack.c.l.s4 1966171168
  %v4245 = vunpack.c.0.s8 %v4244
  %v4246 = vlaneseq
  %v4247 = vshrl.u32 %v4246, 7
  %v4248 = vsub.s32 %v4245, %v4247
  %v4249 = vrot.slane %v4233, %v4248
  %v4251 = vunpack.c.l.s4 1966171168
  %v4252 = vunpack.c.0.s8 %v4251
  %v4253 = vlaneseq
  %v4254 = vshrl.u32 %v4253, 7
  %v4255 = vsub.s32 %v4252, %v4254
  %v4256 = vrot.slane %v4234, %v4255
  %v4258 = vunpack.c.l.s4 1966171168
  %v4259 = vunpack.c.0.s8 %v4258
  %v4260 = vlaneseq
  %v4261 = vshrl.u32 %v4260, 7
  %v4262 = vsub.s32 %v4259, %v4261
  %v4263 = vrot.slane %v4235, %v4262
  %v4264 = vcombine.high %v4242, %v4242
  %v4265 = vcombine.high %v4249, %v4249
  %v4266 = vcombine.high %v4256, %v4256
  %v4267 = vcombine.high %v4210, %v4210
  %v4269 = vunpack.c.l.s4 1966171168
  %v4270 = vunpack.c.0.s8 %v4269
  %v4271 = vlaneseq
  %v4272 = vshrl.u32 %v4271, 7
  %v4273 = vsub.s32 %v4270, %v4272
  %v4274 = vrot.slane %v4210, %v4273
  %v4276 = vunpack.c.l.s4 1966171168
  %v4277 = vunpack.c.0.s8 %v4276
  %v4278 = vlaneseq
  %v4279 = vshrl.u32 %v4278, 7
  %v4280 = vsub.s32 %v4277, %v4279
  %v4281 = vrot.slane %v4267, %v4280
  %v4282 = vcombine.high %v4274, %v4274
  %v4283 = vcombine.high %v4281, %v4281
  %v4285 = vunpack.c.l.s4 1966171168
  %v4286 = vunpack.c.0.s8 %v4285
  %v4287 = vlaneseq
  %v4288 = vshrl.u32 %v4287, 7
  %v4289 = vsub.s32 %v4286, %v4288
  %v4290 = vrot.slane %v4274, %v4289
  %v4292 = vunpack.c.l.s4 1966171168
  %v4293 = vunpack.c.0.s8 %v4292
  %v4294 = vlaneseq
  %v4295 = vshrl.u32 %v4294, 7
  %v4296 = vsub.s32 %v4293, %v4295
  %v4297 = vrot.slane %v4281, %v4296
  %v4299 = vunpack.c.l.s4 1966171168
  %v4300 = vunpack.c.0.s8 %v4299
  %v4301 = vlaneseq
  %v4302 = vshrl.u32 %v4301, 7
  %v4303 = vsub.s32 %v4300, %v4302
  %v4304 = vrot.slane %v4282, %v4303
  %v4306 = vunpack.c.l.s4 1966171168
  %v4307 = vunpack.c.0.s8 %v4306
  %v4308 = vlaneseq
  %v4309 = vshrl.u32 %v4308, 7
  %v4310 = vsub.s32 %v4307, %v4309
  %v4311 = vrot.slane %v4283, %v4310
  %v4312 = vcombine.high %v4290, %v4290
  %v4313 = vcombine.high %v4297, %v4297
  %v4314 = vcombine.high %v4304, %v4304
  %v4315 = vcombine.high %v4214, %v4214
  %v4317 = vunpack.c.l.s4 1966171168
  %v4318 = vunpack.c.0.s8 %v4317
  %v4319 = vlaneseq
  %v4320 = vshrl.u32 %v4319, 7
  %v4321 = vsub.s32 %v4318, %v4320
  %v4322 = vrot.slane %v4214, %v4321
  %v4324 = vunpack.c.l.s4 1966171168
  %v4325 = vunpack.c.0.s8 %v4324
  %v4326 = vlaneseq
  %v4327 = vshrl.u32 %v4326, 7
  %v4328 = vsub.s32 %v4325, %v4327
  %v4329 = vrot.slane %v4315, %v4328
  %v4330 = vcombine.high %v4322, %v4322
  %v4331 = vcombine.high %v4329, %v4329
  %v4333 = vunpack.c.l.s4 1966171168
  %v4334 = vunpack.c.0.s8 %v4333
  %v4335 = vlaneseq
  %v4336 = vshrl.u32 %v4335, 7
  %v4337 = vsub.s32 %v4334, %v4336
  %v4338 = vrot.slane %v4322, %v4337
  %v4340 = vunpack.c.l.s4 1966171168
  %v4341 = vunpack.c.0.s8 %v4340
  %v4342 = vlaneseq
  %v4343 = vshrl.u32 %v4342, 7
  %v4344 = vsub.s32 %v4341, %v4343
  %v4345 = vrot.slane %v4329, %v4344
  %v4347 = vunpack.c.l.s4 1966171168
  %v4348 = vunpack.c.0.s8 %v4347
  %v4349 = vlaneseq
  %v4350 = vshrl.u32 %v4349, 7
  %v4351 = vsub.s32 %v4348, %v4350
  %v4352 = vrot.slane %v4330, %v4351
  %v4354 = vunpack.c.l.s4 1966171168
  %v4355 = vunpack.c.0.s8 %v4354
  %v4356 = vlaneseq
  %v4357 = vshrl.u32 %v4356, 7
  %v4358 = vsub.s32 %v4355, %v4357
  %v4359 = vrot.slane %v4331, %v4358
  %v4360 = vcombine.high %v4338, %v4338
  %v4361 = vcombine.high %v4345, %v4345
  %v4362 = vcombine.high %v4352, %v4352
  %v4363 = vcombine.high %v4218, %v4218
  %v4365 = vunpack.c.l.s4 1966171168
  %v4366 = vunpack.c.0.s8 %v4365
  %v4367 = vlaneseq
  %v4368 = vshrl.u32 %v4367, 7
  %v4369 = vsub.s32 %v4366, %v4368
  %v4370 = vrot.slane %v4218, %v4369
  %v4372 = vunpack.c.l.s4 1966171168
  %v4373 = vunpack.c.0.s8 %v4372
  %v4374 = vlaneseq
  %v4375 = vshrl.u32 %v4374, 7
  %v4376 = vsub.s32 %v4373, %v4375
  %v4377 = vrot.slane %v4363, %v4376
  %v4378 = vcombine.high %v4370, %v4370
  %v4379 = vcombine.high %v4377, %v4377
  %v4381 = vunpack.c.l.s4 1966171168
  %v4382 = vunpack.c.0.s8 %v4381
  %v4383 = vlaneseq
  %v4384 = vshrl.u32 %v4383, 7
  %v4385 = vsub.s32 %v4382, %v4384
  %v4386 = vrot.slane %v4370, %v4385
  %v4388 = vunpack.c.l.s4 1966171168
  %v4389 = vunpack.c.0.s8 %v4388
  %v4390 = vlaneseq
  %v4391 = vshrl.u32 %v4390, 7
  %v4392 = vsub.s32 %v4389, %v4391
  %v4393 = vrot.slane %v4377, %v4392
  %v4395 = vunpack.c.l.s4 1966171168
  %v4396 = vunpack.c.0.s8 %v4395
  %v4397 = vlaneseq
  %v4398 = vshrl.u32 %v4397, 7
  %v4399 = vsub.s32 %v4396, %v4398
  %v4400 = vrot.slane %v4378, %v4399
  %v4402 = vunpack.c.l.s4 1966171168
  %v4403 = vunpack.c.0.s8 %v4402
  %v4404 = vlaneseq
  %v4405 = vshrl.u32 %v4404, 7
  %v4406 = vsub.s32 %v4403, %v4405
  %v4407 = vrot.slane %v4379, %v4406
  %v4408 = vcombine.high %v4386, %v4386
  %v4409 = vcombine.high %v4393, %v4393
  %v4410 = vcombine.high %v4400, %v4400
  %v4439 = vadd.f32 %v766, %v4242
  %v4440 = vadd.f32 %v780, %v4256
  %v4441 = vadd.f32 %v788, %v4264
  %v4442 = vadd.f32 %v790, %v4266
  %v4443 = vadd.f32 %v773, %v4249
  %v4444 = vadd.f32 %v787, %v4263
  %v4445 = vadd.f32 %v789, %v4265
  %v4446 = vadd.f32 %v791, %v4290
  %v4447 = vadd.f32 %v815, %v4304
  %v4448 = vadd.f32 %v829, %v4312
  %v4449 = vadd.f32 %v837, %v4314
  %v4450 = vadd.f32 %v839, %v4297
  %v4451 = vadd.f32 %v822, %v4311
  %v4452 = vadd.f32 %v836, %v4313
  %v4453 = vadd.f32 %v838, %v4338
  %v4454 = vadd.f32 %v840, %v4352
  %v4455 = vadd.f32 %v864, %v4360
  %v4456 = vadd.f32 %v878, %v4362
  %v4457 = vadd.f32 %v886, %v4345
  %v4458 = vadd.f32 %v888, %v4359
  %v4459 = vadd.f32 %v871, %v4361
  %v4460 = vadd.f32 %v885, %v4386
  %v4461 = vadd.f32 %v887, %v4400
  %v4462 = vadd.f32 %v889, %v4408
  %v4463 = vadd.f32 %v904, %v4410
  %v4464 = vadd.f32 %v911, %v4393
  %v4465 = vadd.f32 %v912, %v4407
  %v4466 = vadd.f32 %v913, %v4409
  %v4467 = vtanh.pop %v4439
  %v4468 = vtanh.pop %v4440
  %v4469 = vtanh.pop %v4441
  %v4470 = vtanh.pop %v4442
  %v4471 = vtanh.pop %v4443
  %v4472 = vtanh.pop %v4444
  %v4473 = vtanh.pop %v4445
  %v4474 = vtanh.pop %v4446
  %v4475 = vtanh.pop %v4447
  %v4476 = vtanh.pop %v4448
  %v4477 = vtanh.pop %v4449
  %v4478 = vtanh.pop %v4450
  %v4479 = vtanh.pop %v4451
  %v4480 = vtanh.pop %v4452
  %v4481 = vtanh.pop %v4453
  %v4482 = vtanh.pop %v4454
  %v4483 = vtanh.pop %v4455
  %v4484 = vtanh.pop %v4456
  %v4485 = vtanh.pop %v4457
  %v4486 = vtanh.pop %v4458
  %v4487 = vtanh.pop %v4459
  %v4488 = vtanh.pop %v4460
  %v4489 = vtanh.pop %v4461
  %v4490 = vtanh.pop %v4462
  %v4491 = vtanh.pop %v4463
  %v4492 = vtanh.pop %v4464
  %v4493 = vtanh.pop %v4465
  %v4494 = vtanh.pop %v4466
  %v4495 = vmul.f32 %v4467, %v1361
  %v4496 = vmul.f32 %v4468, %v1375
  %v4497 = vmul.f32 %v4469, %v1383
  %v4498 = vmul.f32 %v4470, %v1385
  %v4499 = vmul.f32 %v4471, %v1368
  %v4500 = vmul.f32 %v4472, %v1382
  %v4501 = vmul.f32 %v4473, %v1384
  %v4502 = vmul.f32 %v4474, %v1361
  %v4503 = vmul.f32 %v4475, %v1375
  %v4504 = vmul.f32 %v4476, %v1383
  %v4505 = vmul.f32 %v4477, %v1385
  %v4506 = vmul.f32 %v4478, %v1368
  %v4507 = vmul.f32 %v4479, %v1382
  %v4508 = vmul.f32 %v4480, %v1384
  %v4509 = vmul.f32 %v4481, %v1361
  %v4510 = vmul.f32 %v4482, %v1375
  %v4511 = vmul.f32 %v4483, %v1383
  %v4512 = vmul.f32 %v4484, %v1385
  %v4513 = vmul.f32 %v4485, %v1368
  %v4514 = vmul.f32 %v4486, %v1382
  %v4515 = vmul.f32 %v4487, %v1384
  %v4516 = vmul.f32 %v4488, %v1361
  %v4517 = vmul.f32 %v4489, %v1375
  %v4518 = vmul.f32 %v4490, %v1383
  %v4519 = vmul.f32 %v4491, %v1385
  %v4520 = vmul.f32 %v4492, %v1368
  %v4521 = vmul.f32 %v4493, %v1382
  %v4522 = vmul.f32 %v4494, %v1384
  %v4551 = vcombine.low %v4495, %v4496
  %v4552 = vcombine.low %v4497, %v4498
  %v4553 = vcombine.low %v4499, %v4500
  %v4555 = vunpack.c.l.s4 1966171168
  %v4556 = vunpack.c.0.s8 %v4555
  %v4557 = vlaneseq
  %v4558 = vshrl.u32 %v4557, 7
  %v4559 = vsub.s32 %v4556, %v4558
  %v4560 = vrot.slane %v4551, %v4559
  %v4562 = vunpack.c.l.s4 1966171168
  %v4563 = vunpack.c.0.s8 %v4562
  %v4564 = vlaneseq
  %v4565 = vshrl.u32 %v4564, 7
  %v4566 = vsub.s32 %v4563, %v4565
  %v4567 = vrot.slane %v4552, %v4566
  %v4569 = vunpack.c.l.s4 1966171168
  %v4570 = vunpack.c.0.s8 %v4569
  %v4571 = vlaneseq
  %v4572 = vshrl.u32 %v4571, 7
  %v4573 = vsub.s32 %v4570, %v4572
  %v4574 = vrot.slane %v4553, %v4573
  %v4576 = vunpack.c.l.s4 1966171168
  %v4577 = vunpack.c.0.s8 %v4576
  %v4578 = vlaneseq
  %v4579 = vshrl.u32 %v4578, 7
  %v4580 = vsub.s32 %v4577, %v4579
  %v4581 = vrot.slane %v4501, %v4580
  %v4582 = vcombine.low %v4560, %v4567
  %v4583 = vcombine.low %v4574, %v4581
  %v4585 = vunpack.c.l.s4 1966171168
  %v4586 = vunpack.c.0.s8 %v4585
  %v4587 = vlaneseq
  %v4588 = vshrl.u32 %v4587, 7
  %v4589 = vsub.s32 %v4586, %v4588
  %v4590 = vrot.slane %v4582, %v4589
  %v4592 = vunpack.c.l.s4 1966171168
  %v4593 = vunpack.c.0.s8 %v4592
  %v4594 = vlaneseq
  %v4595 = vshrl.u32 %v4594, 7
  %v4596 = vsub.s32 %v4593, %v4595
  %v4597 = vrot.slane %v4583, %v4596
  %v4598 = vcombine.low %v4590, %v4597
  %v4599 = vcombine.low %v4502, %v4503
  %v4600 = vcombine.low %v4504, %v4505
  %v4601 = vcombine.low %v4506, %v4507
  %v4603 = vunpack.c.l.s4 1966171168
  %v4604 = vunpack.c.0.s8 %v4603
  %v4605 = vlaneseq
  %v4606 = vshrl.u32 %v4605, 7
  %v4607 = vsub.s32 %v4604, %v4606
  %v4608 = vrot.slane %v4599, %v4607
  %v4610 = vunpack.c.l.s4 1966171168
  %v4611 = vunpack.c.0.s8 %v4610
  %v4612 = vlaneseq
  %v4613 = vshrl.u32 %v4612, 7
  %v4614 = vsub.s32 %v4611, %v4613
  %v4615 = vrot.slane %v4600, %v4614
  %v4617 = vunpack.c.l.s4 1966171168
  %v4618 = vunpack.c.0.s8 %v4617
  %v4619 = vlaneseq
  %v4620 = vshrl.u32 %v4619, 7
  %v4621 = vsub.s32 %v4618, %v4620
  %v4622 = vrot.slane %v4601, %v4621
  %v4624 = vunpack.c.l.s4 1966171168
  %v4625 = vunpack.c.0.s8 %v4624
  %v4626 = vlaneseq
  %v4627 = vshrl.u32 %v4626, 7
  %v4628 = vsub.s32 %v4625, %v4627
  %v4629 = vrot.slane %v4508, %v4628
  %v4630 = vcombine.low %v4608, %v4615
  %v4631 = vcombine.low %v4622, %v4629
  %v4633 = vunpack.c.l.s4 1966171168
  %v4634 = vunpack.c.0.s8 %v4633
  %v4635 = vlaneseq
  %v4636 = vshrl.u32 %v4635, 7
  %v4637 = vsub.s32 %v4634, %v4636
  %v4638 = vrot.slane %v4630, %v4637
  %v4640 = vunpack.c.l.s4 1966171168
  %v4641 = vunpack.c.0.s8 %v4640
  %v4642 = vlaneseq
  %v4643 = vshrl.u32 %v4642, 7
  %v4644 = vsub.s32 %v4641, %v4643
  %v4645 = vrot.slane %v4631, %v4644
  %v4646 = vcombine.low %v4638, %v4645
  %v4647 = vcombine.low %v4509, %v4510
  %v4648 = vcombine.low %v4511, %v4512
  %v4649 = vcombine.low %v4513, %v4514
  %v4651 = vunpack.c.l.s4 1966171168
  %v4652 = vunpack.c.0.s8 %v4651
  %v4653 = vlaneseq
  %v4654 = vshrl.u32 %v4653, 7
  %v4655 = vsub.s32 %v4652, %v4654
  %v4656 = vrot.slane %v4647, %v4655
  %v4658 = vunpack.c.l.s4 1966171168
  %v4659 = vunpack.c.0.s8 %v4658
  %v4660 = vlaneseq
  %v4661 = vshrl.u32 %v4660, 7
  %v4662 = vsub.s32 %v4659, %v4661
  %v4663 = vrot.slane %v4648, %v4662
  %v4665 = vunpack.c.l.s4 1966171168
  %v4666 = vunpack.c.0.s8 %v4665
  %v4667 = vlaneseq
  %v4668 = vshrl.u32 %v4667, 7
  %v4669 = vsub.s32 %v4666, %v4668
  %v4670 = vrot.slane %v4649, %v4669
  %v4672 = vunpack.c.l.s4 1966171168
  %v4673 = vunpack.c.0.s8 %v4672
  %v4674 = vlaneseq
  %v4675 = vshrl.u32 %v4674, 7
  %v4676 = vsub.s32 %v4673, %v4675
  %v4677 = vrot.slane %v4515, %v4676
  %v4678 = vcombine.low %v4656, %v4663
  %v4679 = vcombine.low %v4670, %v4677
  %v4681 = vunpack.c.l.s4 1966171168
  %v4682 = vunpack.c.0.s8 %v4681
  %v4683 = vlaneseq
  %v4684 = vshrl.u32 %v4683, 7
  %v4685 = vsub.s32 %v4682, %v4684
  %v4686 = vrot.slane %v4678, %v4685
  %v4688 = vunpack.c.l.s4 1966171168
  %v4689 = vunpack.c.0.s8 %v4688
  %v4690 = vlaneseq
  %v4691 = vshrl.u32 %v4690, 7
  %v4692 = vsub.s32 %v4689, %v4691
  %v4693 = vrot.slane %v4679, %v4692
  %v4694 = vcombine.low %v4686, %v4693
  %v4695 = vcombine.low %v4516, %v4517
  %v4696 = vcombine.low %v4518, %v4519
  %v4697 = vcombine.low %v4520, %v4521
  %v4699 = vunpack.c.l.s4 1966171168
  %v4700 = vunpack.c.0.s8 %v4699
  %v4701 = vlaneseq
  %v4702 = vshrl.u32 %v4701, 7
  %v4703 = vsub.s32 %v4700, %v4702
  %v4704 = vrot.slane %v4695, %v4703
  %v4706 = vunpack.c.l.s4 1966171168
  %v4707 = vunpack.c.0.s8 %v4706
  %v4708 = vlaneseq
  %v4709 = vshrl.u32 %v4708, 7
  %v4710 = vsub.s32 %v4707, %v4709
  %v4711 = vrot.slane %v4696, %v4710
  %v4713 = vunpack.c.l.s4 1966171168
  %v4714 = vunpack.c.0.s8 %v4713
  %v4715 = vlaneseq
  %v4716 = vshrl.u32 %v4715, 7
  %v4717 = vsub.s32 %v4714, %v4716
  %v4718 = vrot.slane %v4697, %v4717
  %v4720 = vunpack.c.l.s4 1966171168
  %v4721 = vunpack.c.0.s8 %v4720
  %v4722 = vlaneseq
  %v4723 = vshrl.u32 %v4722, 7
  %v4724 = vsub.s32 %v4721, %v4723
  %v4725 = vrot.slane %v4522, %v4724
  %v4726 = vcombine.low %v4704, %v4711
  %v4727 = vcombine.low %v4718, %v4725
  %v4729 = vunpack.c.l.s4 1966171168
  %v4730 = vunpack.c.0.s8 %v4729
  %v4731 = vlaneseq
  %v4732 = vshrl.u32 %v4731, 7
  %v4733 = vsub.s32 %v4730, %v4732
  %v4734 = vrot.slane %v4726, %v4733
  %v4736 = vunpack.c.l.s4 1966171168
  %v4737 = vunpack.c.0.s8 %v4736
  %v4738 = vlaneseq
  %v4739 = vshrl.u32 %v4738, 7
  %v4740 = vsub.s32 %v4737, %v4739
  %v4741 = vrot.slane %v4727, %v4740
  %v4742 = vcombine.low %v4734, %v4741
  %v4747 = vsel %vm1645, %v4598, 0.0
  %4748 = vadd.xlane.f32.xlu0 %v4747
  %v4749 = vpop.xlane.xlu0 %4748
  %v4750 = vsel %vm1645, %v4646, 0.0
  %4751 = vadd.xlane.f32.xlu0 %v4750
  %v4752 = vpop.xlane.xlu0 %4751
  %v4753 = vsel %vm1645, %v4694, 0.0
  %4754 = vadd.xlane.f32.xlu0 %v4753
  %v4755 = vpop.xlane.xlu0 %4754
  %v4756 = vsel %vm1645, %v4742, 0.0
  %4757 = vadd.xlane.f32.xlu0 %v4756
  %v4758 = vpop.xlane.xlu0 %4757
  %v4759 = vadd.f32 %v4749, %v1658
  %v4760 = vadd.f32 %v4752, %v1658
  %v4761 = vadd.f32 %v4755, %v1658
  %v4762 = vadd.f32 %v4758, %v1658
  %v4767 = vlaneseq
  %v4768 = vshrl.u32 %v4767, 7
  %v4769 = vsub.s32 %v1668, %v4768
  %v4770 = vrot.slane %v4759, %v4769
  %v4771 = vlaneseq
  %v4772 = vshrl.u32 %v4771, 7
  %v4773 = vsub.s32 %v1668, %v4772
  %v4774 = vrot.slane %v4760, %v4773
  %v4775 = vlaneseq
  %v4776 = vshrl.u32 %v4775, 7
  %v4777 = vsub.s32 %v1668, %v4776
  %v4778 = vrot.slane %v4761, %v4777
  %v4779 = vlaneseq
  %v4780 = vshrl.u32 %v4779, 7
  %v4781 = vsub.s32 %v1668, %v4780
  %v4782 = vrot.slane %v4762, %v4781
  %v4783 = vsel %vm1685, %v4774, %v4770
  %v4784 = vsel %vm1687, %v4778, %v4783
  %v4785 = vsel %vm1689, %v4782, %v4784
  %v4787 = vsel %vm1692, %v4785, -inf
  %4788 = vmax.xlane.f32.xlu0 %v4787
  %v4789 = vpop.xlane.xlu0 %4788
  %v4791 = vlaneseq
  %v4792 = vshrl.u32 %v4791, 7
  %v4793 = vsub.s32 0, %v4792
  %v4794 = vrot.slane %v4789, %v4793
  %v4795 = vlaneseq
  %v4796 = vshrl.u32 %v4795, 7
  %v4797 = vsub.s32 1, %v4796
  %v4798 = vrot.slane %v4789, %v4797
  %v4799 = vlaneseq
  %v4800 = vshrl.u32 %v4799, 7
  %v4801 = vsub.s32 2, %v4800
  %v4802 = vrot.slane %v4789, %v4801
  %v4803 = vlaneseq
  %v4804 = vshrl.u32 %v4803, 7
  %v4805 = vsub.s32 3, %v4804
  %v4806 = vrot.slane %v4789, %v4805
  %v4811 = vsub.f32 %v4759, %v4794
  %v4812 = vsub.f32 %v4760, %v4798
  %v4813 = vsub.f32 %v4761, %v4802
  %v4814 = vsub.f32 %v4762, %v4806
  %v4815 = vmul.f32 %v4811, 1.442695
  %v4816 = vpow.pop %v4815
  %v4817 = vmul.f32 %v4812, 1.442695
  %v4818 = vpow.pop %v4817
  %v4819 = vmul.f32 %v4813, 1.442695
  %v4820 = vpow.pop %v4819
  %v4821 = vmul.f32 %v4814, 1.442695
  %v4822 = vpow.pop %v4821
  %4827 = vset.pattern.permute.xlu0 0
  %4828 = vperm.xlu0 %4827, %v4816
  %v4829 = vpop.permute.xlu0 %4828
  %4830 = vset.pattern.permute.xlu0 0
  %4831 = vperm.xlu0 %4830, %v4818
  %v4832 = vpop.permute.xlu0 %4831
  %4833 = vset.pattern.permute.xlu0 0
  %4834 = vperm.xlu0 %4833, %v4820
  %v4835 = vpop.permute.xlu0 %4834
  %4836 = vset.pattern.permute.xlu0 0
  %4837 = vperm.xlu0 %4836, %v4822
  %v4838 = vpop.permute.xlu0 %4837
  %v4839 = vlaneseq
  %v4840 = vshrl.u32 %v4839, 7
  %v4841 = vsub.s32 %v1668, %v4840
  %v4842 = vrot.slane %v4829, %v4841
  %v4843 = vlaneseq
  %v4844 = vshrl.u32 %v4843, 7
  %v4845 = vsub.s32 %v1668, %v4844
  %v4846 = vrot.slane %v4832, %v4845
  %v4847 = vlaneseq
  %v4848 = vshrl.u32 %v4847, 7
  %v4849 = vsub.s32 %v1668, %v4848
  %v4850 = vrot.slane %v4835, %v4849
  %v4851 = vlaneseq
  %v4852 = vshrl.u32 %v4851, 7
  %v4853 = vsub.s32 %v1668, %v4852
  %v4854 = vrot.slane %v4838, %v4853
  %v4855 = vsel %vm1685, %v4846, %v4842
  %v4856 = vsel %vm1687, %v4850, %v4855
  %v4857 = vsel %vm1689, %v4854, %v4856
  %v4859 = vsel %vm1692, %v4857, 0.0
  %4860 = vadd.xlane.f32.xlu0 %v4859
  %v4861 = vpop.xlane.xlu0 %4860
  %v4862 = vrcp.pop %v4861
  %v4864 = vlaneseq
  %v4865 = vshrl.u32 %v4864, 7
  %v4866 = vsub.s32 0, %v4865
  %v4867 = vrot.slane %v4862, %v4866
  %v4868 = vlaneseq
  %v4869 = vshrl.u32 %v4868, 7
  %v4870 = vsub.s32 1, %v4869
  %v4871 = vrot.slane %v4862, %v4870
  %v4872 = vlaneseq
  %v4873 = vshrl.u32 %v4872, 7
  %v4874 = vsub.s32 2, %v4873
  %v4875 = vrot.slane %v4862, %v4874
  %v4876 = vlaneseq
  %v4877 = vshrl.u32 %v4876, 7
  %v4878 = vsub.s32 3, %v4877
  %v4879 = vrot.slane %v4862, %v4878
  %v4884 = vmul.f32 %v4816, %v4867
  %v4885 = vmul.f32 %v4818, %v4871
  %v4886 = vmul.f32 %v4820, %v4875
  %v4887 = vmul.f32 %v4822, %v4879
  %4889 = vset.pattern.permute.xlu0 0
  %4890 = vperm.xlu0 %4889, %v4884
  %v4891 = vpop.permute.xlu0 %4890
  %4894 = vset.pattern.permute.xlu0 0
  %4895 = vperm.xlu0 %4894, %v4885
  %v4896 = vpop.permute.xlu0 %4895
  %4899 = vset.pattern.permute.xlu0 0
  %4900 = vperm.xlu0 %4899, %v4886
  %v4901 = vpop.permute.xlu0 %4900
  %4904 = vset.pattern.permute.xlu0 0
  %4905 = vperm.xlu0 %4904, %v4887
  %v4906 = vpop.permute.xlu0 %4905
  %v4908 = vmul.f32 %v4891, %v61
  %v4909 = vmul.f32 %v4896, %v62
  %v4910 = vmul.f32 %v4901, %v63
  %v4911 = vmul.f32 %v4906, %v64
  %v4912 = vsel %vm1645, %v4908, 0.0
  %v4913 = vrot.slane %v4912, 4
  %v4914 = vadd.f32 %v4912, %v4913
  %v4915 = vrot.slane %v4914, 2
  %v4916 = vadd.f32 %v4914, %v4915
  %v4917 = vrot.slane %v4916, 1
  %v4918 = vadd.f32 %v4916, %v4917
  %v4919 = vsel %vm1645, %v4909, 0.0
  %v4920 = vrot.slane %v4919, 4
  %v4921 = vadd.f32 %v4919, %v4920
  %v4922 = vrot.slane %v4921, 2
  %v4923 = vadd.f32 %v4921, %v4922
  %v4924 = vrot.slane %v4923, 1
  %v4925 = vadd.f32 %v4923, %v4924
  %v4926 = vsel %vm1645, %v4910, 0.0
  %v4927 = vrot.slane %v4926, 4
  %v4928 = vadd.f32 %v4926, %v4927
  %v4929 = vrot.slane %v4928, 2
  %v4930 = vadd.f32 %v4928, %v4929
  %v4931 = vrot.slane %v4930, 1
  %v4932 = vadd.f32 %v4930, %v4931
  %v4933 = vsel %vm1645, %v4911, 0.0
  %v4934 = vrot.slane %v4933, 4
  %v4935 = vadd.f32 %v4933, %v4934
  %v4936 = vrot.slane %v4935, 2
  %v4937 = vadd.f32 %v4935, %v4936
  %v4938 = vrot.slane %v4937, 1
  %v4939 = vadd.f32 %v4937, %v4938
  %v4944 = vsel %vm1685, %v4925, %v4918
  %v4945 = vsel %vm1687, %v4932, %v4944
  %v4946 = vsel %vm1689, %v4939, %v4945
  %4947 = vrot.lane.b32.xlu0 %v1847, 125
  %v4948 = vpop.permute.xlu0 %4947
  %v4950 = vsel %vm645, %v4946, 0
  %4952 = vmatprep.subr.mxu0 0.0
  %4953 = vmatpush1.msra.mxu0 %v88
  %4954 = vmatprep.subr.mxu0 0.0
  %4955 = vmatpush1.msra.mxu0 %v89
  %4956 = vmatprep.subr.mxu0 0.0
  %4957 = vmatpush1.msra.mxu0 %v90
  %4958 = vmatprep.subr.mxu0 0.0
  %4959 = vmatpush1.msra.mxu0 %v91
  %4960 = vmatprep.subr.mxu0 0.0
  %4961 = vmatpush1.msra.mxu0 0.0
  %4962 = vmatprep.subr.mxu0 0.0
  %4963 = vmatpush1.msra.mxu0 0.0
  %4964 = vmatprep.subr.mxu0 0.0
  %4965 = vmatpush1.msra.mxu0 0.0
  %4966 = vmatprep.subr.mxu0 0.0
  %4967 = vmatpush1.msra.mxu0 0.0
  %4968 = vmatprep.subr.mxu0 0.0
  %4969 = vmatpush1.msra.mxu0 0.0
  %4970 = vmatprep.subr.mxu0 0.0
  %4971 = vmatpush1.msra.mxu0 0.0
  %4972 = vmatprep.subr.mxu0 0.0
  %4973 = vmatpush1.msra.mxu0 0.0
  %4974 = vmatprep.subr.mxu0 0.0
  %4975 = vmatpush1.msra.mxu0 0.0
  %4976 = vmatprep.subr.mxu0 0.0
  %4977 = vmatpush1.msra.mxu0 0.0
  %4978 = vmatprep.subr.mxu0 0.0
  %4979 = vmatpush1.msra.mxu0 0.0
  %4980 = vmatprep.subr.mxu0 0.0
  %4981 = vmatpush1.msra.mxu0 0.0
  %4982 = vmatprep.subr.mxu0 0.0
  %4983 = vmatpush1.msra.mxu0 0.0
  %4984 = vmatprep.subr.mxu0 0.0
  %4985 = vmatpush1.msra.mxu0 0.0
  %4986 = vmatprep.subr.mxu0 0.0
  %4987 = vmatpush1.msra.mxu0 0.0
  %4988 = vmatprep.subr.mxu0 0.0
  %4989 = vmatpush1.msra.mxu0 0.0
  %4990 = vmatprep.subr.mxu0 0.0
  %4991 = vmatpush1.msra.mxu0 0.0
  %4992 = vmatprep.subr.mxu0 0.0
  %4993 = vmatpush1.msra.mxu0 0.0
  %4994 = vmatprep.subr.mxu0 0.0
  %4995 = vmatpush1.msra.mxu0 0.0
  %4996 = vmatprep.subr.mxu0 0.0
  %4997 = vmatpush1.msra.mxu0 0.0
  %4998 = vmatprep.subr.mxu0 0.0
  %4999 = vmatpush1.msra.mxu0 0.0
  %5000 = vmatprep.subr.mxu0 0.0
  %5001 = vmatpush1.msra.mxu0 0.0
  %5002 = vmatprep.subr.mxu0 0.0
  %5003 = vmatpush1.msra.mxu0 0.0
  %5004 = vmatprep.subr.mxu0 0.0
  %5005 = vmatpush1.msra.mxu0 0.0
  %5006 = vmatprep.subr.mxu0 0.0
  %5007 = vmatpush1.msra.mxu0 0.0
  %5008 = vmatprep.subr.mxu0 0.0
  %5009 = vmatpush1.msra.mxu0 0.0
  %5010 = vmatprep.subr.mxu0 0.0
  %5011 = vmatpush1.msra.mxu0 0.0
  %5012 = vmatprep.subr.mxu0 0.0
  %5013 = vmatpush1.msra.mxu0 0.0
  %5014 = vmatprep.subr.mxu0 0.0
  %5015 = vmatpush1.msra.mxu0 0.0
  %5016 = vmatprep.mubr.f32.mxu0 0.0
  %5017 = vmatmul.mubr.f32.gmra.mrb[0].mxu0 %v4950
  %v5018 = vpop.f32.mrb[0].mxu0
  %v5019 = vadd.f32 %v4948, %v5018
  %v5020 = vpop.f32.mrb[0].mxu0
  %5021 = vdwg.mxu0
  %v5022 = vadd.f32 %v5019, %v1927
  %5024 = vset.pattern.permute.xlu0 0
  %5025 = vperm.xlu0 %5024, %v5022
  %v5026 = vpop.permute.xlu0 %5025
  %v5028 = vmul.f32 %v5026, %v1938
  %v5029 = vsel %vm645, %v4102, 0
  %5031 = vmatprep.subr.mxu0 0.0
  %5032 = vmatpush1.msra.mxu0 %v83
  %5033 = vmatprep.subr.mxu0 0.0
  %5034 = vmatpush1.msra.mxu0 %v84
  %5035 = vmatprep.subr.mxu0 0.0
  %5036 = vmatpush1.msra.mxu0 %v85
  %5037 = vmatprep.subr.mxu0 0.0
  %5038 = vmatpush1.msra.mxu0 %v86
  %5039 = vmatprep.subr.mxu0 0.0
  %5040 = vmatpush1.msra.mxu0 0.0
  %5041 = vmatprep.subr.mxu0 0.0
  %5042 = vmatpush1.msra.mxu0 0.0
  %5043 = vmatprep.subr.mxu0 0.0
  %5044 = vmatpush1.msra.mxu0 0.0
  %5045 = vmatprep.subr.mxu0 0.0
  %5046 = vmatpush1.msra.mxu0 0.0
  %5047 = vmatprep.subr.mxu0 0.0
  %5048 = vmatpush1.msra.mxu0 0.0
  %5049 = vmatprep.subr.mxu0 0.0
  %5050 = vmatpush1.msra.mxu0 0.0
  %5051 = vmatprep.subr.mxu0 0.0
  %5052 = vmatpush1.msra.mxu0 0.0
  %5053 = vmatprep.subr.mxu0 0.0
  %5054 = vmatpush1.msra.mxu0 0.0
  %5055 = vmatprep.subr.mxu0 0.0
  %5056 = vmatpush1.msra.mxu0 0.0
  %5057 = vmatprep.subr.mxu0 0.0
  %5058 = vmatpush1.msra.mxu0 0.0
  %5059 = vmatprep.subr.mxu0 0.0
  %5060 = vmatpush1.msra.mxu0 0.0
  %5061 = vmatprep.subr.mxu0 0.0
  %5062 = vmatpush1.msra.mxu0 0.0
  %5063 = vmatprep.subr.mxu0 0.0
  %5064 = vmatpush1.msra.mxu0 0.0
  %5065 = vmatprep.subr.mxu0 0.0
  %5066 = vmatpush1.msra.mxu0 0.0
  %5067 = vmatprep.subr.mxu0 0.0
  %5068 = vmatpush1.msra.mxu0 0.0
  %5069 = vmatprep.subr.mxu0 0.0
  %5070 = vmatpush1.msra.mxu0 0.0
  %5071 = vmatprep.subr.mxu0 0.0
  %5072 = vmatpush1.msra.mxu0 0.0
  %5073 = vmatprep.subr.mxu0 0.0
  %5074 = vmatpush1.msra.mxu0 0.0
  %5075 = vmatprep.subr.mxu0 0.0
  %5076 = vmatpush1.msra.mxu0 0.0
  %5077 = vmatprep.subr.mxu0 0.0
  %5078 = vmatpush1.msra.mxu0 0.0
  %5079 = vmatprep.subr.mxu0 0.0
  %5080 = vmatpush1.msra.mxu0 0.0
  %5081 = vmatprep.subr.mxu0 0.0
  %5082 = vmatpush1.msra.mxu0 0.0
  %5083 = vmatprep.subr.mxu0 0.0
  %5084 = vmatpush1.msra.mxu0 0.0
  %5085 = vmatprep.subr.mxu0 0.0
  %5086 = vmatpush1.msra.mxu0 0.0
  %5087 = vmatprep.subr.mxu0 0.0
  %5088 = vmatpush1.msra.mxu0 0.0
  %5089 = vmatprep.subr.mxu0 0.0
  %5090 = vmatpush1.msra.mxu0 0.0
  %5091 = vmatprep.subr.mxu0 0.0
  %5092 = vmatpush1.msra.mxu0 0.0
  %5093 = vmatprep.subr.mxu0 0.0
  %5094 = vmatpush1.msra.mxu0 0.0
  %5095 = vmatprep.mubr.f32.mxu0 0.0
  %5096 = vmatmul.mubr.f32.gmra.mrb[0].mxu0 %v5029
  %v5097 = vpop.f32.mrb[0].mxu0
  %v5098 = vadd.f32 0.0, %v5097
  %v5099 = vpop.f32.mrb[0].mxu0
  %5100 = vdwg.mxu0
  %v5101 = vadd.f32 %v5028, %v5098
  %v5102 = vadd.f32 %v5101, %v2018
  %v5103 = vxor.u32 %v5102, 2147483648
  %v5104 = vmul.f32 %v5103, 1.442695
  %v5105 = vpow.pop %v5104
  %v5106 = vadd.f32 %v5105, 1.0
  %v5107 = vrcp.pop %v5106
  %v5108 = vmul.f32 1.0, %v5107
  %v5109 = vtanh.pop %v5102
  %v5110 = vmul.f32 %v5108, %v4093
  %5112 = vrot.lane.b32.xlu0 %v5109, 64
  %v5113 = vpop.permute.xlu0 %5112
  %v5115 = vmul.f32 %v5108, %v5113
  %5117 = vrot.lane.b32.xlu0 %v5115, 32
  %v5118 = vpop.permute.xlu0 %5117
  %v5120 = vadd.f32 %v5110, %v5118
  %v5121 = vtanh.pop %v5120
  %5123 = vrot.lane.b32.xlu0 %v5121, 64
  %v5124 = vpop.permute.xlu0 %5123
  %v5126 = vmul.f32 %v5108, %v5124
  %5128 = vrot.lane.b32.xlu0 %v5126, 32
  %v5129 = vpop.permute.xlu0 %5128
  %v5131 = vsel %vm645, %v5129, %v5120
  %v5133 = vsel %vm942, %v5131, 0
  %5135 = vmatprep.subr.mxu0 0.0
  %5136 = vmatpush1.msra.mxu0 %v66
  %5137 = vmatprep.subr.mxu0 0.0
  %5138 = vmatpush1.msra.mxu0 %v67
  %5139 = vmatprep.subr.mxu0 0.0
  %5140 = vmatpush1.msra.mxu0 %v68
  %5141 = vmatprep.subr.mxu0 0.0
  %5142 = vmatpush1.msra.mxu0 %v69
  %5143 = vmatprep.subr.mxu0 0.0
  %5144 = vmatpush1.msra.mxu0 %v70
  %5145 = vmatprep.subr.mxu0 0.0
  %5146 = vmatpush1.msra.mxu0 %v71
  %5147 = vmatprep.subr.mxu0 0.0
  %5148 = vmatpush1.msra.mxu0 %v72
  %5149 = vmatprep.subr.mxu0 0.0
  %5150 = vmatpush1.msra.mxu0 %v73
  %5151 = vmatprep.subr.mxu0 0.0
  %5152 = vmatpush1.msra.mxu0 0.0
  %5153 = vmatprep.subr.mxu0 0.0
  %5154 = vmatpush1.msra.mxu0 0.0
  %5155 = vmatprep.subr.mxu0 0.0
  %5156 = vmatpush1.msra.mxu0 0.0
  %5157 = vmatprep.subr.mxu0 0.0
  %5158 = vmatpush1.msra.mxu0 0.0
  %5159 = vmatprep.subr.mxu0 0.0
  %5160 = vmatpush1.msra.mxu0 0.0
  %5161 = vmatprep.subr.mxu0 0.0
  %5162 = vmatpush1.msra.mxu0 0.0
  %5163 = vmatprep.subr.mxu0 0.0
  %5164 = vmatpush1.msra.mxu0 0.0
  %5165 = vmatprep.subr.mxu0 0.0
  %5166 = vmatpush1.msra.mxu0 0.0
  %5167 = vmatprep.subr.mxu0 0.0
  %5168 = vmatpush1.msra.mxu0 0.0
  %5169 = vmatprep.subr.mxu0 0.0
  %5170 = vmatpush1.msra.mxu0 0.0
  %5171 = vmatprep.subr.mxu0 0.0
  %5172 = vmatpush1.msra.mxu0 0.0
  %5173 = vmatprep.subr.mxu0 0.0
  %5174 = vmatpush1.msra.mxu0 0.0
  %5175 = vmatprep.subr.mxu0 0.0
  %5176 = vmatpush1.msra.mxu0 0.0
  %5177 = vmatprep.subr.mxu0 0.0
  %5178 = vmatpush1.msra.mxu0 0.0
  %5179 = vmatprep.subr.mxu0 0.0
  %5180 = vmatpush1.msra.mxu0 0.0
  %5181 = vmatprep.subr.mxu0 0.0
  %5182 = vmatpush1.msra.mxu0 0.0
  %5183 = vmatprep.subr.mxu0 0.0
  %5184 = vmatpush1.msra.mxu0 0.0
  %5185 = vmatprep.subr.mxu0 0.0
  %5186 = vmatpush1.msra.mxu0 0.0
  %5187 = vmatprep.subr.mxu0 0.0
  %5188 = vmatpush1.msra.mxu0 0.0
  %5189 = vmatprep.subr.mxu0 0.0
  %5190 = vmatpush1.msra.mxu0 0.0
  %5191 = vmatprep.subr.mxu0 0.0
  %5192 = vmatpush1.msra.mxu0 0.0
  %5193 = vmatprep.subr.mxu0 0.0
  %5194 = vmatpush1.msra.mxu0 0.0
  %5195 = vmatprep.subr.mxu0 0.0
  %5196 = vmatpush1.msra.mxu0 0.0
  %5197 = vmatprep.subr.mxu0 0.0
  %5198 = vmatpush1.msra.mxu0 0.0
  %5199 = vmatprep.mubr.f32.mxu0 0.0
  %5200 = vmatmul.mubr.f32.gmra.mrb[0].mxu0 %v5133
  %v5201 = vpop.f32.mrb[0].mxu0
  %v5202 = vadd.f32 0.0, %v5201
  %v5203 = vpop.f32.mrb[0].mxu0
  %5204 = vdwg.mxu0
  %v5207 = vunpack.c.l.s4 1966171168
  %v5208 = vunpack.c.0.s8 %v5207
  %v5209 = vlaneseq
  %v5210 = vshrl.u32 %v5209, 7
  %v5211 = vsub.s32 %v5208, %v5210
  %v5212 = vrot.slane %v5202, %v5211
  %v5213 = vcombine.high %v5212, %v5212
  %v5215 = vunpack.c.l.s4 1966171168
  %v5216 = vunpack.c.0.s8 %v5215
  %v5217 = vlaneseq
  %v5218 = vshrl.u32 %v5217, 7
  %v5219 = vsub.s32 %v5216, %v5218
  %v5220 = vrot.slane %v5212, %v5219
  %v5222 = vunpack.c.l.s4 1966171168
  %v5223 = vunpack.c.0.s8 %v5222
  %v5224 = vlaneseq
  %v5225 = vshrl.u32 %v5224, 7
  %v5226 = vsub.s32 %v5223, %v5225
  %v5227 = vrot.slane %v5213, %v5226
  %v5228 = vcombine.high %v5220, %v5220
  %v5229 = vcombine.high %v5227, %v5227
  %v5230 = vlaneseq
  %v5231 = vshrl.u32 %v5230, 7
  %v5232 = vsub.s32 0, %v5231
  %v5233 = vrot.slane %v5220, %v5232
  %v5234 = vlaneseq
  %v5235 = vshrl.u32 %v5234, 7
  %v5236 = vsub.s32 0, %v5235
  %v5237 = vrot.slane %v5227, %v5236
  %v5238 = vlaneseq
  %v5239 = vshrl.u32 %v5238, 7
  %v5240 = vsub.s32 0, %v5239
  %v5241 = vrot.slane %v5228, %v5240
  %v5242 = vlaneseq
  %v5243 = vshrl.u32 %v5242, 7
  %v5244 = vsub.s32 0, %v5243
  %v5245 = vrot.slane %v5229, %v5244
  %v5246 = vcombine.high %v5233, %v5233
  %v5248 = vunpack.c.l.s4 1966171168
  %v5249 = vunpack.c.0.s8 %v5248
  %v5250 = vlaneseq
  %v5251 = vshrl.u32 %v5250, 7
  %v5252 = vsub.s32 %v5249, %v5251
  %v5253 = vrot.slane %v5233, %v5252
  %v5255 = vunpack.c.l.s4 1966171168
  %v5256 = vunpack.c.0.s8 %v5255
  %v5257 = vlaneseq
  %v5258 = vshrl.u32 %v5257, 7
  %v5259 = vsub.s32 %v5256, %v5258
  %v5260 = vrot.slane %v5246, %v5259
  %v5261 = vcombine.high %v5253, %v5253
  %v5262 = vcombine.high %v5260, %v5260
  %v5264 = vunpack.c.l.s4 1966171168
  %v5265 = vunpack.c.0.s8 %v5264
  %v5266 = vlaneseq
  %v5267 = vshrl.u32 %v5266, 7
  %v5268 = vsub.s32 %v5265, %v5267
  %v5269 = vrot.slane %v5253, %v5268
  %v5271 = vunpack.c.l.s4 1966171168
  %v5272 = vunpack.c.0.s8 %v5271
  %v5273 = vlaneseq
  %v5274 = vshrl.u32 %v5273, 7
  %v5275 = vsub.s32 %v5272, %v5274
  %v5276 = vrot.slane %v5260, %v5275
  %v5278 = vunpack.c.l.s4 1966171168
  %v5279 = vunpack.c.0.s8 %v5278
  %v5280 = vlaneseq
  %v5281 = vshrl.u32 %v5280, 7
  %v5282 = vsub.s32 %v5279, %v5281
  %v5283 = vrot.slane %v5261, %v5282
  %v5285 = vunpack.c.l.s4 1966171168
  %v5286 = vunpack.c.0.s8 %v5285
  %v5287 = vlaneseq
  %v5288 = vshrl.u32 %v5287, 7
  %v5289 = vsub.s32 %v5286, %v5288
  %v5290 = vrot.slane %v5262, %v5289
  %v5291 = vcombine.high %v5269, %v5269
  %v5292 = vcombine.high %v5276, %v5276
  %v5293 = vcombine.high %v5283, %v5283
  %v5294 = vcombine.high %v5237, %v5237
  %v5296 = vunpack.c.l.s4 1966171168
  %v5297 = vunpack.c.0.s8 %v5296
  %v5298 = vlaneseq
  %v5299 = vshrl.u32 %v5298, 7
  %v5300 = vsub.s32 %v5297, %v5299
  %v5301 = vrot.slane %v5237, %v5300
  %v5303 = vunpack.c.l.s4 1966171168
  %v5304 = vunpack.c.0.s8 %v5303
  %v5305 = vlaneseq
  %v5306 = vshrl.u32 %v5305, 7
  %v5307 = vsub.s32 %v5304, %v5306
  %v5308 = vrot.slane %v5294, %v5307
  %v5309 = vcombine.high %v5301, %v5301
  %v5310 = vcombine.high %v5308, %v5308
  %v5312 = vunpack.c.l.s4 1966171168
  %v5313 = vunpack.c.0.s8 %v5312
  %v5314 = vlaneseq
  %v5315 = vshrl.u32 %v5314, 7
  %v5316 = vsub.s32 %v5313, %v5315
  %v5317 = vrot.slane %v5301, %v5316
  %v5319 = vunpack.c.l.s4 1966171168
  %v5320 = vunpack.c.0.s8 %v5319
  %v5321 = vlaneseq
  %v5322 = vshrl.u32 %v5321, 7
  %v5323 = vsub.s32 %v5320, %v5322
  %v5324 = vrot.slane %v5308, %v5323
  %v5326 = vunpack.c.l.s4 1966171168
  %v5327 = vunpack.c.0.s8 %v5326
  %v5328 = vlaneseq
  %v5329 = vshrl.u32 %v5328, 7
  %v5330 = vsub.s32 %v5327, %v5329
  %v5331 = vrot.slane %v5309, %v5330
  %v5333 = vunpack.c.l.s4 1966171168
  %v5334 = vunpack.c.0.s8 %v5333
  %v5335 = vlaneseq
  %v5336 = vshrl.u32 %v5335, 7
  %v5337 = vsub.s32 %v5334, %v5336
  %v5338 = vrot.slane %v5310, %v5337
  %v5339 = vcombine.high %v5317, %v5317
  %v5340 = vcombine.high %v5324, %v5324
  %v5341 = vcombine.high %v5331, %v5331
  %v5342 = vcombine.high %v5241, %v5241
  %v5344 = vunpack.c.l.s4 1966171168
  %v5345 = vunpack.c.0.s8 %v5344
  %v5346 = vlaneseq
  %v5347 = vshrl.u32 %v5346, 7
  %v5348 = vsub.s32 %v5345, %v5347
  %v5349 = vrot.slane %v5241, %v5348
  %v5351 = vunpack.c.l.s4 1966171168
  %v5352 = vunpack.c.0.s8 %v5351
  %v5353 = vlaneseq
  %v5354 = vshrl.u32 %v5353, 7
  %v5355 = vsub.s32 %v5352, %v5354
  %v5356 = vrot.slane %v5342, %v5355
  %v5357 = vcombine.high %v5349, %v5349
  %v5358 = vcombine.high %v5356, %v5356
  %v5360 = vunpack.c.l.s4 1966171168
  %v5361 = vunpack.c.0.s8 %v5360
  %v5362 = vlaneseq
  %v5363 = vshrl.u32 %v5362, 7
  %v5364 = vsub.s32 %v5361, %v5363
  %v5365 = vrot.slane %v5349, %v5364
  %v5367 = vunpack.c.l.s4 1966171168
  %v5368 = vunpack.c.0.s8 %v5367
  %v5369 = vlaneseq
  %v5370 = vshrl.u32 %v5369, 7
  %v5371 = vsub.s32 %v5368, %v5370
  %v5372 = vrot.slane %v5356, %v5371
  %v5374 = vunpack.c.l.s4 1966171168
  %v5375 = vunpack.c.0.s8 %v5374
  %v5376 = vlaneseq
  %v5377 = vshrl.u32 %v5376, 7
  %v5378 = vsub.s32 %v5375, %v5377
  %v5379 = vrot.slane %v5357, %v5378
  %v5381 = vunpack.c.l.s4 1966171168
  %v5382 = vunpack.c.0.s8 %v5381
  %v5383 = vlaneseq
  %v5384 = vshrl.u32 %v5383, 7
  %v5385 = vsub.s32 %v5382, %v5384
  %v5386 = vrot.slane %v5358, %v5385
  %v5387 = vcombine.high %v5365, %v5365
  %v5388 = vcombine.high %v5372, %v5372
  %v5389 = vcombine.high %v5379, %v5379
  %v5390 = vcombine.high %v5245, %v5245
  %v5392 = vunpack.c.l.s4 1966171168
  %v5393 = vunpack.c.0.s8 %v5392
  %v5394 = vlaneseq
  %v5395 = vshrl.u32 %v5394, 7
  %v5396 = vsub.s32 %v5393, %v5395
  %v5397 = vrot.slane %v5245, %v5396
  %v5399 = vunpack.c.l.s4 1966171168
  %v5400 = vunpack.c.0.s8 %v5399
  %v5401 = vlaneseq
  %v5402 = vshrl.u32 %v5401, 7
  %v5403 = vsub.s32 %v5400, %v5402
  %v5404 = vrot.slane %v5390, %v5403
  %v5405 = vcombine.high %v5397, %v5397
  %v5406 = vcombine.high %v5404, %v5404
  %v5408 = vunpack.c.l.s4 1966171168
  %v5409 = vunpack.c.0.s8 %v5408
  %v5410 = vlaneseq
  %v5411 = vshrl.u32 %v5410, 7
  %v5412 = vsub.s32 %v5409, %v5411
  %v5413 = vrot.slane %v5397, %v5412
  %v5415 = vunpack.c.l.s4 1966171168
  %v5416 = vunpack.c.0.s8 %v5415
  %v5417 = vlaneseq
  %v5418 = vshrl.u32 %v5417, 7
  %v5419 = vsub.s32 %v5416, %v5418
  %v5420 = vrot.slane %v5404, %v5419
  %v5422 = vunpack.c.l.s4 1966171168
  %v5423 = vunpack.c.0.s8 %v5422
  %v5424 = vlaneseq
  %v5425 = vshrl.u32 %v5424, 7
  %v5426 = vsub.s32 %v5423, %v5425
  %v5427 = vrot.slane %v5405, %v5426
  %v5429 = vunpack.c.l.s4 1966171168
  %v5430 = vunpack.c.0.s8 %v5429
  %v5431 = vlaneseq
  %v5432 = vshrl.u32 %v5431, 7
  %v5433 = vsub.s32 %v5430, %v5432
  %v5434 = vrot.slane %v5406, %v5433
  %v5435 = vcombine.high %v5413, %v5413
  %v5436 = vcombine.high %v5420, %v5420
  %v5437 = vcombine.high %v5427, %v5427
  %v5466 = vadd.f32 %v766, %v5269
  %v5467 = vadd.f32 %v780, %v5283
  %v5468 = vadd.f32 %v788, %v5291
  %v5469 = vadd.f32 %v790, %v5293
  %v5470 = vadd.f32 %v773, %v5276
  %v5471 = vadd.f32 %v787, %v5290
  %v5472 = vadd.f32 %v789, %v5292
  %v5473 = vadd.f32 %v791, %v5317
  %v5474 = vadd.f32 %v815, %v5331
  %v5475 = vadd.f32 %v829, %v5339
  %v5476 = vadd.f32 %v837, %v5341
  %v5477 = vadd.f32 %v839, %v5324
  %v5478 = vadd.f32 %v822, %v5338
  %v5479 = vadd.f32 %v836, %v5340
  %v5480 = vadd.f32 %v838, %v5365
  %v5481 = vadd.f32 %v840, %v5379
  %v5482 = vadd.f32 %v864, %v5387
  %v5483 = vadd.f32 %v878, %v5389
  %v5484 = vadd.f32 %v886, %v5372
  %v5485 = vadd.f32 %v888, %v5386
  %v5486 = vadd.f32 %v871, %v5388
  %v5487 = vadd.f32 %v885, %v5413
  %v5488 = vadd.f32 %v887, %v5427
  %v5489 = vadd.f32 %v889, %v5435
  %v5490 = vadd.f32 %v904, %v5437
  %v5491 = vadd.f32 %v911, %v5420
  %v5492 = vadd.f32 %v912, %v5434
  %v5493 = vadd.f32 %v913, %v5436
  %v5494 = vtanh.pop %v5466
  %v5495 = vtanh.pop %v5467
  %v5496 = vtanh.pop %v5468
  %v5497 = vtanh.pop %v5469
  %v5498 = vtanh.pop %v5470
  %v5499 = vtanh.pop %v5471
  %v5500 = vtanh.pop %v5472
  %v5501 = vtanh.pop %v5473
  %v5502 = vtanh.pop %v5474
  %v5503 = vtanh.pop %v5475
  %v5504 = vtanh.pop %v5476
  %v5505 = vtanh.pop %v5477
  %v5506 = vtanh.pop %v5478
  %v5507 = vtanh.pop %v5479
  %v5508 = vtanh.pop %v5480
  %v5509 = vtanh.pop %v5481
  %v5510 = vtanh.pop %v5482
  %v5511 = vtanh.pop %v5483
  %v5512 = vtanh.pop %v5484
  %v5513 = vtanh.pop %v5485
  %v5514 = vtanh.pop %v5486
  %v5515 = vtanh.pop %v5487
  %v5516 = vtanh.pop %v5488
  %v5517 = vtanh.pop %v5489
  %v5518 = vtanh.pop %v5490
  %v5519 = vtanh.pop %v5491
  %v5520 = vtanh.pop %v5492
  %v5521 = vtanh.pop %v5493
  %v5522 = vmul.f32 %v5494, %v1361
  %v5523 = vmul.f32 %v5495, %v1375
  %v5524 = vmul.f32 %v5496, %v1383
  %v5525 = vmul.f32 %v5497, %v1385
  %v5526 = vmul.f32 %v5498, %v1368
  %v5527 = vmul.f32 %v5499, %v1382
  %v5528 = vmul.f32 %v5500, %v1384
  %v5529 = vmul.f32 %v5501, %v1361
  %v5530 = vmul.f32 %v5502, %v1375
  %v5531 = vmul.f32 %v5503, %v1383
  %v5532 = vmul.f32 %v5504, %v1385
  %v5533 = vmul.f32 %v5505, %v1368
  %v5534 = vmul.f32 %v5506, %v1382
  %v5535 = vmul.f32 %v5507, %v1384
  %v5536 = vmul.f32 %v5508, %v1361
  %v5537 = vmul.f32 %v5509, %v1375
  %v5538 = vmul.f32 %v5510, %v1383
  %v5539 = vmul.f32 %v5511, %v1385
  %v5540 = vmul.f32 %v5512, %v1368
  %v5541 = vmul.f32 %v5513, %v1382
  %v5542 = vmul.f32 %v5514, %v1384
  %v5543 = vmul.f32 %v5515, %v1361
  %v5544 = vmul.f32 %v5516, %v1375
  %v5545 = vmul.f32 %v5517, %v1383
  %v5546 = vmul.f32 %v5518, %v1385
  %v5547 = vmul.f32 %v5519, %v1368
  %v5548 = vmul.f32 %v5520, %v1382
  %v5549 = vmul.f32 %v5521, %v1384
  %v5578 = vcombine.low %v5522, %v5523
  %v5579 = vcombine.low %v5524, %v5525
  %v5580 = vcombine.low %v5526, %v5527
  %v5582 = vunpack.c.l.s4 1966171168
  %v5583 = vunpack.c.0.s8 %v5582
  %v5584 = vlaneseq
  %v5585 = vshrl.u32 %v5584, 7
  %v5586 = vsub.s32 %v5583, %v5585
  %v5587 = vrot.slane %v5578, %v5586
  %v5589 = vunpack.c.l.s4 1966171168
  %v5590 = vunpack.c.0.s8 %v5589
  %v5591 = vlaneseq
  %v5592 = vshrl.u32 %v5591, 7
  %v5593 = vsub.s32 %v5590, %v5592
  %v5594 = vrot.slane %v5579, %v5593
  %v5596 = vunpack.c.l.s4 1966171168
  %v5597 = vunpack.c.0.s8 %v5596
  %v5598 = vlaneseq
  %v5599 = vshrl.u32 %v5598, 7
  %v5600 = vsub.s32 %v5597, %v5599
  %v5601 = vrot.slane %v5580, %v5600
  %v5603 = vunpack.c.l.s4 1966171168
  %v5604 = vunpack.c.0.s8 %v5603
  %v5605 = vlaneseq
  %v5606 = vshrl.u32 %v5605, 7
  %v5607 = vsub.s32 %v5604, %v5606
  %v5608 = vrot.slane %v5528, %v5607
  %v5609 = vcombine.low %v5587, %v5594
  %v5610 = vcombine.low %v5601, %v5608
  %v5612 = vunpack.c.l.s4 1966171168
  %v5613 = vunpack.c.0.s8 %v5612
  %v5614 = vlaneseq
  %v5615 = vshrl.u32 %v5614, 7
  %v5616 = vsub.s32 %v5613, %v5615
  %v5617 = vrot.slane %v5609, %v5616
  %v5619 = vunpack.c.l.s4 1966171168
  %v5620 = vunpack.c.0.s8 %v5619
  %v5621 = vlaneseq
  %v5622 = vshrl.u32 %v5621, 7
  %v5623 = vsub.s32 %v5620, %v5622
  %v5624 = vrot.slane %v5610, %v5623
  %v5625 = vcombine.low %v5617, %v5624
  %v5626 = vcombine.low %v5529, %v5530
  %v5627 = vcombine.low %v5531, %v5532
  %v5628 = vcombine.low %v5533, %v5534
  %v5630 = vunpack.c.l.s4 1966171168
  %v5631 = vunpack.c.0.s8 %v5630
  %v5632 = vlaneseq
  %v5633 = vshrl.u32 %v5632, 7
  %v5634 = vsub.s32 %v5631, %v5633
  %v5635 = vrot.slane %v5626, %v5634
  %v5637 = vunpack.c.l.s4 1966171168
  %v5638 = vunpack.c.0.s8 %v5637
  %v5639 = vlaneseq
  %v5640 = vshrl.u32 %v5639, 7
  %v5641 = vsub.s32 %v5638, %v5640
  %v5642 = vrot.slane %v5627, %v5641
  %v5644 = vunpack.c.l.s4 1966171168
  %v5645 = vunpack.c.0.s8 %v5644
  %v5646 = vlaneseq
  %v5647 = vshrl.u32 %v5646, 7
  %v5648 = vsub.s32 %v5645, %v5647
  %v5649 = vrot.slane %v5628, %v5648
  %v5651 = vunpack.c.l.s4 1966171168
  %v5652 = vunpack.c.0.s8 %v5651
  %v5653 = vlaneseq
  %v5654 = vshrl.u32 %v5653, 7
  %v5655 = vsub.s32 %v5652, %v5654
  %v5656 = vrot.slane %v5535, %v5655
  %v5657 = vcombine.low %v5635, %v5642
  %v5658 = vcombine.low %v5649, %v5656
  %v5660 = vunpack.c.l.s4 1966171168
  %v5661 = vunpack.c.0.s8 %v5660
  %v5662 = vlaneseq
  %v5663 = vshrl.u32 %v5662, 7
  %v5664 = vsub.s32 %v5661, %v5663
  %v5665 = vrot.slane %v5657, %v5664
  %v5667 = vunpack.c.l.s4 1966171168
  %v5668 = vunpack.c.0.s8 %v5667
  %v5669 = vlaneseq
  %v5670 = vshrl.u32 %v5669, 7
  %v5671 = vsub.s32 %v5668, %v5670
  %v5672 = vrot.slane %v5658, %v5671
  %v5673 = vcombine.low %v5665, %v5672
  %v5674 = vcombine.low %v5536, %v5537
  %v5675 = vcombine.low %v5538, %v5539
  %v5676 = vcombine.low %v5540, %v5541
  %v5678 = vunpack.c.l.s4 1966171168
  %v5679 = vunpack.c.0.s8 %v5678
  %v5680 = vlaneseq
  %v5681 = vshrl.u32 %v5680, 7
  %v5682 = vsub.s32 %v5679, %v5681
  %v5683 = vrot.slane %v5674, %v5682
  %v5685 = vunpack.c.l.s4 1966171168
  %v5686 = vunpack.c.0.s8 %v5685
  %v5687 = vlaneseq
  %v5688 = vshrl.u32 %v5687, 7
  %v5689 = vsub.s32 %v5686, %v5688
  %v5690 = vrot.slane %v5675, %v5689
  %v5692 = vunpack.c.l.s4 1966171168
  %v5693 = vunpack.c.0.s8 %v5692
  %v5694 = vlaneseq
  %v5695 = vshrl.u32 %v5694, 7
  %v5696 = vsub.s32 %v5693, %v5695
  %v5697 = vrot.slane %v5676, %v5696
  %v5699 = vunpack.c.l.s4 1966171168
  %v5700 = vunpack.c.0.s8 %v5699
  %v5701 = vlaneseq
  %v5702 = vshrl.u32 %v5701, 7
  %v5703 = vsub.s32 %v5700, %v5702
  %v5704 = vrot.slane %v5542, %v5703
  %v5705 = vcombine.low %v5683, %v5690
  %v5706 = vcombine.low %v5697, %v5704
  %v5708 = vunpack.c.l.s4 1966171168
  %v5709 = vunpack.c.0.s8 %v5708
  %v5710 = vlaneseq
  %v5711 = vshrl.u32 %v5710, 7
  %v5712 = vsub.s32 %v5709, %v5711
  %v5713 = vrot.slane %v5705, %v5712
  %v5715 = vunpack.c.l.s4 1966171168
  %v5716 = vunpack.c.0.s8 %v5715
  %v5717 = vlaneseq
  %v5718 = vshrl.u32 %v5717, 7
  %v5719 = vsub.s32 %v5716, %v5718
  %v5720 = vrot.slane %v5706, %v5719
  %v5721 = vcombine.low %v5713, %v5720
  %v5722 = vcombine.low %v5543, %v5544
  %v5723 = vcombine.low %v5545, %v5546
  %v5724 = vcombine.low %v5547, %v5548
  %v5726 = vunpack.c.l.s4 1966171168
  %v5727 = vunpack.c.0.s8 %v5726
  %v5728 = vlaneseq
  %v5729 = vshrl.u32 %v5728, 7
  %v5730 = vsub.s32 %v5727, %v5729
  %v5731 = vrot.slane %v5722, %v5730
  %v5733 = vunpack.c.l.s4 1966171168
  %v5734 = vunpack.c.0.s8 %v5733
  %v5735 = vlaneseq
  %v5736 = vshrl.u32 %v5735, 7
  %v5737 = vsub.s32 %v5734, %v5736
  %v5738 = vrot.slane %v5723, %v5737
  %v5740 = vunpack.c.l.s4 1966171168
  %v5741 = vunpack.c.0.s8 %v5740
  %v5742 = vlaneseq
  %v5743 = vshrl.u32 %v5742, 7
  %v5744 = vsub.s32 %v5741, %v5743
  %v5745 = vrot.slane %v5724, %v5744
  %v5747 = vunpack.c.l.s4 1966171168
  %v5748 = vunpack.c.0.s8 %v5747
  %v5749 = vlaneseq
  %v5750 = vshrl.u32 %v5749, 7
  %v5751 = vsub.s32 %v5748, %v5750
  %v5752 = vrot.slane %v5549, %v5751
  %v5753 = vcombine.low %v5731, %v5738
  %v5754 = vcombine.low %v5745, %v5752
  %v5756 = vunpack.c.l.s4 1966171168
  %v5757 = vunpack.c.0.s8 %v5756
  %v5758 = vlaneseq
  %v5759 = vshrl.u32 %v5758, 7
  %v5760 = vsub.s32 %v5757, %v5759
  %v5761 = vrot.slane %v5753, %v5760
  %v5763 = vunpack.c.l.s4 1966171168
  %v5764 = vunpack.c.0.s8 %v5763
  %v5765 = vlaneseq
  %v5766 = vshrl.u32 %v5765, 7
  %v5767 = vsub.s32 %v5764, %v5766
  %v5768 = vrot.slane %v5754, %v5767
  %v5769 = vcombine.low %v5761, %v5768
  %v5774 = vsel %vm1645, %v5625, 0.0
  %5775 = vadd.xlane.f32.xlu0 %v5774
  %v5776 = vpop.xlane.xlu0 %5775
  %v5777 = vsel %vm1645, %v5673, 0.0
  %5778 = vadd.xlane.f32.xlu0 %v5777
  %v5779 = vpop.xlane.xlu0 %5778
  %v5780 = vsel %vm1645, %v5721, 0.0
  %5781 = vadd.xlane.f32.xlu0 %v5780
  %v5782 = vpop.xlane.xlu0 %5781
  %v5783 = vsel %vm1645, %v5769, 0.0
  %5784 = vadd.xlane.f32.xlu0 %v5783
  %v5785 = vpop.xlane.xlu0 %5784
  %v5786 = vadd.f32 %v5776, %v1658
  %v5787 = vadd.f32 %v5779, %v1658
  %v5788 = vadd.f32 %v5782, %v1658
  %v5789 = vadd.f32 %v5785, %v1658
  %v5794 = vlaneseq
  %v5795 = vshrl.u32 %v5794, 7
  %v5796 = vsub.s32 %v1668, %v5795
  %v5797 = vrot.slane %v5786, %v5796
  %v5798 = vlaneseq
  %v5799 = vshrl.u32 %v5798, 7
  %v5800 = vsub.s32 %v1668, %v5799
  %v5801 = vrot.slane %v5787, %v5800
  %v5802 = vlaneseq
  %v5803 = vshrl.u32 %v5802, 7
  %v5804 = vsub.s32 %v1668, %v5803
  %v5805 = vrot.slane %v5788, %v5804
  %v5806 = vlaneseq
  %v5807 = vshrl.u32 %v5806, 7
  %v5808 = vsub.s32 %v1668, %v5807
  %v5809 = vrot.slane %v5789, %v5808
  %v5810 = vsel %vm1685, %v5801, %v5797
  %v5811 = vsel %vm1687, %v5805, %v5810
  %v5812 = vsel %vm1689, %v5809, %v5811
  %v5814 = vsel %vm1692, %v5812, -inf
  %5815 = vmax.xlane.f32.xlu0 %v5814
  %v5816 = vpop.xlane.xlu0 %5815
  %v5818 = vlaneseq
  %v5819 = vshrl.u32 %v5818, 7
  %v5820 = vsub.s32 0, %v5819
  %v5821 = vrot.slane %v5816, %v5820
  %v5822 = vlaneseq
  %v5823 = vshrl.u32 %v5822, 7
  %v5824 = vsub.s32 1, %v5823
  %v5825 = vrot.slane %v5816, %v5824
  %v5826 = vlaneseq
  %v5827 = vshrl.u32 %v5826, 7
  %v5828 = vsub.s32 2, %v5827
  %v5829 = vrot.slane %v5816, %v5828
  %v5830 = vlaneseq
  %v5831 = vshrl.u32 %v5830, 7
  %v5832 = vsub.s32 3, %v5831
  %v5833 = vrot.slane %v5816, %v5832
  %v5838 = vsub.f32 %v5786, %v5821
  %v5839 = vsub.f32 %v5787, %v5825
  %v5840 = vsub.f32 %v5788, %v5829
  %v5841 = vsub.f32 %v5789, %v5833
  %v5842 = vmul.f32 %v5838, 1.442695
  %v5843 = vpow.pop %v5842
  %v5844 = vmul.f32 %v5839, 1.442695
  %v5845 = vpow.pop %v5844
  %v5846 = vmul.f32 %v5840, 1.442695
  %v5847 = vpow.pop %v5846
  %v5848 = vmul.f32 %v5841, 1.442695
  %v5849 = vpow.pop %v5848
  %5854 = vset.pattern.permute.xlu0 0
  %5855 = vperm.xlu0 %5854, %v5843
  %v5856 = vpop.permute.xlu0 %5855
  %5857 = vset.pattern.permute.xlu0 0
  %5858 = vperm.xlu0 %5857, %v5845
  %v5859 = vpop.permute.xlu0 %5858
  %5860 = vset.pattern.permute.xlu0 0
  %5861 = vperm.xlu0 %5860, %v5847
  %v5862 = vpop.permute.xlu0 %5861
  %5863 = vset.pattern.permute.xlu0 0
  %5864 = vperm.xlu0 %5863, %v5849
  %v5865 = vpop.permute.xlu0 %5864
  %v5866 = vlaneseq
  %v5867 = vshrl.u32 %v5866, 7
  %v5868 = vsub.s32 %v1668, %v5867
  %v5869 = vrot.slane %v5856, %v5868
  %v5870 = vlaneseq
  %v5871 = vshrl.u32 %v5870, 7
  %v5872 = vsub.s32 %v1668, %v5871
  %v5873 = vrot.slane %v5859, %v5872
  %v5874 = vlaneseq
  %v5875 = vshrl.u32 %v5874, 7
  %v5876 = vsub.s32 %v1668, %v5875
  %v5877 = vrot.slane %v5862, %v5876
  %v5878 = vlaneseq
  %v5879 = vshrl.u32 %v5878, 7
  %v5880 = vsub.s32 %v1668, %v5879
  %v5881 = vrot.slane %v5865, %v5880
  %v5882 = vsel %vm1685, %v5873, %v5869
  %v5883 = vsel %vm1687, %v5877, %v5882
  %v5884 = vsel %vm1689, %v5881, %v5883
  %v5886 = vsel %vm1692, %v5884, 0.0
  %5887 = vadd.xlane.f32.xlu0 %v5886
  %v5888 = vpop.xlane.xlu0 %5887
  %v5889 = vrcp.pop %v5888
  %v5891 = vlaneseq
  %v5892 = vshrl.u32 %v5891, 7
  %v5893 = vsub.s32 0, %v5892
  %v5894 = vrot.slane %v5889, %v5893
  %v5895 = vlaneseq
  %v5896 = vshrl.u32 %v5895, 7
  %v5897 = vsub.s32 1, %v5896
  %v5898 = vrot.slane %v5889, %v5897
  %v5899 = vlaneseq
  %v5900 = vshrl.u32 %v5899, 7
  %v5901 = vsub.s32 2, %v5900
  %v5902 = vrot.slane %v5889, %v5901
  %v5903 = vlaneseq
  %v5904 = vshrl.u32 %v5903, 7
  %v5905 = vsub.s32 3, %v5904
  %v5906 = vrot.slane %v5889, %v5905
  %v5911 = vmul.f32 %v5843, %v5894
  %v5912 = vmul.f32 %v5845, %v5898
  %v5913 = vmul.f32 %v5847, %v5902
  %v5914 = vmul.f32 %v5849, %v5906
  %5916 = vset.pattern.permute.xlu0 0
  %5917 = vperm.xlu0 %5916, %v5911
  %v5918 = vpop.permute.xlu0 %5917
  %5921 = vset.pattern.permute.xlu0 0
  %5922 = vperm.xlu0 %5921, %v5912
  %v5923 = vpop.permute.xlu0 %5922
  %5926 = vset.pattern.permute.xlu0 0
  %5927 = vperm.xlu0 %5926, %v5913
  %v5928 = vpop.permute.xlu0 %5927
  %5931 = vset.pattern.permute.xlu0 0
  %5932 = vperm.xlu0 %5931, %v5914
  %v5933 = vpop.permute.xlu0 %5932
  %v5935 = vmul.f32 %v5918, %v61
  %v5936 = vmul.f32 %v5923, %v62
  %v5937 = vmul.f32 %v5928, %v63
  %v5938 = vmul.f32 %v5933, %v64
  %v5939 = vsel %vm1645, %v5935, 0.0
  %v5940 = vrot.slane %v5939, 4
  %v5941 = vadd.f32 %v5939, %v5940
  %v5942 = vrot.slane %v5941, 2
  %v5943 = vadd.f32 %v5941, %v5942
  %v5944 = vrot.slane %v5943, 1
  %v5945 = vadd.f32 %v5943, %v5944
  %v5946 = vsel %vm1645, %v5936, 0.0
  %v5947 = vrot.slane %v5946, 4
  %v5948 = vadd.f32 %v5946, %v5947
  %v5949 = vrot.slane %v5948, 2
  %v5950 = vadd.f32 %v5948, %v5949
  %v5951 = vrot.slane %v5950, 1
  %v5952 = vadd.f32 %v5950, %v5951
  %v5953 = vsel %vm1645, %v5937, 0.0
  %v5954 = vrot.slane %v5953, 4
  %v5955 = vadd.f32 %v5953, %v5954
  %v5956 = vrot.slane %v5955, 2
  %v5957 = vadd.f32 %v5955, %v5956
  %v5958 = vrot.slane %v5957, 1
  %v5959 = vadd.f32 %v5957, %v5958
  %v5960 = vsel %vm1645, %v5938, 0.0
  %v5961 = vrot.slane %v5960, 4
  %v5962 = vadd.f32 %v5960, %v5961
  %v5963 = vrot.slane %v5962, 2
  %v5964 = vadd.f32 %v5962, %v5963
  %v5965 = vrot.slane %v5964, 1
  %v5966 = vadd.f32 %v5964, %v5965
  %v5971 = vsel %vm1685, %v5952, %v5945
  %v5972 = vsel %vm1687, %v5959, %v5971
  %v5973 = vsel %vm1689, %v5966, %v5972
  %5974 = vrot.lane.b32.xlu0 %v1847, 124
  %v5975 = vpop.permute.xlu0 %5974
  %v5977 = vsel %vm645, %v5973, 0
  %5979 = vmatprep.subr.mxu0 0.0
  %5980 = vmatpush1.msra.mxu0 %v88
  %5981 = vmatprep.subr.mxu0 0.0
  %5982 = vmatpush1.msra.mxu0 %v89
  %5983 = vmatprep.subr.mxu0 0.0
  %5984 = vmatpush1.msra.mxu0 %v90
  %5985 = vmatprep.subr.mxu0 0.0
  %5986 = vmatpush1.msra.mxu0 %v91
  %5987 = vmatprep.subr.mxu0 0.0
  %5988 = vmatpush1.msra.mxu0 0.0
  %5989 = vmatprep.subr.mxu0 0.0
  %5990 = vmatpush1.msra.mxu0 0.0
  %5991 = vmatprep.subr.mxu0 0.0
  %5992 = vmatpush1.msra.mxu0 0.0
  %5993 = vmatprep.subr.mxu0 0.0
  %5994 = vmatpush1.msra.mxu0 0.0
  %5995 = vmatprep.subr.mxu0 0.0
  %5996 = vmatpush1.msra.mxu0 0.0
  %5997 = vmatprep.subr.mxu0 0.0
  %5998 = vmatpush1.msra.mxu0 0.0
  %5999 = vmatprep.subr.mxu0 0.0
  %6000 = vmatpush1.msra.mxu0 0.0
  %6001 = vmatprep.subr.mxu0 0.0
  %6002 = vmatpush1.msra.mxu0 0.0
  %6003 = vmatprep.subr.mxu0 0.0
  %6004 = vmatpush1.msra.mxu0 0.0
  %6005 = vmatprep.subr.mxu0 0.0
  %6006 = vmatpush1.msra.mxu0 0.0
  %6007 = vmatprep.subr.mxu0 0.0
  %6008 = vmatpush1.msra.mxu0 0.0
  %6009 = vmatprep.subr.mxu0 0.0
  %6010 = vmatpush1.msra.mxu0 0.0
  %6011 = vmatprep.subr.mxu0 0.0
  %6012 = vmatpush1.msra.mxu0 0.0
  %6013 = vmatprep.subr.mxu0 0.0
  %6014 = vmatpush1.msra.mxu0 0.0
  %6015 = vmatprep.subr.mxu0 0.0
  %6016 = vmatpush1.msra.mxu0 0.0
  %6017 = vmatprep.subr.mxu0 0.0
  %6018 = vmatpush1.msra.mxu0 0.0
  %6019 = vmatprep.subr.mxu0 0.0
  %6020 = vmatpush1.msra.mxu0 0.0
  %6021 = vmatprep.subr.mxu0 0.0
  %6022 = vmatpush1.msra.mxu0 0.0
  %6023 = vmatprep.subr.mxu0 0.0
  %6024 = vmatpush1.msra.mxu0 0.0
  %6025 = vmatprep.subr.mxu0 0.0
  %6026 = vmatpush1.msra.mxu0 0.0
  %6027 = vmatprep.subr.mxu0 0.0
  %6028 = vmatpush1.msra.mxu0 0.0
  %6029 = vmatprep.subr.mxu0 0.0
  %6030 = vmatpush1.msra.mxu0 0.0
  %6031 = vmatprep.subr.mxu0 0.0
  %6032 = vmatpush1.msra.mxu0 0.0
  %6033 = vmatprep.subr.mxu0 0.0
  %6034 = vmatpush1.msra.mxu0 0.0
  %6035 = vmatprep.subr.mxu0 0.0
  %6036 = vmatpush1.msra.mxu0 0.0
  %6037 = vmatprep.subr.mxu0 0.0
  %6038 = vmatpush1.msra.mxu0 0.0
  %6039 = vmatprep.subr.mxu0 0.0
  %6040 = vmatpush1.msra.mxu0 0.0
  %6041 = vmatprep.subr.mxu0 0.0
  %6042 = vmatpush1.msra.mxu0 0.0
  %6043 = vmatprep.mubr.f32.mxu0 0.0
  %6044 = vmatmul.mubr.f32.gmra.mrb[0].mxu0 %v5977
  %v6045 = vpop.f32.mrb[0].mxu0
  %v6046 = vadd.f32 %v5975, %v6045
  %v6047 = vpop.f32.mrb[0].mxu0
  %6048 = vdwg.mxu0
  %v6049 = vadd.f32 %v6046, %v1927
  %6051 = vset.pattern.permute.xlu0 0
  %6052 = vperm.xlu0 %6051, %v6049
  %v6053 = vpop.permute.xlu0 %6052
  %v6055 = vmul.f32 %v6053, %v1938
  %v6056 = vsel %vm645, %v5129, 0
  %6058 = vmatprep.subr.mxu0 0.0
  %6059 = vmatpush1.msra.mxu0 %v83
  %6060 = vmatprep.subr.mxu0 0.0
  %6061 = vmatpush1.msra.mxu0 %v84
  %6062 = vmatprep.subr.mxu0 0.0
  %6063 = vmatpush1.msra.mxu0 %v85
  %6064 = vmatprep.subr.mxu0 0.0
  %6065 = vmatpush1.msra.mxu0 %v86
  %6066 = vmatprep.subr.mxu0 0.0
  %6067 = vmatpush1.msra.mxu0 0.0
  %6068 = vmatprep.subr.mxu0 0.0
  %6069 = vmatpush1.msra.mxu0 0.0
  %6070 = vmatprep.subr.mxu0 0.0
  %6071 = vmatpush1.msra.mxu0 0.0
  %6072 = vmatprep.subr.mxu0 0.0
  %6073 = vmatpush1.msra.mxu0 0.0
  %6074 = vmatprep.subr.mxu0 0.0
  %6075 = vmatpush1.msra.mxu0 0.0
  %6076 = vmatprep.subr.mxu0 0.0
  %6077 = vmatpush1.msra.mxu0 0.0
  %6078 = vmatprep.subr.mxu0 0.0
  %6079 = vmatpush1.msra.mxu0 0.0
  %6080 = vmatprep.subr.mxu0 0.0
  %6081 = vmatpush1.msra.mxu0 0.0
  %6082 = vmatprep.subr.mxu0 0.0
  %6083 = vmatpush1.msra.mxu0 0.0
  %6084 = vmatprep.subr.mxu0 0.0
  %6085 = vmatpush1.msra.mxu0 0.0
  %6086 = vmatprep.subr.mxu0 0.0
  %6087 = vmatpush1.msra.mxu0 0.0
  %6088 = vmatprep.subr.mxu0 0.0
  %6089 = vmatpush1.msra.mxu0 0.0
  %6090 = vmatprep.subr.mxu0 0.0
  %6091 = vmatpush1.msra.mxu0 0.0
  %6092 = vmatprep.subr.mxu0 0.0
  %6093 = vmatpush1.msra.mxu0 0.0
  %6094 = vmatprep.subr.mxu0 0.0
  %6095 = vmatpush1.msra.mxu0 0.0
  %6096 = vmatprep.subr.mxu0 0.0
  %6097 = vmatpush1.msra.mxu0 0.0
  %6098 = vmatprep.subr.mxu0 0.0
  %6099 = vmatpush1.msra.mxu0 0.0
  %6100 = vmatprep.subr.mxu0 0.0
  %6101 = vmatpush1.msra.mxu0 0.0
  %6102 = vmatprep.subr.mxu0 0.0
  %6103 = vmatpush1.msra.mxu0 0.0
  %6104 = vmatprep.subr.mxu0 0.0
  %6105 = vmatpush1.msra.mxu0 0.0
  %6106 = vmatprep.subr.mxu0 0.0
  %6107 = vmatpush1.msra.mxu0 0.0
  %6108 = vmatprep.subr.mxu0 0.0
  %6109 = vmatpush1.msra.mxu0 0.0
  %6110 = vmatprep.subr.mxu0 0.0
  %6111 = vmatpush1.msra.mxu0 0.0
  %6112 = vmatprep.subr.mxu0 0.0
  %6113 = vmatpush1.msra.mxu0 0.0
  %6114 = vmatprep.subr.mxu0 0.0
  %6115 = vmatpush1.msra.mxu0 0.0
  %6116 = vmatprep.subr.mxu0 0.0
  %6117 = vmatpush1.msra.mxu0 0.0
  %6118 = vmatprep.subr.mxu0 0.0
  %6119 = vmatpush1.msra.mxu0 0.0
  %6120 = vmatprep.subr.mxu0 0.0
  %6121 = vmatpush1.msra.mxu0 0.0
  %6122 = vmatprep.mubr.f32.mxu0 0.0
  %6123 = vmatmul.mubr.f32.gmra.mrb[0].mxu0 %v6056
  %v6124 = vpop.f32.mrb[0].mxu0
  %v6125 = vadd.f32 0.0, %v6124
  %v6126 = vpop.f32.mrb[0].mxu0
  %6127 = vdwg.mxu0
  %v6128 = vadd.f32 %v6055, %v6125
  %v6129 = vadd.f32 %v6128, %v2018
  %v6130 = vxor.u32 %v6129, 2147483648
  %v6131 = vmul.f32 %v6130, 1.442695
  %v6132 = vpow.pop %v6131
  %v6133 = vadd.f32 %v6132, 1.0
  %v6134 = vrcp.pop %v6133
  %v6135 = vmul.f32 1.0, %v6134
  %v6136 = vtanh.pop %v6129
  %v6137 = vmul.f32 %v6135, %v5120
  %6139 = vrot.lane.b32.xlu0 %v6136, 64
  %v6140 = vpop.permute.xlu0 %6139
  %v6142 = vmul.f32 %v6135, %v6140
  %6144 = vrot.lane.b32.xlu0 %v6142, 32
  %v6145 = vpop.permute.xlu0 %6144
  %v6147 = vadd.f32 %v6137, %v6145
  %v6148 = vtanh.pop %v6147
  %6150 = vrot.lane.b32.xlu0 %v6148, 64
  %v6151 = vpop.permute.xlu0 %6150
  %v6153 = vmul.f32 %v6135, %v6151
  %6155 = vrot.lane.b32.xlu0 %v6153, 32
  %v6156 = vpop.permute.xlu0 %6155
  %v6158 = vsel %vm645, %v6156, %v6147
  %v6160 = vsel %vm942, %v6158, 0
  %6162 = vmatprep.subr.mxu0 0.0
  %6163 = vmatpush1.msra.mxu0 %v66
  %6164 = vmatprep.subr.mxu0 0.0
  %6165 = vmatpush1.msra.mxu0 %v67
  %6166 = vmatprep.subr.mxu0 0.0
  %6167 = vmatpush1.msra.mxu0 %v68
  %6168 = vmatprep.subr.mxu0 0.0
  %6169 = vmatpush1.msra.mxu0 %v69
  %6170 = vmatprep.subr.mxu0 0.0
  %6171 = vmatpush1.msra.mxu0 %v70
  %6172 = vmatprep.subr.mxu0 0.0
  %6173 = vmatpush1.msra.mxu0 %v71
  %6174 = vmatprep.subr.mxu0 0.0
  %6175 = vmatpush1.msra.mxu0 %v72
  %6176 = vmatprep.subr.mxu0 0.0
  %6177 = vmatpush1.msra.mxu0 %v73
  %6178 = vmatprep.subr.mxu0 0.0
  %6179 = vmatpush1.msra.mxu0 0.0
  %6180 = vmatprep.subr.mxu0 0.0
  %6181 = vmatpush1.msra.mxu0 0.0
  %6182 = vmatprep.subr.mxu0 0.0
  %6183 = vmatpush1.msra.mxu0 0.0
  %6184 = vmatprep.subr.mxu0 0.0
  %6185 = vmatpush1.msra.mxu0 0.0
  %6186 = vmatprep.subr.mxu0 0.0
  %6187 = vmatpush1.msra.mxu0 0.0
  %6188 = vmatprep.subr.mxu0 0.0
  %6189 = vmatpush1.msra.mxu0 0.0
  %6190 = vmatprep.subr.mxu0 0.0
  %6191 = vmatpush1.msra.mxu0 0.0
  %6192 = vmatprep.subr.mxu0 0.0
  %6193 = vmatpush1.msra.mxu0 0.0
  %6194 = vmatprep.subr.mxu0 0.0
  %6195 = vmatpush1.msra.mxu0 0.0
  %6196 = vmatprep.subr.mxu0 0.0
  %6197 = vmatpush1.msra.mxu0 0.0
  %6198 = vmatprep.subr.mxu0 0.0
  %6199 = vmatpush1.msra.mxu0 0.0
  %6200 = vmatprep.subr.mxu0 0.0
  %6201 = vmatpush1.msra.mxu0 0.0
  %6202 = vmatprep.subr.mxu0 0.0
  %6203 = vmatpush1.msra.mxu0 0.0
  %6204 = vmatprep.subr.mxu0 0.0
  %6205 = vmatpush1.msra.mxu0 0.0
  %6206 = vmatprep.subr.mxu0 0.0
  %6207 = vmatpush1.msra.mxu0 0.0
  %6208 = vmatprep.subr.mxu0 0.0
  %6209 = vmatpush1.msra.mxu0 0.0
  %6210 = vmatprep.subr.mxu0 0.0
  %6211 = vmatpush1.msra.mxu0 0.0
  %6212 = vmatprep.subr.mxu0 0.0
  %6213 = vmatpush1.msra.mxu0 0.0
  %6214 = vmatprep.subr.mxu0 0.0
  %6215 = vmatpush1.msra.mxu0 0.0
  %6216 = vmatprep.subr.mxu0 0.0
  %6217 = vmatpush1.msra.mxu0 0.0
  %6218 = vmatprep.subr.mxu0 0.0
  %6219 = vmatpush1.msra.mxu0 0.0
  %6220 = vmatprep.subr.mxu0 0.0
  %6221 = vmatpush1.msra.mxu0 0.0
  %6222 = vmatprep.subr.mxu0 0.0
  %6223 = vmatpush1.msra.mxu0 0.0
  %6224 = vmatprep.subr.mxu0 0.0
  %6225 = vmatpush1.msra.mxu0 0.0
  %6226 = vmatprep.mubr.f32.mxu0 0.0
  %6227 = vmatmul.mubr.f32.gmra.mrb[0].mxu0 %v6160
  %v6228 = vpop.f32.mrb[0].mxu0
  %v6229 = vadd.f32 0.0, %v6228
  %v6230 = vpop.f32.mrb[0].mxu0
  %6231 = vdwg.mxu0
  %v6234 = vunpack.c.l.s4 1966171168
  %v6235 = vunpack.c.0.s8 %v6234
  %v6236 = vlaneseq
  %v6237 = vshrl.u32 %v6236, 7
  %v6238 = vsub.s32 %v6235, %v6237
  %v6239 = vrot.slane %v6229, %v6238
  %v6240 = vcombine.high %v6239, %v6239
  %v6242 = vunpack.c.l.s4 1966171168
  %v6243 = vunpack.c.0.s8 %v6242
  %v6244 = vlaneseq
  %v6245 = vshrl.u32 %v6244, 7
  %v6246 = vsub.s32 %v6243, %v6245
  %v6247 = vrot.slane %v6239, %v6246
  %v6249 = vunpack.c.l.s4 1966171168
  %v6250 = vunpack.c.0.s8 %v6249
  %v6251 = vlaneseq
  %v6252 = vshrl.u32 %v6251, 7
  %v6253 = vsub.s32 %v6250, %v6252
  %v6254 = vrot.slane %v6240, %v6253
  %v6255 = vcombine.high %v6247, %v6247
  %v6256 = vcombine.high %v6254, %v6254
  %v6257 = vlaneseq
  %v6258 = vshrl.u32 %v6257, 7
  %v6259 = vsub.s32 0, %v6258
  %v6260 = vrot.slane %v6247, %v6259
  %v6261 = vlaneseq
  %v6262 = vshrl.u32 %v6261, 7
  %v6263 = vsub.s32 0, %v6262
  %v6264 = vrot.slane %v6254, %v6263
  %v6265 = vlaneseq
  %v6266 = vshrl.u32 %v6265, 7
  %v6267 = vsub.s32 0, %v6266
  %v6268 = vrot.slane %v6255, %v6267
  %v6269 = vlaneseq
  %v6270 = vshrl.u32 %v6269, 7
  %v6271 = vsub.s32 0, %v6270
  %v6272 = vrot.slane %v6256, %v6271
  %v6273 = vcombine.high %v6260, %v6260
  %v6275 = vunpack.c.l.s4 1966171168
  %v6276 = vunpack.c.0.s8 %v6275
  %v6277 = vlaneseq
  %v6278 = vshrl.u32 %v6277, 7
  %v6279 = vsub.s32 %v6276, %v6278
  %v6280 = vrot.slane %v6260, %v6279
  %v6282 = vunpack.c.l.s4 1966171168
  %v6283 = vunpack.c.0.s8 %v6282
  %v6284 = vlaneseq
  %v6285 = vshrl.u32 %v6284, 7
  %v6286 = vsub.s32 %v6283, %v6285
  %v6287 = vrot.slane %v6273, %v6286
  %v6288 = vcombine.high %v6280, %v6280
  %v6289 = vcombine.high %v6287, %v6287
  %v6291 = vunpack.c.l.s4 1966171168
  %v6292 = vunpack.c.0.s8 %v6291
  %v6293 = vlaneseq
  %v6294 = vshrl.u32 %v6293, 7
  %v6295 = vsub.s32 %v6292, %v6294
  %v6296 = vrot.slane %v6280, %v6295
  %v6298 = vunpack.c.l.s4 1966171168
  %v6299 = vunpack.c.0.s8 %v6298
  %v6300 = vlaneseq
  %v6301 = vshrl.u32 %v6300, 7
  %v6302 = vsub.s32 %v6299, %v6301
  %v6303 = vrot.slane %v6287, %v6302
  %v6305 = vunpack.c.l.s4 1966171168
  %v6306 = vunpack.c.0.s8 %v6305
  %v6307 = vlaneseq
  %v6308 = vshrl.u32 %v6307, 7
  %v6309 = vsub.s32 %v6306, %v6308
  %v6310 = vrot.slane %v6288, %v6309
  %v6312 = vunpack.c.l.s4 1966171168
  %v6313 = vunpack.c.0.s8 %v6312
  %v6314 = vlaneseq
  %v6315 = vshrl.u32 %v6314, 7
  %v6316 = vsub.s32 %v6313, %v6315
  %v6317 = vrot.slane %v6289, %v6316
  %v6318 = vcombine.high %v6296, %v6296
  %v6319 = vcombine.high %v6303, %v6303
  %v6320 = vcombine.high %v6310, %v6310
  %v6321 = vcombine.high %v6264, %v6264
  %v6323 = vunpack.c.l.s4 1966171168
  %v6324 = vunpack.c.0.s8 %v6323
  %v6325 = vlaneseq
  %v6326 = vshrl.u32 %v6325, 7
  %v6327 = vsub.s32 %v6324, %v6326
  %v6328 = vrot.slane %v6264, %v6327
  %v6330 = vunpack.c.l.s4 1966171168
  %v6331 = vunpack.c.0.s8 %v6330
  %v6332 = vlaneseq
  %v6333 = vshrl.u32 %v6332, 7
  %v6334 = vsub.s32 %v6331, %v6333
  %v6335 = vrot.slane %v6321, %v6334
  %v6336 = vcombine.high %v6328, %v6328
  %v6337 = vcombine.high %v6335, %v6335
  %v6339 = vunpack.c.l.s4 1966171168
  %v6340 = vunpack.c.0.s8 %v6339
  %v6341 = vlaneseq
  %v6342 = vshrl.u32 %v6341, 7
  %v6343 = vsub.s32 %v6340, %v6342
  %v6344 = vrot.slane %v6328, %v6343
  %v6346 = vunpack.c.l.s4 1966171168
  %v6347 = vunpack.c.0.s8 %v6346
  %v6348 = vlaneseq
  %v6349 = vshrl.u32 %v6348, 7
  %v6350 = vsub.s32 %v6347, %v6349
  %v6351 = vrot.slane %v6335, %v6350
  %v6353 = vunpack.c.l.s4 1966171168
  %v6354 = vunpack.c.0.s8 %v6353
  %v6355 = vlaneseq
  %v6356 = vshrl.u32 %v6355, 7
  %v6357 = vsub.s32 %v6354, %v6356
  %v6358 = vrot.slane %v6336, %v6357
  %v6360 = vunpack.c.l.s4 1966171168
  %v6361 = vunpack.c.0.s8 %v6360
  %v6362 = vlaneseq
  %v6363 = vshrl.u32 %v6362, 7
  %v6364 = vsub.s32 %v6361, %v6363
  %v6365 = vrot.slane %v6337, %v6364
  %v6366 = vcombine.high %v6344, %v6344
  %v6367 = vcombine.high %v6351, %v6351
  %v6368 = vcombine.high %v6358, %v6358
  %v6369 = vcombine.high %v6268, %v6268
  %v6371 = vunpack.c.l.s4 1966171168
  %v6372 = vunpack.c.0.s8 %v6371
  %v6373 = vlaneseq
  %v6374 = vshrl.u32 %v6373, 7
  %v6375 = vsub.s32 %v6372, %v6374
  %v6376 = vrot.slane %v6268, %v6375
  %v6378 = vunpack.c.l.s4 1966171168
  %v6379 = vunpack.c.0.s8 %v6378
  %v6380 = vlaneseq
  %v6381 = vshrl.u32 %v6380, 7
  %v6382 = vsub.s32 %v6379, %v6381
  %v6383 = vrot.slane %v6369, %v6382
  %v6384 = vcombine.high %v6376, %v6376
  %v6385 = vcombine.high %v6383, %v6383
  %v6387 = vunpack.c.l.s4 1966171168
  %v6388 = vunpack.c.0.s8 %v6387
  %v6389 = vlaneseq
  %v6390 = vshrl.u32 %v6389, 7
  %v6391 = vsub.s32 %v6388, %v6390
  %v6392 = vrot.slane %v6376, %v6391
  %v6394 = vunpack.c.l.s4 1966171168
  %v6395 = vunpack.c.0.s8 %v6394
  %v6396 = vlaneseq
  %v6397 = vshrl.u32 %v6396, 7
  %v6398 = vsub.s32 %v6395, %v6397
  %v6399 = vrot.slane %v6383, %v6398
  %v6401 = vunpack.c.l.s4 1966171168
  %v6402 = vunpack.c.0.s8 %v6401
  %v6403 = vlaneseq
  %v6404 = vshrl.u32 %v6403, 7
  %v6405 = vsub.s32 %v6402, %v6404
  %v6406 = vrot.slane %v6384, %v6405
  %v6408 = vunpack.c.l.s4 1966171168
  %v6409 = vunpack.c.0.s8 %v6408
  %v6410 = vlaneseq
  %v6411 = vshrl.u32 %v6410, 7
  %v6412 = vsub.s32 %v6409, %v6411
  %v6413 = vrot.slane %v6385, %v6412
  %v6414 = vcombine.high %v6392, %v6392
  %v6415 = vcombine.high %v6399, %v6399
  %v6416 = vcombine.high %v6406, %v6406
  %v6417 = vcombine.high %v6272, %v6272
  %v6419 = vunpack.c.l.s4 1966171168
  %v6420 = vunpack.c.0.s8 %v6419
  %v6421 = vlaneseq
  %v6422 = vshrl.u32 %v6421, 7
  %v6423 = vsub.s32 %v6420, %v6422
  %v6424 = vrot.slane %v6272, %v6423
  %v6426 = vunpack.c.l.s4 1966171168
  %v6427 = vunpack.c.0.s8 %v6426
  %v6428 = vlaneseq
  %v6429 = vshrl.u32 %v6428, 7
  %v6430 = vsub.s32 %v6427, %v6429
  %v6431 = vrot.slane %v6417, %v6430
  %v6432 = vcombine.high %v6424, %v6424
  %v6433 = vcombine.high %v6431, %v6431
  %v6435 = vunpack.c.l.s4 1966171168
  %v6436 = vunpack.c.0.s8 %v6435
  %v6437 = vlaneseq
  %v6438 = vshrl.u32 %v6437, 7
  %v6439 = vsub.s32 %v6436, %v6438
  %v6440 = vrot.slane %v6424, %v6439
  %v6442 = vunpack.c.l.s4 1966171168
  %v6443 = vunpack.c.0.s8 %v6442
  %v6444 = vlaneseq
  %v6445 = vshrl.u32 %v6444, 7
  %v6446 = vsub.s32 %v6443, %v6445
  %v6447 = vrot.slane %v6431, %v6446
  %v6449 = vunpack.c.l.s4 1966171168
  %v6450 = vunpack.c.0.s8 %v6449
  %v6451 = vlaneseq
  %v6452 = vshrl.u32 %v6451, 7
  %v6453 = vsub.s32 %v6450, %v6452
  %v6454 = vrot.slane %v6432, %v6453
  %v6456 = vunpack.c.l.s4 1966171168
  %v6457 = vunpack.c.0.s8 %v6456
  %v6458 = vlaneseq
  %v6459 = vshrl.u32 %v6458, 7
  %v6460 = vsub.s32 %v6457, %v6459
  %v6461 = vrot.slane %v6433, %v6460
  %v6462 = vcombine.high %v6440, %v6440
  %v6463 = vcombine.high %v6447, %v6447
  %v6464 = vcombine.high %v6454, %v6454
  %v6493 = vadd.f32 %v766, %v6296
  %v6494 = vadd.f32 %v780, %v6310
  %v6495 = vadd.f32 %v788, %v6318
  %v6496 = vadd.f32 %v790, %v6320
  %v6497 = vadd.f32 %v773, %v6303
  %v6498 = vadd.f32 %v787, %v6317
  %v6499 = vadd.f32 %v789, %v6319
  %v6500 = vadd.f32 %v791, %v6344
  %v6501 = vadd.f32 %v815, %v6358
  %v6502 = vadd.f32 %v829, %v6366
  %v6503 = vadd.f32 %v837, %v6368
  %v6504 = vadd.f32 %v839, %v6351
  %v6505 = vadd.f32 %v822, %v6365
  %v6506 = vadd.f32 %v836, %v6367
  %v6507 = vadd.f32 %v838, %v6392
  %v6508 = vadd.f32 %v840, %v6406
  %v6509 = vadd.f32 %v864, %v6414
  %v6510 = vadd.f32 %v878, %v6416
  %v6511 = vadd.f32 %v886, %v6399
  %v6512 = vadd.f32 %v888, %v6413
  %v6513 = vadd.f32 %v871, %v6415
  %v6514 = vadd.f32 %v885, %v6440
  %v6515 = vadd.f32 %v887, %v6454
  %v6516 = vadd.f32 %v889, %v6462
  %v6517 = vadd.f32 %v904, %v6464
  %v6518 = vadd.f32 %v911, %v6447
  %v6519 = vadd.f32 %v912, %v6461
  %v6520 = vadd.f32 %v913, %v6463
  %v6521 = vtanh.pop %v6493
  %v6522 = vtanh.pop %v6494
  %v6523 = vtanh.pop %v6495
  %v6524 = vtanh.pop %v6496
  %v6525 = vtanh.pop %v6497
  %v6526 = vtanh.pop %v6498
  %v6527 = vtanh.pop %v6499
  %v6528 = vtanh.pop %v6500
  %v6529 = vtanh.pop %v6501
  %v6530 = vtanh.pop %v6502
  %v6531 = vtanh.pop %v6503
  %v6532 = vtanh.pop %v6504
  %v6533 = vtanh.pop %v6505
  %v6534 = vtanh.pop %v6506
  %v6535 = vtanh.pop %v6507
  %v6536 = vtanh.pop %v6508
  %v6537 = vtanh.pop %v6509
  %v6538 = vtanh.pop %v6510
  %v6539 = vtanh.pop %v6511
  %v6540 = vtanh.pop %v6512
  %v6541 = vtanh.pop %v6513
  %v6542 = vtanh.pop %v6514
  %v6543 = vtanh.pop %v6515
  %v6544 = vtanh.pop %v6516
  %v6545 = vtanh.pop %v6517
  %v6546 = vtanh.pop %v6518
  %v6547 = vtanh.pop %v6519
  %v6548 = vtanh.pop %v6520
  %v6549 = vmul.f32 %v6521, %v1361
  %v6550 = vmul.f32 %v6522, %v1375
  %v6551 = vmul.f32 %v6523, %v1383
  %v6552 = vmul.f32 %v6524, %v1385
  %v6553 = vmul.f32 %v6525, %v1368
  %v6554 = vmul.f32 %v6526, %v1382
  %v6555 = vmul.f32 %v6527, %v1384
  %v6556 = vmul.f32 %v6528, %v1361
  %v6557 = vmul.f32 %v6529, %v1375
  %v6558 = vmul.f32 %v6530, %v1383
  %v6559 = vmul.f32 %v6531, %v1385
  %v6560 = vmul.f32 %v6532, %v1368
  %v6561 = vmul.f32 %v6533, %v1382
  %v6562 = vmul.f32 %v6534, %v1384
  %v6563 = vmul.f32 %v6535, %v1361
  %v6564 = vmul.f32 %v6536, %v1375
  %v6565 = vmul.f32 %v6537, %v1383
  %v6566 = vmul.f32 %v6538, %v1385
  %v6567 = vmul.f32 %v6539, %v1368
  %v6568 = vmul.f32 %v6540, %v1382
  %v6569 = vmul.f32 %v6541, %v1384
  %v6570 = vmul.f32 %v6542, %v1361
  %v6571 = vmul.f32 %v6543, %v1375
  %v6572 = vmul.f32 %v6544, %v1383
  %v6573 = vmul.f32 %v6545, %v1385
  %v6574 = vmul.f32 %v6546, %v1368
  %v6575 = vmul.f32 %v6547, %v1382
  %v6576 = vmul.f32 %v6548, %v1384
  %v6605 = vcombine.low %v6549, %v6550
  %v6606 = vcombine.low %v6551, %v6552
  %v6607 = vcombine.low %v6553, %v6554
  %v6609 = vunpack.c.l.s4 1966171168
  %v6610 = vunpack.c.0.s8 %v6609
  %v6611 = vlaneseq
  %v6612 = vshrl.u32 %v6611, 7
  %v6613 = vsub.s32 %v6610, %v6612
  %v6614 = vrot.slane %v6605, %v6613
  %v6616 = vunpack.c.l.s4 1966171168
  %v6617 = vunpack.c.0.s8 %v6616
  %v6618 = vlaneseq
  %v6619 = vshrl.u32 %v6618, 7
  %v6620 = vsub.s32 %v6617, %v6619
  %v6621 = vrot.slane %v6606, %v6620
  %v6623 = vunpack.c.l.s4 1966171168
  %v6624 = vunpack.c.0.s8 %v6623
  %v6625 = vlaneseq
  %v6626 = vshrl.u32 %v6625, 7
  %v6627 = vsub.s32 %v6624, %v6626
  %v6628 = vrot.slane %v6607, %v6627
  %v6630 = vunpack.c.l.s4 1966171168
  %v6631 = vunpack.c.0.s8 %v6630
  %v6632 = vlaneseq
  %v6633 = vshrl.u32 %v6632, 7
  %v6634 = vsub.s32 %v6631, %v6633
  %v6635 = vrot.slane %v6555, %v6634
  %v6636 = vcombine.low %v6614, %v6621
  %v6637 = vcombine.low %v6628, %v6635
  %v6639 = vunpack.c.l.s4 1966171168
  %v6640 = vunpack.c.0.s8 %v6639
  %v6641 = vlaneseq
  %v6642 = vshrl.u32 %v6641, 7
  %v6643 = vsub.s32 %v6640, %v6642
  %v6644 = vrot.slane %v6636, %v6643
  %v6646 = vunpack.c.l.s4 1966171168
  %v6647 = vunpack.c.0.s8 %v6646
  %v6648 = vlaneseq
  %v6649 = vshrl.u32 %v6648, 7
  %v6650 = vsub.s32 %v6647, %v6649
  %v6651 = vrot.slane %v6637, %v6650
  %v6652 = vcombine.low %v6644, %v6651
  %v6653 = vcombine.low %v6556, %v6557
  %v6654 = vcombine.low %v6558, %v6559
  %v6655 = vcombine.low %v6560, %v6561
  %v6657 = vunpack.c.l.s4 1966171168
  %v6658 = vunpack.c.0.s8 %v6657
  %v6659 = vlaneseq
  %v6660 = vshrl.u32 %v6659, 7
  %v6661 = vsub.s32 %v6658, %v6660
  %v6662 = vrot.slane %v6653, %v6661
  %v6664 = vunpack.c.l.s4 1966171168
  %v6665 = vunpack.c.0.s8 %v6664
  %v6666 = vlaneseq
  %v6667 = vshrl.u32 %v6666, 7
  %v6668 = vsub.s32 %v6665, %v6667
  %v6669 = vrot.slane %v6654, %v6668
  %v6671 = vunpack.c.l.s4 1966171168
  %v6672 = vunpack.c.0.s8 %v6671
  %v6673 = vlaneseq
  %v6674 = vshrl.u32 %v6673, 7
  %v6675 = vsub.s32 %v6672, %v6674
  %v6676 = vrot.slane %v6655, %v6675
  %v6678 = vunpack.c.l.s4 1966171168
  %v6679 = vunpack.c.0.s8 %v6678
  %v6680 = vlaneseq
  %v6681 = vshrl.u32 %v6680, 7
  %v6682 = vsub.s32 %v6679, %v6681
  %v6683 = vrot.slane %v6562, %v6682
  %v6684 = vcombine.low %v6662, %v6669
  %v6685 = vcombine.low %v6676, %v6683
  %v6687 = vunpack.c.l.s4 1966171168
  %v6688 = vunpack.c.0.s8 %v6687
  %v6689 = vlaneseq
  %v6690 = vshrl.u32 %v6689, 7
  %v6691 = vsub.s32 %v6688, %v6690
  %v6692 = vrot.slane %v6684, %v6691
  %v6694 = vunpack.c.l.s4 1966171168
  %v6695 = vunpack.c.0.s8 %v6694
  %v6696 = vlaneseq
  %v6697 = vshrl.u32 %v6696, 7
  %v6698 = vsub.s32 %v6695, %v6697
  %v6699 = vrot.slane %v6685, %v6698
  %v6700 = vcombine.low %v6692, %v6699
  %v6701 = vcombine.low %v6563, %v6564
  %v6702 = vcombine.low %v6565, %v6566
  %v6703 = vcombine.low %v6567, %v6568
  %v6705 = vunpack.c.l.s4 1966171168
  %v6706 = vunpack.c.0.s8 %v6705
  %v6707 = vlaneseq
  %v6708 = vshrl.u32 %v6707, 7
  %v6709 = vsub.s32 %v6706, %v6708
  %v6710 = vrot.slane %v6701, %v6709
  %v6712 = vunpack.c.l.s4 1966171168
  %v6713 = vunpack.c.0.s8 %v6712
  %v6714 = vlaneseq
  %v6715 = vshrl.u32 %v6714, 7
  %v6716 = vsub.s32 %v6713, %v6715
  %v6717 = vrot.slane %v6702, %v6716
  %v6719 = vunpack.c.l.s4 1966171168
  %v6720 = vunpack.c.0.s8 %v6719
  %v6721 = vlaneseq
  %v6722 = vshrl.u32 %v6721, 7
  %v6723 = vsub.s32 %v6720, %v6722
  %v6724 = vrot.slane %v6703, %v6723
  %v6726 = vunpack.c.l.s4 1966171168
  %v6727 = vunpack.c.0.s8 %v6726
  %v6728 = vlaneseq
  %v6729 = vshrl.u32 %v6728, 7
  %v6730 = vsub.s32 %v6727, %v6729
  %v6731 = vrot.slane %v6569, %v6730
  %v6732 = vcombine.low %v6710, %v6717
  %v6733 = vcombine.low %v6724, %v6731
  %v6735 = vunpack.c.l.s4 1966171168
  %v6736 = vunpack.c.0.s8 %v6735
  %v6737 = vlaneseq
  %v6738 = vshrl.u32 %v6737, 7
  %v6739 = vsub.s32 %v6736, %v6738
  %v6740 = vrot.slane %v6732, %v6739
  %v6742 = vunpack.c.l.s4 1966171168
  %v6743 = vunpack.c.0.s8 %v6742
  %v6744 = vlaneseq
  %v6745 = vshrl.u32 %v6744, 7
  %v6746 = vsub.s32 %v6743, %v6745
  %v6747 = vrot.slane %v6733, %v6746
  %v6748 = vcombine.low %v6740, %v6747
  %v6749 = vcombine.low %v6570, %v6571
  %v6750 = vcombine.low %v6572, %v6573
  %v6751 = vcombine.low %v6574, %v6575
  %v6753 = vunpack.c.l.s4 1966171168
  %v6754 = vunpack.c.0.s8 %v6753
  %v6755 = vlaneseq
  %v6756 = vshrl.u32 %v6755, 7
  %v6757 = vsub.s32 %v6754, %v6756
  %v6758 = vrot.slane %v6749, %v6757
  %v6760 = vunpack.c.l.s4 1966171168
  %v6761 = vunpack.c.0.s8 %v6760
  %v6762 = vlaneseq
  %v6763 = vshrl.u32 %v6762, 7
  %v6764 = vsub.s32 %v6761, %v6763
  %v6765 = vrot.slane %v6750, %v6764
  %v6767 = vunpack.c.l.s4 1966171168
  %v6768 = vunpack.c.0.s8 %v6767
  %v6769 = vlaneseq
  %v6770 = vshrl.u32 %v6769, 7
  %v6771 = vsub.s32 %v6768, %v6770
  %v6772 = vrot.slane %v6751, %v6771
  %v6774 = vunpack.c.l.s4 1966171168
  %v6775 = vunpack.c.0.s8 %v6774
  %v6776 = vlaneseq
  %v6777 = vshrl.u32 %v6776, 7
  %v6778 = vsub.s32 %v6775, %v6777
  %v6779 = vrot.slane %v6576, %v6778
  %v6780 = vcombine.low %v6758, %v6765
  %v6781 = vcombine.low %v6772, %v6779
  %v6783 = vunpack.c.l.s4 1966171168
  %v6784 = vunpack.c.0.s8 %v6783
  %v6785 = vlaneseq
  %v6786 = vshrl.u32 %v6785, 7
  %v6787 = vsub.s32 %v6784, %v6786
  %v6788 = vrot.slane %v6780, %v6787
  %v6790 = vunpack.c.l.s4 1966171168
  %v6791 = vunpack.c.0.s8 %v6790
  %v6792 = vlaneseq
  %v6793 = vshrl.u32 %v6792, 7
  %v6794 = vsub.s32 %v6791, %v6793
  %v6795 = vrot.slane %v6781, %v6794
  %v6796 = vcombine.low %v6788, %v6795
  %v6801 = vsel %vm1645, %v6652, 0.0
  %6802 = vadd.xlane.f32.xlu0 %v6801
  %v6803 = vpop.xlane.xlu0 %6802
  %v6804 = vsel %vm1645, %v6700, 0.0
  %6805 = vadd.xlane.f32.xlu0 %v6804
  %v6806 = vpop.xlane.xlu0 %6805
  %v6807 = vsel %vm1645, %v6748, 0.0
  %6808 = vadd.xlane.f32.xlu0 %v6807
  %v6809 = vpop.xlane.xlu0 %6808
  %v6810 = vsel %vm1645, %v6796, 0.0
  %6811 = vadd.xlane.f32.xlu0 %v6810
  %v6812 = vpop.xlane.xlu0 %6811
  %v6813 = vadd.f32 %v6803, %v1658
  %v6814 = vadd.f32 %v6806, %v1658
  %v6815 = vadd.f32 %v6809, %v1658
  %v6816 = vadd.f32 %v6812, %v1658
  %v6821 = vlaneseq
  %v6822 = vshrl.u32 %v6821, 7
  %v6823 = vsub.s32 %v1668, %v6822
  %v6824 = vrot.slane %v6813, %v6823
  %v6825 = vlaneseq
  %v6826 = vshrl.u32 %v6825, 7
  %v6827 = vsub.s32 %v1668, %v6826
  %v6828 = vrot.slane %v6814, %v6827
  %v6829 = vlaneseq
  %v6830 = vshrl.u32 %v6829, 7
  %v6831 = vsub.s32 %v1668, %v6830
  %v6832 = vrot.slane %v6815, %v6831
  %v6833 = vlaneseq
  %v6834 = vshrl.u32 %v6833, 7
  %v6835 = vsub.s32 %v1668, %v6834
  %v6836 = vrot.slane %v6816, %v6835
  %v6837 = vsel %vm1685, %v6828, %v6824
  %v6838 = vsel %vm1687, %v6832, %v6837
  %v6839 = vsel %vm1689, %v6836, %v6838
  %v6841 = vsel %vm1692, %v6839, -inf
  %6842 = vmax.xlane.f32.xlu0 %v6841
  %v6843 = vpop.xlane.xlu0 %6842
  %v6845 = vlaneseq
  %v6846 = vshrl.u32 %v6845, 7
  %v6847 = vsub.s32 0, %v6846
  %v6848 = vrot.slane %v6843, %v6847
  %v6849 = vlaneseq
  %v6850 = vshrl.u32 %v6849, 7
  %v6851 = vsub.s32 1, %v6850
  %v6852 = vrot.slane %v6843, %v6851
  %v6853 = vlaneseq
  %v6854 = vshrl.u32 %v6853, 7
  %v6855 = vsub.s32 2, %v6854
  %v6856 = vrot.slane %v6843, %v6855
  %v6857 = vlaneseq
  %v6858 = vshrl.u32 %v6857, 7
  %v6859 = vsub.s32 3, %v6858
  %v6860 = vrot.slane %v6843, %v6859
  %v6865 = vsub.f32 %v6813, %v6848
  %v6866 = vsub.f32 %v6814, %v6852
  %v6867 = vsub.f32 %v6815, %v6856
  %v6868 = vsub.f32 %v6816, %v6860
  %v6869 = vmul.f32 %v6865, 1.442695
  %v6870 = vpow.pop %v6869
  %v6871 = vmul.f32 %v6866, 1.442695
  %v6872 = vpow.pop %v6871
  %v6873 = vmul.f32 %v6867, 1.442695
  %v6874 = vpow.pop %v6873
  %v6875 = vmul.f32 %v6868, 1.442695
  %v6876 = vpow.pop %v6875
  %6881 = vset.pattern.permute.xlu0 0
  %6882 = vperm.xlu0 %6881, %v6870
  %v6883 = vpop.permute.xlu0 %6882
  %6884 = vset.pattern.permute.xlu0 0
  %6885 = vperm.xlu0 %6884, %v6872
  %v6886 = vpop.permute.xlu0 %6885
  %6887 = vset.pattern.permute.xlu0 0
  %6888 = vperm.xlu0 %6887, %v6874
  %v6889 = vpop.permute.xlu0 %6888
  %6890 = vset.pattern.permute.xlu0 0
  %6891 = vperm.xlu0 %6890, %v6876
  %v6892 = vpop.permute.xlu0 %6891
  %v6893 = vlaneseq
  %v6894 = vshrl.u32 %v6893, 7
  %v6895 = vsub.s32 %v1668, %v6894
  %v6896 = vrot.slane %v6883, %v6895
  %v6897 = vlaneseq
  %v6898 = vshrl.u32 %v6897, 7
  %v6899 = vsub.s32 %v1668, %v6898
  %v6900 = vrot.slane %v6886, %v6899
  %v6901 = vlaneseq
  %v6902 = vshrl.u32 %v6901, 7
  %v6903 = vsub.s32 %v1668, %v6902
  %v6904 = vrot.slane %v6889, %v6903
  %v6905 = vlaneseq
  %v6906 = vshrl.u32 %v6905, 7
  %v6907 = vsub.s32 %v1668, %v6906
  %v6908 = vrot.slane %v6892, %v6907
  %v6909 = vsel %vm1685, %v6900, %v6896
  %v6910 = vsel %vm1687, %v6904, %v6909
  %v6911 = vsel %vm1689, %v6908, %v6910
  %v6913 = vsel %vm1692, %v6911, 0.0
  %6914 = vadd.xlane.f32.xlu0 %v6913
  %v6915 = vpop.xlane.xlu0 %6914
  %v6916 = vrcp.pop %v6915
  %v6918 = vlaneseq
  %v6919 = vshrl.u32 %v6918, 7
  %v6920 = vsub.s32 0, %v6919
  %v6921 = vrot.slane %v6916, %v6920
  %v6922 = vlaneseq
  %v6923 = vshrl.u32 %v6922, 7
  %v6924 = vsub.s32 1, %v6923
  %v6925 = vrot.slane %v6916, %v6924
  %v6926 = vlaneseq
  %v6927 = vshrl.u32 %v6926, 7
  %v6928 = vsub.s32 2, %v6927
  %v6929 = vrot.slane %v6916, %v6928
  %v6930 = vlaneseq
  %v6931 = vshrl.u32 %v6930, 7
  %v6932 = vsub.s32 3, %v6931
  %v6933 = vrot.slane %v6916, %v6932
  %v6938 = vmul.f32 %v6870, %v6921
  %v6939 = vmul.f32 %v6872, %v6925
  %v6940 = vmul.f32 %v6874, %v6929
  %v6941 = vmul.f32 %v6876, %v6933
  %6943 = vset.pattern.permute.xlu0 0
  %6944 = vperm.xlu0 %6943, %v6938
  %v6945 = vpop.permute.xlu0 %6944
  %6948 = vset.pattern.permute.xlu0 0
  %6949 = vperm.xlu0 %6948, %v6939
  %v6950 = vpop.permute.xlu0 %6949
  %6953 = vset.pattern.permute.xlu0 0
  %6954 = vperm.xlu0 %6953, %v6940
  %v6955 = vpop.permute.xlu0 %6954
  %6958 = vset.pattern.permute.xlu0 0
  %6959 = vperm.xlu0 %6958, %v6941
  %v6960 = vpop.permute.xlu0 %6959
  %v6962 = vmul.f32 %v6945, %v61
  %v6963 = vmul.f32 %v6950, %v62
  %v6964 = vmul.f32 %v6955, %v63
  %v6965 = vmul.f32 %v6960, %v64
  %v6966 = vsel %vm1645, %v6962, 0.0
  %v6967 = vrot.slane %v6966, 4
  %v6968 = vadd.f32 %v6966, %v6967
  %v6969 = vrot.slane %v6968, 2
  %v6970 = vadd.f32 %v6968, %v6969
  %v6971 = vrot.slane %v6970, 1
  %v6972 = vadd.f32 %v6970, %v6971
  %v6973 = vsel %vm1645, %v6963, 0.0
  %v6974 = vrot.slane %v6973, 4
  %v6975 = vadd.f32 %v6973, %v6974
  %v6976 = vrot.slane %v6975, 2
  %v6977 = vadd.f32 %v6975, %v6976
  %v6978 = vrot.slane %v6977, 1
  %v6979 = vadd.f32 %v6977, %v6978
  %v6980 = vsel %vm1645, %v6964, 0.0
  %v6981 = vrot.slane %v6980, 4
  %v6982 = vadd.f32 %v6980, %v6981
  %v6983 = vrot.slane %v6982, 2
  %v6984 = vadd.f32 %v6982, %v6983
  %v6985 = vrot.slane %v6984, 1
  %v6986 = vadd.f32 %v6984, %v6985
  %v6987 = vsel %vm1645, %v6965, 0.0
  %v6988 = vrot.slane %v6987, 4
  %v6989 = vadd.f32 %v6987, %v6988
  %v6990 = vrot.slane %v6989, 2
  %v6991 = vadd.f32 %v6989, %v6990
  %v6992 = vrot.slane %v6991, 1
  %v6993 = vadd.f32 %v6991, %v6992
  %v6998 = vsel %vm1685, %v6979, %v6972
  %v6999 = vsel %vm1687, %v6986, %v6998
  %v7000 = vsel %vm1689, %v6993, %v6999
  %7001 = vrot.lane.b32.xlu0 %v1847, 123
  %v7002 = vpop.permute.xlu0 %7001
  %v7004 = vsel %vm645, %v7000, 0
  %7006 = vmatprep.subr.mxu0 0.0
  %7007 = vmatpush1.msra.mxu0 %v88
  %7008 = vmatprep.subr.mxu0 0.0
  %7009 = vmatpush1.msra.mxu0 %v89
  %7010 = vmatprep.subr.mxu0 0.0
  %7011 = vmatpush1.msra.mxu0 %v90
  %7012 = vmatprep.subr.mxu0 0.0
  %7013 = vmatpush1.msra.mxu0 %v91
  %7014 = vmatprep.subr.mxu0 0.0
  %7015 = vmatpush1.msra.mxu0 0.0
  %7016 = vmatprep.subr.mxu0 0.0
  %7017 = vmatpush1.msra.mxu0 0.0
  %7018 = vmatprep.subr.mxu0 0.0
  %7019 = vmatpush1.msra.mxu0 0.0
  %7020 = vmatprep.subr.mxu0 0.0
  %7021 = vmatpush1.msra.mxu0 0.0
  %7022 = vmatprep.subr.mxu0 0.0
  %7023 = vmatpush1.msra.mxu0 0.0
  %7024 = vmatprep.subr.mxu0 0.0
  %7025 = vmatpush1.msra.mxu0 0.0
  %7026 = vmatprep.subr.mxu0 0.0
  %7027 = vmatpush1.msra.mxu0 0.0
  %7028 = vmatprep.subr.mxu0 0.0
  %7029 = vmatpush1.msra.mxu0 0.0
  %7030 = vmatprep.subr.mxu0 0.0
  %7031 = vmatpush1.msra.mxu0 0.0
  %7032 = vmatprep.subr.mxu0 0.0
  %7033 = vmatpush1.msra.mxu0 0.0
  %7034 = vmatprep.subr.mxu0 0.0
  %7035 = vmatpush1.msra.mxu0 0.0
  %7036 = vmatprep.subr.mxu0 0.0
  %7037 = vmatpush1.msra.mxu0 0.0
  %7038 = vmatprep.subr.mxu0 0.0
  %7039 = vmatpush1.msra.mxu0 0.0
  %7040 = vmatprep.subr.mxu0 0.0
  %7041 = vmatpush1.msra.mxu0 0.0
  %7042 = vmatprep.subr.mxu0 0.0
  %7043 = vmatpush1.msra.mxu0 0.0
  %7044 = vmatprep.subr.mxu0 0.0
  %7045 = vmatpush1.msra.mxu0 0.0
  %7046 = vmatprep.subr.mxu0 0.0
  %7047 = vmatpush1.msra.mxu0 0.0
  %7048 = vmatprep.subr.mxu0 0.0
  %7049 = vmatpush1.msra.mxu0 0.0
  %7050 = vmatprep.subr.mxu0 0.0
  %7051 = vmatpush1.msra.mxu0 0.0
  %7052 = vmatprep.subr.mxu0 0.0
  %7053 = vmatpush1.msra.mxu0 0.0
  %7054 = vmatprep.subr.mxu0 0.0
  %7055 = vmatpush1.msra.mxu0 0.0
  %7056 = vmatprep.subr.mxu0 0.0
  %7057 = vmatpush1.msra.mxu0 0.0
  %7058 = vmatprep.subr.mxu0 0.0
  %7059 = vmatpush1.msra.mxu0 0.0
  %7060 = vmatprep.subr.mxu0 0.0
  %7061 = vmatpush1.msra.mxu0 0.0
  %7062 = vmatprep.subr.mxu0 0.0
  %7063 = vmatpush1.msra.mxu0 0.0
  %7064 = vmatprep.subr.mxu0 0.0
  %7065 = vmatpush1.msra.mxu0 0.0
  %7066 = vmatprep.subr.mxu0 0.0
  %7067 = vmatpush1.msra.mxu0 0.0
  %7068 = vmatprep.subr.mxu0 0.0
  %7069 = vmatpush1.msra.mxu0 0.0
  %7070 = vmatprep.mubr.f32.mxu0 0.0
  %7071 = vmatmul.mubr.f32.gmra.mrb[0].mxu0 %v7004
  %v7072 = vpop.f32.mrb[0].mxu0
  %v7073 = vadd.f32 %v7002, %v7072
  %v7074 = vpop.f32.mrb[0].mxu0
  %7075 = vdwg.mxu0
  %v7076 = vadd.f32 %v7073, %v1927
  %7078 = vset.pattern.permute.xlu0 0
  %7079 = vperm.xlu0 %7078, %v7076
  %v7080 = vpop.permute.xlu0 %7079
  %v7082 = vmul.f32 %v7080, %v1938
  %v7083 = vsel %vm645, %v6156, 0
  %7085 = vmatprep.subr.mxu0 0.0
  %7086 = vmatpush1.msra.mxu0 %v83
  %7087 = vmatprep.subr.mxu0 0.0
  %7088 = vmatpush1.msra.mxu0 %v84
  %7089 = vmatprep.subr.mxu0 0.0
  %7090 = vmatpush1.msra.mxu0 %v85
  %7091 = vmatprep.subr.mxu0 0.0
  %7092 = vmatpush1.msra.mxu0 %v86
  %7093 = vmatprep.subr.mxu0 0.0
  %7094 = vmatpush1.msra.mxu0 0.0
  %7095 = vmatprep.subr.mxu0 0.0
  %7096 = vmatpush1.msra.mxu0 0.0
  %7097 = vmatprep.subr.mxu0 0.0
  %7098 = vmatpush1.msra.mxu0 0.0
  %7099 = vmatprep.subr.mxu0 0.0
  %7100 = vmatpush1.msra.mxu0 0.0
  %7101 = vmatprep.subr.mxu0 0.0
  %7102 = vmatpush1.msra.mxu0 0.0
  %7103 = vmatprep.subr.mxu0 0.0
  %7104 = vmatpush1.msra.mxu0 0.0
  %7105 = vmatprep.subr.mxu0 0.0
  %7106 = vmatpush1.msra.mxu0 0.0
  %7107 = vmatprep.subr.mxu0 0.0
  %7108 = vmatpush1.msra.mxu0 0.0
  %7109 = vmatprep.subr.mxu0 0.0
  %7110 = vmatpush1.msra.mxu0 0.0
  %7111 = vmatprep.subr.mxu0 0.0
  %7112 = vmatpush1.msra.mxu0 0.0
  %7113 = vmatprep.subr.mxu0 0.0
  %7114 = vmatpush1.msra.mxu0 0.0
  %7115 = vmatprep.subr.mxu0 0.0
  %7116 = vmatpush1.msra.mxu0 0.0
  %7117 = vmatprep.subr.mxu0 0.0
  %7118 = vmatpush1.msra.mxu0 0.0
  %7119 = vmatprep.subr.mxu0 0.0
  %7120 = vmatpush1.msra.mxu0 0.0
  %7121 = vmatprep.subr.mxu0 0.0
  %7122 = vmatpush1.msra.mxu0 0.0
  %7123 = vmatprep.subr.mxu0 0.0
  %7124 = vmatpush1.msra.mxu0 0.0
  %7125 = vmatprep.subr.mxu0 0.0
  %7126 = vmatpush1.msra.mxu0 0.0
  %7127 = vmatprep.subr.mxu0 0.0
  %7128 = vmatpush1.msra.mxu0 0.0
  %7129 = vmatprep.subr.mxu0 0.0
  %7130 = vmatpush1.msra.mxu0 0.0
  %7131 = vmatprep.subr.mxu0 0.0
  %7132 = vmatpush1.msra.mxu0 0.0
  %7133 = vmatprep.subr.mxu0 0.0
  %7134 = vmatpush1.msra.mxu0 0.0
  %7135 = vmatprep.subr.mxu0 0.0
  %7136 = vmatpush1.msra.mxu0 0.0
  %7137 = vmatprep.subr.mxu0 0.0
  %7138 = vmatpush1.msra.mxu0 0.0
  %7139 = vmatprep.subr.mxu0 0.0
  %7140 = vmatpush1.msra.mxu0 0.0
  %7141 = vmatprep.subr.mxu0 0.0
  %7142 = vmatpush1.msra.mxu0 0.0
  %7143 = vmatprep.subr.mxu0 0.0
  %7144 = vmatpush1.msra.mxu0 0.0
  %7145 = vmatprep.subr.mxu0 0.0
  %7146 = vmatpush1.msra.mxu0 0.0
  %7147 = vmatprep.subr.mxu0 0.0
  %7148 = vmatpush1.msra.mxu0 0.0
  %7149 = vmatprep.mubr.f32.mxu0 0.0
  %7150 = vmatmul.mubr.f32.gmra.mrb[0].mxu0 %v7083
  %v7151 = vpop.f32.mrb[0].mxu0
  %v7152 = vadd.f32 0.0, %v7151
  %v7153 = vpop.f32.mrb[0].mxu0
  %7154 = vdwg.mxu0
  %v7155 = vadd.f32 %v7082, %v7152
  %v7156 = vadd.f32 %v7155, %v2018
  %v7157 = vxor.u32 %v7156, 2147483648
  %v7158 = vmul.f32 %v7157, 1.442695
  %v7159 = vpow.pop %v7158
  %v7160 = vadd.f32 %v7159, 1.0
  %v7161 = vrcp.pop %v7160
  %v7162 = vmul.f32 1.0, %v7161
  %v7163 = vtanh.pop %v7156
  %v7164 = vmul.f32 %v7162, %v6147
  %7166 = vrot.lane.b32.xlu0 %v7163, 64
  %v7167 = vpop.permute.xlu0 %7166
  %v7169 = vmul.f32 %v7162, %v7167
  %7171 = vrot.lane.b32.xlu0 %v7169, 32
  %v7172 = vpop.permute.xlu0 %7171
  %v7174 = vadd.f32 %v7164, %v7172
  %v7175 = vtanh.pop %v7174
  %7177 = vrot.lane.b32.xlu0 %v7175, 64
  %v7178 = vpop.permute.xlu0 %7177
  %v7180 = vmul.f32 %v7162, %v7178
  %7182 = vrot.lane.b32.xlu0 %v7180, 32
  %v7183 = vpop.permute.xlu0 %7182
  %v7185 = vsel %vm645, %v7183, %v7174
  %v7187 = vsel %vm942, %v7185, 0
  %7189 = vmatprep.subr.mxu0 0.0
  %7190 = vmatpush1.msra.mxu0 %v66
  %7191 = vmatprep.subr.mxu0 0.0
  %7192 = vmatpush1.msra.mxu0 %v67
  %7193 = vmatprep.subr.mxu0 0.0
  %7194 = vmatpush1.msra.mxu0 %v68
  %7195 = vmatprep.subr.mxu0 0.0
  %7196 = vmatpush1.msra.mxu0 %v69
  %7197 = vmatprep.subr.mxu0 0.0
  %7198 = vmatpush1.msra.mxu0 %v70
  %7199 = vmatprep.subr.mxu0 0.0
  %7200 = vmatpush1.msra.mxu0 %v71
  %7201 = vmatprep.subr.mxu0 0.0
  %7202 = vmatpush1.msra.mxu0 %v72
  %7203 = vmatprep.subr.mxu0 0.0
  %7204 = vmatpush1.msra.mxu0 %v73
  %7205 = vmatprep.subr.mxu0 0.0
  %7206 = vmatpush1.msra.mxu0 0.0
  %7207 = vmatprep.subr.mxu0 0.0
  %7208 = vmatpush1.msra.mxu0 0.0
  %7209 = vmatprep.subr.mxu0 0.0
  %7210 = vmatpush1.msra.mxu0 0.0
  %7211 = vmatprep.subr.mxu0 0.0
  %7212 = vmatpush1.msra.mxu0 0.0
  %7213 = vmatprep.subr.mxu0 0.0
  %7214 = vmatpush1.msra.mxu0 0.0
  %7215 = vmatprep.subr.mxu0 0.0
  %7216 = vmatpush1.msra.mxu0 0.0
  %7217 = vmatprep.subr.mxu0 0.0
  %7218 = vmatpush1.msra.mxu0 0.0
  %7219 = vmatprep.subr.mxu0 0.0
  %7220 = vmatpush1.msra.mxu0 0.0
  %7221 = vmatprep.subr.mxu0 0.0
  %7222 = vmatpush1.msra.mxu0 0.0
  %7223 = vmatprep.subr.mxu0 0.0
  %7224 = vmatpush1.msra.mxu0 0.0
  %7225 = vmatprep.subr.mxu0 0.0
  %7226 = vmatpush1.msra.mxu0 0.0
  %7227 = vmatprep.subr.mxu0 0.0
  %7228 = vmatpush1.msra.mxu0 0.0
  %7229 = vmatprep.subr.mxu0 0.0
  %7230 = vmatpush1.msra.mxu0 0.0
  %7231 = vmatprep.subr.mxu0 0.0
  %7232 = vmatpush1.msra.mxu0 0.0
  %7233 = vmatprep.subr.mxu0 0.0
  %7234 = vmatpush1.msra.mxu0 0.0
  %7235 = vmatprep.subr.mxu0 0.0
  %7236 = vmatpush1.msra.mxu0 0.0
  %7237 = vmatprep.subr.mxu0 0.0
  %7238 = vmatpush1.msra.mxu0 0.0
  %7239 = vmatprep.subr.mxu0 0.0
  %7240 = vmatpush1.msra.mxu0 0.0
  %7241 = vmatprep.subr.mxu0 0.0
  %7242 = vmatpush1.msra.mxu0 0.0
  %7243 = vmatprep.subr.mxu0 0.0
  %7244 = vmatpush1.msra.mxu0 0.0
  %7245 = vmatprep.subr.mxu0 0.0
  %7246 = vmatpush1.msra.mxu0 0.0
  %7247 = vmatprep.subr.mxu0 0.0
  %7248 = vmatpush1.msra.mxu0 0.0
  %7249 = vmatprep.subr.mxu0 0.0
  %7250 = vmatpush1.msra.mxu0 0.0
  %7251 = vmatprep.subr.mxu0 0.0
  %7252 = vmatpush1.msra.mxu0 0.0
  %7253 = vmatprep.mubr.f32.mxu0 0.0
  %7254 = vmatmul.mubr.f32.gmra.mrb[0].mxu0 %v7187
  %v7255 = vpop.f32.mrb[0].mxu0
  %v7256 = vadd.f32 0.0, %v7255
  %v7257 = vpop.f32.mrb[0].mxu0
  %7258 = vdwg.mxu0
  %v7261 = vunpack.c.l.s4 1966171168
  %v7262 = vunpack.c.0.s8 %v7261
  %v7263 = vlaneseq
  %v7264 = vshrl.u32 %v7263, 7
  %v7265 = vsub.s32 %v7262, %v7264
  %v7266 = vrot.slane %v7256, %v7265
  %v7267 = vcombine.high %v7266, %v7266
  %v7269 = vunpack.c.l.s4 1966171168
  %v7270 = vunpack.c.0.s8 %v7269
  %v7271 = vlaneseq
  %v7272 = vshrl.u32 %v7271, 7
  %v7273 = vsub.s32 %v7270, %v7272
  %v7274 = vrot.slane %v7266, %v7273
  %v7276 = vunpack.c.l.s4 1966171168
  %v7277 = vunpack.c.0.s8 %v7276
  %v7278 = vlaneseq
  %v7279 = vshrl.u32 %v7278, 7
  %v7280 = vsub.s32 %v7277, %v7279
  %v7281 = vrot.slane %v7267, %v7280
  %v7282 = vcombine.high %v7274, %v7274
  %v7283 = vcombine.high %v7281, %v7281
  %v7284 = vlaneseq
  %v7285 = vshrl.u32 %v7284, 7
  %v7286 = vsub.s32 0, %v7285
  %v7287 = vrot.slane %v7274, %v7286
  %v7288 = vlaneseq
  %v7289 = vshrl.u32 %v7288, 7
  %v7290 = vsub.s32 0, %v7289
  %v7291 = vrot.slane %v7281, %v7290
  %v7292 = vlaneseq
  %v7293 = vshrl.u32 %v7292, 7
  %v7294 = vsub.s32 0, %v7293
  %v7295 = vrot.slane %v7282, %v7294
  %v7296 = vlaneseq
  %v7297 = vshrl.u32 %v7296, 7
  %v7298 = vsub.s32 0, %v7297
  %v7299 = vrot.slane %v7283, %v7298
  %v7300 = vcombine.high %v7287, %v7287
  %v7302 = vunpack.c.l.s4 1966171168
  %v7303 = vunpack.c.0.s8 %v7302
  %v7304 = vlaneseq
  %v7305 = vshrl.u32 %v7304, 7
  %v7306 = vsub.s32 %v7303, %v7305
  %v7307 = vrot.slane %v7287, %v7306
  %v7309 = vunpack.c.l.s4 1966171168
  %v7310 = vunpack.c.0.s8 %v7309
  %v7311 = vlaneseq
  %v7312 = vshrl.u32 %v7311, 7
  %v7313 = vsub.s32 %v7310, %v7312
  %v7314 = vrot.slane %v7300, %v7313
  %v7315 = vcombine.high %v7307, %v7307
  %v7316 = vcombine.high %v7314, %v7314
  %v7318 = vunpack.c.l.s4 1966171168
  %v7319 = vunpack.c.0.s8 %v7318
  %v7320 = vlaneseq
  %v7321 = vshrl.u32 %v7320, 7
  %v7322 = vsub.s32 %v7319, %v7321
  %v7323 = vrot.slane %v7307, %v7322
  %v7325 = vunpack.c.l.s4 1966171168
  %v7326 = vunpack.c.0.s8 %v7325
  %v7327 = vlaneseq
  %v7328 = vshrl.u32 %v7327, 7
  %v7329 = vsub.s32 %v7326, %v7328
  %v7330 = vrot.slane %v7314, %v7329
  %v7332 = vunpack.c.l.s4 1966171168
  %v7333 = vunpack.c.0.s8 %v7332
  %v7334 = vlaneseq
  %v7335 = vshrl.u32 %v7334, 7
  %v7336 = vsub.s32 %v7333, %v7335
  %v7337 = vrot.slane %v7315, %v7336
  %v7339 = vunpack.c.l.s4 1966171168
  %v7340 = vunpack.c.0.s8 %v7339
  %v7341 = vlaneseq
  %v7342 = vshrl.u32 %v7341, 7
  %v7343 = vsub.s32 %v7340, %v7342
  %v7344 = vrot.slane %v7316, %v7343
  %v7345 = vcombine.high %v7323, %v7323
  %v7346 = vcombine.high %v7330, %v7330
  %v7347 = vcombine.high %v7337, %v7337
  %v7348 = vcombine.high %v7291, %v7291
  %v7350 = vunpack.c.l.s4 1966171168
  %v7351 = vunpack.c.0.s8 %v7350
  %v7352 = vlaneseq
  %v7353 = vshrl.u32 %v7352, 7
  %v7354 = vsub.s32 %v7351, %v7353
  %v7355 = vrot.slane %v7291, %v7354
  %v7357 = vunpack.c.l.s4 1966171168
  %v7358 = vunpack.c.0.s8 %v7357
  %v7359 = vlaneseq
  %v7360 = vshrl.u32 %v7359, 7
  %v7361 = vsub.s32 %v7358, %v7360
  %v7362 = vrot.slane %v7348, %v7361
  %v7363 = vcombine.high %v7355, %v7355
  %v7364 = vcombine.high %v7362, %v7362
  %v7366 = vunpack.c.l.s4 1966171168
  %v7367 = vunpack.c.0.s8 %v7366
  %v7368 = vlaneseq
  %v7369 = vshrl.u32 %v7368, 7
  %v7370 = vsub.s32 %v7367, %v7369
  %v7371 = vrot.slane %v7355, %v7370
  %v7373 = vunpack.c.l.s4 1966171168
  %v7374 = vunpack.c.0.s8 %v7373
  %v7375 = vlaneseq
  %v7376 = vshrl.u32 %v7375, 7
  %v7377 = vsub.s32 %v7374, %v7376
  %v7378 = vrot.slane %v7362, %v7377
  %v7380 = vunpack.c.l.s4 1966171168
  %v7381 = vunpack.c.0.s8 %v7380
  %v7382 = vlaneseq
  %v7383 = vshrl.u32 %v7382, 7
  %v7384 = vsub.s32 %v7381, %v7383
  %v7385 = vrot.slane %v7363, %v7384
  %v7387 = vunpack.c.l.s4 1966171168
  %v7388 = vunpack.c.0.s8 %v7387
  %v7389 = vlaneseq
  %v7390 = vshrl.u32 %v7389, 7
  %v7391 = vsub.s32 %v7388, %v7390
  %v7392 = vrot.slane %v7364, %v7391
  %v7393 = vcombine.high %v7371, %v7371
  %v7394 = vcombine.high %v7378, %v7378
  %v7395 = vcombine.high %v7385, %v7385
  %v7396 = vcombine.high %v7295, %v7295
  %v7398 = vunpack.c.l.s4 1966171168
  %v7399 = vunpack.c.0.s8 %v7398
  %v7400 = vlaneseq
  %v7401 = vshrl.u32 %v7400, 7
  %v7402 = vsub.s32 %v7399, %v7401
  %v7403 = vrot.slane %v7295, %v7402
  %v7405 = vunpack.c.l.s4 1966171168
  %v7406 = vunpack.c.0.s8 %v7405
  %v7407 = vlaneseq
  %v7408 = vshrl.u32 %v7407, 7
  %v7409 = vsub.s32 %v7406, %v7408
  %v7410 = vrot.slane %v7396, %v7409
  %v7411 = vcombine.high %v7403, %v7403
  %v7412 = vcombine.high %v7410, %v7410
  %v7414 = vunpack.c.l.s4 1966171168
  %v7415 = vunpack.c.0.s8 %v7414
  %v7416 = vlaneseq
  %v7417 = vshrl.u32 %v7416, 7
  %v7418 = vsub.s32 %v7415, %v7417
  %v7419 = vrot.slane %v7403, %v7418
  %v7421 = vunpack.c.l.s4 1966171168
  %v7422 = vunpack.c.0.s8 %v7421
  %v7423 = vlaneseq
  %v7424 = vshrl.u32 %v7423, 7
  %v7425 = vsub.s32 %v7422, %v7424
  %v7426 = vrot.slane %v7410, %v7425
  %v7428 = vunpack.c.l.s4 1966171168
  %v7429 = vunpack.c.0.s8 %v7428
  %v7430 = vlaneseq
  %v7431 = vshrl.u32 %v7430, 7
  %v7432 = vsub.s32 %v7429, %v7431
  %v7433 = vrot.slane %v7411, %v7432
  %v7435 = vunpack.c.l.s4 1966171168
  %v7436 = vunpack.c.0.s8 %v7435
  %v7437 = vlaneseq
  %v7438 = vshrl.u32 %v7437, 7
  %v7439 = vsub.s32 %v7436, %v7438
  %v7440 = vrot.slane %v7412, %v7439
  %v7441 = vcombine.high %v7419, %v7419
  %v7442 = vcombine.high %v7426, %v7426
  %v7443 = vcombine.high %v7433, %v7433
  %v7444 = vcombine.high %v7299, %v7299
  %v7446 = vunpack.c.l.s4 1966171168
  %v7447 = vunpack.c.0.s8 %v7446
  %v7448 = vlaneseq
  %v7449 = vshrl.u32 %v7448, 7
  %v7450 = vsub.s32 %v7447, %v7449
  %v7451 = vrot.slane %v7299, %v7450
  %v7453 = vunpack.c.l.s4 1966171168
  %v7454 = vunpack.c.0.s8 %v7453
  %v7455 = vlaneseq
  %v7456 = vshrl.u32 %v7455, 7
  %v7457 = vsub.s32 %v7454, %v7456
  %v7458 = vrot.slane %v7444, %v7457
  %v7459 = vcombine.high %v7451, %v7451
  %v7460 = vcombine.high %v7458, %v7458
  %v7462 = vunpack.c.l.s4 1966171168
  %v7463 = vunpack.c.0.s8 %v7462
  %v7464 = vlaneseq
  %v7465 = vshrl.u32 %v7464, 7
  %v7466 = vsub.s32 %v7463, %v7465
  %v7467 = vrot.slane %v7451, %v7466
  %v7469 = vunpack.c.l.s4 1966171168
  %v7470 = vunpack.c.0.s8 %v7469
  %v7471 = vlaneseq
  %v7472 = vshrl.u32 %v7471, 7
  %v7473 = vsub.s32 %v7470, %v7472
  %v7474 = vrot.slane %v7458, %v7473
  %v7476 = vunpack.c.l.s4 1966171168
  %v7477 = vunpack.c.0.s8 %v7476
  %v7478 = vlaneseq
  %v7479 = vshrl.u32 %v7478, 7
  %v7480 = vsub.s32 %v7477, %v7479
  %v7481 = vrot.slane %v7459, %v7480
  %v7483 = vunpack.c.l.s4 1966171168
  %v7484 = vunpack.c.0.s8 %v7483
  %v7485 = vlaneseq
  %v7486 = vshrl.u32 %v7485, 7
  %v7487 = vsub.s32 %v7484, %v7486
  %v7488 = vrot.slane %v7460, %v7487
  %v7489 = vcombine.high %v7467, %v7467
  %v7490 = vcombine.high %v7474, %v7474
  %v7491 = vcombine.high %v7481, %v7481
  %v7520 = vadd.f32 %v766, %v7323
  %v7521 = vadd.f32 %v780, %v7337
  %v7522 = vadd.f32 %v788, %v7345
  %v7523 = vadd.f32 %v790, %v7347
  %v7524 = vadd.f32 %v773, %v7330
  %v7525 = vadd.f32 %v787, %v7344
  %v7526 = vadd.f32 %v789, %v7346
  %v7527 = vadd.f32 %v791, %v7371
  %v7528 = vadd.f32 %v815, %v7385
  %v7529 = vadd.f32 %v829, %v7393
  %v7530 = vadd.f32 %v837, %v7395
  %v7531 = vadd.f32 %v839, %v7378
  %v7532 = vadd.f32 %v822, %v7392
  %v7533 = vadd.f32 %v836, %v7394
  %v7534 = vadd.f32 %v838, %v7419
  %v7535 = vadd.f32 %v840, %v7433
  %v7536 = vadd.f32 %v864, %v7441
  %v7537 = vadd.f32 %v878, %v7443
  %v7538 = vadd.f32 %v886, %v7426
  %v7539 = vadd.f32 %v888, %v7440
  %v7540 = vadd.f32 %v871, %v7442
  %v7541 = vadd.f32 %v885, %v7467
  %v7542 = vadd.f32 %v887, %v7481
  %v7543 = vadd.f32 %v889, %v7489
  %v7544 = vadd.f32 %v904, %v7491
  %v7545 = vadd.f32 %v911, %v7474
  %v7546 = vadd.f32 %v912, %v7488
  %v7547 = vadd.f32 %v913, %v7490
  %v7548 = vtanh.pop %v7520
  %v7549 = vtanh.pop %v7521
  %v7550 = vtanh.pop %v7522
  %v7551 = vtanh.pop %v7523
  %v7552 = vtanh.pop %v7524
  %v7553 = vtanh.pop %v7525
  %v7554 = vtanh.pop %v7526
  %v7555 = vtanh.pop %v7527
  %v7556 = vtanh.pop %v7528
  %v7557 = vtanh.pop %v7529
  %v7558 = vtanh.pop %v7530
  %v7559 = vtanh.pop %v7531
  %v7560 = vtanh.pop %v7532
  %v7561 = vtanh.pop %v7533
  %v7562 = vtanh.pop %v7534
  %v7563 = vtanh.pop %v7535
  %v7564 = vtanh.pop %v7536
  %v7565 = vtanh.pop %v7537
  %v7566 = vtanh.pop %v7538
  %v7567 = vtanh.pop %v7539
  %v7568 = vtanh.pop %v7540
  %v7569 = vtanh.pop %v7541
  %v7570 = vtanh.pop %v7542
  %v7571 = vtanh.pop %v7543
  %v7572 = vtanh.pop %v7544
  %v7573 = vtanh.pop %v7545
  %v7574 = vtanh.pop %v7546
  %v7575 = vtanh.pop %v7547
  %v7576 = vmul.f32 %v7548, %v1361
  %v7577 = vmul.f32 %v7549, %v1375
  %v7578 = vmul.f32 %v7550, %v1383
  %v7579 = vmul.f32 %v7551, %v1385
  %v7580 = vmul.f32 %v7552, %v1368
  %v7581 = vmul.f32 %v7553, %v1382
  %v7582 = vmul.f32 %v7554, %v1384
  %v7583 = vmul.f32 %v7555, %v1361
  %v7584 = vmul.f32 %v7556, %v1375
  %v7585 = vmul.f32 %v7557, %v1383
  %v7586 = vmul.f32 %v7558, %v1385
  %v7587 = vmul.f32 %v7559, %v1368
  %v7588 = vmul.f32 %v7560, %v1382
  %v7589 = vmul.f32 %v7561, %v1384
  %v7590 = vmul.f32 %v7562, %v1361
  %v7591 = vmul.f32 %v7563, %v1375
  %v7592 = vmul.f32 %v7564, %v1383
  %v7593 = vmul.f32 %v7565, %v1385
  %v7594 = vmul.f32 %v7566, %v1368
  %v7595 = vmul.f32 %v7567, %v1382
  %v7596 = vmul.f32 %v7568, %v1384
  %v7597 = vmul.f32 %v7569, %v1361
  %v7598 = vmul.f32 %v7570, %v1375
  %v7599 = vmul.f32 %v7571, %v1383
  %v7600 = vmul.f32 %v7572, %v1385
  %v7601 = vmul.f32 %v7573, %v1368
  %v7602 = vmul.f32 %v7574, %v1382
  %v7603 = vmul.f32 %v7575, %v1384
  %v7632 = vcombine.low %v7576, %v7577
  %v7633 = vcombine.low %v7578, %v7579
  %v7634 = vcombine.low %v7580, %v7581
  %v7636 = vunpack.c.l.s4 1966171168
  %v7637 = vunpack.c.0.s8 %v7636
  %v7638 = vlaneseq
  %v7639 = vshrl.u32 %v7638, 7
  %v7640 = vsub.s32 %v7637, %v7639
  %v7641 = vrot.slane %v7632, %v7640
  %v7643 = vunpack.c.l.s4 1966171168
  %v7644 = vunpack.c.0.s8 %v7643
  %v7645 = vlaneseq
  %v7646 = vshrl.u32 %v7645, 7
  %v7647 = vsub.s32 %v7644, %v7646
  %v7648 = vrot.slane %v7633, %v7647
  %v7650 = vunpack.c.l.s4 1966171168
  %v7651 = vunpack.c.0.s8 %v7650
  %v7652 = vlaneseq
  %v7653 = vshrl.u32 %v7652, 7
  %v7654 = vsub.s32 %v7651, %v7653
  %v7655 = vrot.slane %v7634, %v7654
  %v7657 = vunpack.c.l.s4 1966171168
  %v7658 = vunpack.c.0.s8 %v7657
  %v7659 = vlaneseq
  %v7660 = vshrl.u32 %v7659, 7
  %v7661 = vsub.s32 %v7658, %v7660
  %v7662 = vrot.slane %v7582, %v7661
  %v7663 = vcombine.low %v7641, %v7648
  %v7664 = vcombine.low %v7655, %v7662
  %v7666 = vunpack.c.l.s4 1966171168
  %v7667 = vunpack.c.0.s8 %v7666
  %v7668 = vlaneseq
  %v7669 = vshrl.u32 %v7668, 7
  %v7670 = vsub.s32 %v7667, %v7669
  %v7671 = vrot.slane %v7663, %v7670
  %v7673 = vunpack.c.l.s4 1966171168
  %v7674 = vunpack.c.0.s8 %v7673
  %v7675 = vlaneseq
  %v7676 = vshrl.u32 %v7675, 7
  %v7677 = vsub.s32 %v7674, %v7676
  %v7678 = vrot.slane %v7664, %v7677
  %v7679 = vcombine.low %v7671, %v7678
  %v7680 = vcombine.low %v7583, %v7584
  %v7681 = vcombine.low %v7585, %v7586
  %v7682 = vcombine.low %v7587, %v7588
  %v7684 = vunpack.c.l.s4 1966171168
  %v7685 = vunpack.c.0.s8 %v7684
  %v7686 = vlaneseq
  %v7687 = vshrl.u32 %v7686, 7
  %v7688 = vsub.s32 %v7685, %v7687
  %v7689 = vrot.slane %v7680, %v7688
  %v7691 = vunpack.c.l.s4 1966171168
  %v7692 = vunpack.c.0.s8 %v7691
  %v7693 = vlaneseq
  %v7694 = vshrl.u32 %v7693, 7
  %v7695 = vsub.s32 %v7692, %v7694
  %v7696 = vrot.slane %v7681, %v7695
  %v7698 = vunpack.c.l.s4 1966171168
  %v7699 = vunpack.c.0.s8 %v7698
  %v7700 = vlaneseq
  %v7701 = vshrl.u32 %v7700, 7
  %v7702 = vsub.s32 %v7699, %v7701
  %v7703 = vrot.slane %v7682, %v7702
  %v7705 = vunpack.c.l.s4 1966171168
  %v7706 = vunpack.c.0.s8 %v7705
  %v7707 = vlaneseq
  %v7708 = vshrl.u32 %v7707, 7
  %v7709 = vsub.s32 %v7706, %v7708
  %v7710 = vrot.slane %v7589, %v7709
  %v7711 = vcombine.low %v7689, %v7696
  %v7712 = vcombine.low %v7703, %v7710
  %v7714 = vunpack.c.l.s4 1966171168
  %v7715 = vunpack.c.0.s8 %v7714
  %v7716 = vlaneseq
  %v7717 = vshrl.u32 %v7716, 7
  %v7718 = vsub.s32 %v7715, %v7717
  %v7719 = vrot.slane %v7711, %v7718
  %v7721 = vunpack.c.l.s4 1966171168
  %v7722 = vunpack.c.0.s8 %v7721
  %v7723 = vlaneseq
  %v7724 = vshrl.u32 %v7723, 7
  %v7725 = vsub.s32 %v7722, %v7724
  %v7726 = vrot.slane %v7712, %v7725
  %v7727 = vcombine.low %v7719, %v7726
  %v7728 = vcombine.low %v7590, %v7591
  %v7729 = vcombine.low %v7592, %v7593
  %v7730 = vcombine.low %v7594, %v7595
  %v7732 = vunpack.c.l.s4 1966171168
  %v7733 = vunpack.c.0.s8 %v7732
  %v7734 = vlaneseq
  %v7735 = vshrl.u32 %v7734, 7
  %v7736 = vsub.s32 %v7733, %v7735
  %v7737 = vrot.slane %v7728, %v7736
  %v7739 = vunpack.c.l.s4 1966171168
  %v7740 = vunpack.c.0.s8 %v7739
  %v7741 = vlaneseq
  %v7742 = vshrl.u32 %v7741, 7
  %v7743 = vsub.s32 %v7740, %v7742
  %v7744 = vrot.slane %v7729, %v7743
  %v7746 = vunpack.c.l.s4 1966171168
  %v7747 = vunpack.c.0.s8 %v7746
  %v7748 = vlaneseq
  %v7749 = vshrl.u32 %v7748, 7
  %v7750 = vsub.s32 %v7747, %v7749
  %v7751 = vrot.slane %v7730, %v7750
  %v7753 = vunpack.c.l.s4 1966171168
  %v7754 = vunpack.c.0.s8 %v7753
  %v7755 = vlaneseq
  %v7756 = vshrl.u32 %v7755, 7
  %v7757 = vsub.s32 %v7754, %v7756
  %v7758 = vrot.slane %v7596, %v7757
  %v7759 = vcombine.low %v7737, %v7744
  %v7760 = vcombine.low %v7751, %v7758
  %v7762 = vunpack.c.l.s4 1966171168
  %v7763 = vunpack.c.0.s8 %v7762
  %v7764 = vlaneseq
  %v7765 = vshrl.u32 %v7764, 7
  %v7766 = vsub.s32 %v7763, %v7765
  %v7767 = vrot.slane %v7759, %v7766
  %v7769 = vunpack.c.l.s4 1966171168
  %v7770 = vunpack.c.0.s8 %v7769
  %v7771 = vlaneseq
  %v7772 = vshrl.u32 %v7771, 7
  %v7773 = vsub.s32 %v7770, %v7772
  %v7774 = vrot.slane %v7760, %v7773
  %v7775 = vcombine.low %v7767, %v7774
  %v7776 = vcombine.low %v7597, %v7598
  %v7777 = vcombine.low %v7599, %v7600
  %v7778 = vcombine.low %v7601, %v7602
  %v7780 = vunpack.c.l.s4 1966171168
  %v7781 = vunpack.c.0.s8 %v7780
  %v7782 = vlaneseq
  %v7783 = vshrl.u32 %v7782, 7
  %v7784 = vsub.s32 %v7781, %v7783
  %v7785 = vrot.slane %v7776, %v7784
  %v7787 = vunpack.c.l.s4 1966171168
  %v7788 = vunpack.c.0.s8 %v7787
  %v7789 = vlaneseq
  %v7790 = vshrl.u32 %v7789, 7
  %v7791 = vsub.s32 %v7788, %v7790
  %v7792 = vrot.slane %v7777, %v7791
  %v7794 = vunpack.c.l.s4 1966171168
  %v7795 = vunpack.c.0.s8 %v7794
  %v7796 = vlaneseq
  %v7797 = vshrl.u32 %v7796, 7
  %v7798 = vsub.s32 %v7795, %v7797
  %v7799 = vrot.slane %v7778, %v7798
  %v7801 = vunpack.c.l.s4 1966171168
  %v7802 = vunpack.c.0.s8 %v7801
  %v7803 = vlaneseq
  %v7804 = vshrl.u32 %v7803, 7
  %v7805 = vsub.s32 %v7802, %v7804
  %v7806 = vrot.slane %v7603, %v7805
  %v7807 = vcombine.low %v7785, %v7792
  %v7808 = vcombine.low %v7799, %v7806
  %v7810 = vunpack.c.l.s4 1966171168
  %v7811 = vunpack.c.0.s8 %v7810
  %v7812 = vlaneseq
  %v7813 = vshrl.u32 %v7812, 7
  %v7814 = vsub.s32 %v7811, %v7813
  %v7815 = vrot.slane %v7807, %v7814
  %v7817 = vunpack.c.l.s4 1966171168
  %v7818 = vunpack.c.0.s8 %v7817
  %v7819 = vlaneseq
  %v7820 = vshrl.u32 %v7819, 7
  %v7821 = vsub.s32 %v7818, %v7820
  %v7822 = vrot.slane %v7808, %v7821
  %v7823 = vcombine.low %v7815, %v7822
  %v7828 = vsel %vm1645, %v7679, 0.0
  %7829 = vadd.xlane.f32.xlu0 %v7828
  %v7830 = vpop.xlane.xlu0 %7829
  %v7831 = vsel %vm1645, %v7727, 0.0
  %7832 = vadd.xlane.f32.xlu0 %v7831
  %v7833 = vpop.xlane.xlu0 %7832
  %v7834 = vsel %vm1645, %v7775, 0.0
  %7835 = vadd.xlane.f32.xlu0 %v7834
  %v7836 = vpop.xlane.xlu0 %7835
  %v7837 = vsel %vm1645, %v7823, 0.0
  %7838 = vadd.xlane.f32.xlu0 %v7837
  %v7839 = vpop.xlane.xlu0 %7838
  %v7840 = vadd.f32 %v7830, %v1658
  %v7841 = vadd.f32 %v7833, %v1658
  %v7842 = vadd.f32 %v7836, %v1658
  %v7843 = vadd.f32 %v7839, %v1658
  %v7848 = vlaneseq
  %v7849 = vshrl.u32 %v7848, 7
  %v7850 = vsub.s32 %v1668, %v7849
  %v7851 = vrot.slane %v7840, %v7850
  %v7852 = vlaneseq
  %v7853 = vshrl.u32 %v7852, 7
  %v7854 = vsub.s32 %v1668, %v7853
  %v7855 = vrot.slane %v7841, %v7854
  %v7856 = vlaneseq
  %v7857 = vshrl.u32 %v7856, 7
  %v7858 = vsub.s32 %v1668, %v7857
  %v7859 = vrot.slane %v7842, %v7858
  %v7860 = vlaneseq
  %v7861 = vshrl.u32 %v7860, 7
  %v7862 = vsub.s32 %v1668, %v7861
  %v7863 = vrot.slane %v7843, %v7862
  %v7864 = vsel %vm1685, %v7855, %v7851
  %v7865 = vsel %vm1687, %v7859, %v7864
  %v7866 = vsel %vm1689, %v7863, %v7865
  %v7868 = vsel %vm1692, %v7866, -inf
  %7869 = vmax.xlane.f32.xlu0 %v7868
  %v7870 = vpop.xlane.xlu0 %7869
  %v7872 = vlaneseq
  %v7873 = vshrl.u32 %v7872, 7
  %v7874 = vsub.s32 0, %v7873
  %v7875 = vrot.slane %v7870, %v7874
  %v7876 = vlaneseq
  %v7877 = vshrl.u32 %v7876, 7
  %v7878 = vsub.s32 1, %v7877
  %v7879 = vrot.slane %v7870, %v7878
  %v7880 = vlaneseq
  %v7881 = vshrl.u32 %v7880, 7
  %v7882 = vsub.s32 2, %v7881
  %v7883 = vrot.slane %v7870, %v7882
  %v7884 = vlaneseq
  %v7885 = vshrl.u32 %v7884, 7
  %v7886 = vsub.s32 3, %v7885
  %v7887 = vrot.slane %v7870, %v7886
  %v7892 = vsub.f32 %v7840, %v7875
  %v7893 = vsub.f32 %v7841, %v7879
  %v7894 = vsub.f32 %v7842, %v7883
  %v7895 = vsub.f32 %v7843, %v7887
  %v7896 = vmul.f32 %v7892, 1.442695
  %v7897 = vpow.pop %v7896
  %v7898 = vmul.f32 %v7893, 1.442695
  %v7899 = vpow.pop %v7898
  %v7900 = vmul.f32 %v7894, 1.442695
  %v7901 = vpow.pop %v7900
  %v7902 = vmul.f32 %v7895, 1.442695
  %v7903 = vpow.pop %v7902
  %7908 = vset.pattern.permute.xlu0 0
  %7909 = vperm.xlu0 %7908, %v7897
  %v7910 = vpop.permute.xlu0 %7909
  %7911 = vset.pattern.permute.xlu0 0
  %7912 = vperm.xlu0 %7911, %v7899
  %v7913 = vpop.permute.xlu0 %7912
  %7914 = vset.pattern.permute.xlu0 0
  %7915 = vperm.xlu0 %7914, %v7901
  %v7916 = vpop.permute.xlu0 %7915
  %7917 = vset.pattern.permute.xlu0 0
  %7918 = vperm.xlu0 %7917, %v7903
  %v7919 = vpop.permute.xlu0 %7918
  %v7920 = vlaneseq
  %v7921 = vshrl.u32 %v7920, 7
  %v7922 = vsub.s32 %v1668, %v7921
  %v7923 = vrot.slane %v7910, %v7922
  %v7924 = vlaneseq
  %v7925 = vshrl.u32 %v7924, 7
  %v7926 = vsub.s32 %v1668, %v7925
  %v7927 = vrot.slane %v7913, %v7926
  %v7928 = vlaneseq
  %v7929 = vshrl.u32 %v7928, 7
  %v7930 = vsub.s32 %v1668, %v7929
  %v7931 = vrot.slane %v7916, %v7930
  %v7932 = vlaneseq
  %v7933 = vshrl.u32 %v7932, 7
  %v7934 = vsub.s32 %v1668, %v7933
  %v7935 = vrot.slane %v7919, %v7934
  %v7936 = vsel %vm1685, %v7927, %v7923
  %v7937 = vsel %vm1687, %v7931, %v7936
  %v7938 = vsel %vm1689, %v7935, %v7937
  %v7940 = vsel %vm1692, %v7938, 0.0
  %7941 = vadd.xlane.f32.xlu0 %v7940
  %v7942 = vpop.xlane.xlu0 %7941
  %v7943 = vrcp.pop %v7942
  %v7945 = vlaneseq
  %v7946 = vshrl.u32 %v7945, 7
  %v7947 = vsub.s32 0, %v7946
  %v7948 = vrot.slane %v7943, %v7947
  %v7949 = vlaneseq
  %v7950 = vshrl.u32 %v7949, 7
  %v7951 = vsub.s32 1, %v7950
  %v7952 = vrot.slane %v7943, %v7951
  %v7953 = vlaneseq
  %v7954 = vshrl.u32 %v7953, 7
  %v7955 = vsub.s32 2, %v7954
  %v7956 = vrot.slane %v7943, %v7955
  %v7957 = vlaneseq
  %v7958 = vshrl.u32 %v7957, 7
  %v7959 = vsub.s32 3, %v7958
  %v7960 = vrot.slane %v7943, %v7959
  %v7965 = vmul.f32 %v7897, %v7948
  %v7966 = vmul.f32 %v7899, %v7952
  %v7967 = vmul.f32 %v7901, %v7956
  %v7968 = vmul.f32 %v7903, %v7960
  %7970 = vset.pattern.permute.xlu0 0
  %7971 = vperm.xlu0 %7970, %v7965
  %v7972 = vpop.permute.xlu0 %7971
  %7975 = vset.pattern.permute.xlu0 0
  %7976 = vperm.xlu0 %7975, %v7966
  %v7977 = vpop.permute.xlu0 %7976
  %7980 = vset.pattern.permute.xlu0 0
  %7981 = vperm.xlu0 %7980, %v7967
  %v7982 = vpop.permute.xlu0 %7981
  %7985 = vset.pattern.permute.xlu0 0
  %7986 = vperm.xlu0 %7985, %v7968
  %v7987 = vpop.permute.xlu0 %7986
  %v7989 = vmul.f32 %v7972, %v61
  %v7990 = vmul.f32 %v7977, %v62
  %v7991 = vmul.f32 %v7982, %v63
  %v7992 = vmul.f32 %v7987, %v64
  %v7993 = vsel %vm1645, %v7989, 0.0
  %v7994 = vrot.slane %v7993, 4
  %v7995 = vadd.f32 %v7993, %v7994
  %v7996 = vrot.slane %v7995, 2
  %v7997 = vadd.f32 %v7995, %v7996
  %v7998 = vrot.slane %v7997, 1
  %v7999 = vadd.f32 %v7997, %v7998
  %v8000 = vsel %vm1645, %v7990, 0.0
  %v8001 = vrot.slane %v8000, 4
  %v8002 = vadd.f32 %v8000, %v8001
  %v8003 = vrot.slane %v8002, 2
  %v8004 = vadd.f32 %v8002, %v8003
  %v8005 = vrot.slane %v8004, 1
  %v8006 = vadd.f32 %v8004, %v8005
  %v8007 = vsel %vm1645, %v7991, 0.0
  %v8008 = vrot.slane %v8007, 4
  %v8009 = vadd.f32 %v8007, %v8008
  %v8010 = vrot.slane %v8009, 2
  %v8011 = vadd.f32 %v8009, %v8010
  %v8012 = vrot.slane %v8011, 1
  %v8013 = vadd.f32 %v8011, %v8012
  %v8014 = vsel %vm1645, %v7992, 0.0
  %v8015 = vrot.slane %v8014, 4
  %v8016 = vadd.f32 %v8014, %v8015
  %v8017 = vrot.slane %v8016, 2
  %v8018 = vadd.f32 %v8016, %v8017
  %v8019 = vrot.slane %v8018, 1
  %v8020 = vadd.f32 %v8018, %v8019
  %v8025 = vsel %vm1685, %v8006, %v7999
  %v8026 = vsel %vm1687, %v8013, %v8025
  %v8027 = vsel %vm1689, %v8020, %v8026
  %8028 = vrot.lane.b32.xlu0 %v1847, 122
  %v8029 = vpop.permute.xlu0 %8028
  %v8031 = vsel %vm645, %v8027, 0
  %8033 = vmatprep.subr.mxu0 0.0
  %8034 = vmatpush1.msra.mxu0 %v88
  %8035 = vmatprep.subr.mxu0 0.0
  %8036 = vmatpush1.msra.mxu0 %v89
  %8037 = vmatprep.subr.mxu0 0.0
  %8038 = vmatpush1.msra.mxu0 %v90
  %8039 = vmatprep.subr.mxu0 0.0
  %8040 = vmatpush1.msra.mxu0 %v91
  %8041 = vmatprep.subr.mxu0 0.0
  %8042 = vmatpush1.msra.mxu0 0.0
  %8043 = vmatprep.subr.mxu0 0.0
  %8044 = vmatpush1.msra.mxu0 0.0
  %8045 = vmatprep.subr.mxu0 0.0
  %8046 = vmatpush1.msra.mxu0 0.0
  %8047 = vmatprep.subr.mxu0 0.0
  %8048 = vmatpush1.msra.mxu0 0.0
  %8049 = vmatprep.subr.mxu0 0.0
  %8050 = vmatpush1.msra.mxu0 0.0
  %8051 = vmatprep.subr.mxu0 0.0
  %8052 = vmatpush1.msra.mxu0 0.0
  %8053 = vmatprep.subr.mxu0 0.0
  %8054 = vmatpush1.msra.mxu0 0.0
  %8055 = vmatprep.subr.mxu0 0.0
  %8056 = vmatpush1.msra.mxu0 0.0
  %8057 = vmatprep.subr.mxu0 0.0
  %8058 = vmatpush1.msra.mxu0 0.0
  %8059 = vmatprep.subr.mxu0 0.0
  %8060 = vmatpush1.msra.mxu0 0.0
  %8061 = vmatprep.subr.mxu0 0.0
  %8062 = vmatpush1.msra.mxu0 0.0
  %8063 = vmatprep.subr.mxu0 0.0
  %8064 = vmatpush1.msra.mxu0 0.0
  %8065 = vmatprep.subr.mxu0 0.0
  %8066 = vmatpush1.msra.mxu0 0.0
  %8067 = vmatprep.subr.mxu0 0.0
  %8068 = vmatpush1.msra.mxu0 0.0
  %8069 = vmatprep.subr.mxu0 0.0
  %8070 = vmatpush1.msra.mxu0 0.0
  %8071 = vmatprep.subr.mxu0 0.0
  %8072 = vmatpush1.msra.mxu0 0.0
  %8073 = vmatprep.subr.mxu0 0.0
  %8074 = vmatpush1.msra.mxu0 0.0
  %8075 = vmatprep.subr.mxu0 0.0
  %8076 = vmatpush1.msra.mxu0 0.0
  %8077 = vmatprep.subr.mxu0 0.0
  %8078 = vmatpush1.msra.mxu0 0.0
  %8079 = vmatprep.subr.mxu0 0.0
  %8080 = vmatpush1.msra.mxu0 0.0
  %8081 = vmatprep.subr.mxu0 0.0
  %8082 = vmatpush1.msra.mxu0 0.0
  %8083 = vmatprep.subr.mxu0 0.0
  %8084 = vmatpush1.msra.mxu0 0.0
  %8085 = vmatprep.subr.mxu0 0.0
  %8086 = vmatpush1.msra.mxu0 0.0
  %8087 = vmatprep.subr.mxu0 0.0
  %8088 = vmatpush1.msra.mxu0 0.0
  %8089 = vmatprep.subr.mxu0 0.0
  %8090 = vmatpush1.msra.mxu0 0.0
  %8091 = vmatprep.subr.mxu0 0.0
  %8092 = vmatpush1.msra.mxu0 0.0
  %8093 = vmatprep.subr.mxu0 0.0
  %8094 = vmatpush1.msra.mxu0 0.0
  %8095 = vmatprep.subr.mxu0 0.0
  %8096 = vmatpush1.msra.mxu0 0.0
  %8097 = vmatprep.mubr.f32.mxu0 0.0
  %8098 = vmatmul.mubr.f32.gmra.mrb[0].mxu0 %v8031
  %v8099 = vpop.f32.mrb[0].mxu0
  %v8100 = vadd.f32 %v8029, %v8099
  %v8101 = vpop.f32.mrb[0].mxu0
  %8102 = vdwg.mxu0
  %v8103 = vadd.f32 %v8100, %v1927
  %8105 = vset.pattern.permute.xlu0 0
  %8106 = vperm.xlu0 %8105, %v8103
  %v8107 = vpop.permute.xlu0 %8106
  %v8109 = vmul.f32 %v8107, %v1938
  %v8110 = vsel %vm645, %v7183, 0
  %8112 = vmatprep.subr.mxu0 0.0
  %8113 = vmatpush1.msra.mxu0 %v83
  %8114 = vmatprep.subr.mxu0 0.0
  %8115 = vmatpush1.msra.mxu0 %v84
  %8116 = vmatprep.subr.mxu0 0.0
  %8117 = vmatpush1.msra.mxu0 %v85
  %8118 = vmatprep.subr.mxu0 0.0
  %8119 = vmatpush1.msra.mxu0 %v86
  %8120 = vmatprep.subr.mxu0 0.0
  %8121 = vmatpush1.msra.mxu0 0.0
  %8122 = vmatprep.subr.mxu0 0.0
  %8123 = vmatpush1.msra.mxu0 0.0
  %8124 = vmatprep.subr.mxu0 0.0
  %8125 = vmatpush1.msra.mxu0 0.0
  %8126 = vmatprep.subr.mxu0 0.0
  %8127 = vmatpush1.msra.mxu0 0.0
  %8128 = vmatprep.subr.mxu0 0.0
  %8129 = vmatpush1.msra.mxu0 0.0
  %8130 = vmatprep.subr.mxu0 0.0
  %8131 = vmatpush1.msra.mxu0 0.0
  %8132 = vmatprep.subr.mxu0 0.0
  %8133 = vmatpush1.msra.mxu0 0.0
  %8134 = vmatprep.subr.mxu0 0.0
  %8135 = vmatpush1.msra.mxu0 0.0
  %8136 = vmatprep.subr.mxu0 0.0
  %8137 = vmatpush1.msra.mxu0 0.0
  %8138 = vmatprep.subr.mxu0 0.0
  %8139 = vmatpush1.msra.mxu0 0.0
  %8140 = vmatprep.subr.mxu0 0.0
  %8141 = vmatpush1.msra.mxu0 0.0
  %8142 = vmatprep.subr.mxu0 0.0
  %8143 = vmatpush1.msra.mxu0 0.0
  %8144 = vmatprep.subr.mxu0 0.0
  %8145 = vmatpush1.msra.mxu0 0.0
  %8146 = vmatprep.subr.mxu0 0.0
  %8147 = vmatpush1.msra.mxu0 0.0
  %8148 = vmatprep.subr.mxu0 0.0
  %8149 = vmatpush1.msra.mxu0 0.0
  %8150 = vmatprep.subr.mxu0 0.0
  %8151 = vmatpush1.msra.mxu0 0.0
  %8152 = vmatprep.subr.mxu0 0.0
  %8153 = vmatpush1.msra.mxu0 0.0
  %8154 = vmatprep.subr.mxu0 0.0
  %8155 = vmatpush1.msra.mxu0 0.0
  %8156 = vmatprep.subr.mxu0 0.0
  %8157 = vmatpush1.msra.mxu0 0.0
  %8158 = vmatprep.subr.mxu0 0.0
  %8159 = vmatpush1.msra.mxu0 0.0
  %8160 = vmatprep.subr.mxu0 0.0
  %8161 = vmatpush1.msra.mxu0 0.0
  %8162 = vmatprep.subr.mxu0 0.0
  %8163 = vmatpush1.msra.mxu0 0.0
  %8164 = vmatprep.subr.mxu0 0.0
  %8165 = vmatpush1.msra.mxu0 0.0
  %8166 = vmatprep.subr.mxu0 0.0
  %8167 = vmatpush1.msra.mxu0 0.0
  %8168 = vmatprep.subr.mxu0 0.0
  %8169 = vmatpush1.msra.mxu0 0.0
  %8170 = vmatprep.subr.mxu0 0.0
  %8171 = vmatpush1.msra.mxu0 0.0
  %8172 = vmatprep.subr.mxu0 0.0
  %8173 = vmatpush1.msra.mxu0 0.0
  %8174 = vmatprep.subr.mxu0 0.0
  %8175 = vmatpush1.msra.mxu0 0.0
  %8176 = vmatprep.mubr.f32.mxu0 0.0
  %8177 = vmatmul.mubr.f32.gmra.mrb[0].mxu0 %v8110
  %v8178 = vpop.f32.mrb[0].mxu0
  %v8179 = vadd.f32 0.0, %v8178
  %v8180 = vpop.f32.mrb[0].mxu0
  %8181 = vdwg.mxu0
  %v8182 = vadd.f32 %v8109, %v8179
  %v8183 = vadd.f32 %v8182, %v2018
  %v8184 = vxor.u32 %v8183, 2147483648
  %v8185 = vmul.f32 %v8184, 1.442695
  %v8186 = vpow.pop %v8185
  %v8187 = vadd.f32 %v8186, 1.0
  %v8188 = vrcp.pop %v8187
  %v8189 = vmul.f32 1.0, %v8188
  %v8190 = vtanh.pop %v8183
  %v8191 = vmul.f32 %v8189, %v7174
  %8193 = vrot.lane.b32.xlu0 %v8190, 64
  %v8194 = vpop.permute.xlu0 %8193
  %v8196 = vmul.f32 %v8189, %v8194
  %8198 = vrot.lane.b32.xlu0 %v8196, 32
  %v8199 = vpop.permute.xlu0 %8198
  %v8201 = vadd.f32 %v8191, %v8199
  %v8202 = vtanh.pop %v8201
  %8204 = vrot.lane.b32.xlu0 %v8202, 64
  %v8205 = vpop.permute.xlu0 %8204
  %v8207 = vmul.f32 %v8189, %v8205
  %8208 = vmatprep.subr.mxu0 0.0
  %8209 = vmatpush1.msra.mxu0 %v100
  %8210 = vmatprep.subr.mxu0 0.0
  %8211 = vmatpush1.msra.mxu0 %v101
  %8212 = vmatprep.subr.mxu0 0.0
  %8213 = vmatpush1.msra.mxu0 %v102
  %8214 = vmatprep.subr.mxu0 0.0
  %8215 = vmatpush1.msra.mxu0 %v103
  %8216 = vmatprep.subr.mxu0 0.0
  %8217 = vmatpush1.msra.mxu0 0.0
  %8218 = vmatprep.subr.mxu0 0.0
  %8219 = vmatpush1.msra.mxu0 0.0
  %8220 = vmatprep.subr.mxu0 0.0
  %8221 = vmatpush1.msra.mxu0 0.0
  %8222 = vmatprep.subr.mxu0 0.0
  %8223 = vmatpush1.msra.mxu0 0.0
  %8224 = vmatprep.subr.mxu0 0.0
  %8225 = vmatpush1.msra.mxu0 0.0
  %8226 = vmatprep.subr.mxu0 0.0
  %8227 = vmatpush1.msra.mxu0 0.0
  %8228 = vmatprep.subr.mxu0 0.0
  %8229 = vmatpush1.msra.mxu0 0.0
  %8230 = vmatprep.subr.mxu0 0.0
  %8231 = vmatpush1.msra.mxu0 0.0
  %8232 = vmatprep.subr.mxu0 0.0
  %8233 = vmatpush1.msra.mxu0 0.0
  %8234 = vmatprep.subr.mxu0 0.0
  %8235 = vmatpush1.msra.mxu0 0.0
  %8236 = vmatprep.subr.mxu0 0.0
  %8237 = vmatpush1.msra.mxu0 0.0
  %8238 = vmatprep.subr.mxu0 0.0
  %8239 = vmatpush1.msra.mxu0 0.0
  %8240 = vmatprep.subr.mxu0 0.0
  %8241 = vmatpush1.msra.mxu0 0.0
  %8242 = vmatprep.subr.mxu0 0.0
  %8243 = vmatpush1.msra.mxu0 0.0
  %8244 = vmatprep.subr.mxu0 0.0
  %8245 = vmatpush1.msra.mxu0 0.0
  %8246 = vmatprep.subr.mxu0 0.0
  %8247 = vmatpush1.msra.mxu0 0.0
  %8248 = vmatprep.subr.mxu0 0.0
  %8249 = vmatpush1.msra.mxu0 0.0
  %8250 = vmatprep.subr.mxu0 0.0
  %8251 = vmatpush1.msra.mxu0 0.0
  %8252 = vmatprep.subr.mxu0 0.0
  %8253 = vmatpush1.msra.mxu0 0.0
  %8254 = vmatprep.subr.mxu0 0.0
  %8255 = vmatpush1.msra.mxu0 0.0
  %8256 = vmatprep.subr.mxu0 0.0
  %8257 = vmatpush1.msra.mxu0 0.0
  %8258 = vmatprep.subr.mxu0 0.0
  %8259 = vmatpush1.msra.mxu0 0.0
  %8260 = vmatprep.subr.mxu0 0.0
  %8261 = vmatpush1.msra.mxu0 0.0
  %8262 = vmatprep.subr.mxu0 0.0
  %8263 = vmatpush1.msra.mxu0 0.0
  %8264 = vmatprep.subr.mxu0 0.0
  %8265 = vmatpush1.msra.mxu0 0.0
  %8266 = vmatprep.subr.mxu0 0.0
  %8267 = vmatpush1.msra.mxu0 0.0
  %8268 = vmatprep.subr.mxu0 0.0
  %8269 = vmatpush1.msra.mxu0 0.0
  %8270 = vmatprep.subr.mxu0 0.0
  %8271 = vmatpush1.msra.mxu0 0.0
  %8272 = vmatprep.mubr.f32.mxu0 0.0
  %8273 = vmatmul.mubr.f32.gmra.mrb[0].mxu0 %v8031
  %v8274 = vpop.f32.mrb[0].mxu0
  %v8275 = vadd.f32 0.0, %v8274
  %v8276 = vpop.f32.mrb[0].mxu0
  %8277 = vdwg.mxu0
  %8279 = vrot.lane.b32.xlu0 %v8207, 32
  %v8280 = vpop.permute.xlu0 %8279
  %v8281 = vsel %vm645, %v8280, 0
  %8283 = vmatprep.subr.mxu0 0.0
  %8284 = vmatpush1.msra.mxu0 %v96
  %8285 = vmatprep.subr.mxu0 0.0
  %8286 = vmatpush1.msra.mxu0 %v97
  %8287 = vmatprep.subr.mxu0 0.0
  %8288 = vmatpush1.msra.mxu0 %v98
  %8289 = vmatprep.subr.mxu0 0.0
  %8290 = vmatpush1.msra.mxu0 %v99
  %8291 = vmatprep.subr.mxu0 0.0
  %8292 = vmatpush1.msra.mxu0 0.0
  %8293 = vmatprep.subr.mxu0 0.0
  %8294 = vmatpush1.msra.mxu0 0.0
  %8295 = vmatprep.subr.mxu0 0.0
  %8296 = vmatpush1.msra.mxu0 0.0
  %8297 = vmatprep.subr.mxu0 0.0
  %8298 = vmatpush1.msra.mxu0 0.0
  %8299 = vmatprep.subr.mxu0 0.0
  %8300 = vmatpush1.msra.mxu0 0.0
  %8301 = vmatprep.subr.mxu0 0.0
  %8302 = vmatpush1.msra.mxu0 0.0
  %8303 = vmatprep.subr.mxu0 0.0
  %8304 = vmatpush1.msra.mxu0 0.0
  %8305 = vmatprep.subr.mxu0 0.0
  %8306 = vmatpush1.msra.mxu0 0.0
  %8307 = vmatprep.subr.mxu0 0.0
  %8308 = vmatpush1.msra.mxu0 0.0
  %8309 = vmatprep.subr.mxu0 0.0
  %8310 = vmatpush1.msra.mxu0 0.0
  %8311 = vmatprep.subr.mxu0 0.0
  %8312 = vmatpush1.msra.mxu0 0.0
  %8313 = vmatprep.subr.mxu0 0.0
  %8314 = vmatpush1.msra.mxu0 0.0
  %8315 = vmatprep.subr.mxu0 0.0
  %8316 = vmatpush1.msra.mxu0 0.0
  %8317 = vmatprep.subr.mxu0 0.0
  %8318 = vmatpush1.msra.mxu0 0.0
  %8319 = vmatprep.subr.mxu0 0.0
  %8320 = vmatpush1.msra.mxu0 0.0
  %8321 = vmatprep.subr.mxu0 0.0
  %8322 = vmatpush1.msra.mxu0 0.0
  %8323 = vmatprep.subr.mxu0 0.0
  %8324 = vmatpush1.msra.mxu0 0.0
  %8325 = vmatprep.subr.mxu0 0.0
  %8326 = vmatpush1.msra.mxu0 0.0
  %8327 = vmatprep.subr.mxu0 0.0
  %8328 = vmatpush1.msra.mxu0 0.0
  %8329 = vmatprep.subr.mxu0 0.0
  %8330 = vmatpush1.msra.mxu0 0.0
  %8331 = vmatprep.subr.mxu0 0.0
  %8332 = vmatpush1.msra.mxu0 0.0
  %8333 = vmatprep.subr.mxu0 0.0
  %8334 = vmatpush1.msra.mxu0 0.0
  %8335 = vmatprep.subr.mxu0 0.0
  %8336 = vmatpush1.msra.mxu0 0.0
  %8337 = vmatprep.subr.mxu0 0.0
  %8338 = vmatpush1.msra.mxu0 0.0
  %8339 = vmatprep.subr.mxu0 0.0
  %8340 = vmatpush1.msra.mxu0 0.0
  %8341 = vmatprep.subr.mxu0 0.0
  %8342 = vmatpush1.msra.mxu0 0.0
  %8343 = vmatprep.subr.mxu0 0.0
  %8344 = vmatpush1.msra.mxu0 0.0
  %8345 = vmatprep.subr.mxu0 0.0
  %8346 = vmatpush1.msra.mxu0 0.0
  %8347 = vmatprep.mubr.f32.mxu0 0.0
  %8348 = vmatmul.mubr.f32.gmra.mrb[0].mxu0 %v8281
  %v8349 = vpop.f32.mrb[0].mxu0
  %v8350 = vadd.f32 %v8275, %v8349
  %v8351 = vpop.f32.mrb[0].mxu0
  %8352 = vdwg.mxu0
  %v8353 = vstv %s105
  %v8354 = vadd.f32 %v8350, %v8353
  %vm8355 = vcmask 3072
  %8356 = vst.msk [vmem:[%s16] sm:$0xf] %vm8355, %v8354
  // Predicated region
  $region66: #{tpu_custom_call.1} parent=0 // pred_check
    _
  $region67: #{tpu_custom_call.1} parent=0 // pred_check_branch
    %8358 = sbr.rel (0) target = $region69
  $region68: #{tpu_custom_call.1} parent=0 // pred_region
    _
  $region69: #{tpu_custom_call.1} parent=0 // pred_fallthru
    _
  // Predicated region
  $region70: #{tpu_custom_call.1} parent=0 // pred_check
    _
  $region71: #{tpu_custom_call.1} parent=0 // pred_check_branch
    %8360 = sbr.rel (0) target = $region73
  $region72: #{tpu_custom_call.1} parent=0 // pred_region
    _
  $region73: #{tpu_custom_call.1} parent=0 // pred_fallthru
    _

</llo_original>
